<compile_context>
chip_gen: v7x
topology: tpu7x:2x2x1
jax: 0.10.0
libtpu: 0.0.40
codegen_flags: <defaults>
</compile_context>

<pallas_src>
import functools

import jax
import jax.numpy as jnp
from jax import lax
from jax.experimental import pallas as pl
from jax.experimental.pallas import tpu as pltpu

_LANE = 128
_GN_EPS = 1e-5


# ----------------------------------------------------------------------------
# small helpers
# ----------------------------------------------------------------------------
def _round_up(n, m):
    return ((n + m - 1) // m) * m


def _largest_divisor_leq(n, cap):
    for d in range(min(n, cap), 0, -1):
        if n % d == 0:
            return d
    return 1


def _cparams(n_axes, vmem_bytes):
    limit = int(min(max(vmem_bytes + (16 << 20), 32 << 20), 100 << 20))
    return pltpu.CompilerParams(
        dimension_semantics=("parallel",) * n_axes,
        vmem_limit_bytes=limit)


# ----------------------------------------------------------------------------
# kernel bodies
# ----------------------------------------------------------------------------
def _conv1_kernel(pc_ref, pn_ref, w_ref, b_ref, o_ref, ph_ref, acc_ref,
                  *, th, sw, use_mxu):
    """Stride-2 3x3 conv via the 4-phase decomposition, one row/cout tile."""
    cin = ph_ref.shape[-1]
    tc = acc_ref.shape[-1]
    m = th * sw
    # assemble the (4, th+1, sw+1, cin) phase window in VMEM scratch
    ph_ref[:, 0:th, :, :] = pc_ref[0]
    ph_ref[:, th:th + 1, :, :] = pn_ref[0]
    for t in range(9):                                 # static, unrolled
        ki, kj = divmod(t, 3)
        p = 2 * (ki % 2) + (kj % 2)
        ro, co = ki // 2, kj // 2
        xsl = ph_ref[p, ro:ro + th, co:co + sw, :].reshape(m, cin)
        if use_mxu:
            contrib = jnp.dot(xsl, w_ref[t], preferred_element_type=jnp.float32)
        else:                                          # tiny cin: VPU FMA chain
            xf = xsl.astype(jnp.float32)
            wf = w_ref[t].astype(jnp.float32)
            contrib = xf[:, 0:1] * wf[0:1, :]
            for k in range(1, cin):
                contrib = contrib + xf[:, k:k + 1] * wf[k:k + 1, :]
        if t == 0:
            acc_ref[...] = contrib + b_ref[...]
        else:
            acc_ref[...] += contrib
    o_ref[...] = acc_ref[...].reshape(1, th, sw, tc).astype(o_ref.dtype)


def _res_conv_kernel(*refs, th, sw, pre_affine):
    """3x3 stride-1 conv (+ fused GN-affine+SiLU of the *previous* layer on
    the input path) + bias + per-tile GroupNorm partial statistics."""
    if pre_affine:
        (xc_ref, xp_ref, xn_ref, sc_ref, sh_ref, w_ref, b_ref, oh_ref,
         y_ref, st_ref, xpad_ref, acc_ref) = refs
    else:
        (xc_ref, xp_ref, xn_ref, w_ref, b_ref, oh_ref,
         y_ref, st_ref, xpad_ref, acc_ref) = refs
        sc_ref = sh_ref = None

    i = pl.program_id(1)
    n_rows = pl.num_programs(1)
    cin = xpad_ref.shape[-1]
    tc = acc_ref.shape[-1]
    m = th * sw

    def activate(v):
        if not pre_affine:
            return v
        vf = v.astype(jnp.float32) * sc_ref[0] + sh_ref[0]
        vf = vf * (1.0 / (1.0 + jnp.exp(-vf)))          # exact SiLU
        return vf.astype(jnp.bfloat16)

    prev = activate(xp_ref[0, 0])                       # (sw, cin)
    nxt = activate(xn_ref[0, 0])
    prev = jnp.where(i > 0, prev, jnp.zeros_like(prev))          # global halo
    nxt = jnp.where(i < n_rows - 1, nxt, jnp.zeros_like(nxt))
    center = activate(xc_ref[0])                        # (th, sw, cin)

    # assemble the halo'd (th+2, sw+2, cin) input tile in VMEM scratch
    zcol = jnp.zeros((th + 2, 1, cin), jnp.bfloat16)
    xpad_ref[:, 0:1, :] = zcol
    xpad_ref[:, sw + 1:sw + 2, :] = zcol
    xpad_ref[0:1, 1:sw + 1, :] = prev[None]
    xpad_ref[1:th + 1, 1:sw + 1, :] = center
    xpad_ref[th + 1:th + 2, 1:sw + 1, :] = nxt[None]

    for t in range(9):                                  # static, unrolled
        ki, kj = divmod(t, 3)
        xsl = xpad_ref[ki:ki + th, kj:kj + sw, :].reshape(m, cin)
        contrib = jnp.dot(xsl, w_ref[t], preferred_element_type=jnp.float32)
        if t == 0:
            acc_ref[...] = contrib + b_ref[...]
        else:
            acc_ref[...] += contrib

    acc = acc_ref[...]
    y_ref[...] = acc.reshape(1, th, sw, tc).astype(y_ref.dtype)

    # per-(row-tile, cout-tile) partial GroupNorm stats (sum, sum of squares)
    ch_sum = jnp.sum(acc, axis=0, keepdims=True)                 # (1, tc)
    ch_sq = jnp.sum(acc * acc, axis=0, keepdims=True)            # (1, tc)
    st_ref[0, 0, 0:1, :] = jnp.dot(ch_sum, oh_ref[...],
                                   preferred_element_type=jnp.float32)
    st_ref[0, 0, 1:2, :] = jnp.dot(ch_sq, oh_ref[...],
                                   preferred_element_type=jnp.float32)


def _norm_silu_add_kernel(y_ref, sc_ref, sh_ref, short_ref, o_ref):
    """Final GroupNorm affine + SiLU + residual shortcut add (pointwise)."""
    x = y_ref[...].astype(jnp.float32)
    t = x * sc_ref[0] + sh_ref[0]
    act = t * (1.0 / (1.0 + jnp.exp(-t)))
    act = act + short_ref[...].astype(jnp.float32)
    o_ref[...] = act.astype(o_ref.dtype)


# ----------------------------------------------------------------------------
# pallas_call wrappers
# ----------------------------------------------------------------------------
def conv1_pallas(x_nhwc, w_hwio, bias, *, row_tile, cout_tile):
    """3x3, stride 2, pad 1 conv.  Output (N, Sh, Sw, Cout_pad) bf16."""
    n, h, w, cin = x_nhwc.shape
    cout = w_hwio.shape[-1]
    cout_p = _round_up(cout, _LANE)
    s_h = (h - 1) // 2 + 1
    s_w = (w - 1) // 2 + 1
    th, tc = row_tile, cout_tile
    assert s_h % th == 0 and cout_p % tc == 0

    # 4-phase (even/odd row, even/odd col) planes, true cin (no channel pad).
    xb = jnp.pad(x_nhwc.astype(jnp.bfloat16), ((0, 0), (1, 1), (1, 1), (0, 0)))
    planes = []
    for pi in range(2):
        for pj in range(2):
            pln = xb[:, pi::2, pj::2, :][:, :s_h + 1, :s_w + 1, :]
            pln = jnp.pad(pln, ((0, 0), (0, s_h + 1 - pln.shape[1]),
                                (0, s_w + 1 - pln.shape[2]), (0, 0)))
            planes.append(pln)
    phases = jnp.stack(planes, axis=1)                 # (N, 4, Sh+1, Sw+1, cin)

    wq = jnp.pad(w_hwio, ((0, 0), (0, 0), (0, 0), (0, cout_p - cout)))
    wq = wq.reshape(9, cin, cout_p).astype(jnp.bfloat16)
    bq = jnp.pad(bias, (0, cout_p - cout)).reshape(1, cout_p).astype(jnp.float32)

    n_t, n_ct = s_h // th, cout_p // tc
    kernel = functools.partial(_conv1_kernel, th=th, sw=s_w,
                               use_mxu=(cin >= 16))

    blk_bytes = 2 * (4 * th * (s_w + 1) * cin * 2 + 4 * (s_w + 1) * cin * 2
                     + 9 * cin * tc * 2 + tc * 4 + th * s_w * tc * 2)
    scr_bytes = 4 * (th + 1) * (s_w + 1) * cin * 2 + th * s_w * tc * 4

    return pl.pallas_call(
        kernel,
        out_shape=jax.ShapeDtypeStruct((n, s_h, s_w, cout_p), jnp.bfloat16),
        grid=(n, n_t, n_ct),
        in_specs=[
            pl.BlockSpec((1, 4, th, s_w + 1, cin),
                         lambda b, i, j: (b, 0, i, 0, 0)),
            pl.BlockSpec((1, 4, 1, s_w + 1, cin),
                         lambda b, i, j: (b, 0, i * th + th, 0, 0)),
            pl.BlockSpec((9, cin, tc), lambda b, i, j: (0, 0, j)),
            pl.BlockSpec((1, tc), lambda b, i, j: (0, j)),
        ],
        out_specs=pl.BlockSpec((1, th, s_w, tc), lambda b, i, j: (b, i, 0, j)),
        scratch_shapes=[pltpu.VMEM((4, th + 1, s_w + 1, cin), jnp.bfloat16),
                        pltpu.VMEM((th * s_w, tc), jnp.float32)],
        compiler_params=_cparams(3, blk_bytes + scr_bytes),
    )(phases, phases, wq, bq)


def res_conv_pallas(act, w_hwio, bias, scale, shift, *, num_groups,
                    row_tile, cout_tile):
    """3x3 stride-1 conv (+fused GN+SiLU of prev layer) + partial GN stats."""
    n, s_h, s_w, cin_p = act.shape
    cin = w_hwio.shape[2]
    cout = w_hwio.shape[3]
    cout_p = _round_up(cout, _LANE)
    th, tc = row_tile, cout_tile
    assert s_h % th == 0 and cout_p % tc == 0
    assert cout % num_groups == 0 and num_groups <= _LANE
    cg = cout // num_groups
    n_t, n_ct = s_h // th, cout_p // tc

    wq = jnp.pad(w_hwio, ((0, 0), (0, 0), (0, cin_p - cin), (0, cout_p - cout)))
    wq = wq.reshape(9, cin_p, cout_p).astype(jnp.bfloat16)
    bq = jnp.pad(bias, (0, cout_p - cout)).reshape(1, cout_p).astype(jnp.float32)
    ch = jnp.arange(cout_p)
    onehot = ((ch < cout)[:, None] &
              ((ch // cg)[:, None] == jnp.arange(_LANE)[None, :])
              ).astype(jnp.float32)                    # (Cout_pad, 128)

    pre_affine = scale is not None
    kernel = functools.partial(_res_conv_kernel, th=th, sw=s_w,
                               pre_affine=pre_affine)

    in_specs = [
        pl.BlockSpec((1, th, s_w, cin_p), lambda b, i, j: (b, i, 0, 0)),
        pl.BlockSpec((1, 1, s_w, cin_p),
                     lambda b, i, j: (b, jnp.maximum(i * th - 1, 0), 0, 0)),
        pl.BlockSpec((1, 1, s_w, cin_p),
                     lambda b, i, j: (b, jnp.minimum(i * th + th, s_h - 1), 0, 0)),
    ]
    args = [act, act, act]
    if pre_affine:
        in_specs += [pl.BlockSpec((1, 1, cin_p), lambda b, i, j: (b, 0, 0)),
                     pl.BlockSpec((1, 1, cin_p), lambda b, i, j: (b, 0, 0))]
        args += [scale, shift]
    in_specs += [
        pl.BlockSpec((9, cin_p, tc), lambda b, i, j: (0, 0, j)),
        pl.BlockSpec((1, tc), lambda b, i, j: (0, j)),
        pl.BlockSpec((tc, _LANE), lambda b, i, j: (j, 0)),
    ]
    args += [wq, bq, onehot]

    blk_bytes = 2 * (th * s_w * cin_p * 2 + 2 * s_w * cin_p * 2
                     + (2 * cin_p * 4 if pre_affine else 0)
                     + 9 * cin_p * tc * 2 + tc * 4 + tc * _LANE * 4
                     + th * s_w * tc * 2 + 2 * _LANE * 4)
    scr_bytes = (th + 2) * (s_w + 2) * cin_p * 2 + th * s_w * tc * 4

    y, stats = pl.pallas_call(
        kernel,
        out_shape=(jax.ShapeDtypeStruct((n, s_h, s_w, cout_p), jnp.bfloat16),
                   jax.ShapeDtypeStruct((n, n_t * n_ct, 2, _LANE), jnp.float32)),
        grid=(n, n_t, n_ct),
        in_specs=in_specs,
        out_specs=(pl.BlockSpec((1, th, s_w, tc), lambda b, i, j: (b, i, 0, j)),
                   pl.BlockSpec((1, 1, 2, _LANE),
                                lambda b, i, j: (b, i * n_ct + j, 0, 0))),
        scratch_shapes=[pltpu.VMEM((th + 2, s_w + 2, cin_p), jnp.bfloat16),
                        pltpu.VMEM((th * s_w, tc), jnp.float32)],
        compiler_params=_cparams(3, blk_bytes + scr_bytes),
    )(*args)
    return y, stats


def norm_silu_add_pallas(y, scale, shift, shortcut, *, row_tile, cout_tile):
    n, s_h, s_w, cout_p = y.shape
    th, tc = row_tile, cout_tile
    n_t, n_ct = s_h // th, cout_p // tc
    blk_bytes = 2 * (2 * th * s_w * tc * 2 + 2 * tc * 4 + th * s_w * tc * 4)
    return pl.pallas_call(
        _norm_silu_add_kernel,
        out_shape=jax.ShapeDtypeStruct((n, s_h, s_w, cout_p), jnp.float32),
        grid=(n, n_t, n_ct),
        in_specs=[
            pl.BlockSpec((1, th, s_w, tc), lambda b, i, j: (b, i, 0, j)),
            pl.BlockSpec((1, 1, tc), lambda b, i, j: (b, 0, j)),
            pl.BlockSpec((1, 1, tc), lambda b, i, j: (b, 0, j)),
            pl.BlockSpec((1, th, s_w, tc), lambda b, i, j: (b, i, 0, j)),
        ],
        out_specs=pl.BlockSpec((1, th, s_w, tc), lambda b, i, j: (b, i, 0, j)),
        compiler_params=_cparams(3, blk_bytes),
    )(y, scale, shift, shortcut)


# ----------------------------------------------------------------------------
# GroupNorm stats -> per-channel scale/shift (tiny, XLA side)
# ----------------------------------------------------------------------------
def _gn_affine(stats, gamma, beta, num_groups, cout, cout_p, count):
    tot = jnp.sum(stats, axis=1)                        # (N, 2, 128)
    g_sum, g_sq = tot[:, 0], tot[:, 1]                  # (N, 128)
    mean = g_sum / count
    var = g_sq / count - mean * mean
    inv = lax.rsqrt(var + _GN_EPS)
    cg = cout // num_groups
    ch = jnp.arange(cout_p)
    grp = jnp.clip(ch // cg, 0, num_groups - 1)
    mean_c = mean[:, grp]                                # (N, Cout_pad)
    inv_c = inv[:, grp]
    gpad = jnp.pad(gamma, (0, cout_p - cout))
    bpad = jnp.pad(beta, (0, cout_p - cout))
    valid = (ch < cout).astype(jnp.float32)
    scale = gpad * inv_c * valid
    shift = (bpad - mean_c * gpad * inv_c) * valid
    return (scale[:, None, :].astype(jnp.float32),
            shift[:, None, :].astype(jnp.float32))


# ----------------------------------------------------------------------------
# DownBlock forward
# ----------------------------------------------------------------------------
def init_downblock_params(key, in_chans, out_chans, num_residuals=2):
    """Synthetic params; conv weights stored HWIO (PyTorch OIHW -> (2,3,1,0))."""
    keys = jax.random.split(key, 2 + 2 * num_residuals)
    params = {
        "conv_w": 0.05 * jax.random.normal(keys[0], (3, 3, in_chans, out_chans),
                                           jnp.float32),
        "conv_b": 0.05 * jax.random.normal(keys[1], (out_chans,), jnp.float32),
        "res": [],
    }
    for i in range(num_residuals):
        params["res"].append({
            "w": 0.05 * jax.random.normal(keys[2 + 2 * i],
                                          (3, 3, out_chans, out_chans),
                                          jnp.float32),
            "b": 0.05 * jax.random.normal(keys[3 + 2 * i], (out_chans,),
                                          jnp.float32),
            "gamma": jnp.ones((out_chans,), jnp.float32),
            "beta": jnp.zeros((out_chans,), jnp.float32),
        })
    return params


def downblock_forward(x_nchw, params, num_groups, *, row_tile=None,
                      cout_tile=None):
    n, _, h, w = x_nchw.shape
    cout = params["conv_b"].shape[0]
    cout_p = _round_up(cout, _LANE)
    assert len(params["res"]) >= 1
    s_h = (h - 1) // 2 + 1
    s_w = (w - 1) // 2 + 1
    th = row_tile if row_tile is not None else _largest_divisor_leq(s_h, 64)
    if cout_tile is None:
        tc = 256 if cout_p % 256 == 0 else _LANE       # 256-wide MXU on v6e/v7x
    else:
        tc = cout_tile
    assert s_h % th == 0 and cout_p % tc == 0

    x = jnp.transpose(x_nchw, (0, 2, 3, 1))             # NCHW -> NHWC
    # stride-2 conv; single bf16 output = shortcut AND first residual input
    a0 = conv1_pallas(x, params["conv_w"], params["conv_b"],
                      row_tile=th, cout_tile=tc)

    count = float(s_h * s_w * (cout // num_groups))
    act, scale, shift = a0, None, None
    for blk in params["res"]:
        act, stats = res_conv_pallas(act, blk["w"], blk["b"], scale, shift,
                                     num_groups=num_groups,
                                     row_tile=th, cout_tile=tc)
        scale, shift = _gn_affine(stats, blk["gamma"], blk["beta"],
                                  num_groups, cout, cout_p, count)
    out = norm_silu_add_pallas(act, scale, shift, a0,
                               row_tile=th, cout_tile=tc)

    res = out[..., :cout]                                # strip channel padding
    if h % 2 != 0:
        res = res[:, :-1, :, :]
    if w % 2 != 0:
        res = res[:, :, :-1, :]
    return jnp.transpose(res, (0, 3, 1, 2))              # NHWC -> NCHW


# ----------------------------------------------------------------------------
# pure-JAX reference (correctness check only)
# ----------------------------------------------------------------------------
def _reference_forward(x_nchw, params, num_groups):
    x = jnp.transpose(x_nchw, (0, 2, 3, 1)).astype(jnp.float32)

    def conv(y, w_hwio, b, stride):
        out = lax.conv_general_dilated(
            y, w_hwio, (stride, stride), ((1, 1), (1, 1)),
            dimension_numbers=("NHWC", "HWIO", "NHWC"),
            precision=lax.Precision.HIGHEST)
        return out + b

    x = conv(x, params["conv_w"], params["conv_b"], 2)
    shortcut = x
    for blk in params["res"]:
        x = conv(x, blk["w"], blk["b"], 1)
        n_, h_, w_, c_ = x.shape
        xg = x.reshape(n_, h_ * w_, num_groups, c_ // num_groups)
        mean = jnp.mean(xg, axis=(1, 3), keepdims=True)
        var = jnp.mean((xg - mean) ** 2, axis=(1, 3), keepdims=True)
        xn = ((xg - mean) * lax.rsqrt(var + _GN_EPS)).reshape(n_, h_, w_, c_)
        xn = xn * blk["gamma"] + blk["beta"]
        x = xn * jax.nn.sigmoid(xn)
    res = x + shortcut
    _, _, h, w = x_nchw.shape
    if h % 2 != 0:
        res = res[:, :-1, :, :]
    if w % 2 != 0:
        res = res[:, :, :-1, :]
    return jnp.transpose(res, (0, 3, 1, 2))


if __name__ == "__main__":
    def run_case(case, batch, in_chans, out_chans, num_groups, hw,
                 row_tile, cout_tile):
        key = jax.random.fold_in(jax.random.PRNGKey(0), case)
        kx, kp = jax.random.split(key)
        h, w = hw
        x = jax.random.normal(kx, (batch, in_chans, h, w), jnp.float32)
        params = init_downblock_params(kp, in_chans, out_chans,
                                       num_residuals=2)
        fwd = jax.jit(functools.partial(downblock_forward,
                                        num_groups=num_groups,
                                        row_tile=row_tile,
                                        cout_tile=cout_tile))
        out = jax.block_until_ready(fwd(x, params))
        eh = (h - 1) // 2 + 1 - (1 if h % 2 else 0)
        ew = (w - 1) // 2 + 1 - (1 if w % 2 else 0)
        assert out.shape == (batch, out_chans, eh, ew), out.shape
        assert bool(jnp.all(jnp.isfinite(out)))
        ref = _reference_forward(x, params, num_groups)
        err = float(jnp.max(jnp.abs(out - ref)))
        assert err < 1e-1, f"case {case}: max abs error vs reference {err}"

    # main case: even spatial size, 2 row tiles
    run_case(0, batch=2, in_chans=4, out_chans=8, num_groups=2, hw=(16, 16),
             row_tile=4, cout_tile=128)
    # odd spatial size + multiple Cout tiles + group straddling a tile boundary
    run_case(1, batch=1, in_chans=3, out_chans=192, num_groups=4, hw=(15, 15),
             row_tile=4, cout_tile=128)
    print("KERNEL_OK")
</pallas_src>

<mosaic_0001>
module attributes {stable_mosaic.version = 11 : i64} {
  func.func @_conv1_kernel(%arg0: i32, %arg1: i32, %arg2: i32, %arg3: memref<1x4x4x9x4xbf16, #tpu.memory_space<vmem>>, %arg4: memref<1x4x1x9x4xbf16, #tpu.memory_space<vmem>>, %arg5: memref<9x4x128xbf16, #tpu.memory_space<vmem>>, %arg6: memref<1x128xf32, #tpu.memory_space<vmem>>, %arg7: memref<1x4x8x128xbf16, #tpu.memory_space<vmem>>, %arg8: memref<4x5x9x4xbf16, #tpu.memory_space<vmem>>, %arg9: memref<32x128xf32, #tpu.memory_space<vmem>>) attributes {dimension_semantics = [#tpu.dimension_semantics<parallel>, #tpu.dimension_semantics<parallel>, #tpu.dimension_semantics<parallel>], iteration_bounds = array<i64: 2, 2, 1>, scalar_prefetch = 0 : i64, scratch_operands = 2 : i64, tpu.core_type = #tpu.core_type<tc>, window_params = [{transform_indices = @transform_0, window_bounds = array<i64: 1, 4, 4, 9, 4>}, {transform_indices = @transform_1, window_bounds = array<i64: 1, 4, 1, 9, 4>}, {transform_indices = @transform_2, window_bounds = array<i64: 9, 4, 128>}, {transform_indices = @transform_3, window_bounds = array<i64: 1, 128>}, {transform_indices = @transform_4, window_bounds = array<i64: 1, 4, 8, 128>}]} {
    %c0 = arith.constant 0 : index
    %c0_0 = arith.constant 0 : index
    %c0_1 = arith.constant 0 : index
    %c0_2 = arith.constant 0 : index
    %c0_3 = arith.constant 0 : index
    %0 = vector.load %arg3[%c0, %c0_0, %c0_1, %c0_2, %c0_3] : memref<1x4x4x9x4xbf16, #tpu.memory_space<vmem>>, vector<1x4x4x9x4xbf16>
    %1 = vector.shape_cast %0 : vector<1x4x4x9x4xbf16> to vector<4x4x9x4xbf16>
    %c0_4 = arith.constant 0 : index
    %c0_5 = arith.constant 0 : index
    %c0_6 = arith.constant 0 : index
    %c0_7 = arith.constant 0 : index
    %2 = vector.load %arg8[%c0_4, %c0_5, %c0_6, %c0_7] : memref<4x5x9x4xbf16, #tpu.memory_space<vmem>>, vector<4x4x9x4xbf16>
    tpu.vector_store %arg8[%c0_4, %c0_5, %c0_6, %c0_7], %1 {strides = array<i32>} : memref<4x5x9x4xbf16, #tpu.memory_space<vmem>>, vector<4x4x9x4xbf16>,
    %c0_8 = arith.constant 0 : index
    %c0_9 = arith.constant 0 : index
    %c0_10 = arith.constant 0 : index
    %c0_11 = arith.constant 0 : index
    %c0_12 = arith.constant 0 : index
    %3 = vector.load %arg4[%c0_8, %c0_9, %c0_10, %c0_11, %c0_12] : memref<1x4x1x9x4xbf16, #tpu.memory_space<vmem>>, vector<1x4x1x9x4xbf16>
    %4 = vector.shape_cast %3 : vector<1x4x1x9x4xbf16> to vector<4x1x9x4xbf16>
    %c0_13 = arith.constant 0 : index
    %c4 = arith.constant 4 : index
    %c0_14 = arith.constant 0 : index
    %c0_15 = arith.constant 0 : index
    %5 = vector.load %arg8[%c0_13, %c4, %c0_14, %c0_15] : memref<4x5x9x4xbf16, #tpu.memory_space<vmem>>, vector<4x1x9x4xbf16>
    tpu.vector_store %arg8[%c0_13, %c4, %c0_14, %c0_15], %4 {strides = array<i32>} : memref<4x5x9x4xbf16, #tpu.memory_space<vmem>>, vector<4x1x9x4xbf16>,
    %c0_16 = arith.constant 0 : index
    %c0_17 = arith.constant 0 : index
    %c0_18 = arith.constant 0 : index
    %c0_19 = arith.constant 0 : index
    %6 = vector.load %arg8[%c0_16, %c0_17, %c0_18, %c0_19] : memref<4x5x9x4xbf16, #tpu.memory_space<vmem>>, vector<1x4x8x4xbf16>
    %7 = vector.shape_cast %6 : vector<1x4x8x4xbf16> to vector<4x8x4xbf16>
    %8 = vector.shape_cast %7 : vector<4x8x4xbf16> to vector<32x4xbf16>
    %9 = arith.extf %8 : vector<32x4xbf16> to vector<32x4xf32>
    %c0_20 = arith.constant 0 : index
    %c0_21 = arith.constant 0 : index
    %c0_22 = arith.constant 0 : index
    %10 = vector.load %arg5[%c0_20, %c0_21, %c0_22] : memref<9x4x128xbf16, #tpu.memory_space<vmem>>, vector<1x4x128xbf16>
    %11 = vector.shape_cast %10 : vector<1x4x128xbf16> to vector<4x128xbf16>
    %12 = arith.extf %11 : vector<4x128xbf16> to vector<4x128xf32>
    %13 = vector.extract_strided_slice %9 {offsets = [0, 0], sizes = [32, 1], strides = [1, 1]} : vector<32x4xf32> to vector<32x1xf32>
    %14 = vector.extract_strided_slice %12 {offsets = [0, 0], sizes = [1, 128], strides = [1, 1]} : vector<4x128xf32> to vector<1x128xf32>
    %15 = vector.broadcast %13 : vector<32x1xf32> to vector<32x128xf32>
    %16 = vector.broadcast %14 : vector<1x128xf32> to vector<32x128xf32>
    %17 = arith.mulf %15, %16 : vector<32x128xf32>
    %18 = vector.extract_strided_slice %9 {offsets = [0, 1], sizes = [32, 1], strides = [1, 1]} : vector<32x4xf32> to vector<32x1xf32>
    %19 = vector.extract_strided_slice %12 {offsets = [1, 0], sizes = [1, 128], strides = [1, 1]} : vector<4x128xf32> to vector<1x128xf32>
    %20 = vector.broadcast %18 : vector<32x1xf32> to vector<32x128xf32>
    %21 = vector.broadcast %19 : vector<1x128xf32> to vector<32x128xf32>
    %22 = arith.mulf %20, %21 : vector<32x128xf32>
    %23 = arith.addf %17, %22 : vector<32x128xf32>
    %24 = vector.extract_strided_slice %9 {offsets = [0, 2], sizes = [32, 1], strides = [1, 1]} : vector<32x4xf32> to vector<32x1xf32>
    %25 = vector.extract_strided_slice %12 {offsets = [2, 0], sizes = [1, 128], strides = [1, 1]} : vector<4x128xf32> to vector<1x128xf32>
    %26 = vector.broadcast %24 : vector<32x1xf32> to vector<32x128xf32>
    %27 = vector.broadcast %25 : vector<1x128xf32> to vector<32x128xf32>
    %28 = arith.mulf %26, %27 : vector<32x128xf32>
    %29 = arith.addf %23, %28 : vector<32x128xf32>
    %30 = vector.extract_strided_slice %9 {offsets = [0, 3], sizes = [32, 1], strides = [1, 1]} : vector<32x4xf32> to vector<32x1xf32>
    %31 = vector.extract_strided_slice %12 {offsets = [3, 0], sizes = [1, 128], strides = [1, 1]} : vector<4x128xf32> to vector<1x128xf32>
    %32 = vector.broadcast %30 : vector<32x1xf32> to vector<32x128xf32>
    %33 = vector.broadcast %31 : vector<1x128xf32> to vector<32x128xf32>
    %34 = arith.mulf %32, %33 : vector<32x128xf32>
    %35 = arith.addf %29, %34 : vector<32x128xf32>
    %c0_23 = arith.constant 0 : index
    %c0_24 = arith.constant 0 : index
    %36 = vector.load %arg6[%c0_23, %c0_24] : memref<1x128xf32, #tpu.memory_space<vmem>>, vector<1x128xf32>
    %37 = vector.broadcast %36 : vector<1x128xf32> to vector<32x128xf32>
    %38 = arith.addf %35, %37 : vector<32x128xf32>
    %c0_25 = arith.constant 0 : index
    %c0_26 = arith.constant 0 : index
    %39 = vector.load %arg9[%c0_25, %c0_26] : memref<32x128xf32, #tpu.memory_space<vmem>>, vector<32x128xf32>
    tpu.vector_store %arg9[%c0_25, %c0_26], %38 {strides = array<i32>} : memref<32x128xf32, #tpu.memory_space<vmem>>, vector<32x128xf32>,
    %c1 = arith.constant 1 : index
    %c0_27 = arith.constant 0 : index
    %c0_28 = arith.constant 0 : index
    %c0_29 = arith.constant 0 : index
    %40 = vector.load %arg8[%c1, %c0_27, %c0_28, %c0_29] : memref<4x5x9x4xbf16, #tpu.memory_space<vmem>>, vector<1x4x8x4xbf16>
    %41 = vector.shape_cast %40 : vector<1x4x8x4xbf16> to vector<4x8x4xbf16>
    %42 = vector.shape_cast %41 : vector<4x8x4xbf16> to vector<32x4xbf16>
    %43 = arith.extf %42 : vector<32x4xbf16> to vector<32x4xf32>
    %c1_30 = arith.constant 1 : index
    %c0_31 = arith.constant 0 : index
    %c0_32 = arith.constant 0 : index
    %44 = vector.load %arg5[%c1_30, %c0_31, %c0_32] : memref<9x4x128xbf16, #tpu.memory_space<vmem>>, vector<1x4x128xbf16>
    %45 = vector.shape_cast %44 : vector<1x4x128xbf16> to vector<4x128xbf16>
    %46 = arith.extf %45 : vector<4x128xbf16> to vector<4x128xf32>
    %47 = vector.extract_strided_slice %43 {offsets = [0, 0], sizes = [32, 1], strides = [1, 1]} : vector<32x4xf32> to vector<32x1xf32>
    %48 = vector.extract_strided_slice %46 {offsets = [0, 0], sizes = [1, 128], strides = [1, 1]} : vector<4x128xf32> to vector<1x128xf32>
    %49 = vector.broadcast %47 : vector<32x1xf32> to vector<32x128xf32>
    %50 = vector.broadcast %48 : vector<1x128xf32> to vector<32x128xf32>
    %51 = arith.mulf %49, %50 : vector<32x128xf32>
    %52 = vector.extract_strided_slice %43 {offsets = [0, 1], sizes = [32, 1], strides = [1, 1]} : vector<32x4xf32> to vector<32x1xf32>
    %53 = vector.extract_strided_slice %46 {offsets = [1, 0], sizes = [1, 128], strides = [1, 1]} : vector<4x128xf32> to vector<1x128xf32>
    %54 = vector.broadcast %52 : vector<32x1xf32> to vector<32x128xf32>
    %55 = vector.broadcast %53 : vector<1x128xf32> to vector<32x128xf32>
    %56 = arith.mulf %54, %55 : vector<32x128xf32>
    %57 = arith.addf %51, %56 : vector<32x128xf32>
    %58 = vector.extract_strided_slice %43 {offsets = [0, 2], sizes = [32, 1], strides = [1, 1]} : vector<32x4xf32> to vector<32x1xf32>
    %59 = vector.extract_strided_slice %46 {offsets = [2, 0], sizes = [1, 128], strides = [1, 1]} : vector<4x128xf32> to vector<1x128xf32>
    %60 = vector.broadcast %58 : vector<32x1xf32> to vector<32x128xf32>
    %61 = vector.broadcast %59 : vector<1x128xf32> to vector<32x128xf32>
    %62 = arith.mulf %60, %61 : vector<32x128xf32>
    %63 = arith.addf %57, %62 : vector<32x128xf32>
    %64 = vector.extract_strided_slice %43 {offsets = [0, 3], sizes = [32, 1], strides = [1, 1]} : vector<32x4xf32> to vector<32x1xf32>
    %65 = vector.extract_strided_slice %46 {offsets = [3, 0], sizes = [1, 128], strides = [1, 1]} : vector<4x128xf32> to vector<1x128xf32>
    %66 = vector.broadcast %64 : vector<32x1xf32> to vector<32x128xf32>
    %67 = vector.broadcast %65 : vector<1x128xf32> to vector<32x128xf32>
    %68 = arith.mulf %66, %67 : vector<32x128xf32>
    %69 = arith.addf %63, %68 : vector<32x128xf32>
    %c0_33 = arith.constant 0 : index
    %c0_34 = arith.constant 0 : index
    %70 = vector.load %arg9[%c0_33, %c0_34] : memref<32x128xf32, #tpu.memory_space<vmem>>, vector<32x128xf32>
    %71 = arith.addf %70, %69 : vector<32x128xf32>
    %c0_35 = arith.constant 0 : index
    %c0_36 = arith.constant 0 : index
    %72 = vector.load %arg9[%c0_35, %c0_36] : memref<32x128xf32, #tpu.memory_space<vmem>>, vector<32x128xf32>
    tpu.vector_store %arg9[%c0_35, %c0_36], %71 {strides = array<i32>} : memref<32x128xf32, #tpu.memory_space<vmem>>, vector<32x128xf32>,
    %c0_37 = arith.constant 0 : index
    %c0_38 = arith.constant 0 : index
    %c1_39 = arith.constant 1 : index
    %c0_40 = arith.constant 0 : index
    %73 = vector.load %arg8[%c0_37, %c0_38, %c1_39, %c0_40] : memref<4x5x9x4xbf16, #tpu.memory_space<vmem>>, vector<1x4x8x4xbf16>
    %74 = vector.shape_cast %73 : vector<1x4x8x4xbf16> to vector<4x8x4xbf16>
    %75 = vector.shape_cast %74 : vector<4x8x4xbf16> to vector<32x4xbf16>
    %76 = arith.extf %75 : vector<32x4xbf16> to vector<32x4xf32>
    %c2 = arith.constant 2 : index
    %c0_41 = arith.constant 0 : index
    %c0_42 = arith.constant 0 : index
    %77 = vector.load %arg5[%c2, %c0_41, %c0_42] : memref<9x4x128xbf16, #tpu.memory_space<vmem>>, vector<1x4x128xbf16>
    %78 = vector.shape_cast %77 : vector<1x4x128xbf16> to vector<4x128xbf16>
    %79 = arith.extf %78 : vector<4x128xbf16> to vector<4x128xf32>
    %80 = vector.extract_strided_slice %76 {offsets = [0, 0], sizes = [32, 1], strides = [1, 1]} : vector<32x4xf32> to vector<32x1xf32>
    %81 = vector.extract_strided_slice %79 {offsets = [0, 0], sizes = [1, 128], strides = [1, 1]} : vector<4x128xf32> to vector<1x128xf32>
    %82 = vector.broadcast %80 : vector<32x1xf32> to vector<32x128xf32>
    %83 = vector.broadcast %81 : vector<1x128xf32> to vector<32x128xf32>
    %84 = arith.mulf %82, %83 : vector<32x128xf32>
    %85 = vector.extract_strided_slice %76 {offsets = [0, 1], sizes = [32, 1], strides = [1, 1]} : vector<32x4xf32> to vector<32x1xf32>
    %86 = vector.extract_strided_slice %79 {offsets = [1, 0], sizes = [1, 128], strides = [1, 1]} : vector<4x128xf32> to vector<1x128xf32>
    %87 = vector.broadcast %85 : vector<32x1xf32> to vector<32x128xf32>
    %88 = vector.broadcast %86 : vector<1x128xf32> to vector<32x128xf32>
    %89 = arith.mulf %87, %88 : vector<32x128xf32>
    %90 = arith.addf %84, %89 : vector<32x128xf32>
    %91 = vector.extract_strided_slice %76 {offsets = [0, 2], sizes = [32, 1], strides = [1, 1]} : vector<32x4xf32> to vector<32x1xf32>
    %92 = vector.extract_strided_slice %79 {offsets = [2, 0], sizes = [1, 128], strides = [1, 1]} : vector<4x128xf32> to vector<1x128xf32>
    %93 = vector.broadcast %91 : vector<32x1xf32> to vector<32x128xf32>
    %94 = vector.broadcast %92 : vector<1x128xf32> to vector<32x128xf32>
    %95 = arith.mulf %93, %94 : vector<32x128xf32>
    %96 = arith.addf %90, %95 : vector<32x128xf32>
    %97 = vector.extract_strided_slice %76 {offsets = [0, 3], sizes = [32, 1], strides = [1, 1]} : vector<32x4xf32> to vector<32x1xf32>
    %98 = vector.extract_strided_slice %79 {offsets = [3, 0], sizes = [1, 128], strides = [1, 1]} : vector<4x128xf32> to vector<1x128xf32>
    %99 = vector.broadcast %97 : vector<32x1xf32> to vector<32x128xf32>
    %100 = vector.broadcast %98 : vector<1x128xf32> to vector<32x128xf32>
    %101 = arith.mulf %99, %100 : vector<32x128xf32>
    %102 = arith.addf %96, %101 : vector<32x128xf32>
    %c0_43 = arith.constant 0 : index
    %c0_44 = arith.constant 0 : index
    %103 = vector.load %arg9[%c0_43, %c0_44] : memref<32x128xf32, #tpu.memory_space<vmem>>, vector<32x128xf32>
    %104 = arith.addf %103, %102 : vector<32x128xf32>
    %c0_45 = arith.constant 0 : index
    %c0_46 = arith.constant 0 : index
    %105 = vector.load %arg9[%c0_45, %c0_46] : memref<32x128xf32, #tpu.memory_space<vmem>>, vector<32x128xf32>
    tpu.vector_store %arg9[%c0_45, %c0_46], %104 {strides = array<i32>} : memref<32x128xf32, #tpu.memory_space<vmem>>, vector<32x128xf32>,
    %c2_47 = arith.constant 2 : index
    %c0_48 = arith.constant 0 : index
    %c0_49 = arith.constant 0 : index
    %c0_50 = arith.constant 0 : index
    %106 = vector.load %arg8[%c2_47, %c0_48, %c0_49, %c0_50] : memref<4x5x9x4xbf16, #tpu.memory_space<vmem>>, vector<1x4x8x4xbf16>
    %107 = vector.shape_cast %106 : vector<1x4x8x4xbf16> to vector<4x8x4xbf16>
    %108 = vector.shape_cast %107 : vector<4x8x4xbf16> to vector<32x4xbf16>
    %109 = arith.extf %108 : vector<32x4xbf16> to vector<32x4xf32>
    %c3 = arith.constant 3 : index
    %c0_51 = arith.constant 0 : index
    %c0_52 = arith.constant 0 : index
    %110 = vector.load %arg5[%c3, %c0_51, %c0_52] : memref<9x4x128xbf16, #tpu.memory_space<vmem>>, vector<1x4x128xbf16>
    %111 = vector.shape_cast %110 : vector<1x4x128xbf16> to vector<4x128xbf16>
    %112 = arith.extf %111 : vector<4x128xbf16> to vector<4x128xf32>
    %113 = vector.extract_strided_slice %109 {offsets = [0, 0], sizes = [32, 1], strides = [1, 1]} : vector<32x4xf32> to vector<32x1xf32>
    %114 = vector.extract_strided_slice %112 {offsets = [0, 0], sizes = [1, 128], strides = [1, 1]} : vector<4x128xf32> to vector<1x128xf32>
    %115 = vector.broadcast %113 : vector<32x1xf32> to vector<32x128xf32>
    %116 = vector.broadcast %114 : vector<1x128xf32> to vector<32x128xf32>
    %117 = arith.mulf %115, %116 : vector<32x128xf32>
    %118 = vector.extract_strided_slice %109 {offsets = [0, 1], sizes = [32, 1], strides = [1, 1]} : vector<32x4xf32> to vector<32x1xf32>
    %119 = vector.extract_strided_slice %112 {offsets = [1, 0], sizes = [1, 128], strides = [1, 1]} : vector<4x128xf32> to vector<1x128xf32>
    %120 = vector.broadcast %118 : vector<32x1xf32> to vector<32x128xf32>
    %121 = vector.broadcast %119 : vector<1x128xf32> to vector<32x128xf32>
    %122 = arith.mulf %120, %121 : vector<32x128xf32>
    %123 = arith.addf %117, %122 : vector<32x128xf32>
    %124 = vector.extract_strided_slice %109 {offsets = [0, 2], sizes = [32, 1], strides = [1, 1]} : vector<32x4xf32> to vector<32x1xf32>
    %125 = vector.extract_strided_slice %112 {offsets = [2, 0], sizes = [1, 128], strides = [1, 1]} : vector<4x128xf32> to vector<1x128xf32>
    %126 = vector.broadcast %124 : vector<32x1xf32> to vector<32x128xf32>
    %127 = vector.broadcast %125 : vector<1x128xf32> to vector<32x128xf32>
    %128 = arith.mulf %126, %127 : vector<32x128xf32>
    %129 = arith.addf %123, %128 : vector<32x128xf32>
    %130 = vector.extract_strided_slice %109 {offsets = [0, 3], sizes = [32, 1], strides = [1, 1]} : vector<32x4xf32> to vector<32x1xf32>
    %131 = vector.extract_strided_slice %112 {offsets = [3, 0], sizes = [1, 128], strides = [1, 1]} : vector<4x128xf32> to vector<1x128xf32>
    %132 = vector.broadcast %130 : vector<32x1xf32> to vector<32x128xf32>
    %133 = vector.broadcast %131 : vector<1x128xf32> to vector<32x128xf32>
    %134 = arith.mulf %132, %133 : vector<32x128xf32>
    %135 = arith.addf %129, %134 : vector<32x128xf32>
    %c0_53 = arith.constant 0 : index
    %c0_54 = arith.constant 0 : index
    %136 = vector.load %arg9[%c0_53, %c0_54] : memref<32x128xf32, #tpu.memory_space<vmem>>, vector<32x128xf32>
    %137 = arith.addf %136, %135 : vector<32x128xf32>
    %c0_55 = arith.constant 0 : index
    %c0_56 = arith.constant 0 : index
    %138 = vector.load %arg9[%c0_55, %c0_56] : memref<32x128xf32, #tpu.memory_space<vmem>>, vector<32x128xf32>
    tpu.vector_store %arg9[%c0_55, %c0_56], %137 {strides = array<i32>} : memref<32x128xf32, #tpu.memory_space<vmem>>, vector<32x128xf32>,
    %c3_57 = arith.constant 3 : index
    %c0_58 = arith.constant 0 : index
    %c0_59 = arith.constant 0 : index
    %c0_60 = arith.constant 0 : index
    %139 = vector.load %arg8[%c3_57, %c0_58, %c0_59, %c0_60] : memref<4x5x9x4xbf16, #tpu.memory_space<vmem>>, vector<1x4x8x4xbf16>
    %140 = vector.shape_cast %139 : vector<1x4x8x4xbf16> to vector<4x8x4xbf16>
    %141 = vector.shape_cast %140 : vector<4x8x4xbf16> to vector<32x4xbf16>
    %142 = arith.extf %141 : vector<32x4xbf16> to vector<32x4xf32>
    %c4_61 = arith.constant 4 : index
    %c0_62 = arith.constant 0 : index
    %c0_63 = arith.constant 0 : index
    %143 = vector.load %arg5[%c4_61, %c0_62, %c0_63] : memref<9x4x128xbf16, #tpu.memory_space<vmem>>, vector<1x4x128xbf16>
    %144 = vector.shape_cast %143 : vector<1x4x128xbf16> to vector<4x128xbf16>
    %145 = arith.extf %144 : vector<4x128xbf16> to vector<4x128xf32>
    %146 = vector.extract_strided_slice %142 {offsets = [0, 0], sizes = [32, 1], strides = [1, 1]} : vector<32x4xf32> to vector<32x1xf32>
    %147 = vector.extract_strided_slice %145 {offsets = [0, 0], sizes = [1, 128], strides = [1, 1]} : vector<4x128xf32> to vector<1x128xf32>
    %148 = vector.broadcast %146 : vector<32x1xf32> to vector<32x128xf32>
    %149 = vector.broadcast %147 : vector<1x128xf32> to vector<32x128xf32>
    %150 = arith.mulf %148, %149 : vector<32x128xf32>
    %151 = vector.extract_strided_slice %142 {offsets = [0, 1], sizes = [32, 1], strides = [1, 1]} : vector<32x4xf32> to vector<32x1xf32>
    %152 = vector.extract_strided_slice %145 {offsets = [1, 0], sizes = [1, 128], strides = [1, 1]} : vector<4x128xf32> to vector<1x128xf32>
    %153 = vector.broadcast %151 : vector<32x1xf32> to vector<32x128xf32>
    %154 = vector.broadcast %152 : vector<1x128xf32> to vector<32x128xf32>
    %155 = arith.mulf %153, %154 : vector<32x128xf32>
    %156 = arith.addf %150, %155 : vector<32x128xf32>
    %157 = vector.extract_strided_slice %142 {offsets = [0, 2], sizes = [32, 1], strides = [1, 1]} : vector<32x4xf32> to vector<32x1xf32>
    %158 = vector.extract_strided_slice %145 {offsets = [2, 0], sizes = [1, 128], strides = [1, 1]} : vector<4x128xf32> to vector<1x128xf32>
    %159 = vector.broadcast %157 : vector<32x1xf32> to vector<32x128xf32>
    %160 = vector.broadcast %158 : vector<1x128xf32> to vector<32x128xf32>
    %161 = arith.mulf %159, %160 : vector<32x128xf32>
    %162 = arith.addf %156, %161 : vector<32x128xf32>
    %163 = vector.extract_strided_slice %142 {offsets = [0, 3], sizes = [32, 1], strides = [1, 1]} : vector<32x4xf32> to vector<32x1xf32>
    %164 = vector.extract_strided_slice %145 {offsets = [3, 0], sizes = [1, 128], strides = [1, 1]} : vector<4x128xf32> to vector<1x128xf32>
    %165 = vector.broadcast %163 : vector<32x1xf32> to vector<32x128xf32>
    %166 = vector.broadcast %164 : vector<1x128xf32> to vector<32x128xf32>
    %167 = arith.mulf %165, %166 : vector<32x128xf32>
    %168 = arith.addf %162, %167 : vector<32x128xf32>
    %c0_64 = arith.constant 0 : index
    %c0_65 = arith.constant 0 : index
    %169 = vector.load %arg9[%c0_64, %c0_65] : memref<32x128xf32, #tpu.memory_space<vmem>>, vector<32x128xf32>
    %170 = arith.addf %169, %168 : vector<32x128xf32>
    %c0_66 = arith.constant 0 : index
    %c0_67 = arith.constant 0 : index
    %171 = vector.load %arg9[%c0_66, %c0_67] : memref<32x128xf32, #tpu.memory_space<vmem>>, vector<32x128xf32>
    tpu.vector_store %arg9[%c0_66, %c0_67], %170 {strides = array<i32>} : memref<32x128xf32, #tpu.memory_space<vmem>>, vector<32x128xf32>,
    %c2_68 = arith.constant 2 : index
    %c0_69 = arith.constant 0 : index
    %c1_70 = arith.constant 1 : index
    %c0_71 = arith.constant 0 : index
    %172 = vector.load %arg8[%c2_68, %c0_69, %c1_70, %c0_71] : memref<4x5x9x4xbf16, #tpu.memory_space<vmem>>, vector<1x4x8x4xbf16>
    %173 = vector.shape_cast %172 : vector<1x4x8x4xbf16> to vector<4x8x4xbf16>
    %174 = vector.shape_cast %173 : vector<4x8x4xbf16> to vector<32x4xbf16>
    %175 = arith.extf %174 : vector<32x4xbf16> to vector<32x4xf32>
    %c5 = arith.constant 5 : index
    %c0_72 = arith.constant 0 : index
    %c0_73 = arith.constant 0 : index
    %176 = vector.load %arg5[%c5, %c0_72, %c0_73] : memref<9x4x128xbf16, #tpu.memory_space<vmem>>, vector<1x4x128xbf16>
    %177 = vector.shape_cast %176 : vector<1x4x128xbf16> to vector<4x128xbf16>
    %178 = arith.extf %177 : vector<4x128xbf16> to vector<4x128xf32>
    %179 = vector.extract_strided_slice %175 {offsets = [0, 0], sizes = [32, 1], strides = [1, 1]} : vector<32x4xf32> to vector<32x1xf32>
    %180 = vector.extract_strided_slice %178 {offsets = [0, 0], sizes = [1, 128], strides = [1, 1]} : vector<4x128xf32> to vector<1x128xf32>
    %181 = vector.broadcast %179 : vector<32x1xf32> to vector<32x128xf32>
    %182 = vector.broadcast %180 : vector<1x128xf32> to vector<32x128xf32>
    %183 = arith.mulf %181, %182 : vector<32x128xf32>
    %184 = vector.extract_strided_slice %175 {offsets = [0, 1], sizes = [32, 1], strides = [1, 1]} : vector<32x4xf32> to vector<32x1xf32>
    %185 = vector.extract_strided_slice %178 {offsets = [1, 0], sizes = [1, 128], strides = [1, 1]} : vector<4x128xf32> to vector<1x128xf32>
    %186 = vector.broadcast %184 : vector<32x1xf32> to vector<32x128xf32>
    %187 = vector.broadcast %185 : vector<1x128xf32> to vector<32x128xf32>
    %188 = arith.mulf %186, %187 : vector<32x128xf32>
    %189 = arith.addf %183, %188 : vector<32x128xf32>
    %190 = vector.extract_strided_slice %175 {offsets = [0, 2], sizes = [32, 1], strides = [1, 1]} : vector<32x4xf32> to vector<32x1xf32>
    %191 = vector.extract_strided_slice %178 {offsets = [2, 0], sizes = [1, 128], strides = [1, 1]} : vector<4x128xf32> to vector<1x128xf32>
    %192 = vector.broadcast %190 : vector<32x1xf32> to vector<32x128xf32>
    %193 = vector.broadcast %191 : vector<1x128xf32> to vector<32x128xf32>
    %194 = arith.mulf %192, %193 : vector<32x128xf32>
    %195 = arith.addf %189, %194 : vector<32x128xf32>
    %196 = vector.extract_strided_slice %175 {offsets = [0, 3], sizes = [32, 1], strides = [1, 1]} : vector<32x4xf32> to vector<32x1xf32>
    %197 = vector.extract_strided_slice %178 {offsets = [3, 0], sizes = [1, 128], strides = [1, 1]} : vector<4x128xf32> to vector<1x128xf32>
    %198 = vector.broadcast %196 : vector<32x1xf32> to vector<32x128xf32>
    %199 = vector.broadcast %197 : vector<1x128xf32> to vector<32x128xf32>
    %200 = arith.mulf %198, %199 : vector<32x128xf32>
    %201 = arith.addf %195, %200 : vector<32x128xf32>
    %c0_74 = arith.constant 0 : index
    %c0_75 = arith.constant 0 : index
    %202 = vector.load %arg9[%c0_74, %c0_75] : memref<32x128xf32, #tpu.memory_space<vmem>>, vector<32x128xf32>
    %203 = arith.addf %202, %201 : vector<32x128xf32>
    %c0_76 = arith.constant 0 : index
    %c0_77 = arith.constant 0 : index
    %204 = vector.load %arg9[%c0_76, %c0_77] : memref<32x128xf32, #tpu.memory_space<vmem>>, vector<32x128xf32>
    tpu.vector_store %arg9[%c0_76, %c0_77], %203 {strides = array<i32>} : memref<32x128xf32, #tpu.memory_space<vmem>>, vector<32x128xf32>,
    %c0_78 = arith.constant 0 : index
    %c1_79 = arith.constant 1 : index
    %c0_80 = arith.constant 0 : index
    %c0_81 = arith.constant 0 : index
    %205 = vector.load %arg8[%c0_78, %c1_79, %c0_80, %c0_81] : memref<4x5x9x4xbf16, #tpu.memory_space<vmem>>, vector<1x4x8x4xbf16>
    %206 = vector.shape_cast %205 : vector<1x4x8x4xbf16> to vector<4x8x4xbf16>
    %207 = vector.shape_cast %206 : vector<4x8x4xbf16> to vector<32x4xbf16>
    %208 = arith.extf %207 : vector<32x4xbf16> to vector<32x4xf32>
    %c6 = arith.constant 6 : index
    %c0_82 = arith.constant 0 : index
    %c0_83 = arith.constant 0 : index
    %209 = vector.load %arg5[%c6, %c0_82, %c0_83] : memref<9x4x128xbf16, #tpu.memory_space<vmem>>, vector<1x4x128xbf16>
    %210 = vector.shape_cast %209 : vector<1x4x128xbf16> to vector<4x128xbf16>
    %211 = arith.extf %210 : vector<4x128xbf16> to vector<4x128xf32>
    %212 = vector.extract_strided_slice %208 {offsets = [0, 0], sizes = [32, 1], strides = [1, 1]} : vector<32x4xf32> to vector<32x1xf32>
    %213 = vector.extract_strided_slice %211 {offsets = [0, 0], sizes = [1, 128], strides = [1, 1]} : vector<4x128xf32> to vector<1x128xf32>
    %214 = vector.broadcast %212 : vector<32x1xf32> to vector<32x128xf32>
    %215 = vector.broadcast %213 : vector<1x128xf32> to vector<32x128xf32>
    %216 = arith.mulf %214, %215 : vector<32x128xf32>
    %217 = vector.extract_strided_slice %208 {offsets = [0, 1], sizes = [32, 1], strides = [1, 1]} : vector<32x4xf32> to vector<32x1xf32>
    %218 = vector.extract_strided_slice %211 {offsets = [1, 0], sizes = [1, 128], strides = [1, 1]} : vector<4x128xf32> to vector<1x128xf32>
    %219 = vector.broadcast %217 : vector<32x1xf32> to vector<32x128xf32>
    %220 = vector.broadcast %218 : vector<1x128xf32> to vector<32x128xf32>
    %221 = arith.mulf %219, %220 : vector<32x128xf32>
    %222 = arith.addf %216, %221 : vector<32x128xf32>
    %223 = vector.extract_strided_slice %208 {offsets = [0, 2], sizes = [32, 1], strides = [1, 1]} : vector<32x4xf32> to vector<32x1xf32>
    %224 = vector.extract_strided_slice %211 {offsets = [2, 0], sizes = [1, 128], strides = [1, 1]} : vector<4x128xf32> to vector<1x128xf32>
    %225 = vector.broadcast %223 : vector<32x1xf32> to vector<32x128xf32>
    %226 = vector.broadcast %224 : vector<1x128xf32> to vector<32x128xf32>
    %227 = arith.mulf %225, %226 : vector<32x128xf32>
    %228 = arith.addf %222, %227 : vector<32x128xf32>
    %229 = vector.extract_strided_slice %208 {offsets = [0, 3], sizes = [32, 1], strides = [1, 1]} : vector<32x4xf32> to vector<32x1xf32>
    %230 = vector.extract_strided_slice %211 {offsets = [3, 0], sizes = [1, 128], strides = [1, 1]} : vector<4x128xf32> to vector<1x128xf32>
    %231 = vector.broadcast %229 : vector<32x1xf32> to vector<32x128xf32>
    %232 = vector.broadcast %230 : vector<1x128xf32> to vector<32x128xf32>
    %233 = arith.mulf %231, %232 : vector<32x128xf32>
    %234 = arith.addf %228, %233 : vector<32x128xf32>
    %c0_84 = arith.constant 0 : index
    %c0_85 = arith.constant 0 : index
    %235 = vector.load %arg9[%c0_84, %c0_85] : memref<32x128xf32, #tpu.memory_space<vmem>>, vector<32x128xf32>
    %236 = arith.addf %235, %234 : vector<32x128xf32>
    %c0_86 = arith.constant 0 : index
    %c0_87 = arith.constant 0 : index
    %237 = vector.load %arg9[%c0_86, %c0_87] : memref<32x128xf32, #tpu.memory_space<vmem>>, vector<32x128xf32>
    tpu.vector_store %arg9[%c0_86, %c0_87], %236 {strides = array<i32>} : memref<32x128xf32, #tpu.memory_space<vmem>>, vector<32x128xf32>,
    %c1_88 = arith.constant 1 : index
    %c1_89 = arith.constant 1 : index
    %c0_90 = arith.constant 0 : index
    %c0_91 = arith.constant 0 : index
    %238 = vector.load %arg8[%c1_88, %c1_89, %c0_90, %c0_91] : memref<4x5x9x4xbf16, #tpu.memory_space<vmem>>, vector<1x4x8x4xbf16>
    %239 = vector.shape_cast %238 : vector<1x4x8x4xbf16> to vector<4x8x4xbf16>
    %240 = vector.shape_cast %239 : vector<4x8x4xbf16> to vector<32x4xbf16>
    %241 = arith.extf %240 : vector<32x4xbf16> to vector<32x4xf32>
    %c7 = arith.constant 7 : index
    %c0_92 = arith.constant 0 : index
    %c0_93 = arith.constant 0 : index
    %242 = vector.load %arg5[%c7, %c0_92, %c0_93] : memref<9x4x128xbf16, #tpu.memory_space<vmem>>, vector<1x4x128xbf16>
    %243 = vector.shape_cast %242 : vector<1x4x128xbf16> to vector<4x128xbf16>
    %244 = arith.extf %243 : vector<4x128xbf16> to vector<4x128xf32>
    %245 = vector.extract_strided_slice %241 {offsets = [0, 0], sizes = [32, 1], strides = [1, 1]} : vector<32x4xf32> to vector<32x1xf32>
    %246 = vector.extract_strided_slice %244 {offsets = [0, 0], sizes = [1, 128], strides = [1, 1]} : vector<4x128xf32> to vector<1x128xf32>
    %247 = vector.broadcast %245 : vector<32x1xf32> to vector<32x128xf32>
    %248 = vector.broadcast %246 : vector<1x128xf32> to vector<32x128xf32>
    %249 = arith.mulf %247, %248 : vector<32x128xf32>
    %250 = vector.extract_strided_slice %241 {offsets = [0, 1], sizes = [32, 1], strides = [1, 1]} : vector<32x4xf32> to vector<32x1xf32>
    %251 = vector.extract_strided_slice %244 {offsets = [1, 0], sizes = [1, 128], strides = [1, 1]} : vector<4x128xf32> to vector<1x128xf32>
    %252 = vector.broadcast %250 : vector<32x1xf32> to vector<32x128xf32>
    %253 = vector.broadcast %251 : vector<1x128xf32> to vector<32x128xf32>
    %254 = arith.mulf %252, %253 : vector<32x128xf32>
    %255 = arith.addf %249, %254 : vector<32x128xf32>
    %256 = vector.extract_strided_slice %241 {offsets = [0, 2], sizes = [32, 1], strides = [1, 1]} : vector<32x4xf32> to vector<32x1xf32>
    %257 = vector.extract_strided_slice %244 {offsets = [2, 0], sizes = [1, 128], strides = [1, 1]} : vector<4x128xf32> to vector<1x128xf32>
    %258 = vector.broadcast %256 : vector<32x1xf32> to vector<32x128xf32>
    %259 = vector.broadcast %257 : vector<1x128xf32> to vector<32x128xf32>
    %260 = arith.mulf %258, %259 : vector<32x128xf32>
    %261 = arith.addf %255, %260 : vector<32x128xf32>
    %262 = vector.extract_strided_slice %241 {offsets = [0, 3], sizes = [32, 1], strides = [1, 1]} : vector<32x4xf32> to vector<32x1xf32>
    %263 = vector.extract_strided_slice %244 {offsets = [3, 0], sizes = [1, 128], strides = [1, 1]} : vector<4x128xf32> to vector<1x128xf32>
    %264 = vector.broadcast %262 : vector<32x1xf32> to vector<32x128xf32>
    %265 = vector.broadcast %263 : vector<1x128xf32> to vector<32x128xf32>
    %266 = arith.mulf %264, %265 : vector<32x128xf32>
    %267 = arith.addf %261, %266 : vector<32x128xf32>
    %c0_94 = arith.constant 0 : index
    %c0_95 = arith.constant 0 : index
    %268 = vector.load %arg9[%c0_94, %c0_95] : memref<32x128xf32, #tpu.memory_space<vmem>>, vector<32x128xf32>
    %269 = arith.addf %268, %267 : vector<32x128xf32>
    %c0_96 = arith.constant 0 : index
    %c0_97 = arith.constant 0 : index
    %270 = vector.load %arg9[%c0_96, %c0_97] : memref<32x128xf32, #tpu.memory_space<vmem>>, vector<32x128xf32>
    tpu.vector_store %arg9[%c0_96, %c0_97], %269 {strides = array<i32>} : memref<32x128xf32, #tpu.memory_space<vmem>>, vector<32x128xf32>,
    %c0_98 = arith.constant 0 : index
    %c1_99 = arith.constant 1 : index
    %c1_100 = arith.constant 1 : index
    %c0_101 = arith.constant 0 : index
    %271 = vector.load %arg8[%c0_98, %c1_99, %c1_100, %c0_101] : memref<4x5x9x4xbf16, #tpu.memory_space<vmem>>, vector<1x4x8x4xbf16>
    %272 = vector.shape_cast %271 : vector<1x4x8x4xbf16> to vector<4x8x4xbf16>
    %273 = vector.shape_cast %272 : vector<4x8x4xbf16> to vector<32x4xbf16>
    %274 = arith.extf %273 : vector<32x4xbf16> to vector<32x4xf32>
    %c8 = arith.constant 8 : index
    %c0_102 = arith.constant 0 : index
    %c0_103 = arith.constant 0 : index
    %275 = vector.load %arg5[%c8, %c0_102, %c0_103] : memref<9x4x128xbf16, #tpu.memory_space<vmem>>, vector<1x4x128xbf16>
    %276 = vector.shape_cast %275 : vector<1x4x128xbf16> to vector<4x128xbf16>
    %277 = arith.extf %276 : vector<4x128xbf16> to vector<4x128xf32>
    %278 = vector.extract_strided_slice %274 {offsets = [0, 0], sizes = [32, 1], strides = [1, 1]} : vector<32x4xf32> to vector<32x1xf32>
    %279 = vector.extract_strided_slice %277 {offsets = [0, 0], sizes = [1, 128], strides = [1, 1]} : vector<4x128xf32> to vector<1x128xf32>
    %280 = vector.broadcast %278 : vector<32x1xf32> to vector<32x128xf32>
    %281 = vector.broadcast %279 : vector<1x128xf32> to vector<32x128xf32>
    %282 = arith.mulf %280, %281 : vector<32x128xf32>
    %283 = vector.extract_strided_slice %274 {offsets = [0, 1], sizes = [32, 1], strides = [1, 1]} : vector<32x4xf32> to vector<32x1xf32>
    %284 = vector.extract_strided_slice %277 {offsets = [1, 0], sizes = [1, 128], strides = [1, 1]} : vector<4x128xf32> to vector<1x128xf32>
    %285 = vector.broadcast %283 : vector<32x1xf32> to vector<32x128xf32>
    %286 = vector.broadcast %284 : vector<1x128xf32> to vector<32x128xf32>
    %287 = arith.mulf %285, %286 : vector<32x128xf32>
    %288 = arith.addf %282, %287 : vector<32x128xf32>
    %289 = vector.extract_strided_slice %274 {offsets = [0, 2], sizes = [32, 1], strides = [1, 1]} : vector<32x4xf32> to vector<32x1xf32>
    %290 = vector.extract_strided_slice %277 {offsets = [2, 0], sizes = [1, 128], strides = [1, 1]} : vector<4x128xf32> to vector<1x128xf32>
    %291 = vector.broadcast %289 : vector<32x1xf32> to vector<32x128xf32>
    %292 = vector.broadcast %290 : vector<1x128xf32> to vector<32x128xf32>
    %293 = arith.mulf %291, %292 : vector<32x128xf32>
    %294 = arith.addf %288, %293 : vector<32x128xf32>
    %295 = vector.extract_strided_slice %274 {offsets = [0, 3], sizes = [32, 1], strides = [1, 1]} : vector<32x4xf32> to vector<32x1xf32>
    %296 = vector.extract_strided_slice %277 {offsets = [3, 0], sizes = [1, 128], strides = [1, 1]} : vector<4x128xf32> to vector<1x128xf32>
    %297 = vector.broadcast %295 : vector<32x1xf32> to vector<32x128xf32>
    %298 = vector.broadcast %296 : vector<1x128xf32> to vector<32x128xf32>
    %299 = arith.mulf %297, %298 : vector<32x128xf32>
    %300 = arith.addf %294, %299 : vector<32x128xf32>
    %c0_104 = arith.constant 0 : index
    %c0_105 = arith.constant 0 : index
    %301 = vector.load %arg9[%c0_104, %c0_105] : memref<32x128xf32, #tpu.memory_space<vmem>>, vector<32x128xf32>
    %302 = arith.addf %301, %300 : vector<32x128xf32>
    %c0_106 = arith.constant 0 : index
    %c0_107 = arith.constant 0 : index
    %303 = vector.load %arg9[%c0_106, %c0_107] : memref<32x128xf32, #tpu.memory_space<vmem>>, vector<32x128xf32>
    tpu.vector_store %arg9[%c0_106, %c0_107], %302 {strides = array<i32>} : memref<32x128xf32, #tpu.memory_space<vmem>>, vector<32x128xf32>,
    %c0_108 = arith.constant 0 : index
    %c0_109 = arith.constant 0 : index
    %304 = vector.load %arg9[%c0_108, %c0_109] : memref<32x128xf32, #tpu.memory_space<vmem>>, vector<32x128xf32>
    %305 = vector.shape_cast %304 : vector<32x128xf32> to vector<1x4x8x128xf32>
    %306 = arith.truncf %305 : vector<1x4x8x128xf32> to vector<1x4x8x128xbf16>
    %c0_110 = arith.constant 0 : index
    %c0_111 = arith.constant 0 : index
    %c0_112 = arith.constant 0 : index
    %c0_113 = arith.constant 0 : index
    %307 = vector.load %arg7[%c0_110, %c0_111, %c0_112, %c0_113] : memref<1x4x8x128xbf16, #tpu.memory_space<vmem>>, vector<1x4x8x128xbf16>
    tpu.vector_store %arg7[%c0_110, %c0_111, %c0_112, %c0_113], %306 {strides = array<i32>} : memref<1x4x8x128xbf16, #tpu.memory_space<vmem>>, vector<1x4x8x128xbf16>,
    return
  }
  func.func @transform_0(%arg0: i32, %arg1: i32, %arg2: i32) -> (i32, i32, i32, i32, i32) {
    %c0_i32 = arith.constant 0 : i32
    %c0_i32_0 = arith.constant 0 : i32
    %c0_i32_1 = arith.constant 0 : i32
    %c0_i32_2 = arith.constant 0 : i32
    return %arg0, %c0_i32, %arg1, %c0_i32_0, %c0_i32_1 : i32, i32, i32, i32, i32
  }
  func.func @transform_1(%arg0: i32, %arg1: i32, %arg2: i32) -> (i32, i32, i32, i32, i32) {
    %c4_i32 = arith.constant 4 : i32
    %0 = arith.muli %arg1, %c4_i32 : i32
    %c4_i32_0 = arith.constant 4 : i32
    %1 = arith.addi %0, %c4_i32_0 : i32
    %c0_i32 = arith.constant 0 : i32
    %c0_i32_1 = arith.constant 0 : i32
    %c0_i32_2 = arith.constant 0 : i32
    %c0_i32_3 = arith.constant 0 : i32
    return %arg0, %c0_i32, %1, %c0_i32_1, %c0_i32_2 : i32, i32, i32, i32, i32
  }
  func.func @transform_2(%arg0: i32, %arg1: i32, %arg2: i32) -> (i32, i32, i32) {
    %c0_i32 = arith.constant 0 : i32
    %c0_i32_0 = arith.constant 0 : i32
    %c0_i32_1 = arith.constant 0 : i32
    return %c0_i32, %c0_i32_0, %arg2 : i32, i32, i32
  }
  func.func @transform_3(%arg0: i32, %arg1: i32, %arg2: i32) -> (i32, i32) {
    %c0_i32 = arith.constant 0 : i32
    %c0_i32_0 = arith.constant 0 : i32
    return %c0_i32, %arg2 : i32, i32
  }
  func.func @transform_4(%arg0: i32, %arg1: i32, %arg2: i32) -> (i32, i32, i32, i32) {
    %c0_i32 = arith.constant 0 : i32
    %c0_i32_0 = arith.constant 0 : i32
    return %arg0, %arg1, %c0_i32, %arg2 : i32, i32, i32, i32
  }
}

module attributes {stable_mosaic.version = 11 : i64} {
  func.func @_res_conv_kernel(%arg0: i32, %arg1: i32, %arg2: i32, %arg3: memref<1x4x8x128xbf16, #tpu.memory_space<vmem>>, %arg4: memref<1x1x8x128xbf16, #tpu.memory_space<vmem>>, %arg5: memref<1x1x8x128xbf16, #tpu.memory_space<vmem>>, %arg6: memref<9x128x128xbf16, #tpu.memory_space<vmem>>, %arg7: memref<1x128xf32, #tpu.memory_space<vmem>>, %arg8: memref<128x128xf32, #tpu.memory_space<vmem>>, %arg9: memref<1x4x8x128xbf16, #tpu.memory_space<vmem>>, %arg10: memref<1x1x2x128xf32, #tpu.memory_space<vmem>>, %arg11: memref<6x10x128xbf16, #tpu.memory_space<vmem>>, %arg12: memref<32x128xf32, #tpu.memory_space<vmem>>) attributes {dimension_semantics = [#tpu.dimension_semantics<parallel>, #tpu.dimension_semantics<parallel>, #tpu.dimension_semantics<parallel>], iteration_bounds = array<i64: 2, 2, 1>, scalar_prefetch = 0 : i64, scratch_operands = 2 : i64, tpu.core_type = #tpu.core_type<tc>, window_params = [{transform_indices = @transform_0, window_bounds = array<i64: 1, 4, 8, 128>}, {transform_indices = @transform_1, window_bounds = array<i64: 1, 1, 8, 128>}, {transform_indices = @transform_2, window_bounds = array<i64: 1, 1, 8, 128>}, {transform_indices = @transform_3, window_bounds = array<i64: 9, 128, 128>}, {transform_indices = @transform_4, window_bounds = array<i64: 1, 128>}, {transform_indices = @transform_5, window_bounds = array<i64: 128, 128>}, {transform_indices = @transform_6, window_bounds = array<i64: 1, 4, 8, 128>}, {transform_indices = @transform_7, window_bounds = array<i64: 1, 1, 2, 128>}]} {
    %c0 = arith.constant 0 : index
    %c0_0 = arith.constant 0 : index
    %c0_1 = arith.constant 0 : index
    %c0_2 = arith.constant 0 : index
    %0 = vector.load %arg4[%c0, %c0_0, %c0_1, %c0_2] : memref<1x1x8x128xbf16, #tpu.memory_space<vmem>>, vector<1x1x8x128xbf16>
    %1 = vector.shape_cast %0 : vector<1x1x8x128xbf16> to vector<8x128xbf16>
    %c0_3 = arith.constant 0 : index
    %c0_4 = arith.constant 0 : index
    %c0_5 = arith.constant 0 : index
    %c0_6 = arith.constant 0 : index
    %2 = vector.load %arg5[%c0_3, %c0_4, %c0_5, %c0_6] : memref<1x1x8x128xbf16, #tpu.memory_space<vmem>>, vector<1x1x8x128xbf16>
    %3 = vector.shape_cast %2 : vector<1x1x8x128xbf16> to vector<8x128xbf16>
    %c0_i32 = arith.constant 0 : i32
    %4 = arith.cmpi sgt, %arg1, %c0_i32 : i32
    %cst = arith.constant 0.000000e+00 : bf16
    %5 = vector.broadcast %cst : bf16 to vector<8x128xbf16>
    %6 = arith.select %4, %1, %5 : vector<8x128xbf16>
    %c1_i32 = arith.constant 1 : i32
    %7 = arith.cmpi slt, %arg1, %c1_i32 : i32
    %cst_7 = arith.constant 0.000000e+00 : bf16
    %8 = vector.broadcast %cst_7 : bf16 to vector<8x128xbf16>
    %9 = arith.select %7, %3, %8 : vector<8x128xbf16>
    %c0_8 = arith.constant 0 : index
    %c0_9 = arith.constant 0 : index
    %c0_10 = arith.constant 0 : index
    %c0_11 = arith.constant 0 : index
    %10 = vector.load %arg3[%c0_8, %c0_9, %c0_10, %c0_11] : memref<1x4x8x128xbf16, #tpu.memory_space<vmem>>, vector<1x4x8x128xbf16>
    %11 = vector.shape_cast %10 : vector<1x4x8x128xbf16> to vector<4x8x128xbf16>
    %cst_12 = arith.constant 0.000000e+00 : bf16
    %12 = vector.broadcast %cst_12 : bf16 to vector<6x1x128xbf16>
    %c0_13 = arith.constant 0 : index
    %c0_14 = arith.constant 0 : index
    %c0_15 = arith.constant 0 : index
    %13 = vector.load %arg11[%c0_13, %c0_14, %c0_15] : memref<6x10x128xbf16, #tpu.memory_space<vmem>>, vector<6x1x128xbf16>
    tpu.vector_store %arg11[%c0_13, %c0_14, %c0_15], %12 {strides = array<i32>} : memref<6x10x128xbf16, #tpu.memory_space<vmem>>, vector<6x1x128xbf16>,
    %c0_16 = arith.constant 0 : index
    %c9 = arith.constant 9 : index
    %c0_17 = arith.constant 0 : index
    %14 = vector.load %arg11[%c0_16, %c9, %c0_17] : memref<6x10x128xbf16, #tpu.memory_space<vmem>>, vector<6x1x128xbf16>
    tpu.vector_store %arg11[%c0_16, %c9, %c0_17], %12 {strides = array<i32>} : memref<6x10x128xbf16, #tpu.memory_space<vmem>>, vector<6x1x128xbf16>,
    %15 = vector.shape_cast %6 : vector<8x128xbf16> to vector<1x8x128xbf16>
    %c0_18 = arith.constant 0 : index
    %c1 = arith.constant 1 : index
    %c0_19 = arith.constant 0 : index
    %16 = vector.load %arg11[%c0_18, %c1, %c0_19] : memref<6x10x128xbf16, #tpu.memory_space<vmem>>, vector<1x8x128xbf16>
    tpu.vector_store %arg11[%c0_18, %c1, %c0_19], %15 {strides = array<i32>} : memref<6x10x128xbf16, #tpu.memory_space<vmem>>, vector<1x8x128xbf16>,
    %c1_20 = arith.constant 1 : index
    %c1_21 = arith.constant 1 : index
    %c0_22 = arith.constant 0 : index
    %17 = vector.load %arg11[%c1_20, %c1_21, %c0_22] : memref<6x10x128xbf16, #tpu.memory_space<vmem>>, vector<4x8x128xbf16>
    tpu.vector_store %arg11[%c1_20, %c1_21, %c0_22], %11 {strides = array<i32>} : memref<6x10x128xbf16, #tpu.memory_space<vmem>>, vector<4x8x128xbf16>,
    %18 = vector.shape_cast %9 : vector<8x128xbf16> to vector<1x8x128xbf16>
    %c5 = arith.constant 5 : index
    %c1_23 = arith.constant 1 : index
    %c0_24 = arith.constant 0 : index
    %19 = vector.load %arg11[%c5, %c1_23, %c0_24] : memref<6x10x128xbf16, #tpu.memory_space<vmem>>, vector<1x8x128xbf16>
    tpu.vector_store %arg11[%c5, %c1_23, %c0_24], %18 {strides = array<i32>} : memref<6x10x128xbf16, #tpu.memory_space<vmem>>, vector<1x8x128xbf16>,
    %c0_25 = arith.constant 0 : index
    %c0_26 = arith.constant 0 : index
    %c0_27 = arith.constant 0 : index
    %20 = vector.load %arg11[%c0_25, %c0_26, %c0_27] : memref<6x10x128xbf16, #tpu.memory_space<vmem>>, vector<4x8x128xbf16>
    %21 = vector.shape_cast %20 : vector<4x8x128xbf16> to vector<32x128xbf16>
    %c0_28 = arith.constant 0 : index
    %c0_29 = arith.constant 0 : index
    %c0_30 = arith.constant 0 : index
    %22 = vector.load %arg6[%c0_28, %c0_29, %c0_30] : memref<9x128x128xbf16, #tpu.memory_space<vmem>>, vector<1x128x128xbf16>
    %23 = vector.shape_cast %22 : vector<1x128x128xbf16> to vector<128x128xbf16>
    %cst_31 = arith.constant dense<0.000000e+00> : vector<32x128xf32>
    %24 = tpu.matmul %21, %23, %cst_31 {dimension_numbers = #tpu.dot_dimension_numbers<[1], [0], [0], [1], [0, 0, 1, 1], [], []>} : vector<32x128xbf16>, vector<128x128xbf16>, vector<32x128xf32> -> vector<32x128xf32>
    %c0_32 = arith.constant 0 : index
    %c0_33 = arith.constant 0 : index
    %25 = vector.load %arg7[%c0_32, %c0_33] : memref<1x128xf32, #tpu.memory_space<vmem>>, vector<1x128xf32>
    %26 = vector.broadcast %25 : vector<1x128xf32> to vector<32x128xf32>
    %27 = arith.addf %24, %26 : vector<32x128xf32>
    %c0_34 = arith.constant 0 : index
    %c0_35 = arith.constant 0 : index
    %28 = vector.load %arg12[%c0_34, %c0_35] : memref<32x128xf32, #tpu.memory_space<vmem>>, vector<32x128xf32>
    tpu.vector_store %arg12[%c0_34, %c0_35], %27 {strides = array<i32>} : memref<32x128xf32, #tpu.memory_space<vmem>>, vector<32x128xf32>,
    %c0_36 = arith.constant 0 : index
    %c1_37 = arith.constant 1 : index
    %c0_38 = arith.constant 0 : index
    %29 = vector.load %arg11[%c0_36, %c1_37, %c0_38] : memref<6x10x128xbf16, #tpu.memory_space<vmem>>, vector<4x8x128xbf16>
    %30 = vector.shape_cast %29 : vector<4x8x128xbf16> to vector<32x128xbf16>
    %c1_39 = arith.constant 1 : index
    %c0_40 = arith.constant 0 : index
    %c0_41 = arith.constant 0 : index
    %31 = vector.load %arg6[%c1_39, %c0_40, %c0_41] : memref<9x128x128xbf16, #tpu.memory_space<vmem>>, vector<1x128x128xbf16>
    %32 = vector.shape_cast %31 : vector<1x128x128xbf16> to vector<128x128xbf16>
    %cst_42 = arith.constant dense<0.000000e+00> : vector<32x128xf32>
    %33 = tpu.matmul %30, %32, %cst_42 {dimension_numbers = #tpu.dot_dimension_numbers<[1], [0], [0], [1], [0, 0, 1, 1], [], []>} : vector<32x128xbf16>, vector<128x128xbf16>, vector<32x128xf32> -> vector<32x128xf32>
    %c0_43 = arith.constant 0 : index
    %c0_44 = arith.constant 0 : index
    %34 = vector.load %arg12[%c0_43, %c0_44] : memref<32x128xf32, #tpu.memory_space<vmem>>, vector<32x128xf32>
    %35 = arith.addf %34, %33 : vector<32x128xf32>
    %c0_45 = arith.constant 0 : index
    %c0_46 = arith.constant 0 : index
    %36 = vector.load %arg12[%c0_45, %c0_46] : memref<32x128xf32, #tpu.memory_space<vmem>>, vector<32x128xf32>
    tpu.vector_store %arg12[%c0_45, %c0_46], %35 {strides = array<i32>} : memref<32x128xf32, #tpu.memory_space<vmem>>, vector<32x128xf32>,
    %c0_47 = arith.constant 0 : index
    %c2 = arith.constant 2 : index
    %c0_48 = arith.constant 0 : index
    %37 = vector.load %arg11[%c0_47, %c2, %c0_48] : memref<6x10x128xbf16, #tpu.memory_space<vmem>>, vector<4x8x128xbf16>
    %38 = vector.shape_cast %37 : vector<4x8x128xbf16> to vector<32x128xbf16>
    %c2_49 = arith.constant 2 : index
    %c0_50 = arith.constant 0 : index
    %c0_51 = arith.constant 0 : index
    %39 = vector.load %arg6[%c2_49, %c0_50, %c0_51] : memref<9x128x128xbf16, #tpu.memory_space<vmem>>, vector<1x128x128xbf16>
    %40 = vector.shape_cast %39 : vector<1x128x128xbf16> to vector<128x128xbf16>
    %cst_52 = arith.constant dense<0.000000e+00> : vector<32x128xf32>
    %41 = tpu.matmul %38, %40, %cst_52 {dimension_numbers = #tpu.dot_dimension_numbers<[1], [0], [0], [1], [0, 0, 1, 1], [], []>} : vector<32x128xbf16>, vector<128x128xbf16>, vector<32x128xf32> -> vector<32x128xf32>
    %c0_53 = arith.constant 0 : index
    %c0_54 = arith.constant 0 : index
    %42 = vector.load %arg12[%c0_53, %c0_54] : memref<32x128xf32, #tpu.memory_space<vmem>>, vector<32x128xf32>
    %43 = arith.addf %42, %41 : vector<32x128xf32>
    %c0_55 = arith.constant 0 : index
    %c0_56 = arith.constant 0 : index
    %44 = vector.load %arg12[%c0_55, %c0_56] : memref<32x128xf32, #tpu.memory_space<vmem>>, vector<32x128xf32>
    tpu.vector_store %arg12[%c0_55, %c0_56], %43 {strides = array<i32>} : memref<32x128xf32, #tpu.memory_space<vmem>>, vector<32x128xf32>,
    %c1_57 = arith.constant 1 : index
    %c0_58 = arith.constant 0 : index
    %c0_59 = arith.constant 0 : index
    %45 = vector.load %arg11[%c1_57, %c0_58, %c0_59] : memref<6x10x128xbf16, #tpu.memory_space<vmem>>, vector<4x8x128xbf16>
    %46 = vector.shape_cast %45 : vector<4x8x128xbf16> to vector<32x128xbf16>
    %c3 = arith.constant 3 : index
    %c0_60 = arith.constant 0 : index
    %c0_61 = arith.constant 0 : index
    %47 = vector.load %arg6[%c3, %c0_60, %c0_61] : memref<9x128x128xbf16, #tpu.memory_space<vmem>>, vector<1x128x128xbf16>
    %48 = vector.shape_cast %47 : vector<1x128x128xbf16> to vector<128x128xbf16>
    %cst_62 = arith.constant dense<0.000000e+00> : vector<32x128xf32>
    %49 = tpu.matmul %46, %48, %cst_62 {dimension_numbers = #tpu.dot_dimension_numbers<[1], [0], [0], [1], [0, 0, 1, 1], [], []>} : vector<32x128xbf16>, vector<128x128xbf16>, vector<32x128xf32> -> vector<32x128xf32>
    %c0_63 = arith.constant 0 : index
    %c0_64 = arith.constant 0 : index
    %50 = vector.load %arg12[%c0_63, %c0_64] : memref<32x128xf32, #tpu.memory_space<vmem>>, vector<32x128xf32>
    %51 = arith.addf %50, %49 : vector<32x128xf32>
    %c0_65 = arith.constant 0 : index
    %c0_66 = arith.constant 0 : index
    %52 = vector.load %arg12[%c0_65, %c0_66] : memref<32x128xf32, #tpu.memory_space<vmem>>, vector<32x128xf32>
    tpu.vector_store %arg12[%c0_65, %c0_66], %51 {strides = array<i32>} : memref<32x128xf32, #tpu.memory_space<vmem>>, vector<32x128xf32>,
    %c1_67 = arith.constant 1 : index
    %c1_68 = arith.constant 1 : index
    %c0_69 = arith.constant 0 : index
    %53 = vector.load %arg11[%c1_67, %c1_68, %c0_69] : memref<6x10x128xbf16, #tpu.memory_space<vmem>>, vector<4x8x128xbf16>
    %54 = vector.shape_cast %53 : vector<4x8x128xbf16> to vector<32x128xbf16>
    %c4 = arith.constant 4 : index
    %c0_70 = arith.constant 0 : index
    %c0_71 = arith.constant 0 : index
    %55 = vector.load %arg6[%c4, %c0_70, %c0_71] : memref<9x128x128xbf16, #tpu.memory_space<vmem>>, vector<1x128x128xbf16>
    %56 = vector.shape_cast %55 : vector<1x128x128xbf16> to vector<128x128xbf16>
    %cst_72 = arith.constant dense<0.000000e+00> : vector<32x128xf32>
    %57 = tpu.matmul %54, %56, %cst_72 {dimension_numbers = #tpu.dot_dimension_numbers<[1], [0], [0], [1], [0, 0, 1, 1], [], []>} : vector<32x128xbf16>, vector<128x128xbf16>, vector<32x128xf32> -> vector<32x128xf32>
    %c0_73 = arith.constant 0 : index
    %c0_74 = arith.constant 0 : index
    %58 = vector.load %arg12[%c0_73, %c0_74] : memref<32x128xf32, #tpu.memory_space<vmem>>, vector<32x128xf32>
    %59 = arith.addf %58, %57 : vector<32x128xf32>
    %c0_75 = arith.constant 0 : index
    %c0_76 = arith.constant 0 : index
    %60 = vector.load %arg12[%c0_75, %c0_76] : memref<32x128xf32, #tpu.memory_space<vmem>>, vector<32x128xf32>
    tpu.vector_store %arg12[%c0_75, %c0_76], %59 {strides = array<i32>} : memref<32x128xf32, #tpu.memory_space<vmem>>, vector<32x128xf32>,
    %c1_77 = arith.constant 1 : index
    %c2_78 = arith.constant 2 : index
    %c0_79 = arith.constant 0 : index
    %61 = vector.load %arg11[%c1_77, %c2_78, %c0_79] : memref<6x10x128xbf16, #tpu.memory_space<vmem>>, vector<4x8x128xbf16>
    %62 = vector.shape_cast %61 : vector<4x8x128xbf16> to vector<32x128xbf16>
    %c5_80 = arith.constant 5 : index
    %c0_81 = arith.constant 0 : index
    %c0_82 = arith.constant 0 : index
    %63 = vector.load %arg6[%c5_80, %c0_81, %c0_82] : memref<9x128x128xbf16, #tpu.memory_space<vmem>>, vector<1x128x128xbf16>
    %64 = vector.shape_cast %63 : vector<1x128x128xbf16> to vector<128x128xbf16>
    %cst_83 = arith.constant dense<0.000000e+00> : vector<32x128xf32>
    %65 = tpu.matmul %62, %64, %cst_83 {dimension_numbers = #tpu.dot_dimension_numbers<[1], [0], [0], [1], [0, 0, 1, 1], [], []>} : vector<32x128xbf16>, vector<128x128xbf16>, vector<32x128xf32> -> vector<32x128xf32>
    %c0_84 = arith.constant 0 : index
    %c0_85 = arith.constant 0 : index
    %66 = vector.load %arg12[%c0_84, %c0_85] : memref<32x128xf32, #tpu.memory_space<vmem>>, vector<32x128xf32>
    %67 = arith.addf %66, %65 : vector<32x128xf32>
    %c0_86 = arith.constant 0 : index
    %c0_87 = arith.constant 0 : index
    %68 = vector.load %arg12[%c0_86, %c0_87] : memref<32x128xf32, #tpu.memory_space<vmem>>, vector<32x128xf32>
    tpu.vector_store %arg12[%c0_86, %c0_87], %67 {strides = array<i32>} : memref<32x128xf32, #tpu.memory_space<vmem>>, vector<32x128xf32>,
    %c2_88 = arith.constant 2 : index
    %c0_89 = arith.constant 0 : index
    %c0_90 = arith.constant 0 : index
    %69 = vector.load %arg11[%c2_88, %c0_89, %c0_90] : memref<6x10x128xbf16, #tpu.memory_space<vmem>>, vector<4x8x128xbf16>
    %70 = vector.shape_cast %69 : vector<4x8x128xbf16> to vector<32x128xbf16>
    %c6 = arith.constant 6 : index
    %c0_91 = arith.constant 0 : index
    %c0_92 = arith.constant 0 : index
    %71 = vector.load %arg6[%c6, %c0_91, %c0_92] : memref<9x128x128xbf16, #tpu.memory_space<vmem>>, vector<1x128x128xbf16>
    %72 = vector.shape_cast %71 : vector<1x128x128xbf16> to vector<128x128xbf16>
    %cst_93 = arith.constant dense<0.000000e+00> : vector<32x128xf32>
    %73 = tpu.matmul %70, %72, %cst_93 {dimension_numbers = #tpu.dot_dimension_numbers<[1], [0], [0], [1], [0, 0, 1, 1], [], []>} : vector<32x128xbf16>, vector<128x128xbf16>, vector<32x128xf32> -> vector<32x128xf32>
    %c0_94 = arith.constant 0 : index
    %c0_95 = arith.constant 0 : index
    %74 = vector.load %arg12[%c0_94, %c0_95] : memref<32x128xf32, #tpu.memory_space<vmem>>, vector<32x128xf32>
    %75 = arith.addf %74, %73 : vector<32x128xf32>
    %c0_96 = arith.constant 0 : index
    %c0_97 = arith.constant 0 : index
    %76 = vector.load %arg12[%c0_96, %c0_97] : memref<32x128xf32, #tpu.memory_space<vmem>>, vector<32x128xf32>
    tpu.vector_store %arg12[%c0_96, %c0_97], %75 {strides = array<i32>} : memref<32x128xf32, #tpu.memory_space<vmem>>, vector<32x128xf32>,
    %c2_98 = arith.constant 2 : index
    %c1_99 = arith.constant 1 : index
    %c0_100 = arith.constant 0 : index
    %77 = vector.load %arg11[%c2_98, %c1_99, %c0_100] : memref<6x10x128xbf16, #tpu.memory_space<vmem>>, vector<4x8x128xbf16>
    %78 = vector.shape_cast %77 : vector<4x8x128xbf16> to vector<32x128xbf16>
    %c7 = arith.constant 7 : index
    %c0_101 = arith.constant 0 : index
    %c0_102 = arith.constant 0 : index
    %79 = vector.load %arg6[%c7, %c0_101, %c0_102] : memref<9x128x128xbf16, #tpu.memory_space<vmem>>, vector<1x128x128xbf16>
    %80 = vector.shape_cast %79 : vector<1x128x128xbf16> to vector<128x128xbf16>
    %cst_103 = arith.constant dense<0.000000e+00> : vector<32x128xf32>
    %81 = tpu.matmul %78, %80, %cst_103 {dimension_numbers = #tpu.dot_dimension_numbers<[1], [0], [0], [1], [0, 0, 1, 1], [], []>} : vector<32x128xbf16>, vector<128x128xbf16>, vector<32x128xf32> -> vector<32x128xf32>
    %c0_104 = arith.constant 0 : index
    %c0_105 = arith.constant 0 : index
    %82 = vector.load %arg12[%c0_104, %c0_105] : memref<32x128xf32, #tpu.memory_space<vmem>>, vector<32x128xf32>
    %83 = arith.addf %82, %81 : vector<32x128xf32>
    %c0_106 = arith.constant 0 : index
    %c0_107 = arith.constant 0 : index
    %84 = vector.load %arg12[%c0_106, %c0_107] : memref<32x128xf32, #tpu.memory_space<vmem>>, vector<32x128xf32>
    tpu.vector_store %arg12[%c0_106, %c0_107], %83 {strides = array<i32>} : memref<32x128xf32, #tpu.memory_space<vmem>>, vector<32x128xf32>,
    %c2_108 = arith.constant 2 : index
    %c2_109 = arith.constant 2 : index
    %c0_110 = arith.constant 0 : index
    %85 = vector.load %arg11[%c2_108, %c2_109, %c0_110] : memref<6x10x128xbf16, #tpu.memory_space<vmem>>, vector<4x8x128xbf16>
    %86 = vector.shape_cast %85 : vector<4x8x128xbf16> to vector<32x128xbf16>
    %c8 = arith.constant 8 : index
    %c0_111 = arith.constant 0 : index
    %c0_112 = arith.constant 0 : index
    %87 = vector.load %arg6[%c8, %c0_111, %c0_112] : memref<9x128x128xbf16, #tpu.memory_space<vmem>>, vector<1x128x128xbf16>
    %88 = vector.shape_cast %87 : vector<1x128x128xbf16> to vector<128x128xbf16>
    %cst_113 = arith.constant dense<0.000000e+00> : vector<32x128xf32>
    %89 = tpu.matmul %86, %88, %cst_113 {dimension_numbers = #tpu.dot_dimension_numbers<[1], [0], [0], [1], [0, 0, 1, 1], [], []>} : vector<32x128xbf16>, vector<128x128xbf16>, vector<32x128xf32> -> vector<32x128xf32>
    %c0_114 = arith.constant 0 : index
    %c0_115 = arith.constant 0 : index
    %90 = vector.load %arg12[%c0_114, %c0_115] : memref<32x128xf32, #tpu.memory_space<vmem>>, vector<32x128xf32>
    %91 = arith.addf %90, %89 : vector<32x128xf32>
    %c0_116 = arith.constant 0 : index
    %c0_117 = arith.constant 0 : index
    %92 = vector.load %arg12[%c0_116, %c0_117] : memref<32x128xf32, #tpu.memory_space<vmem>>, vector<32x128xf32>
    tpu.vector_store %arg12[%c0_116, %c0_117], %91 {strides = array<i32>} : memref<32x128xf32, #tpu.memory_space<vmem>>, vector<32x128xf32>,
    %c0_118 = arith.constant 0 : index
    %c0_119 = arith.constant 0 : index
    %93 = vector.load %arg12[%c0_118, %c0_119] : memref<32x128xf32, #tpu.memory_space<vmem>>, vector<32x128xf32>
    %94 = vector.shape_cast %93 : vector<32x128xf32> to vector<1x4x8x128xf32>
    %95 = arith.truncf %94 : vector<1x4x8x128xf32> to vector<1x4x8x128xbf16>
    %c0_120 = arith.constant 0 : index
    %c0_121 = arith.constant 0 : index
    %c0_122 = arith.constant 0 : index
    %c0_123 = arith.constant 0 : index
    %96 = vector.load %arg9[%c0_120, %c0_121, %c0_122, %c0_123] : memref<1x4x8x128xbf16, #tpu.memory_space<vmem>>, vector<1x4x8x128xbf16>
    tpu.vector_store %arg9[%c0_120, %c0_121, %c0_122, %c0_123], %95 {strides = array<i32>} : memref<1x4x8x128xbf16, #tpu.memory_space<vmem>>, vector<1x4x8x128xbf16>,
    %cst_124 = arith.constant dense<0.000000e+00> : vector<128xf32>
    %97 = vector.multi_reduction <add>, %93, %cst_124 [0] : vector<32x128xf32> to vector<128xf32>
    %98 = vector.shape_cast %97 : vector<128xf32> to vector<1x128xf32>
    %99 = arith.mulf %93, %93 : vector<32x128xf32>
    %cst_125 = arith.constant dense<0.000000e+00> : vector<128xf32>
    %100 = vector.multi_reduction <add>, %99, %cst_125 [0] : vector<32x128xf32> to vector<128xf32>
    %101 = vector.shape_cast %100 : vector<128xf32> to vector<1x128xf32>
    %c0_126 = arith.constant 0 : index
    %c0_127 = arith.constant 0 : index
    %102 = vector.load %arg8[%c0_126, %c0_127] : memref<128x128xf32, #tpu.memory_space<vmem>>, vector<128x128xf32>
    %cst_128 = arith.constant dense<0.000000e+00> : vector<1x128xf32>
    %103 = tpu.matmul %98, %102, %cst_128 {dimension_numbers = #tpu.dot_dimension_numbers<[1], [0], [0], [1], [0, 0, 1, 1], [], []>} : vector<1x128xf32>, vector<128x128xf32>, vector<1x128xf32> -> vector<1x128xf32>
    %c0_129 = arith.constant 0 : index
    %c0_130 = arith.constant 0 : index
    %c0_131 = arith.constant 0 : index
    %c0_132 = arith.constant 0 : index
    %104 = vector.load %arg10[%c0_129, %c0_130, %c0_131, %c0_132] : memref<1x1x2x128xf32, #tpu.memory_space<vmem>>, vector<1x1x1x128xf32>
    %105 = vector.shape_cast %104 : vector<1x1x1x128xf32> to vector<1x128xf32>
    %106 = vector.shape_cast %103 : vector<1x128xf32> to vector<1x1x1x128xf32>
    tpu.vector_store %arg10[%c0_129, %c0_130, %c0_131, %c0_132], %106 {strides = array<i32>} : memref<1x1x2x128xf32, #tpu.memory_space<vmem>>, vector<1x1x1x128xf32>,
    %c0_133 = arith.constant 0 : index
    %c0_134 = arith.constant 0 : index
    %107 = vector.load %arg8[%c0_133, %c0_134] : memref<128x128xf32, #tpu.memory_space<vmem>>, vector<128x128xf32>
    %cst_135 = arith.constant dense<0.000000e+00> : vector<1x128xf32>
    %108 = tpu.matmul %101, %107, %cst_135 {dimension_numbers = #tpu.dot_dimension_numbers<[1], [0], [0], [1], [0, 0, 1, 1], [], []>} : vector<1x128xf32>, vector<128x128xf32>, vector<1x128xf32> -> vector<1x128xf32>
    %c0_136 = arith.constant 0 : index
    %c0_137 = arith.constant 0 : index
    %c1_138 = arith.constant 1 : index
    %c0_139 = arith.constant 0 : index
    %109 = vector.load %arg10[%c0_136, %c0_137, %c1_138, %c0_139] : memref<1x1x2x128xf32, #tpu.memory_space<vmem>>, vector<1x1x1x128xf32>
    %110 = vector.shape_cast %109 : vector<1x1x1x128xf32> to vector<1x128xf32>
    %111 = vector.shape_cast %108 : vector<1x128xf32> to vector<1x1x1x128xf32>
    tpu.vector_store %arg10[%c0_136, %c0_137, %c1_138, %c0_139], %111 {strides = array<i32>} : memref<1x1x2x128xf32, #tpu.memory_space<vmem>>, vector<1x1x1x128xf32>,
    return
  }
  func.func @transform_0(%arg0: i32, %arg1: i32, %arg2: i32) -> (i32, i32, i32, i32) {
    %c0_i32 = arith.constant 0 : i32
    %c0_i32_0 = arith.constant 0 : i32
    %c0_i32_1 = arith.constant 0 : i32
    return %arg0, %arg1, %c0_i32, %c0_i32_0 : i32, i32, i32, i32
  }
  func.func @transform_1(%arg0: i32, %arg1: i32, %arg2: i32) -> (i32, i32, i32, i32) {
    %c4_i32 = arith.constant 4 : i32
    %0 = arith.muli %arg1, %c4_i32 : i32
    %c1_i32 = arith.constant 1 : i32
    %1 = arith.subi %0, %c1_i32 : i32
    %c0_i32 = arith.constant 0 : i32
    %2 = arith.maxsi %1, %c0_i32 : i32
    %c0_i32_0 = arith.constant 0 : i32
    %c0_i32_1 = arith.constant 0 : i32
    %c0_i32_2 = arith.constant 0 : i32
    return %arg0, %2, %c0_i32_0, %c0_i32_1 : i32, i32, i32, i32
  }
  func.func @transform_2(%arg0: i32, %arg1: i32, %arg2: i32) -> (i32, i32, i32, i32) {
    %c4_i32 = arith.constant 4 : i32
    %0 = arith.muli %arg1, %c4_i32 : i32
    %c4_i32_0 = arith.constant 4 : i32
    %1 = arith.addi %0, %c4_i32_0 : i32
    %c7_i32 = arith.constant 7 : i32
    %2 = arith.minsi %1, %c7_i32 : i32
    %c0_i32 = arith.constant 0 : i32
    %c0_i32_1 = arith.constant 0 : i32
    %c0_i32_2 = arith.constant 0 : i32
    return %arg0, %2, %c0_i32, %c0_i32_1 : i32, i32, i32, i32
  }
  func.func @transform_3(%arg0: i32, %arg1: i32, %arg2: i32) -> (i32, i32, i32) {
    %c0_i32 = arith.constant 0 : i32
    %c0_i32_0 = arith.constant 0 : i32
    %c0_i32_1 = arith.constant 0 : i32
    return %c0_i32, %c0_i32_0, %arg2 : i32, i32, i32
  }
  func.func @transform_4(%arg0: i32, %arg1: i32, %arg2: i32) -> (i32, i32) {
    %c0_i32 = arith.constant 0 : i32
    %c0_i32_0 = arith.constant 0 : i32
    return %c0_i32, %arg2 : i32, i32
  }
  func.func @transform_5(%arg0: i32, %arg1: i32, %arg2: i32) -> (i32, i32) {
    %c0_i32 = arith.constant 0 : i32
    %c0_i32_0 = arith.constant 0 : i32
    return %arg2, %c0_i32 : i32, i32
  }
  func.func @transform_6(%arg0: i32, %arg1: i32, %arg2: i32) -> (i32, i32, i32, i32) {
    %c0_i32 = arith.constant 0 : i32
    %c0_i32_0 = arith.constant 0 : i32
    return %arg0, %arg1, %c0_i32, %arg2 : i32, i32, i32, i32
  }
  func.func @transform_7(%arg0: i32, %arg1: i32, %arg2: i32) -> (i32, i32, i32, i32) {
    %c1_i32 = arith.constant 1 : i32
    %0 = arith.muli %arg1, %c1_i32 : i32
    %1 = arith.addi %0, %arg2 : i32
    %c0_i32 = arith.constant 0 : i32
    %c0_i32_0 = arith.constant 0 : i32
    %c0_i32_1 = arith.constant 0 : i32
    return %arg0, %1, %c0_i32, %c0_i32_0 : i32, i32, i32, i32
  }
}

module attributes {stable_mosaic.version = 11 : i64} {
  func.func @_norm_silu_add_kernel(%arg0: i32, %arg1: i32, %arg2: i32, %arg3: memref<1x4x8x128xbf16, #tpu.memory_space<vmem>>, %arg4: memref<1x1x128xf32, #tpu.memory_space<vmem>>, %arg5: memref<1x1x128xf32, #tpu.memory_space<vmem>>, %arg6: memref<1x4x8x128xbf16, #tpu.memory_space<vmem>>, %arg7: memref<1x4x8x128xf32, #tpu.memory_space<vmem>>) attributes {dimension_semantics = [#tpu.dimension_semantics<parallel>, #tpu.dimension_semantics<parallel>, #tpu.dimension_semantics<parallel>], iteration_bounds = array<i64: 2, 2, 1>, scalar_prefetch = 0 : i64, scratch_operands = 0 : i64, tpu.core_type = #tpu.core_type<tc>, window_params = [{transform_indices = @transform_0, window_bounds = array<i64: 1, 4, 8, 128>}, {transform_indices = @transform_1, window_bounds = array<i64: 1, 1, 128>}, {transform_indices = @transform_2, window_bounds = array<i64: 1, 1, 128>}, {transform_indices = @transform_3, window_bounds = array<i64: 1, 4, 8, 128>}, {transform_indices = @transform_4, window_bounds = array<i64: 1, 4, 8, 128>}]} {
    %c0 = arith.constant 0 : index
    %c0_0 = arith.constant 0 : index
    %c0_1 = arith.constant 0 : index
    %c0_2 = arith.constant 0 : index
    %0 = vector.load %arg3[%c0, %c0_0, %c0_1, %c0_2] : memref<1x4x8x128xbf16, #tpu.memory_space<vmem>>, vector<1x4x8x128xbf16>
    %1 = arith.extf %0 : vector<1x4x8x128xbf16> to vector<1x4x8x128xf32>
    %c0_3 = arith.constant 0 : index
    %c0_4 = arith.constant 0 : index
    %c0_5 = arith.constant 0 : index
    %2 = vector.load %arg4[%c0_3, %c0_4, %c0_5] : memref<1x1x128xf32, #tpu.memory_space<vmem>>, vector<1x1x128xf32>
    %3 = vector.shape_cast %2 : vector<1x1x128xf32> to vector<1x128xf32>
    %4 = vector.shape_cast %3 : vector<1x128xf32> to vector<1x1x1x128xf32>
    %5 = vector.broadcast %4 : vector<1x1x1x128xf32> to vector<1x4x8x128xf32>
    %6 = arith.mulf %1, %5 : vector<1x4x8x128xf32>
    %c0_6 = arith.constant 0 : index
    %c0_7 = arith.constant 0 : index
    %c0_8 = arith.constant 0 : index
    %7 = vector.load %arg5[%c0_6, %c0_7, %c0_8] : memref<1x1x128xf32, #tpu.memory_space<vmem>>, vector<1x1x128xf32>
    %8 = vector.shape_cast %7 : vector<1x1x128xf32> to vector<1x128xf32>
    %9 = vector.shape_cast %8 : vector<1x128xf32> to vector<1x1x1x128xf32>
    %10 = vector.broadcast %9 : vector<1x1x1x128xf32> to vector<1x4x8x128xf32>
    %11 = arith.addf %6, %10 : vector<1x4x8x128xf32>
    %cst = arith.constant 0.000000e+00 : f32
    %12 = vector.broadcast %cst : f32 to vector<1x4x8x128xf32>
    %13 = arith.subf %12, %11 : vector<1x4x8x128xf32>
    %14 = math.exp %13 : vector<1x4x8x128xf32>
    %cst_9 = arith.constant 1.000000e+00 : f32
    %15 = vector.broadcast %cst_9 : f32 to vector<1x4x8x128xf32>
    %16 = arith.addf %15, %14 : vector<1x4x8x128xf32>
    %cst_10 = arith.constant 1.000000e+00 : f32
    %17 = vector.broadcast %cst_10 : f32 to vector<1x4x8x128xf32>
    %18 = arith.divf %17, %16 : vector<1x4x8x128xf32>
    %19 = arith.mulf %11, %18 : vector<1x4x8x128xf32>
    %c0_11 = arith.constant 0 : index
    %c0_12 = arith.constant 0 : index
    %c0_13 = arith.constant 0 : index
    %c0_14 = arith.constant 0 : index
    %20 = vector.load %arg6[%c0_11, %c0_12, %c0_13, %c0_14] : memref<1x4x8x128xbf16, #tpu.memory_space<vmem>>, vector<1x4x8x128xbf16>
    %21 = arith.extf %20 : vector<1x4x8x128xbf16> to vector<1x4x8x128xf32>
    %22 = arith.addf %19, %21 : vector<1x4x8x128xf32>
    %c0_15 = arith.constant 0 : index
    %c0_16 = arith.constant 0 : index
    %c0_17 = arith.constant 0 : index
    %c0_18 = arith.constant 0 : index
    %23 = vector.load %arg7[%c0_15, %c0_16, %c0_17, %c0_18] : memref<1x4x8x128xf32, #tpu.memory_space<vmem>>, vector<1x4x8x128xf32>
    tpu.vector_store %arg7[%c0_15, %c0_16, %c0_17, %c0_18], %22 {strides = array<i32>} : memref<1x4x8x128xf32, #tpu.memory_space<vmem>>, vector<1x4x8x128xf32>,
    return
  }
  func.func @transform_0(%arg0: i32, %arg1: i32, %arg2: i32) -> (i32, i32, i32, i32) {
    %c0_i32 = arith.constant 0 : i32
    %c0_i32_0 = arith.constant 0 : i32
    return %arg0, %arg1, %c0_i32, %arg2 : i32, i32, i32, i32
  }
  func.func @transform_1(%arg0: i32, %arg1: i32, %arg2: i32) -> (i32, i32, i32) {
    %c0_i32 = arith.constant 0 : i32
    %c0_i32_0 = arith.constant 0 : i32
    return %arg0, %c0_i32, %arg2 : i32, i32, i32
  }
  func.func @transform_2(%arg0: i32, %arg1: i32, %arg2: i32) -> (i32, i32, i32) {
    %c0_i32 = arith.constant 0 : i32
    %c0_i32_0 = arith.constant 0 : i32
    return %arg0, %c0_i32, %arg2 : i32, i32, i32
  }
  func.func @transform_3(%arg0: i32, %arg1: i32, %arg2: i32) -> (i32, i32, i32, i32) {
    %c0_i32 = arith.constant 0 : i32
    %c0_i32_0 = arith.constant 0 : i32
    return %arg0, %arg1, %c0_i32, %arg2 : i32, i32, i32, i32
  }
  func.func @transform_4(%arg0: i32, %arg1: i32, %arg2: i32) -> (i32, i32, i32, i32) {
    %c0_i32 = arith.constant 0 : i32
    %c0_i32_0 = arith.constant 0 : i32
    return %arg0, %arg1, %c0_i32, %arg2 : i32, i32, i32, i32
  }
}

module attributes {stable_mosaic.version = 11 : i64} {
  func.func @_res_conv_kernel(%arg0: i32, %arg1: i32, %arg2: i32, %arg3: memref<1x4x8x128xbf16, #tpu.memory_space<vmem>>, %arg4: memref<1x1x8x128xbf16, #tpu.memory_space<vmem>>, %arg5: memref<1x1x8x128xbf16, #tpu.memory_space<vmem>>, %arg6: memref<1x1x128xf32, #tpu.memory_space<vmem>>, %arg7: memref<1x1x128xf32, #tpu.memory_space<vmem>>, %arg8: memref<9x128x128xbf16, #tpu.memory_space<vmem>>, %arg9: memref<1x128xf32, #tpu.memory_space<vmem>>, %arg10: memref<128x128xf32, #tpu.memory_space<vmem>>, %arg11: memref<1x4x8x128xbf16, #tpu.memory_space<vmem>>, %arg12: memref<1x1x2x128xf32, #tpu.memory_space<vmem>>, %arg13: memref<6x10x128xbf16, #tpu.memory_space<vmem>>, %arg14: memref<32x128xf32, #tpu.memory_space<vmem>>) attributes {dimension_semantics = [#tpu.dimension_semantics<parallel>, #tpu.dimension_semantics<parallel>, #tpu.dimension_semantics<parallel>], iteration_bounds = array<i64: 2, 2, 1>, scalar_prefetch = 0 : i64, scratch_operands = 2 : i64, tpu.core_type = #tpu.core_type<tc>, window_params = [{transform_indices = @transform_0, window_bounds = array<i64: 1, 4, 8, 128>}, {transform_indices = @transform_1, window_bounds = array<i64: 1, 1, 8, 128>}, {transform_indices = @transform_2, window_bounds = array<i64: 1, 1, 8, 128>}, {transform_indices = @transform_3, window_bounds = array<i64: 1, 1, 128>}, {transform_indices = @transform_4, window_bounds = array<i64: 1, 1, 128>}, {transform_indices = @transform_5, window_bounds = array<i64: 9, 128, 128>}, {transform_indices = @transform_6, window_bounds = array<i64: 1, 128>}, {transform_indices = @transform_7, window_bounds = array<i64: 128, 128>}, {transform_indices = @transform_8, window_bounds = array<i64: 1, 4, 8, 128>}, {transform_indices = @transform_9, window_bounds = array<i64: 1, 1, 2, 128>}]} {
    %c0 = arith.constant 0 : index
    %c0_0 = arith.constant 0 : index
    %c0_1 = arith.constant 0 : index
    %c0_2 = arith.constant 0 : index
    %0 = vector.load %arg4[%c0, %c0_0, %c0_1, %c0_2] : memref<1x1x8x128xbf16, #tpu.memory_space<vmem>>, vector<1x1x8x128xbf16>
    %1 = vector.shape_cast %0 : vector<1x1x8x128xbf16> to vector<8x128xbf16>
    %2 = arith.extf %1 : vector<8x128xbf16> to vector<8x128xf32>
    %c0_3 = arith.constant 0 : index
    %c0_4 = arith.constant 0 : index
    %c0_5 = arith.constant 0 : index
    %3 = vector.load %arg6[%c0_3, %c0_4, %c0_5] : memref<1x1x128xf32, #tpu.memory_space<vmem>>, vector<1x1x128xf32>
    %4 = vector.shape_cast %3 : vector<1x1x128xf32> to vector<1x128xf32>
    %5 = vector.broadcast %4 : vector<1x128xf32> to vector<8x128xf32>
    %6 = arith.mulf %2, %5 : vector<8x128xf32>
    %c0_6 = arith.constant 0 : index
    %c0_7 = arith.constant 0 : index
    %c0_8 = arith.constant 0 : index
    %7 = vector.load %arg7[%c0_6, %c0_7, %c0_8] : memref<1x1x128xf32, #tpu.memory_space<vmem>>, vector<1x1x128xf32>
    %8 = vector.shape_cast %7 : vector<1x1x128xf32> to vector<1x128xf32>
    %9 = vector.broadcast %8 : vector<1x128xf32> to vector<8x128xf32>
    %10 = arith.addf %6, %9 : vector<8x128xf32>
    %cst = arith.constant 0.000000e+00 : f32
    %11 = vector.broadcast %cst : f32 to vector<8x128xf32>
    %12 = arith.subf %11, %10 : vector<8x128xf32>
    %13 = math.exp %12 : vector<8x128xf32>
    %cst_9 = arith.constant 1.000000e+00 : f32
    %14 = vector.broadcast %cst_9 : f32 to vector<8x128xf32>
    %15 = arith.addf %14, %13 : vector<8x128xf32>
    %cst_10 = arith.constant 1.000000e+00 : f32
    %16 = vector.broadcast %cst_10 : f32 to vector<8x128xf32>
    %17 = arith.divf %16, %15 : vector<8x128xf32>
    %18 = arith.mulf %10, %17 : vector<8x128xf32>
    %19 = arith.truncf %18 : vector<8x128xf32> to vector<8x128xbf16>
    %c0_11 = arith.constant 0 : index
    %c0_12 = arith.constant 0 : index
    %c0_13 = arith.constant 0 : index
    %c0_14 = arith.constant 0 : index
    %20 = vector.load %arg5[%c0_11, %c0_12, %c0_13, %c0_14] : memref<1x1x8x128xbf16, #tpu.memory_space<vmem>>, vector<1x1x8x128xbf16>
    %21 = vector.shape_cast %20 : vector<1x1x8x128xbf16> to vector<8x128xbf16>
    %22 = arith.extf %21 : vector<8x128xbf16> to vector<8x128xf32>
    %c0_15 = arith.constant 0 : index
    %c0_16 = arith.constant 0 : index
    %c0_17 = arith.constant 0 : index
    %23 = vector.load %arg6[%c0_15, %c0_16, %c0_17] : memref<1x1x128xf32, #tpu.memory_space<vmem>>, vector<1x1x128xf32>
    %24 = vector.shape_cast %23 : vector<1x1x128xf32> to vector<1x128xf32>
    %25 = vector.broadcast %24 : vector<1x128xf32> to vector<8x128xf32>
    %26 = arith.mulf %22, %25 : vector<8x128xf32>
    %c0_18 = arith.constant 0 : index
    %c0_19 = arith.constant 0 : index
    %c0_20 = arith.constant 0 : index
    %27 = vector.load %arg7[%c0_18, %c0_19, %c0_20] : memref<1x1x128xf32, #tpu.memory_space<vmem>>, vector<1x1x128xf32>
    %28 = vector.shape_cast %27 : vector<1x1x128xf32> to vector<1x128xf32>
    %29 = vector.broadcast %28 : vector<1x128xf32> to vector<8x128xf32>
    %30 = arith.addf %26, %29 : vector<8x128xf32>
    %cst_21 = arith.constant 0.000000e+00 : f32
    %31 = vector.broadcast %cst_21 : f32 to vector<8x128xf32>
    %32 = arith.subf %31, %30 : vector<8x128xf32>
    %33 = math.exp %32 : vector<8x128xf32>
    %cst_22 = arith.constant 1.000000e+00 : f32
    %34 = vector.broadcast %cst_22 : f32 to vector<8x128xf32>
    %35 = arith.addf %34, %33 : vector<8x128xf32>
    %cst_23 = arith.constant 1.000000e+00 : f32
    %36 = vector.broadcast %cst_23 : f32 to vector<8x128xf32>
    %37 = arith.divf %36, %35 : vector<8x128xf32>
    %38 = arith.mulf %30, %37 : vector<8x128xf32>
    %39 = arith.truncf %38 : vector<8x128xf32> to vector<8x128xbf16>
    %c0_i32 = arith.constant 0 : i32
    %40 = arith.cmpi sgt, %arg1, %c0_i32 : i32
    %cst_24 = arith.constant 0.000000e+00 : bf16
    %41 = vector.broadcast %cst_24 : bf16 to vector<8x128xbf16>
    %42 = arith.select %40, %19, %41 : vector<8x128xbf16>
    %c1_i32 = arith.constant 1 : i32
    %43 = arith.cmpi slt, %arg1, %c1_i32 : i32
    %cst_25 = arith.constant 0.000000e+00 : bf16
    %44 = vector.broadcast %cst_25 : bf16 to vector<8x128xbf16>
    %45 = arith.select %43, %39, %44 : vector<8x128xbf16>
    %c0_26 = arith.constant 0 : index
    %c0_27 = arith.constant 0 : index
    %c0_28 = arith.constant 0 : index
    %c0_29 = arith.constant 0 : index
    %46 = vector.load %arg3[%c0_26, %c0_27, %c0_28, %c0_29] : memref<1x4x8x128xbf16, #tpu.memory_space<vmem>>, vector<1x4x8x128xbf16>
    %47 = vector.shape_cast %46 : vector<1x4x8x128xbf16> to vector<4x8x128xbf16>
    %48 = arith.extf %47 : vector<4x8x128xbf16> to vector<4x8x128xf32>
    %c0_30 = arith.constant 0 : index
    %c0_31 = arith.constant 0 : index
    %c0_32 = arith.constant 0 : index
    %49 = vector.load %arg6[%c0_30, %c0_31, %c0_32] : memref<1x1x128xf32, #tpu.memory_space<vmem>>, vector<1x1x128xf32>
    %50 = vector.shape_cast %49 : vector<1x1x128xf32> to vector<1x128xf32>
    %51 = vector.shape_cast %50 : vector<1x128xf32> to vector<1x1x128xf32>
    %52 = vector.broadcast %51 : vector<1x1x128xf32> to vector<4x8x128xf32>
    %53 = arith.mulf %48, %52 : vector<4x8x128xf32>
    %c0_33 = arith.constant 0 : index
    %c0_34 = arith.constant 0 : index
    %c0_35 = arith.constant 0 : index
    %54 = vector.load %arg7[%c0_33, %c0_34, %c0_35] : memref<1x1x128xf32, #tpu.memory_space<vmem>>, vector<1x1x128xf32>
    %55 = vector.shape_cast %54 : vector<1x1x128xf32> to vector<1x128xf32>
    %56 = vector.shape_cast %55 : vector<1x128xf32> to vector<1x1x128xf32>
    %57 = vector.broadcast %56 : vector<1x1x128xf32> to vector<4x8x128xf32>
    %58 = arith.addf %53, %57 : vector<4x8x128xf32>
    %cst_36 = arith.constant 0.000000e+00 : f32
    %59 = vector.broadcast %cst_36 : f32 to vector<4x8x128xf32>
    %60 = arith.subf %59, %58 : vector<4x8x128xf32>
    %61 = math.exp %60 : vector<4x8x128xf32>
    %cst_37 = arith.constant 1.000000e+00 : f32
    %62 = vector.broadcast %cst_37 : f32 to vector<4x8x128xf32>
    %63 = arith.addf %62, %61 : vector<4x8x128xf32>
    %cst_38 = arith.constant 1.000000e+00 : f32
    %64 = vector.broadcast %cst_38 : f32 to vector<4x8x128xf32>
    %65 = arith.divf %64, %63 : vector<4x8x128xf32>
    %66 = arith.mulf %58, %65 : vector<4x8x128xf32>
    %67 = arith.truncf %66 : vector<4x8x128xf32> to vector<4x8x128xbf16>
    %cst_39 = arith.constant 0.000000e+00 : bf16
    %68 = vector.broadcast %cst_39 : bf16 to vector<6x1x128xbf16>
    %c0_40 = arith.constant 0 : index
    %c0_41 = arith.constant 0 : index
    %c0_42 = arith.constant 0 : index
    %69 = vector.load %arg13[%c0_40, %c0_41, %c0_42] : memref<6x10x128xbf16, #tpu.memory_space<vmem>>, vector<6x1x128xbf16>
    tpu.vector_store %arg13[%c0_40, %c0_41, %c0_42], %68 {strides = array<i32>} : memref<6x10x128xbf16, #tpu.memory_space<vmem>>, vector<6x1x128xbf16>,
    %c0_43 = arith.constant 0 : index
    %c9 = arith.constant 9 : index
    %c0_44 = arith.constant 0 : index
    %70 = vector.load %arg13[%c0_43, %c9, %c0_44] : memref<6x10x128xbf16, #tpu.memory_space<vmem>>, vector<6x1x128xbf16>
    tpu.vector_store %arg13[%c0_43, %c9, %c0_44], %68 {strides = array<i32>} : memref<6x10x128xbf16, #tpu.memory_space<vmem>>, vector<6x1x128xbf16>,
    %71 = vector.shape_cast %42 : vector<8x128xbf16> to vector<1x8x128xbf16>
    %c0_45 = arith.constant 0 : index
    %c1 = arith.constant 1 : index
    %c0_46 = arith.constant 0 : index
    %72 = vector.load %arg13[%c0_45, %c1, %c0_46] : memref<6x10x128xbf16, #tpu.memory_space<vmem>>, vector<1x8x128xbf16>
    tpu.vector_store %arg13[%c0_45, %c1, %c0_46], %71 {strides = array<i32>} : memref<6x10x128xbf16, #tpu.memory_space<vmem>>, vector<1x8x128xbf16>,
    %c1_47 = arith.constant 1 : index
    %c1_48 = arith.constant 1 : index
    %c0_49 = arith.constant 0 : index
    %73 = vector.load %arg13[%c1_47, %c1_48, %c0_49] : memref<6x10x128xbf16, #tpu.memory_space<vmem>>, vector<4x8x128xbf16>
    tpu.vector_store %arg13[%c1_47, %c1_48, %c0_49], %67 {strides = array<i32>} : memref<6x10x128xbf16, #tpu.memory_space<vmem>>, vector<4x8x128xbf16>,
    %74 = vector.shape_cast %45 : vector<8x128xbf16> to vector<1x8x128xbf16>
    %c5 = arith.constant 5 : index
    %c1_50 = arith.constant 1 : index
    %c0_51 = arith.constant 0 : index
    %75 = vector.load %arg13[%c5, %c1_50, %c0_51] : memref<6x10x128xbf16, #tpu.memory_space<vmem>>, vector<1x8x128xbf16>
    tpu.vector_store %arg13[%c5, %c1_50, %c0_51], %74 {strides = array<i32>} : memref<6x10x128xbf16, #tpu.memory_space<vmem>>, vector<1x8x128xbf16>,
    %c0_52 = arith.constant 0 : index
    %c0_53 = arith.constant 0 : index
    %c0_54 = arith.constant 0 : index
    %76 = vector.load %arg13[%c0_52, %c0_53, %c0_54] : memref<6x10x128xbf16, #tpu.memory_space<vmem>>, vector<4x8x128xbf16>
    %77 = vector.shape_cast %76 : vector<4x8x128xbf16> to vector<32x128xbf16>
    %c0_55 = arith.constant 0 : index
    %c0_56 = arith.constant 0 : index
    %c0_57 = arith.constant 0 : index
    %78 = vector.load %arg8[%c0_55, %c0_56, %c0_57] : memref<9x128x128xbf16, #tpu.memory_space<vmem>>, vector<1x128x128xbf16>
    %79 = vector.shape_cast %78 : vector<1x128x128xbf16> to vector<128x128xbf16>
    %cst_58 = arith.constant dense<0.000000e+00> : vector<32x128xf32>
    %80 = tpu.matmul %77, %79, %cst_58 {dimension_numbers = #tpu.dot_dimension_numbers<[1], [0], [0], [1], [0, 0, 1, 1], [], []>} : vector<32x128xbf16>, vector<128x128xbf16>, vector<32x128xf32> -> vector<32x128xf32>
    %c0_59 = arith.constant 0 : index
    %c0_60 = arith.constant 0 : index
    %81 = vector.load %arg9[%c0_59, %c0_60] : memref<1x128xf32, #tpu.memory_space<vmem>>, vector<1x128xf32>
    %82 = vector.broadcast %81 : vector<1x128xf32> to vector<32x128xf32>
    %83 = arith.addf %80, %82 : vector<32x128xf32>
    %c0_61 = arith.constant 0 : index
    %c0_62 = arith.constant 0 : index
    %84 = vector.load %arg14[%c0_61, %c0_62] : memref<32x128xf32, #tpu.memory_space<vmem>>, vector<32x128xf32>
    tpu.vector_store %arg14[%c0_61, %c0_62], %83 {strides = array<i32>} : memref<32x128xf32, #tpu.memory_space<vmem>>, vector<32x128xf32>,
    %c0_63 = arith.constant 0 : index
    %c1_64 = arith.constant 1 : index
    %c0_65 = arith.constant 0 : index
    %85 = vector.load %arg13[%c0_63, %c1_64, %c0_65] : memref<6x10x128xbf16, #tpu.memory_space<vmem>>, vector<4x8x128xbf16>
    %86 = vector.shape_cast %85 : vector<4x8x128xbf16> to vector<32x128xbf16>
    %c1_66 = arith.constant 1 : index
    %c0_67 = arith.constant 0 : index
    %c0_68 = arith.constant 0 : index
    %87 = vector.load %arg8[%c1_66, %c0_67, %c0_68] : memref<9x128x128xbf16, #tpu.memory_space<vmem>>, vector<1x128x128xbf16>
    %88 = vector.shape_cast %87 : vector<1x128x128xbf16> to vector<128x128xbf16>
    %cst_69 = arith.constant dense<0.000000e+00> : vector<32x128xf32>
    %89 = tpu.matmul %86, %88, %cst_69 {dimension_numbers = #tpu.dot_dimension_numbers<[1], [0], [0], [1], [0, 0, 1, 1], [], []>} : vector<32x128xbf16>, vector<128x128xbf16>, vector<32x128xf32> -> vector<32x128xf32>
    %c0_70 = arith.constant 0 : index
    %c0_71 = arith.constant 0 : index
    %90 = vector.load %arg14[%c0_70, %c0_71] : memref<32x128xf32, #tpu.memory_space<vmem>>, vector<32x128xf32>
    %91 = arith.addf %90, %89 : vector<32x128xf32>
    %c0_72 = arith.constant 0 : index
    %c0_73 = arith.constant 0 : index
    %92 = vector.load %arg14[%c0_72, %c0_73] : memref<32x128xf32, #tpu.memory_space<vmem>>, vector<32x128xf32>
    tpu.vector_store %arg14[%c0_72, %c0_73], %91 {strides = array<i32>} : memref<32x128xf32, #tpu.memory_space<vmem>>, vector<32x128xf32>,
    %c0_74 = arith.constant 0 : index
    %c2 = arith.constant 2 : index
    %c0_75 = arith.constant 0 : index
    %93 = vector.load %arg13[%c0_74, %c2, %c0_75] : memref<6x10x128xbf16, #tpu.memory_space<vmem>>, vector<4x8x128xbf16>
    %94 = vector.shape_cast %93 : vector<4x8x128xbf16> to vector<32x128xbf16>
    %c2_76 = arith.constant 2 : index
    %c0_77 = arith.constant 0 : index
    %c0_78 = arith.constant 0 : index
    %95 = vector.load %arg8[%c2_76, %c0_77, %c0_78] : memref<9x128x128xbf16, #tpu.memory_space<vmem>>, vector<1x128x128xbf16>
    %96 = vector.shape_cast %95 : vector<1x128x128xbf16> to vector<128x128xbf16>
    %cst_79 = arith.constant dense<0.000000e+00> : vector<32x128xf32>
    %97 = tpu.matmul %94, %96, %cst_79 {dimension_numbers = #tpu.dot_dimension_numbers<[1], [0], [0], [1], [0, 0, 1, 1], [], []>} : vector<32x128xbf16>, vector<128x128xbf16>, vector<32x128xf32> -> vector<32x128xf32>
    %c0_80 = arith.constant 0 : index
    %c0_81 = arith.constant 0 : index
    %98 = vector.load %arg14[%c0_80, %c0_81] : memref<32x128xf32, #tpu.memory_space<vmem>>, vector<32x128xf32>
    %99 = arith.addf %98, %97 : vector<32x128xf32>
    %c0_82 = arith.constant 0 : index
    %c0_83 = arith.constant 0 : index
    %100 = vector.load %arg14[%c0_82, %c0_83] : memref<32x128xf32, #tpu.memory_space<vmem>>, vector<32x128xf32>
    tpu.vector_store %arg14[%c0_82, %c0_83], %99 {strides = array<i32>} : memref<32x128xf32, #tpu.memory_space<vmem>>, vector<32x128xf32>,
    %c1_84 = arith.constant 1 : index
    %c0_85 = arith.constant 0 : index
    %c0_86 = arith.constant 0 : index
    %101 = vector.load %arg13[%c1_84, %c0_85, %c0_86] : memref<6x10x128xbf16, #tpu.memory_space<vmem>>, vector<4x8x128xbf16>
    %102 = vector.shape_cast %101 : vector<4x8x128xbf16> to vector<32x128xbf16>
    %c3 = arith.constant 3 : index
    %c0_87 = arith.constant 0 : index
    %c0_88 = arith.constant 0 : index
    %103 = vector.load %arg8[%c3, %c0_87, %c0_88] : memref<9x128x128xbf16, #tpu.memory_space<vmem>>, vector<1x128x128xbf16>
    %104 = vector.shape_cast %103 : vector<1x128x128xbf16> to vector<128x128xbf16>
    %cst_89 = arith.constant dense<0.000000e+00> : vector<32x128xf32>
    %105 = tpu.matmul %102, %104, %cst_89 {dimension_numbers = #tpu.dot_dimension_numbers<[1], [0], [0], [1], [0, 0, 1, 1], [], []>} : vector<32x128xbf16>, vector<128x128xbf16>, vector<32x128xf32> -> vector<32x128xf32>
    %c0_90 = arith.constant 0 : index
    %c0_91 = arith.constant 0 : index
    %106 = vector.load %arg14[%c0_90, %c0_91] : memref<32x128xf32, #tpu.memory_space<vmem>>, vector<32x128xf32>
    %107 = arith.addf %106, %105 : vector<32x128xf32>
    %c0_92 = arith.constant 0 : index
    %c0_93 = arith.constant 0 : index
    %108 = vector.load %arg14[%c0_92, %c0_93] : memref<32x128xf32, #tpu.memory_space<vmem>>, vector<32x128xf32>
    tpu.vector_store %arg14[%c0_92, %c0_93], %107 {strides = array<i32>} : memref<32x128xf32, #tpu.memory_space<vmem>>, vector<32x128xf32>,
    %c1_94 = arith.constant 1 : index
    %c1_95 = arith.constant 1 : index
    %c0_96 = arith.constant 0 : index
    %109 = vector.load %arg13[%c1_94, %c1_95, %c0_96] : memref<6x10x128xbf16, #tpu.memory_space<vmem>>, vector<4x8x128xbf16>
    %110 = vector.shape_cast %109 : vector<4x8x128xbf16> to vector<32x128xbf16>
    %c4 = arith.constant 4 : index
    %c0_97 = arith.constant 0 : index
    %c0_98 = arith.constant 0 : index
    %111 = vector.load %arg8[%c4, %c0_97, %c0_98] : memref<9x128x128xbf16, #tpu.memory_space<vmem>>, vector<1x128x128xbf16>
    %112 = vector.shape_cast %111 : vector<1x128x128xbf16> to vector<128x128xbf16>
    %cst_99 = arith.constant dense<0.000000e+00> : vector<32x128xf32>
    %113 = tpu.matmul %110, %112, %cst_99 {dimension_numbers = #tpu.dot_dimension_numbers<[1], [0], [0], [1], [0, 0, 1, 1], [], []>} : vector<32x128xbf16>, vector<128x128xbf16>, vector<32x128xf32> -> vector<32x128xf32>
    %c0_100 = arith.constant 0 : index
    %c0_101 = arith.constant 0 : index
    %114 = vector.load %arg14[%c0_100, %c0_101] : memref<32x128xf32, #tpu.memory_space<vmem>>, vector<32x128xf32>
    %115 = arith.addf %114, %113 : vector<32x128xf32>
    %c0_102 = arith.constant 0 : index
    %c0_103 = arith.constant 0 : index
    %116 = vector.load %arg14[%c0_102, %c0_103] : memref<32x128xf32, #tpu.memory_space<vmem>>, vector<32x128xf32>
    tpu.vector_store %arg14[%c0_102, %c0_103], %115 {strides = array<i32>} : memref<32x128xf32, #tpu.memory_space<vmem>>, vector<32x128xf32>,
    %c1_104 = arith.constant 1 : index
    %c2_105 = arith.constant 2 : index
    %c0_106 = arith.constant 0 : index
    %117 = vector.load %arg13[%c1_104, %c2_105, %c0_106] : memref<6x10x128xbf16, #tpu.memory_space<vmem>>, vector<4x8x128xbf16>
    %118 = vector.shape_cast %117 : vector<4x8x128xbf16> to vector<32x128xbf16>
    %c5_107 = arith.constant 5 : index
    %c0_108 = arith.constant 0 : index
    %c0_109 = arith.constant 0 : index
    %119 = vector.load %arg8[%c5_107, %c0_108, %c0_109] : memref<9x128x128xbf16, #tpu.memory_space<vmem>>, vector<1x128x128xbf16>
    %120 = vector.shape_cast %119 : vector<1x128x128xbf16> to vector<128x128xbf16>
    %cst_110 = arith.constant dense<0.000000e+00> : vector<32x128xf32>
    %121 = tpu.matmul %118, %120, %cst_110 {dimension_numbers = #tpu.dot_dimension_numbers<[1], [0], [0], [1], [0, 0, 1, 1], [], []>} : vector<32x128xbf16>, vector<128x128xbf16>, vector<32x128xf32> -> vector<32x128xf32>
    %c0_111 = arith.constant 0 : index
    %c0_112 = arith.constant 0 : index
    %122 = vector.load %arg14[%c0_111, %c0_112] : memref<32x128xf32, #tpu.memory_space<vmem>>, vector<32x128xf32>
    %123 = arith.addf %122, %121 : vector<32x128xf32>
    %c0_113 = arith.constant 0 : index
    %c0_114 = arith.constant 0 : index
    %124 = vector.load %arg14[%c0_113, %c0_114] : memref<32x128xf32, #tpu.memory_space<vmem>>, vector<32x128xf32>
    tpu.vector_store %arg14[%c0_113, %c0_114], %123 {strides = array<i32>} : memref<32x128xf32, #tpu.memory_space<vmem>>, vector<32x128xf32>,
    %c2_115 = arith.constant 2 : index
    %c0_116 = arith.constant 0 : index
    %c0_117 = arith.constant 0 : index
    %125 = vector.load %arg13[%c2_115, %c0_116, %c0_117] : memref<6x10x128xbf16, #tpu.memory_space<vmem>>, vector<4x8x128xbf16>
    %126 = vector.shape_cast %125 : vector<4x8x128xbf16> to vector<32x128xbf16>
    %c6 = arith.constant 6 : index
    %c0_118 = arith.constant 0 : index
    %c0_119 = arith.constant 0 : index
    %127 = vector.load %arg8[%c6, %c0_118, %c0_119] : memref<9x128x128xbf16, #tpu.memory_space<vmem>>, vector<1x128x128xbf16>
    %128 = vector.shape_cast %127 : vector<1x128x128xbf16> to vector<128x128xbf16>
    %cst_120 = arith.constant dense<0.000000e+00> : vector<32x128xf32>
    %129 = tpu.matmul %126, %128, %cst_120 {dimension_numbers = #tpu.dot_dimension_numbers<[1], [0], [0], [1], [0, 0, 1, 1], [], []>} : vector<32x128xbf16>, vector<128x128xbf16>, vector<32x128xf32> -> vector<32x128xf32>
    %c0_121 = arith.constant 0 : index
    %c0_122 = arith.constant 0 : index
    %130 = vector.load %arg14[%c0_121, %c0_122] : memref<32x128xf32, #tpu.memory_space<vmem>>, vector<32x128xf32>
    %131 = arith.addf %130, %129 : vector<32x128xf32>
    %c0_123 = arith.constant 0 : index
    %c0_124 = arith.constant 0 : index
    %132 = vector.load %arg14[%c0_123, %c0_124] : memref<32x128xf32, #tpu.memory_space<vmem>>, vector<32x128xf32>
    tpu.vector_store %arg14[%c0_123, %c0_124], %131 {strides = array<i32>} : memref<32x128xf32, #tpu.memory_space<vmem>>, vector<32x128xf32>,
    %c2_125 = arith.constant 2 : index
    %c1_126 = arith.constant 1 : index
    %c0_127 = arith.constant 0 : index
    %133 = vector.load %arg13[%c2_125, %c1_126, %c0_127] : memref<6x10x128xbf16, #tpu.memory_space<vmem>>, vector<4x8x128xbf16>
    %134 = vector.shape_cast %133 : vector<4x8x128xbf16> to vector<32x128xbf16>
    %c7 = arith.constant 7 : index
    %c0_128 = arith.constant 0 : index
    %c0_129 = arith.constant 0 : index
    %135 = vector.load %arg8[%c7, %c0_128, %c0_129] : memref<9x128x128xbf16, #tpu.memory_space<vmem>>, vector<1x128x128xbf16>
    %136 = vector.shape_cast %135 : vector<1x128x128xbf16> to vector<128x128xbf16>
    %cst_130 = arith.constant dense<0.000000e+00> : vector<32x128xf32>
    %137 = tpu.matmul %134, %136, %cst_130 {dimension_numbers = #tpu.dot_dimension_numbers<[1], [0], [0], [1], [0, 0, 1, 1], [], []>} : vector<32x128xbf16>, vector<128x128xbf16>, vector<32x128xf32> -> vector<32x128xf32>
    %c0_131 = arith.constant 0 : index
    %c0_132 = arith.constant 0 : index
    %138 = vector.load %arg14[%c0_131, %c0_132] : memref<32x128xf32, #tpu.memory_space<vmem>>, vector<32x128xf32>
    %139 = arith.addf %138, %137 : vector<32x128xf32>
    %c0_133 = arith.constant 0 : index
    %c0_134 = arith.constant 0 : index
    %140 = vector.load %arg14[%c0_133, %c0_134] : memref<32x128xf32, #tpu.memory_space<vmem>>, vector<32x128xf32>
    tpu.vector_store %arg14[%c0_133, %c0_134], %139 {strides = array<i32>} : memref<32x128xf32, #tpu.memory_space<vmem>>, vector<32x128xf32>,
    %c2_135 = arith.constant 2 : index
    %c2_136 = arith.constant 2 : index
    %c0_137 = arith.constant 0 : index
    %141 = vector.load %arg13[%c2_135, %c2_136, %c0_137] : memref<6x10x128xbf16, #tpu.memory_space<vmem>>, vector<4x8x128xbf16>
    %142 = vector.shape_cast %141 : vector<4x8x128xbf16> to vector<32x128xbf16>
    %c8 = arith.constant 8 : index
    %c0_138 = arith.constant 0 : index
    %c0_139 = arith.constant 0 : index
    %143 = vector.load %arg8[%c8, %c0_138, %c0_139] : memref<9x128x128xbf16, #tpu.memory_space<vmem>>, vector<1x128x128xbf16>
    %144 = vector.shape_cast %143 : vector<1x128x128xbf16> to vector<128x128xbf16>
    %cst_140 = arith.constant dense<0.000000e+00> : vector<32x128xf32>
    %145 = tpu.matmul %142, %144, %cst_140 {dimension_numbers = #tpu.dot_dimension_numbers<[1], [0], [0], [1], [0, 0, 1, 1], [], []>} : vector<32x128xbf16>, vector<128x128xbf16>, vector<32x128xf32> -> vector<32x128xf32>
    %c0_141 = arith.constant 0 : index
    %c0_142 = arith.constant 0 : index
    %146 = vector.load %arg14[%c0_141, %c0_142] : memref<32x128xf32, #tpu.memory_space<vmem>>, vector<32x128xf32>
    %147 = arith.addf %146, %145 : vector<32x128xf32>
    %c0_143 = arith.constant 0 : index
    %c0_144 = arith.constant 0 : index
    %148 = vector.load %arg14[%c0_143, %c0_144] : memref<32x128xf32, #tpu.memory_space<vmem>>, vector<32x128xf32>
    tpu.vector_store %arg14[%c0_143, %c0_144], %147 {strides = array<i32>} : memref<32x128xf32, #tpu.memory_space<vmem>>, vector<32x128xf32>,
    %c0_145 = arith.constant 0 : index
    %c0_146 = arith.constant 0 : index
    %149 = vector.load %arg14[%c0_145, %c0_146] : memref<32x128xf32, #tpu.memory_space<vmem>>, vector<32x128xf32>
    %150 = vector.shape_cast %149 : vector<32x128xf32> to vector<1x4x8x128xf32>
    %151 = arith.truncf %150 : vector<1x4x8x128xf32> to vector<1x4x8x128xbf16>
    %c0_147 = arith.constant 0 : index
    %c0_148 = arith.constant 0 : index
    %c0_149 = arith.constant 0 : index
    %c0_150 = arith.constant 0 : index
    %152 = vector.load %arg11[%c0_147, %c0_148, %c0_149, %c0_150] : memref<1x4x8x128xbf16, #tpu.memory_space<vmem>>, vector<1x4x8x128xbf16>
    tpu.vector_store %arg11[%c0_147, %c0_148, %c0_149, %c0_150], %151 {strides = array<i32>} : memref<1x4x8x128xbf16, #tpu.memory_space<vmem>>, vector<1x4x8x128xbf16>,
    %cst_151 = arith.constant dense<0.000000e+00> : vector<128xf32>
    %153 = vector.multi_reduction <add>, %149, %cst_151 [0] : vector<32x128xf32> to vector<128xf32>
    %154 = vector.shape_cast %153 : vector<128xf32> to vector<1x128xf32>
    %155 = arith.mulf %149, %149 : vector<32x128xf32>
    %cst_152 = arith.constant dense<0.000000e+00> : vector<128xf32>
    %156 = vector.multi_reduction <add>, %155, %cst_152 [0] : vector<32x128xf32> to vector<128xf32>
    %157 = vector.shape_cast %156 : vector<128xf32> to vector<1x128xf32>
    %c0_153 = arith.constant 0 : index
    %c0_154 = arith.constant 0 : index
    %158 = vector.load %arg10[%c0_153, %c0_154] : memref<128x128xf32, #tpu.memory_space<vmem>>, vector<128x128xf32>
    %cst_155 = arith.constant dense<0.000000e+00> : vector<1x128xf32>
    %159 = tpu.matmul %154, %158, %cst_155 {dimension_numbers = #tpu.dot_dimension_numbers<[1], [0], [0], [1], [0, 0, 1, 1], [], []>} : vector<1x128xf32>, vector<128x128xf32>, vector<1x128xf32> -> vector<1x128xf32>
    %c0_156 = arith.constant 0 : index
    %c0_157 = arith.constant 0 : index
    %c0_158 = arith.constant 0 : index
    %c0_159 = arith.constant 0 : index
    %160 = vector.load %arg12[%c0_156, %c0_157, %c0_158, %c0_159] : memref<1x1x2x128xf32, #tpu.memory_space<vmem>>, vector<1x1x1x128xf32>
    %161 = vector.shape_cast %160 : vector<1x1x1x128xf32> to vector<1x128xf32>
    %162 = vector.shape_cast %159 : vector<1x128xf32> to vector<1x1x1x128xf32>
    tpu.vector_store %arg12[%c0_156, %c0_157, %c0_158, %c0_159], %162 {strides = array<i32>} : memref<1x1x2x128xf32, #tpu.memory_space<vmem>>, vector<1x1x1x128xf32>,
    %c0_160 = arith.constant 0 : index
    %c0_161 = arith.constant 0 : index
    %163 = vector.load %arg10[%c0_160, %c0_161] : memref<128x128xf32, #tpu.memory_space<vmem>>, vector<128x128xf32>
    %cst_162 = arith.constant dense<0.000000e+00> : vector<1x128xf32>
    %164 = tpu.matmul %157, %163, %cst_162 {dimension_numbers = #tpu.dot_dimension_numbers<[1], [0], [0], [1], [0, 0, 1, 1], [], []>} : vector<1x128xf32>, vector<128x128xf32>, vector<1x128xf32> -> vector<1x128xf32>
    %c0_163 = arith.constant 0 : index
    %c0_164 = arith.constant 0 : index
    %c1_165 = arith.constant 1 : index
    %c0_166 = arith.constant 0 : index
    %165 = vector.load %arg12[%c0_163, %c0_164, %c1_165, %c0_166] : memref<1x1x2x128xf32, #tpu.memory_space<vmem>>, vector<1x1x1x128xf32>
    %166 = vector.shape_cast %165 : vector<1x1x1x128xf32> to vector<1x128xf32>
    %167 = vector.shape_cast %164 : vector<1x128xf32> to vector<1x1x1x128xf32>
    tpu.vector_store %arg12[%c0_163, %c0_164, %c1_165, %c0_166], %167 {strides = array<i32>} : memref<1x1x2x128xf32, #tpu.memory_space<vmem>>, vector<1x1x1x128xf32>,
    return
  }
  func.func @transform_0(%arg0: i32, %arg1: i32, %arg2: i32) -> (i32, i32, i32, i32) {
    %c0_i32 = arith.constant 0 : i32
    %c0_i32_0 = arith.constant 0 : i32
    %c0_i32_1 = arith.constant 0 : i32
    return %arg0, %arg1, %c0_i32, %c0_i32_0 : i32, i32, i32, i32
  }
  func.func @transform_1(%arg0: i32, %arg1: i32, %arg2: i32) -> (i32, i32, i32, i32) {
    %c4_i32 = arith.constant 4 : i32
    %0 = arith.muli %arg1, %c4_i32 : i32
    %c1_i32 = arith.constant 1 : i32
    %1 = arith.subi %0, %c1_i32 : i32
    %c0_i32 = arith.constant 0 : i32
    %2 = arith.maxsi %1, %c0_i32 : i32
    %c0_i32_0 = arith.constant 0 : i32
    %c0_i32_1 = arith.constant 0 : i32
    %c0_i32_2 = arith.constant 0 : i32
    return %arg0, %2, %c0_i32_0, %c0_i32_1 : i32, i32, i32, i32
  }
  func.func @transform_2(%arg0: i32, %arg1: i32, %arg2: i32) -> (i32, i32, i32, i32) {
    %c4_i32 = arith.constant 4 : i32
    %0 = arith.muli %arg1, %c4_i32 : i32
    %c4_i32_0 = arith.constant 4 : i32
    %1 = arith.addi %0, %c4_i32_0 : i32
    %c7_i32 = arith.constant 7 : i32
    %2 = arith.minsi %1, %c7_i32 : i32
    %c0_i32 = arith.constant 0 : i32
    %c0_i32_1 = arith.constant 0 : i32
    %c0_i32_2 = arith.constant 0 : i32
    return %arg0, %2, %c0_i32, %c0_i32_1 : i32, i32, i32, i32
  }
  func.func @transform_3(%arg0: i32, %arg1: i32, %arg2: i32) -> (i32, i32, i32) {
    %c0_i32 = arith.constant 0 : i32
    %c0_i32_0 = arith.constant 0 : i32
    %c0_i32_1 = arith.constant 0 : i32
    return %arg0, %c0_i32, %c0_i32_0 : i32, i32, i32
  }
  func.func @transform_4(%arg0: i32, %arg1: i32, %arg2: i32) -> (i32, i32, i32) {
    %c0_i32 = arith.constant 0 : i32
    %c0_i32_0 = arith.constant 0 : i32
    %c0_i32_1 = arith.constant 0 : i32
    return %arg0, %c0_i32, %c0_i32_0 : i32, i32, i32
  }
  func.func @transform_5(%arg0: i32, %arg1: i32, %arg2: i32) -> (i32, i32, i32) {
    %c0_i32 = arith.constant 0 : i32
    %c0_i32_0 = arith.constant 0 : i32
    %c0_i32_1 = arith.constant 0 : i32
    return %c0_i32, %c0_i32_0, %arg2 : i32, i32, i32
  }
  func.func @transform_6(%arg0: i32, %arg1: i32, %arg2: i32) -> (i32, i32) {
    %c0_i32 = arith.constant 0 : i32
    %c0_i32_0 = arith.constant 0 : i32
    return %c0_i32, %arg2 : i32, i32
  }
  func.func @transform_7(%arg0: i32, %arg1: i32, %arg2: i32) -> (i32, i32) {
    %c0_i32 = arith.constant 0 : i32
    %c0_i32_0 = arith.constant 0 : i32
    return %arg2, %c0_i32 : i32, i32
  }
  func.func @transform_8(%arg0: i32, %arg1: i32, %arg2: i32) -> (i32, i32, i32, i32) {
    %c0_i32 = arith.constant 0 : i32
    %c0_i32_0 = arith.constant 0 : i32
    return %arg0, %arg1, %c0_i32, %arg2 : i32, i32, i32, i32
  }
  func.func @transform_9(%arg0: i32, %arg1: i32, %arg2: i32) -> (i32, i32, i32, i32) {
    %c1_i32 = arith.constant 1 : i32
    %0 = arith.muli %arg1, %c1_i32 : i32
    %1 = arith.addi %0, %arg2 : i32
    %c0_i32 = arith.constant 0 : i32
    %c0_i32_0 = arith.constant 0 : i32
    %c0_i32_1 = arith.constant 0 : i32
    return %arg0, %1, %c0_i32, %c0_i32_0 : i32, i32, i32, i32
  }
}

</mosaic_0001>

<llo_original>
// kernel: downblock_forward.7
$region0: #{downblock_forward.7}
  #allocation0 [shape = 'u32[]', space=smem, size = 0x4, offset = 0x4, fixed_abs, tag = 'smem constant byte address 0x4 - core index']
  #allocation1 [shape = 'u32[144,128]{1,0:T(1,128)}', space=vmem, size = 0x12000, scoped, tag = 'internal scratch']
  %s0 = inlined_call_operand.vmem [shape: bf16[2,8,8,128], index: 0, kind: input, shape index: {}]
  %s1 = inlined_call_operand.vmem [shape: f32[2,1,128], index: 1, kind: input, shape index: {}]
  %s2 = inlined_call_operand.vmem [shape: f32[2,1,128], index: 2, kind: input, shape index: {}]
  %s3 = inlined_call_operand.vmem [shape: bf16[2,8,8,128], index: 3, kind: input, shape index: {}]
  %s4 = inlined_call_operand.vmem [shape: f32[2,8,8,128], index: 4, kind: output, shape index: {}]
  %s5 = sld [smem:[#allocation0]]
  $region49: #{downblock_forward.7} parent=0
    _
  %s7 = ssub.s32 1, %s5
  %s8 = scalar_select 0, %s7, %s5
  loop: start=0, step=1, limit=6
  $region2: #{downblock_forward.7} parent=0 // loop_pre_header
    _
  $region3: #{downblock_forward.7} parent=0 // loop_header
    %s10 = sphi 0, %s14
    %p11 = scmp.ge.s32.totalorder %s10, 6
    %s17 = sphi 0, %s36
    %s18 = sphi 0, %s32
    %s19 = sphi 0, %s28
    %s20 = sphi 0, %s17
    %s21 = sphi 0, %s18
    %s22 = sphi 0, %s19
    %s23 = sphi 0, %s20
    %s24 = sphi 0, %s21
    %s25 = sphi 0, %s22
    %s43 = sphi 0, %s45
    %s46 = sphi 0, %s43
    %s47 = sphi 0, %s46
    %s63 = sphi 0, %s47
    %s71 = sphi 0, %s73
    %s74 = sphi 0, %s71
    %s75 = sphi 0, %s74
    %s91 = sphi 0, %s75
    %s99 = sphi 0, %s101
    %s102 = sphi 0, %s99
    %s103 = sphi 0, %s102
    %s119 = sphi 0, %s103
    %s129 = sphi 0, %s131
    %s132 = sphi 0, %s129
    %s133 = sphi 0, %s132
    %s149 = sphi 0, %s133
    %s159 = sphi 0, %s161
    %s162 = sphi 0, %s159
    %s163 = sphi 0, %s162
    %s179 = sphi 0, %s163
  $region4: #{downblock_forward.7} parent=0 // loop_header_branch
    %13 = sbr.rel (%p11) target = $region8
  $region5: #{downblock_forward.7} parent=0 // loop_body
    %s15 = ssub.s32 %s10, 1
    %s16 = ssub.s32 %s10, 2
    %s26 = sadd.s32 1, %s19
    %p27 = scmp.ge.s32.totalorder %s26, 1
    %s28 = scalar_select %p27, 0, %s26
    %s29 = sadd.s32 1, %s18
    %s30 = scalar_select %p27, %s29, %s18
    %p31 = scmp.ge.s32.totalorder %s30, 2
    %s32 = scalar_select %p31, 0, %s30
    %s33 = sadd.s32 1, %s17
    %s34 = scalar_select %p31, %s33, %s17
    %p35 = scmp.ge.s32.totalorder %s34, 2
    %s36 = scalar_select %p35, 0, %s34
    %s37 = ssub.s32 %s17, %s36
    %s38 = ssub.s32 %s18, %s32
    %s39 = sor.u32 %s37, %s38
    %s40 = ssub.s32 %s19, %s28
    %s41 = sor.u32 %s39, %s40
    %p42 = scmp.eq.s32.totalorder %s41, 0
    %s44 = sadd.s32 %s43, 1
    %s45 = scalar_select %p42, %s43, %s44
    %p48 = pneg %p42
    %p49 = scmp.eq.s32.totalorder %s10, 3
    %p50 = por %p48, %p49
    %p51 = scmp.ne.s32.totalorder %s43, %s46
    %p52 = scmp.eq.s32.totalorder %s10, 0
    %p53 = por %p51, %p52
    %p54 = scmp.ne.s32.totalorder %s43, %s46
    %p55 = scmp.eq.s32.totalorder %s15, 3
    %p56 = por %p54, %p55
    %p57 = scmp.ne.s32.totalorder %s46, %s47
    %p58 = scmp.eq.s32.totalorder %s15, 0
    %p59 = por %p57, %p58
    %p60 = scmp.ne.s32.totalorder %s46, %s47
    %p61 = scmp.eq.s32.totalorder %s16, 3
    %p62 = por %p60, %p61
    %p64 = scmp.ne.s32.totalorder %s47, %s63
    %p65 = scmp.eq.s32.totalorder %s16, 0
    %p66 = por %p64, %p65
    %s67 = ssub.s32 %s17, %s36
    %s68 = ssub.s32 %s19, %s28
    %s69 = sor.u32 %s67, %s68
    %p70 = scmp.eq.s32.totalorder %s69, 0
    %s72 = sadd.s32 %s71, 1
    %s73 = scalar_select %p70, %s71, %s72
    %p76 = pneg %p70
    %p77 = scmp.eq.s32.totalorder %s10, 3
    %p78 = por %p76, %p77
    %p79 = scmp.ne.s32.totalorder %s71, %s74
    %p80 = scmp.eq.s32.totalorder %s10, 0
    %p81 = por %p79, %p80
    %p82 = scmp.ne.s32.totalorder %s71, %s74
    %p83 = scmp.eq.s32.totalorder %s15, 3
    %p84 = por %p82, %p83
    %p85 = scmp.ne.s32.totalorder %s74, %s75
    %p86 = scmp.eq.s32.totalorder %s15, 0
    %p87 = por %p85, %p86
    %p88 = scmp.ne.s32.totalorder %s74, %s75
    %p89 = scmp.eq.s32.totalorder %s16, 3
    %p90 = por %p88, %p89
    %p92 = scmp.ne.s32.totalorder %s75, %s91
    %p93 = scmp.eq.s32.totalorder %s16, 0
    %p94 = por %p92, %p93
    %s95 = ssub.s32 %s17, %s36
    %s96 = ssub.s32 %s19, %s28
    %s97 = sor.u32 %s95, %s96
    %p98 = scmp.eq.s32.totalorder %s97, 0
    %s100 = sadd.s32 %s99, 1
    %s101 = scalar_select %p98, %s99, %s100
    %p104 = pneg %p98
    %p105 = scmp.eq.s32.totalorder %s10, 3
    %p106 = por %p104, %p105
    %p107 = scmp.ne.s32.totalorder %s99, %s102
    %p108 = scmp.eq.s32.totalorder %s10, 0
    %p109 = por %p107, %p108
    %p110 = scmp.ne.s32.totalorder %s99, %s102
    %p111 = scmp.eq.s32.totalorder %s15, 3
    %p112 = por %p110, %p111
    %p113 = scmp.ne.s32.totalorder %s102, %s103
    %p114 = scmp.eq.s32.totalorder %s15, 0
    %p115 = por %p113, %p114
    %p116 = scmp.ne.s32.totalorder %s102, %s103
    %p117 = scmp.eq.s32.totalorder %s16, 3
    %p118 = por %p116, %p117
    %p120 = scmp.ne.s32.totalorder %s103, %s119
    %p121 = scmp.eq.s32.totalorder %s16, 0
    %p122 = por %p120, %p121
    %s123 = ssub.s32 %s17, %s36
    %s124 = ssub.s32 %s18, %s32
    %s125 = sor.u32 %s123, %s124
    %s126 = ssub.s32 %s19, %s28
    %s127 = sor.u32 %s125, %s126
    %p128 = scmp.eq.s32.totalorder %s127, 0
    %s130 = sadd.s32 %s129, 1
    %s131 = scalar_select %p128, %s129, %s130
    %p134 = pneg %p128
    %p135 = scmp.eq.s32.totalorder %s10, 3
    %p136 = por %p134, %p135
    %p137 = scmp.ne.s32.totalorder %s129, %s132
    %p138 = scmp.eq.s32.totalorder %s10, 0
    %p139 = por %p137, %p138
    %p140 = scmp.ne.s32.totalorder %s129, %s132
    %p141 = scmp.eq.s32.totalorder %s15, 3
    %p142 = por %p140, %p141
    %p143 = scmp.ne.s32.totalorder %s132, %s133
    %p144 = scmp.eq.s32.totalorder %s15, 0
    %p145 = por %p143, %p144
    %p146 = scmp.ne.s32.totalorder %s132, %s133
    %p147 = scmp.eq.s32.totalorder %s16, 3
    %p148 = por %p146, %p147
    %p150 = scmp.ne.s32.totalorder %s133, %s149
    %p151 = scmp.eq.s32.totalorder %s16, 0
    %p152 = por %p150, %p151
    %s153 = ssub.s32 %s17, %s36
    %s154 = ssub.s32 %s18, %s32
    %s155 = sor.u32 %s153, %s154
    %s156 = ssub.s32 %s19, %s28
    %s157 = sor.u32 %s155, %s156
    %p158 = scmp.eq.s32.totalorder %s157, 0
    %s160 = sadd.s32 %s159, 1
    %s161 = scalar_select %p158, %s159, %s160
    %p164 = pneg %p158
    %p165 = scmp.eq.s32.totalorder %s10, 3
    %p166 = por %p164, %p165
    %p167 = scmp.ne.s32.totalorder %s159, %s162
    %p168 = scmp.eq.s32.totalorder %s10, 0
    %p169 = por %p167, %p168
    %p170 = scmp.ne.s32.totalorder %s159, %s162
    %p171 = scmp.eq.s32.totalorder %s15, 3
    %p172 = por %p170, %p171
    %p173 = scmp.ne.s32.totalorder %s162, %s163
    %p174 = scmp.eq.s32.totalorder %s15, 0
    %p175 = por %p173, %p174
    %p176 = scmp.ne.s32.totalorder %s162, %s163
    %p177 = scmp.eq.s32.totalorder %s16, 3
    %p178 = por %p176, %p177
    %p180 = scmp.ne.s32.totalorder %s163, %s179
    %p181 = scmp.eq.s32.totalorder %s16, 0
    %p182 = por %p180, %p181
    %p183 = scmp.le.s32.totalorder 1, %s10
    %p184 = scmp.lt.s32.totalorder %s10, 5
    %p185 = pnand %p183, %p184
    %p186 = pneg %p185
    // Predicated region
    $region9: #{downblock_forward.7} parent=5 // pred_check
      _
    $region10: #{downblock_forward.7} parent=5 // pred_check_branch
      %188 = sbr.rel (%p185) target = $region12
    $region11: #{downblock_forward.7} parent=5 // pred_region
      %s189 = ssub.s32 %s10, 1
    $region12: #{downblock_forward.7} parent=5 // pred_fallthru
      _
    %p190 = scmp.lt.s32.totalorder %s10, 4
    // Predicated region
    $region13: #{downblock_forward.7} parent=5 // pred_check
      %p191 = pneg %p190
    $region14: #{downblock_forward.7} parent=5 // pred_check_branch
      %193 = sbr.rel (%p191) target = $region16
    $region15: #{downblock_forward.7} parent=5 // pred_region
      // Predicated region
      $region17: #{downblock_forward.7} parent=15 // pred_check
        %p194 = pneg %p53
      $region18: #{downblock_forward.7} parent=15 // pred_check_branch
        %196 = sbr.rel (%p194) target = $region20
      $region19: #{downblock_forward.7} parent=15 // pred_region
        %s197 = smul.u32 4, %s18
        %p198 = scmp.lt.s32.totalorder %s17, 1
        %s199 = scalar_select %p198, %s17, 1
        %p200 = scmp.lt.s32.totalorder %s197, 7
        %s201 = scalar_select %p200, %s197, 7
        %p202 = scmp.lt.s32.totalorder %s19, 0
        %s203 = scalar_select %p202, %s19, 0
        %s204 = sadd.s32 %s203, %s201
        %s205 = smul.addr %s199, 8
        %s206 = sadd.s32 %s204, %s205
        %s207 = smul.addr %s206, 4
        %s208 = scalar_lea.vmem %s0, %s207
        %s209 = smul.u32 4, %s18
      $region20: #{downblock_forward.7} parent=15 // pred_fallthru
        _
      // Predicated region
      $region21: #{downblock_forward.7} parent=15 // pred_check
        %p210 = pneg %p81
      $region22: #{downblock_forward.7} parent=15 // pred_check_branch
        %212 = sbr.rel (%p210) target = $region24
      $region23: #{downblock_forward.7} parent=15 // pred_region
        %p213 = scmp.lt.s32.totalorder %s17, 1
        %s214 = scalar_select %p213, %s17, 1
        %p215 = scmp.lt.s32.totalorder %s19, 0
        %s216 = scalar_select %p215, %s19, 0
        %s217 = sadd.s32 %s216, %s214
        %s218 = scalar_lea.vmem %s1, %s217
      $region24: #{downblock_forward.7} parent=15 // pred_fallthru
        _
      // Predicated region
      $region25: #{downblock_forward.7} parent=15 // pred_check
        %p219 = pneg %p109
      $region26: #{downblock_forward.7} parent=15 // pred_check_branch
        %221 = sbr.rel (%p219) target = $region28
      $region27: #{downblock_forward.7} parent=15 // pred_region
        %p222 = scmp.lt.s32.totalorder %s17, 1
        %s223 = scalar_select %p222, %s17, 1
        %p224 = scmp.lt.s32.totalorder %s19, 0
        %s225 = scalar_select %p224, %s19, 0
        %s226 = sadd.s32 %s225, %s223
        %s227 = scalar_lea.vmem %s2, %s226
      $region28: #{downblock_forward.7} parent=15 // pred_fallthru
        _
      // Predicated region
      $region29: #{downblock_forward.7} parent=15 // pred_check
        %p228 = pneg %p139
      $region30: #{downblock_forward.7} parent=15 // pred_check_branch
        %230 = sbr.rel (%p228) target = $region32
      $region31: #{downblock_forward.7} parent=15 // pred_region
        %s231 = smul.u32 4, %s18
        %p232 = scmp.lt.s32.totalorder %s17, 1
        %s233 = scalar_select %p232, %s17, 1
        %p234 = scmp.lt.s32.totalorder %s231, 7
        %s235 = scalar_select %p234, %s231, 7
        %p236 = scmp.lt.s32.totalorder %s19, 0
        %s237 = scalar_select %p236, %s19, 0
        %s238 = sadd.s32 %s237, %s235
        %s239 = smul.addr %s233, 8
        %s240 = sadd.s32 %s238, %s239
        %s241 = smul.addr %s240, 4
        %s242 = scalar_lea.vmem %s3, %s241
        %s243 = smul.u32 4, %s18
      $region32: #{downblock_forward.7} parent=15 // pred_fallthru
        _
    $region16: #{downblock_forward.7} parent=5 // pred_fallthru
      _
    %p244 = scmp.le.s32.totalorder 1, %s10
    %p245 = scmp.lt.s32.totalorder %s10, 5
    %p246 = pnand %p244, %p245
    %p247 = pneg %p246
    // Predicated region
    $region33: #{downblock_forward.7} parent=5 // pred_check
      _
    $region34: #{downblock_forward.7} parent=5 // pred_check_branch
      %249 = sbr.rel (%p246) target = $region36
    $region35: #{downblock_forward.7} parent=5 // pred_region
      %s250 = ssub.s32 %s10, 1
      %s251 = smul.u32 4, %s21
      %p252 = scmp.lt.s32.totalorder %s20, 1
      %s253 = scalar_select %p252, %s20, 1
      %p254 = scmp.lt.s32.totalorder %s251, 7
      %s255 = scalar_select %p254, %s251, 7
      %p256 = scmp.lt.s32.totalorder %s22, 0
      %s257 = scalar_select %p256, %s22, 0
      %s258 = sadd.s32 %s257, %s255
      %s259 = smul.addr %s253, 8
      %s260 = sadd.s32 %s258, %s259
      %s261 = smul.addr %s260, 4
      %s262 = scalar_lea.vmem %s0, %s261
      %p263 = pneg %p59
      %p264 = pneg %p56
      %p265 = scmp.lt.s32.totalorder %s20, 1
      %s266 = scalar_select %p265, %s20, 1
      %p267 = scmp.lt.s32.totalorder %s22, 0
      %s268 = scalar_select %p267, %s22, 0
      %s269 = sadd.s32 %s268, %s266
      %s270 = scalar_lea.vmem %s1, %s269
      %p271 = pneg %p87
      %p272 = pneg %p84
      %p273 = scmp.lt.s32.totalorder %s20, 1
      %s274 = scalar_select %p273, %s20, 1
      %p275 = scmp.lt.s32.totalorder %s22, 0
      %s276 = scalar_select %p275, %s22, 0
      %s277 = sadd.s32 %s276, %s274
      %s278 = scalar_lea.vmem %s2, %s277
      %p279 = pneg %p115
      %p280 = pneg %p112
      %s281 = smul.u32 4, %s21
      %p282 = scmp.lt.s32.totalorder %s20, 1
      %s283 = scalar_select %p282, %s20, 1
      %p284 = scmp.lt.s32.totalorder %s281, 7
      %s285 = scalar_select %p284, %s281, 7
      %p286 = scmp.lt.s32.totalorder %s22, 0
      %s287 = scalar_select %p286, %s22, 0
      %s288 = sadd.s32 %s287, %s285
      %s289 = smul.addr %s283, 8
      %s290 = sadd.s32 %s288, %s289
      %s291 = smul.addr %s290, 4
      %s292 = scalar_lea.vmem %s3, %s291
      %p293 = pneg %p145
      %p294 = pneg %p142
      %p295 = pneg %p175
      %p296 = pneg %p172
      %s297 = smul.u32 4, %s21
      %p298 = scmp.lt.s32.totalorder %s20, 1
      %s299 = scalar_select %p298, %s20, 1
      %p300 = scmp.lt.s32.totalorder %s297, 7
      %s301 = scalar_select %p300, %s297, 7
      %p302 = scmp.lt.s32.totalorder %s22, 0
      %s303 = scalar_select %p302, %s22, 0
      %s304 = sadd.s32 %s303, %s301
      %s305 = smul.addr %s299, 8
      %s306 = sadd.s32 %s304, %s305
      %s307 = smul.addr %s306, 8
      %s308 = scalar_lea.vmem %s4, %s307
      %s309 = smul.u32 4, %s21
      %p310 = scmp.lt.s32.totalorder %s20, 1
      %s311 = scalar_select %p310, %s20, 1
      %p312 = scmp.lt.s32.totalorder %s309, 7
      %s313 = scalar_select %p312, %s309, 7
      %p314 = scmp.lt.s32.totalorder %s22, 0
      %s315 = scalar_select %p314, %s22, 0
      %s316 = sadd.s32 %s315, %s313
      %s317 = smul.addr %s311, 8
      %s318 = sadd.s32 %s316, %s317
      %s319 = smul.addr %s318, 4
      %s320 = scalar_lea.vmem %s0, %s319
      %s321 = smul.u32 4, %s21
      %p322 = scmp.lt.s32.totalorder %s20, 1
      %s323 = scalar_select %p322, %s20, 1
      %p324 = scmp.lt.s32.totalorder %s22, 0
      %s325 = scalar_select %p324, %s22, 0
      %s326 = sadd.s32 %s325, %s323
      %s327 = scalar_lea.vmem %s1, %s326
      %p328 = scmp.lt.s32.totalorder %s20, 1
      %s329 = scalar_select %p328, %s20, 1
      %p330 = scmp.lt.s32.totalorder %s22, 0
      %s331 = scalar_select %p330, %s22, 0
      %s332 = sadd.s32 %s331, %s329
      %s333 = scalar_lea.vmem %s2, %s332
      %s334 = smul.u32 4, %s21
      %p335 = scmp.lt.s32.totalorder %s20, 1
      %s336 = scalar_select %p335, %s20, 1
      %p337 = scmp.lt.s32.totalorder %s334, 7
      %s338 = scalar_select %p337, %s334, 7
      %p339 = scmp.lt.s32.totalorder %s22, 0
      %s340 = scalar_select %p339, %s22, 0
      %s341 = sadd.s32 %s340, %s338
      %s342 = smul.addr %s336, 8
      %s343 = sadd.s32 %s341, %s342
      %s344 = smul.addr %s343, 4
      %s345 = scalar_lea.vmem %s3, %s344
      %s346 = smul.u32 4, %s21
      %s347 = smul.u32 4, %s21
      %p348 = scmp.lt.s32.totalorder %s20, 1
      %s349 = scalar_select %p348, %s20, 1
      %p350 = scmp.lt.s32.totalorder %s347, 7
      %s351 = scalar_select %p350, %s347, 7
      %p352 = scmp.lt.s32.totalorder %s22, 0
      %s353 = scalar_select %p352, %s22, 0
      %s354 = sadd.s32 %s353, %s351
      %s355 = smul.addr %s349, 8
      %s356 = sadd.s32 %s354, %s355
      %s357 = smul.addr %s356, 8
      %s358 = scalar_lea.vmem %s4, %s357
      %s359 = smul.u32 4, %s21
      %v360 = vld [vmem:[%s320] sm:$0xf]
      %v361 = vld [vmem:[%s320 + $0x4] sm:$0xf]
      %v362 = vld [vmem:[%s320 + $0x8] sm:$0xf]
      %v363 = vld [vmem:[%s320 + $0xc] sm:$0xf]
      %v364 = vunpack.c.l.bf16 %v360
      %v365 = vunpack.c.l.bf16 %v361
      %v366 = vunpack.c.l.bf16 %v362
      %v367 = vunpack.c.l.bf16 %v363
      %v368 = vld [vmem:[%s327] sm:$0x1]
      %v370 = vlaneseq
      %v371 = vshrl.u32 %v370, 7
      %v372 = vsub.s32 0, %v371
      %v373 = vrot.slane %v368, %v372
      %v375 = vmul.f32 %v364, %v373
      %v376 = vmul.f32 %v365, %v373
      %v377 = vmul.f32 %v366, %v373
      %v378 = vmul.f32 %v367, %v373
      %v379 = vld [vmem:[%s333] sm:$0x1]
      %v381 = vlaneseq
      %v382 = vshrl.u32 %v381, 7
      %v383 = vsub.s32 0, %v382
      %v384 = vrot.slane %v379, %v383
      %v386 = vadd.f32 %v375, %v384
      %v387 = vadd.f32 %v376, %v384
      %v388 = vadd.f32 %v377, %v384
      %v389 = vadd.f32 %v378, %v384
      %v390 = vsub.f32 0.0, %v386
      %v391 = vsub.f32 0.0, %v387
      %v392 = vsub.f32 0.0, %v388
      %v393 = vsub.f32 0.0, %v389
      %v394 = vmul.f32 %v390, 1.442695
      %v395 = vpow.pop %v394
      %v396 = vmul.f32 %v391, 1.442695
      %v397 = vpow.pop %v396
      %v398 = vmul.f32 %v392, 1.442695
      %v399 = vpow.pop %v398
      %v400 = vmul.f32 %v393, 1.442695
      %v401 = vpow.pop %v400
      %v402 = vadd.f32 %v395, 1.0
      %v403 = vadd.f32 %v397, 1.0
      %v404 = vadd.f32 %v399, 1.0
      %v405 = vadd.f32 %v401, 1.0
      %v406 = vrcp.pop %v402
      %v407 = vmul.f32 1.0, %v406
      %v408 = vrcp.pop %v403
      %v409 = vmul.f32 1.0, %v408
      %v410 = vrcp.pop %v404
      %v411 = vmul.f32 1.0, %v410
      %v412 = vrcp.pop %v405
      %v413 = vmul.f32 1.0, %v412
      %v414 = vmul.f32 %v386, %v407
      %v415 = vmul.f32 %v387, %v409
      %v416 = vmul.f32 %v388, %v411
      %v417 = vmul.f32 %v389, %v413
      %v418 = vld [vmem:[%s345] sm:$0xf]
      %v419 = vld [vmem:[%s345 + $0x4] sm:$0xf]
      %v420 = vld [vmem:[%s345 + $0x8] sm:$0xf]
      %v421 = vld [vmem:[%s345 + $0xc] sm:$0xf]
      %v422 = vunpack.c.l.bf16 %v418
      %v423 = vunpack.c.l.bf16 %v419
      %v424 = vunpack.c.l.bf16 %v420
      %v425 = vunpack.c.l.bf16 %v421
      %v426 = vadd.f32 %v414, %v422
      %v427 = vadd.f32 %v415, %v423
      %v428 = vadd.f32 %v416, %v424
      %v429 = vadd.f32 %v417, %v425
      %430 = vst [vmem:[%s358] sm:$0xff] %v426
      %431 = vst [vmem:[%s358 + $0x8] sm:$0xff] %v427
      %432 = vst [vmem:[%s358 + $0x10] sm:$0xff] %v428
      %433 = vst [vmem:[%s358 + $0x18] sm:$0xff] %v429
      %s434 = smul.u32 4, %s21
      %p435 = scmp.lt.s32.totalorder %s20, 1
      %s436 = scalar_select %p435, %s20, 1
      %p437 = scmp.lt.s32.totalorder %s434, 7
      %s438 = scalar_select %p437, %s434, 7
      %p439 = scmp.lt.s32.totalorder %s22, 0
      %s440 = scalar_select %p439, %s22, 0
      %s441 = sadd.s32 %s440, %s438
      %s442 = smul.addr %s436, 8
      %s443 = sadd.s32 %s441, %s442
      %s444 = smul.addr %s443, 8
      %s445 = scalar_lea.vmem %s4, %s444
      // Predicated region
      $region37: #{downblock_forward.7} parent=35 // pred_check
        %p446 = pneg %p172
      $region38: #{downblock_forward.7} parent=35 // pred_check_branch
        %448 = sbr.rel (%p446) target = $region40
      $region39: #{downblock_forward.7} parent=35 // pred_region
        %s449 = smul.u32 4, %s21
      $region40: #{downblock_forward.7} parent=35 // pred_fallthru
        _
    $region36: #{downblock_forward.7} parent=5 // pred_fallthru
      _
    %p450 = scmp.le.s32.totalorder 2, %s10
    // Predicated region
    $region41: #{downblock_forward.7} parent=5 // pred_check
      %p451 = pneg %p450
    $region42: #{downblock_forward.7} parent=5 // pred_check_branch
      %453 = sbr.rel (%p451) target = $region44
    $region43: #{downblock_forward.7} parent=5 // pred_region
      %s454 = ssub.s32 %s10, 2
      // Predicated region
      $region45: #{downblock_forward.7} parent=43 // pred_check
        %p455 = pneg %p178
      $region46: #{downblock_forward.7} parent=43 // pred_check_branch
        %457 = sbr.rel (%p455) target = $region48
      $region47: #{downblock_forward.7} parent=43 // pred_region
        %s458 = smul.u32 4, %s24
        %p459 = scmp.lt.s32.totalorder %s23, 1
        %s460 = scalar_select %p459, %s23, 1
        %p461 = scmp.lt.s32.totalorder %s458, 7
        %s462 = scalar_select %p461, %s458, 7
        %p463 = scmp.lt.s32.totalorder %s25, 0
        %s464 = scalar_select %p463, %s25, 0
        %s465 = sadd.s32 %s464, %s462
        %s466 = smul.addr %s460, 8
        %s467 = sadd.s32 %s465, %s466
        %s468 = smul.addr %s467, 8
        %s469 = scalar_lea.vmem %s4, %s468
      $region48: #{downblock_forward.7} parent=43 // pred_fallthru
        _
    $region44: #{downblock_forward.7} parent=5 // pred_fallthru
      _
  $region6: #{downblock_forward.7} parent=0 // loop_footer
    %s14 = sadd.s32 1, %s10
  $region7: #{downblock_forward.7} parent=0 // loop_footer_branch
    %9 = sbr.rel target = $region3
  $region8: #{downblock_forward.7} parent=0 // loop_exit
    _

// kernel: downblock_forward.4
$region0: #{downblock_forward.4}
  #allocation0 [shape = 'u32[]', space=smem, size = 0x4, offset = 0x4, fixed_abs, tag = 'smem constant byte address 0x4 - core index']
  #allocation1 [shape = 'u32[144,128]{1,0:T(1,128)}', space=vmem, size = 0x12000, scoped, tag = 'internal scratch']
  #allocation2 [shape = 'bf16[4,5,9,4]{3,2,1,0:T(8,128)(2,1)}', space=vmem, size = 0x14000, scoped, tag = 'scratch operand']
  #allocation3 [shape = 'f32[32,128]{1,0:T(8,128)}', space=vmem, size = 0x4000, scoped, tag = 'scratch operand']
  %s0 = inlined_call_operand.vmem [shape: bf16[2,4,9,9,4], index: 0, kind: input, shape index: {}, may-alias: {0,1}]
  %s1 = inlined_call_operand.vmem [shape: bf16[2,4,9,9,4], index: 1, kind: input, shape index: {}, may-alias: {0,1}]
  %s2 = inlined_call_operand.vmem [shape: bf16[9,4,128], index: 2, kind: input, shape index: {}]
  %s3 = inlined_call_operand.vmem [shape: f32[1,128], index: 3, kind: input, shape index: {}]
  %s4 = inlined_call_operand.vmem [shape: bf16[2,8,8,128], index: 4, kind: output, shape index: {}]
  %s5 = sld [smem:[#allocation0]]
  $region152: #{downblock_forward.4} parent=0
    _
  %s7 = ssub.s32 1, %s5
  %s8 = scalar_select 0, %s7, %s5
  $region1: #{downblock_forward.4} parent=0
    #allocation4 [shape = 'u8[131072]{0}', space=vmem, size = 0x20000, scoped, tag = 'input window, operand 0']
    #allocation5 [shape = 'u8[32768]{0}', space=vmem, size = 0x8000, scoped, tag = 'input window, operand 1']
    loop: start=0, step=1, limit=6
    $region2: #{downblock_forward.4} parent=1 // loop_pre_header
      _
    $region3: #{downblock_forward.4} parent=1 // loop_header
      %s10 = sphi 0, %s14
      %p11 = scmp.ge.s32.totalorder %s10, 6
      %s17 = sphi 0, %s36
      %s18 = sphi 0, %s32
      %s19 = sphi 0, %s28
      %s20 = sphi 0, %s17
      %s21 = sphi 0, %s18
      %s22 = sphi 0, %s19
      %s23 = sphi 0, %s20
      %s24 = sphi 0, %s21
      %s25 = sphi 0, %s22
      %s41 = sphi 0, %s43
      %s44 = sphi 0, %s41
      %s45 = sphi 0, %s44
      %s61 = sphi 0, %s45
      %s73 = sphi 0, %s75
      %s76 = sphi 0, %s73
      %s77 = sphi 0, %s76
      %s93 = sphi 0, %s77
      %s99 = sphi 0, %s101
      %s102 = sphi 0, %s99
      %s103 = sphi 0, %s102
      %s119 = sphi 0, %s103
      %s125 = sphi 0, %s127
      %s128 = sphi 0, %s125
      %s129 = sphi 0, %s128
      %s145 = sphi 0, %s129
      %s155 = sphi 0, %s157
      %s158 = sphi 0, %s155
      %s159 = sphi 0, %s158
      %s175 = sphi 0, %s159
    $region4: #{downblock_forward.4} parent=1 // loop_header_branch
      %13 = sbr.rel (%p11) target = $region8
    $region5: #{downblock_forward.4} parent=1 // loop_body
      %s15 = ssub.s32 %s10, 1
      %s16 = ssub.s32 %s10, 2
      %s26 = sadd.s32 1, %s19
      %p27 = scmp.ge.s32.totalorder %s26, 1
      %s28 = scalar_select %p27, 0, %s26
      %s29 = sadd.s32 1, %s18
      %s30 = scalar_select %p27, %s29, %s18
      %p31 = scmp.ge.s32.totalorder %s30, 2
      %s32 = scalar_select %p31, 0, %s30
      %s33 = sadd.s32 1, %s17
      %s34 = scalar_select %p31, %s33, %s17
      %p35 = scmp.ge.s32.totalorder %s34, 2
      %s36 = scalar_select %p35, 0, %s34
      %s37 = ssub.s32 %s17, %s36
      %s38 = ssub.s32 %s18, %s32
      %s39 = sor.u32 %s37, %s38
      %p40 = scmp.eq.s32.totalorder %s39, 0
      %s42 = sadd.s32 %s41, 1
      %s43 = scalar_select %p40, %s41, %s42
      %p46 = pneg %p40
      %p47 = scmp.eq.s32.totalorder %s10, 3
      %p48 = por %p46, %p47
      %p49 = scmp.ne.s32.totalorder %s41, %s44
      %p50 = scmp.eq.s32.totalorder %s10, 0
      %p51 = por %p49, %p50
      %p52 = scmp.ne.s32.totalorder %s41, %s44
      %p53 = scmp.eq.s32.totalorder %s15, 3
      %p54 = por %p52, %p53
      %p55 = scmp.ne.s32.totalorder %s44, %s45
      %p56 = scmp.eq.s32.totalorder %s15, 0
      %p57 = por %p55, %p56
      %p58 = scmp.ne.s32.totalorder %s44, %s45
      %p59 = scmp.eq.s32.totalorder %s16, 3
      %p60 = por %p58, %p59
      %p62 = scmp.ne.s32.totalorder %s45, %s61
      %p63 = scmp.eq.s32.totalorder %s16, 0
      %p64 = por %p62, %p63
      %s65 = smul.u32 %s18, 4
      %s66 = sadd.s32 %s65, 4
      %s67 = smul.u32 %s32, 4
      %s68 = sadd.s32 %s67, 4
      %s69 = ssub.s32 %s17, %s36
      %s70 = ssub.s32 %s66, %s68
      %s71 = sor.u32 %s69, %s70
      %p72 = scmp.eq.s32.totalorder %s71, 0
      %s74 = sadd.s32 %s73, 1
      %s75 = scalar_select %p72, %s73, %s74
      %p78 = pneg %p72
      %p79 = scmp.eq.s32.totalorder %s10, 3
      %p80 = por %p78, %p79
      %p81 = scmp.ne.s32.totalorder %s73, %s76
      %p82 = scmp.eq.s32.totalorder %s10, 0
      %p83 = por %p81, %p82
      %p84 = scmp.ne.s32.totalorder %s73, %s76
      %p85 = scmp.eq.s32.totalorder %s15, 3
      %p86 = por %p84, %p85
      %p87 = scmp.ne.s32.totalorder %s76, %s77
      %p88 = scmp.eq.s32.totalorder %s15, 0
      %p89 = por %p87, %p88
      %p90 = scmp.ne.s32.totalorder %s76, %s77
      %p91 = scmp.eq.s32.totalorder %s16, 3
      %p92 = por %p90, %p91
      %p94 = scmp.ne.s32.totalorder %s77, %s93
      %p95 = scmp.eq.s32.totalorder %s16, 0
      %p96 = por %p94, %p95
      %s97 = ssub.s32 %s19, %s28
      %p98 = scmp.eq.s32.totalorder %s97, 0
      %s100 = sadd.s32 %s99, 1
      %s101 = scalar_select %p98, %s99, %s100
      %p104 = pneg %p98
      %p105 = scmp.eq.s32.totalorder %s10, 3
      %p106 = por %p104, %p105
      %p107 = scmp.ne.s32.totalorder %s99, %s102
      %p108 = scmp.eq.s32.totalorder %s10, 0
      %p109 = por %p107, %p108
      %p110 = scmp.ne.s32.totalorder %s99, %s102
      %p111 = scmp.eq.s32.totalorder %s15, 3
      %p112 = por %p110, %p111
      %p113 = scmp.ne.s32.totalorder %s102, %s103
      %p114 = scmp.eq.s32.totalorder %s15, 0
      %p115 = por %p113, %p114
      %p116 = scmp.ne.s32.totalorder %s102, %s103
      %p117 = scmp.eq.s32.totalorder %s16, 3
      %p118 = por %p116, %p117
      %p120 = scmp.ne.s32.totalorder %s103, %s119
      %p121 = scmp.eq.s32.totalorder %s16, 0
      %p122 = por %p120, %p121
      %s123 = ssub.s32 %s19, %s28
      %p124 = scmp.eq.s32.totalorder %s123, 0
      %s126 = sadd.s32 %s125, 1
      %s127 = scalar_select %p124, %s125, %s126
      %p130 = pneg %p124
      %p131 = scmp.eq.s32.totalorder %s10, 3
      %p132 = por %p130, %p131
      %p133 = scmp.ne.s32.totalorder %s125, %s128
      %p134 = scmp.eq.s32.totalorder %s10, 0
      %p135 = por %p133, %p134
      %p136 = scmp.ne.s32.totalorder %s125, %s128
      %p137 = scmp.eq.s32.totalorder %s15, 3
      %p138 = por %p136, %p137
      %p139 = scmp.ne.s32.totalorder %s128, %s129
      %p140 = scmp.eq.s32.totalorder %s15, 0
      %p141 = por %p139, %p140
      %p142 = scmp.ne.s32.totalorder %s128, %s129
      %p143 = scmp.eq.s32.totalorder %s16, 3
      %p144 = por %p142, %p143
      %p146 = scmp.ne.s32.totalorder %s129, %s145
      %p147 = scmp.eq.s32.totalorder %s16, 0
      %p148 = por %p146, %p147
      %s149 = ssub.s32 %s17, %s36
      %s150 = ssub.s32 %s18, %s32
      %s151 = sor.u32 %s149, %s150
      %s152 = ssub.s32 %s19, %s28
      %s153 = sor.u32 %s151, %s152
      %p154 = scmp.eq.s32.totalorder %s153, 0
      %s156 = sadd.s32 %s155, 1
      %s157 = scalar_select %p154, %s155, %s156
      %p160 = pneg %p154
      %p161 = scmp.eq.s32.totalorder %s10, 3
      %p162 = por %p160, %p161
      %p163 = scmp.ne.s32.totalorder %s155, %s158
      %p164 = scmp.eq.s32.totalorder %s10, 0
      %p165 = por %p163, %p164
      %p166 = scmp.ne.s32.totalorder %s155, %s158
      %p167 = scmp.eq.s32.totalorder %s15, 3
      %p168 = por %p166, %p167
      %p169 = scmp.ne.s32.totalorder %s158, %s159
      %p170 = scmp.eq.s32.totalorder %s15, 0
      %p171 = por %p169, %p170
      %p172 = scmp.ne.s32.totalorder %s158, %s159
      %p173 = scmp.eq.s32.totalorder %s16, 3
      %p174 = por %p172, %p173
      %p176 = scmp.ne.s32.totalorder %s159, %s175
      %p177 = scmp.eq.s32.totalorder %s16, 0
      %p178 = por %p176, %p177
      %p179 = scmp.le.s32.totalorder 1, %s10
      %p180 = scmp.lt.s32.totalorder %s10, 5
      %p181 = pnand %p179, %p180
      %p182 = pneg %p181
      // Predicated region
      $region9: #{downblock_forward.4} parent=5 // pred_check
        _
      $region10: #{downblock_forward.4} parent=5 // pred_check_branch
        %184 = sbr.rel (%p181) target = $region12
      $region11: #{downblock_forward.4} parent=5 // pred_region
        %s185 = ssub.s32 %s10, 1
        // Predicated region
        $region13: #{downblock_forward.4} parent=11 // pred_check
          %p186 = pneg %p115
        $region14: #{downblock_forward.4} parent=11 // pred_check_branch
          %188 = sbr.rel (%p186) target = $region16
        $region15: #{downblock_forward.4} parent=11 // pred_region
          %p189 = scmp.lt.s32.totalorder %s22, 0
          %s190 = scalar_select %p189, %s22, 0
          %s191 = smul.addr %s190, 2
          %s192 = scalar_lea.vmem %s2, %s191
        $region16: #{downblock_forward.4} parent=11 // pred_fallthru
          _
        // Predicated region
        $region17: #{downblock_forward.4} parent=11 // pred_check
          %p193 = pneg %p141
        $region18: #{downblock_forward.4} parent=11 // pred_check_branch
          %195 = sbr.rel (%p193) target = $region20
        $region19: #{downblock_forward.4} parent=11 // pred_region
          %p196 = scmp.lt.s32.totalorder %s22, 0
          %s197 = scalar_select %p196, %s22, 0
          %s198 = scalar_lea.vmem %s3, %s197
        $region20: #{downblock_forward.4} parent=11 // pred_fallthru
          _
      $region12: #{downblock_forward.4} parent=5 // pred_fallthru
        _
      %p199 = scmp.lt.s32.totalorder %s10, 4
      // Predicated region
      $region21: #{downblock_forward.4} parent=5 // pred_check
        %p200 = pneg %p199
      $region22: #{downblock_forward.4} parent=5 // pred_check_branch
        %202 = sbr.rel (%p200) target = $region24
      $region23: #{downblock_forward.4} parent=5 // pred_region
        // Predicated region
        $region25: #{downblock_forward.4} parent=23 // pred_check
          %p203 = pneg %p51
        $region26: #{downblock_forward.4} parent=23 // pred_check_branch
          %205 = sbr.rel (%p203) target = $region28
        $region27: #{downblock_forward.4} parent=23 // pred_region
          %s206 = sand.u32 %s41, 1
          %s207 = sand.u32 %s41, 1
          %s208 = smul.addr %s207, 128
          %s209 = scalar_lea.vmem [#allocation4], %s208
          %s210 = smul.u32 4, %s18
          %s211 = ssub.s32 9, %s210
          %p212 = scmp.lt.s32.totalorder %s211, 4
          %s213 = scalar_select %p212, %s211, 4
          %s214 = smul.u32 256, %s213
          %s215 = smul.u32 %s214, 2
          %p216 = scmp.ne.s32.totalorder 0, %s215
          %s217 = smul.addr %s210, 2
          %s218 = smul.addr %s17, 72
          %s219 = sadd.s32 %s217, %s218
          %s220 = smul.addr %s219, 4
          %s221 = scalar_lea.vmem %s0, %s220
          %s222 = smul.u32 %s213, 2
          // Predicated region
          $region29: #{downblock_forward.4} parent=27 // pred_check
            %p223 = pneg %p216
          $region30: #{downblock_forward.4} parent=27 // pred_check_branch
            %225 = sbr.rel (%p223) target = $region32
          $region31: #{downblock_forward.4} parent=27 // pred_region
            // Predicated region
            $region33: #{downblock_forward.4} parent=31 // pred_check
              _
            $region34: #{downblock_forward.4} parent=31 // pred_check_branch
              %227 = sbr.rel target = $region36
            $region35: #{downblock_forward.4} parent=31 // pred_region
              // Predicated region
              $region55: #{downblock_forward.4} parent=35 // pred_check
                _
              $region56: #{downblock_forward.4} parent=35 // pred_check_branch
                %344 = sbr.rel (0) target = $region58
              $region57: #{downblock_forward.4} parent=35 // pred_region
                %s345 = sshrl.u32 %s222, 3
                // While loop
                $region59: #{downblock_forward.4} parent=57 // loop_pre_header
                  _
                $region60: #{downblock_forward.4} parent=57 // loop_header
                  %s347 = sphi 0, %s349
                  %p348 = scmp.ge.s32.totalorder %s347, %s345
                  %s352 = sphi 0, %s357
                  %s353 = sphi %s221, %s360
                  %s354 = sphi %s209, %s361
                $region61: #{downblock_forward.4} parent=57 // loop_header_branch
                  %351 = sbr.rel (%p348) target = $region65
                $region62: #{downblock_forward.4} parent=57 // loop_body
                  %s355 = sadd.s32 1, %s352
                  %p356 = scmp.ge.s32.totalorder %s355, %s345
                  %s357 = scalar_select %p356, 0, %s355
                  %s358 = smul.u32 %s357, 32
                  %s359 = smul.u32 %s357, 32
                  %s360 = scalar_lea.vmem %s221, %s358
                  %s361 = scalar_lea.vmem %s209, %s359 [#allocation4]
                $region63: #{downblock_forward.4} parent=57 // loop_footer
                  %s349 = sadd.s32 %s347, 1
                $region64: #{downblock_forward.4} parent=57 // loop_footer_branch
                  %346 = sbr.rel target = $region60
                $region65: #{downblock_forward.4} parent=57 // loop_exit
                  _
                %s362 = sshrl.u32 %s222, 3
                %s363 = sand.u32 %s222, 7
                %s364 = smul.u32 %s362, 8
                %s365 = smul.u32 4, %s364
                %s366 = scalar_lea.vmem %s221, %s365
                %s367 = smul.u32 4, %s364
                %s368 = scalar_lea.vmem %s209, %s367 [#allocation4]
                // While loop
                $region66: #{downblock_forward.4} parent=57 // loop_pre_header
                  _
                $region67: #{downblock_forward.4} parent=57 // loop_header
                  %s370 = sphi 0, %s372
                  %p371 = scmp.ge.s32.totalorder %s370, %s363
                  %s375 = sphi 0, %s380
                  %s376 = sphi %s366, %s383
                  %s377 = sphi %s368, %s384
                $region68: #{downblock_forward.4} parent=57 // loop_header_branch
                  %374 = sbr.rel (%p371) target = $region72
                $region69: #{downblock_forward.4} parent=57 // loop_body
                  %s378 = sadd.s32 1, %s375
                  %p379 = scmp.ge.s32.totalorder %s378, %s363
                  %s380 = scalar_select %p379, 0, %s378
                  %s381 = smul.u32 %s380, 4
                  %s382 = smul.u32 %s380, 4
                  %s383 = scalar_lea.vmem %s366, %s381
                  %s384 = scalar_lea.vmem %s368, %s382 [#allocation4]
                $region70: #{downblock_forward.4} parent=57 // loop_footer
                  %s372 = sadd.s32 %s370, 1
                $region71: #{downblock_forward.4} parent=57 // loop_footer_branch
                  %369 = sbr.rel target = $region67
                $region72: #{downblock_forward.4} parent=57 // loop_exit
                  _
                %s386 = sshrl.u32 %s222, 3
                // While loop
                $region73: #{downblock_forward.4} parent=57 // loop_pre_header
                  _
                $region74: #{downblock_forward.4} parent=57 // loop_header
                  %s388 = sphi 0, %s390
                  %p389 = scmp.ge.s32.totalorder %s388, %s386
                  %s393 = sphi 0, %s462
                  %s394 = sphi %s221, %s465
                  %s395 = sphi %s209, %s466
                $region75: #{downblock_forward.4} parent=57 // loop_header_branch
                  %392 = sbr.rel (%p389) target = $region79
                $region76: #{downblock_forward.4} parent=57 // loop_body
                  %v396 = vld [vmem:[%s394] sm:$0xf]
                  %397 = vst [vmem:[%s395] sm:$0xf] %v396
                  %v398 = vld [vmem:[%s394 + $0x4] sm:$0xf]
                  %399 = vst [vmem:[%s395 + $0x4] sm:$0xf] %v398
                  %v400 = vld [vmem:[%s394 + $0x8] sm:$0xf]
                  %401 = vst [vmem:[%s395 + $0x8] sm:$0xf] %v400
                  %v402 = vld [vmem:[%s394 + $0xc] sm:$0xf]
                  %403 = vst [vmem:[%s395 + $0xc] sm:$0xf] %v402
                  %v404 = vld [vmem:[%s394 + $0x10] sm:$0xf]
                  %405 = vst [vmem:[%s395 + $0x10] sm:$0xf] %v404
                  %v406 = vld [vmem:[%s394 + $0x14] sm:$0xf]
                  %407 = vst [vmem:[%s395 + $0x14] sm:$0xf] %v406
                  %v408 = vld [vmem:[%s394 + $0x18] sm:$0xf]
                  %409 = vst [vmem:[%s395 + $0x18] sm:$0xf] %v408
                  %v410 = vld [vmem:[%s394 + $0x1c] sm:$0xf]
                  %411 = vst [vmem:[%s395 + $0x1c] sm:$0xf] %v410
                  %v412 = vld [vmem:[%s394 + $0x48] sm:$0xf]
                  %413 = vst [vmem:[%s395 + $0x20] sm:$0xf] %v412
                  %v414 = vld [vmem:[%s394 + $0x4c] sm:$0xf]
                  %415 = vst [vmem:[%s395 + $0x24] sm:$0xf] %v414
                  %v416 = vld [vmem:[%s394 + $0x50] sm:$0xf]
                  %417 = vst [vmem:[%s395 + $0x28] sm:$0xf] %v416
                  %v418 = vld [vmem:[%s394 + $0x54] sm:$0xf]
                  %419 = vst [vmem:[%s395 + $0x2c] sm:$0xf] %v418
                  %v420 = vld [vmem:[%s394 + $0x58] sm:$0xf]
                  %421 = vst [vmem:[%s395 + $0x30] sm:$0xf] %v420
                  %v422 = vld [vmem:[%s394 + $0x5c] sm:$0xf]
                  %423 = vst [vmem:[%s395 + $0x34] sm:$0xf] %v422
                  %v424 = vld [vmem:[%s394 + $0x60] sm:$0xf]
                  %425 = vst [vmem:[%s395 + $0x38] sm:$0xf] %v424
                  %v426 = vld [vmem:[%s394 + $0x64] sm:$0xf]
                  %427 = vst [vmem:[%s395 + $0x3c] sm:$0xf] %v426
                  %v428 = vld [vmem:[%s394 + $0x90] sm:$0xf]
                  %429 = vst [vmem:[%s395 + $0x40] sm:$0xf] %v428
                  %v430 = vld [vmem:[%s394 + $0x94] sm:$0xf]
                  %431 = vst [vmem:[%s395 + $0x44] sm:$0xf] %v430
                  %v432 = vld [vmem:[%s394 + $0x98] sm:$0xf]
                  %433 = vst [vmem:[%s395 + $0x48] sm:$0xf] %v432
                  %v434 = vld [vmem:[%s394 + $0x9c] sm:$0xf]
                  %435 = vst [vmem:[%s395 + $0x4c] sm:$0xf] %v434
                  %v436 = vld [vmem:[%s394 + $0xa0] sm:$0xf]
                  %437 = vst [vmem:[%s395 + $0x50] sm:$0xf] %v436
                  %v438 = vld [vmem:[%s394 + $0xa4] sm:$0xf]
                  %439 = vst [vmem:[%s395 + $0x54] sm:$0xf] %v438
                  %v440 = vld [vmem:[%s394 + $0xa8] sm:$0xf]
                  %441 = vst [vmem:[%s395 + $0x58] sm:$0xf] %v440
                  %v442 = vld [vmem:[%s394 + $0xac] sm:$0xf]
                  %443 = vst [vmem:[%s395 + $0x5c] sm:$0xf] %v442
                  %v444 = vld [vmem:[%s394 + $0xd8] sm:$0xf]
                  %445 = vst [vmem:[%s395 + $0x60] sm:$0xf] %v444
                  %v446 = vld [vmem:[%s394 + $0xdc] sm:$0xf]
                  %447 = vst [vmem:[%s395 + $0x64] sm:$0xf] %v446
                  %v448 = vld [vmem:[%s394 + $0xe0] sm:$0xf]
                  %449 = vst [vmem:[%s395 + $0x68] sm:$0xf] %v448
                  %v450 = vld [vmem:[%s394 + $0xe4] sm:$0xf]
                  %451 = vst [vmem:[%s395 + $0x6c] sm:$0xf] %v450
                  %v452 = vld [vmem:[%s394 + $0xe8] sm:$0xf]
                  %453 = vst [vmem:[%s395 + $0x70] sm:$0xf] %v452
                  %v454 = vld [vmem:[%s394 + $0xec] sm:$0xf]
                  %455 = vst [vmem:[%s395 + $0x74] sm:$0xf] %v454
                  %v456 = vld [vmem:[%s394 + $0xf0] sm:$0xf]
                  %457 = vst [vmem:[%s395 + $0x78] sm:$0xf] %v456
                  %v458 = vld [vmem:[%s394 + $0xf4] sm:$0xf]
                  %459 = vst [vmem:[%s395 + $0x7c] sm:$0xf] %v458
                  %s460 = sadd.s32 1, %s393
                  %p461 = scmp.ge.s32.totalorder %s460, %s386
                  %s462 = scalar_select %p461, 0, %s460
                  %s463 = smul.u32 %s462, 32
                  %s464 = smul.u32 %s462, 32
                  %s465 = scalar_lea.vmem %s221, %s463
                  %s466 = scalar_lea.vmem %s209, %s464 [#allocation4]
                $region77: #{downblock_forward.4} parent=57 // loop_footer
                  %s390 = sadd.s32 %s388, 1
                $region78: #{downblock_forward.4} parent=57 // loop_footer_branch
                  %387 = sbr.rel target = $region74
                $region79: #{downblock_forward.4} parent=57 // loop_exit
                  _
                %s467 = sshrl.u32 %s222, 3
                %s468 = sand.u32 %s222, 7
                %s469 = smul.u32 %s467, 8
                %s470 = smul.u32 4, %s469
                %s471 = scalar_lea.vmem %s221, %s470
                %s472 = smul.u32 4, %s469
                %s473 = scalar_lea.vmem %s209, %s472 [#allocation4]
                // While loop
                $region80: #{downblock_forward.4} parent=57 // loop_pre_header
                  _
                $region81: #{downblock_forward.4} parent=57 // loop_header
                  %s475 = sphi 0, %s477
                  %p476 = scmp.ge.s32.totalorder %s475, %s468
                  %s480 = sphi 0, %s493
                  %s481 = sphi %s471, %s496
                  %s482 = sphi %s473, %s497
                $region82: #{downblock_forward.4} parent=57 // loop_header_branch
                  %479 = sbr.rel (%p476) target = $region86
                $region83: #{downblock_forward.4} parent=57 // loop_body
                  %v483 = vld [vmem:[%s481] sm:$0xf]
                  %484 = vst [vmem:[%s482] sm:$0xf] %v483
                  %v485 = vld [vmem:[%s481 + $0x48] sm:$0xf]
                  %486 = vst [vmem:[%s482 + $0x20] sm:$0xf] %v485
                  %v487 = vld [vmem:[%s481 + $0x90] sm:$0xf]
                  %488 = vst [vmem:[%s482 + $0x40] sm:$0xf] %v487
                  %v489 = vld [vmem:[%s481 + $0xd8] sm:$0xf]
                  %490 = vst [vmem:[%s482 + $0x60] sm:$0xf] %v489
                  %s491 = sadd.s32 1, %s480
                  %p492 = scmp.ge.s32.totalorder %s491, %s468
                  %s493 = scalar_select %p492, 0, %s491
                  %s494 = smul.u32 %s493, 4
                  %s495 = smul.u32 %s493, 4
                  %s496 = scalar_lea.vmem %s471, %s494
                  %s497 = scalar_lea.vmem %s473, %s495 [#allocation4]
                $region84: #{downblock_forward.4} parent=57 // loop_footer
                  %s477 = sadd.s32 %s475, 1
                $region85: #{downblock_forward.4} parent=57 // loop_footer_branch
                  %474 = sbr.rel target = $region81
                $region86: #{downblock_forward.4} parent=57 // loop_exit
                  _
              $region58: #{downblock_forward.4} parent=35 // pred_fallthru
                _
            $region36: #{downblock_forward.4} parent=31 // pred_fallthru
              _
            // Predicated region
            $region37: #{downblock_forward.4} parent=31 // pred_check
              _
            $region38: #{downblock_forward.4} parent=31 // pred_check_branch
              %229 = sbr.rel (0) target = $region40
            $region39: #{downblock_forward.4} parent=31 // pred_region
              %s231 = sshrl.u32 %s222, 3
              // While loop
              $region41: #{downblock_forward.4} parent=39 // loop_pre_header
                _
              $region42: #{downblock_forward.4} parent=39 // loop_header
                %s233 = sphi 0, %s235
                %p234 = scmp.ge.s32.totalorder %s233, %s231
                %s238 = sphi 0, %s307
                %s239 = sphi %s221, %s310
                %s240 = sphi %s209, %s311
              $region43: #{downblock_forward.4} parent=39 // loop_header_branch
                %237 = sbr.rel (%p234) target = $region47
              $region44: #{downblock_forward.4} parent=39 // loop_body
                %v241 = vld [vmem:[%s239] sm:$0xf]
                %242 = vst [vmem:[%s240] sm:$0xf] %v241
                %v243 = vld [vmem:[%s239 + $0x4] sm:$0xf]
                %244 = vst [vmem:[%s240 + $0x4] sm:$0xf] %v243
                %v245 = vld [vmem:[%s239 + $0x8] sm:$0xf]
                %246 = vst [vmem:[%s240 + $0x8] sm:$0xf] %v245
                %v247 = vld [vmem:[%s239 + $0xc] sm:$0xf]
                %248 = vst [vmem:[%s240 + $0xc] sm:$0xf] %v247
                %v249 = vld [vmem:[%s239 + $0x10] sm:$0xf]
                %250 = vst [vmem:[%s240 + $0x10] sm:$0xf] %v249
                %v251 = vld [vmem:[%s239 + $0x14] sm:$0xf]
                %252 = vst [vmem:[%s240 + $0x14] sm:$0xf] %v251
                %v253 = vld [vmem:[%s239 + $0x18] sm:$0xf]
                %254 = vst [vmem:[%s240 + $0x18] sm:$0xf] %v253
                %v255 = vld [vmem:[%s239 + $0x1c] sm:$0xf]
                %256 = vst [vmem:[%s240 + $0x1c] sm:$0xf] %v255
                %v257 = vld [vmem:[%s239 + $0x48] sm:$0xf]
                %258 = vst [vmem:[%s240 + $0x20] sm:$0xf] %v257
                %v259 = vld [vmem:[%s239 + $0x4c] sm:$0xf]
                %260 = vst [vmem:[%s240 + $0x24] sm:$0xf] %v259
                %v261 = vld [vmem:[%s239 + $0x50] sm:$0xf]
                %262 = vst [vmem:[%s240 + $0x28] sm:$0xf] %v261
                %v263 = vld [vmem:[%s239 + $0x54] sm:$0xf]
                %264 = vst [vmem:[%s240 + $0x2c] sm:$0xf] %v263
                %v265 = vld [vmem:[%s239 + $0x58] sm:$0xf]
                %266 = vst [vmem:[%s240 + $0x30] sm:$0xf] %v265
                %v267 = vld [vmem:[%s239 + $0x5c] sm:$0xf]
                %268 = vst [vmem:[%s240 + $0x34] sm:$0xf] %v267
                %v269 = vld [vmem:[%s239 + $0x60] sm:$0xf]
                %270 = vst [vmem:[%s240 + $0x38] sm:$0xf] %v269
                %v271 = vld [vmem:[%s239 + $0x64] sm:$0xf]
                %272 = vst [vmem:[%s240 + $0x3c] sm:$0xf] %v271
                %v273 = vld [vmem:[%s239 + $0x90] sm:$0xf]
                %274 = vst [vmem:[%s240 + $0x40] sm:$0xf] %v273
                %v275 = vld [vmem:[%s239 + $0x94] sm:$0xf]
                %276 = vst [vmem:[%s240 + $0x44] sm:$0xf] %v275
                %v277 = vld [vmem:[%s239 + $0x98] sm:$0xf]
                %278 = vst [vmem:[%s240 + $0x48] sm:$0xf] %v277
                %v279 = vld [vmem:[%s239 + $0x9c] sm:$0xf]
                %280 = vst [vmem:[%s240 + $0x4c] sm:$0xf] %v279
                %v281 = vld [vmem:[%s239 + $0xa0] sm:$0xf]
                %282 = vst [vmem:[%s240 + $0x50] sm:$0xf] %v281
                %v283 = vld [vmem:[%s239 + $0xa4] sm:$0xf]
                %284 = vst [vmem:[%s240 + $0x54] sm:$0xf] %v283
                %v285 = vld [vmem:[%s239 + $0xa8] sm:$0xf]
                %286 = vst [vmem:[%s240 + $0x58] sm:$0xf] %v285
                %v287 = vld [vmem:[%s239 + $0xac] sm:$0xf]
                %288 = vst [vmem:[%s240 + $0x5c] sm:$0xf] %v287
                %v289 = vld [vmem:[%s239 + $0xd8] sm:$0xf]
                %290 = vst [vmem:[%s240 + $0x60] sm:$0xf] %v289
                %v291 = vld [vmem:[%s239 + $0xdc] sm:$0xf]
                %292 = vst [vmem:[%s240 + $0x64] sm:$0xf] %v291
                %v293 = vld [vmem:[%s239 + $0xe0] sm:$0xf]
                %294 = vst [vmem:[%s240 + $0x68] sm:$0xf] %v293
                %v295 = vld [vmem:[%s239 + $0xe4] sm:$0xf]
                %296 = vst [vmem:[%s240 + $0x6c] sm:$0xf] %v295
                %v297 = vld [vmem:[%s239 + $0xe8] sm:$0xf]
                %298 = vst [vmem:[%s240 + $0x70] sm:$0xf] %v297
                %v299 = vld [vmem:[%s239 + $0xec] sm:$0xf]
                %300 = vst [vmem:[%s240 + $0x74] sm:$0xf] %v299
                %v301 = vld [vmem:[%s239 + $0xf0] sm:$0xf]
                %302 = vst [vmem:[%s240 + $0x78] sm:$0xf] %v301
                %v303 = vld [vmem:[%s239 + $0xf4] sm:$0xf]
                %304 = vst [vmem:[%s240 + $0x7c] sm:$0xf] %v303
                %s305 = sadd.s32 1, %s238
                %p306 = scmp.ge.s32.totalorder %s305, %s231
                %s307 = scalar_select %p306, 0, %s305
                %s308 = smul.u32 %s307, 32
                %s309 = smul.u32 %s307, 32
                %s310 = scalar_lea.vmem %s221, %s308
                %s311 = scalar_lea.vmem %s209, %s309 [#allocation4]
              $region45: #{downblock_forward.4} parent=39 // loop_footer
                %s235 = sadd.s32 %s233, 1
              $region46: #{downblock_forward.4} parent=39 // loop_footer_branch
                %232 = sbr.rel target = $region42
              $region47: #{downblock_forward.4} parent=39 // loop_exit
                _
              %s312 = sshrl.u32 %s222, 3
              %s313 = sand.u32 %s222, 7
              %s314 = smul.u32 %s312, 8
              %s315 = smul.u32 4, %s314
              %s316 = scalar_lea.vmem %s221, %s315
              %s317 = smul.u32 4, %s314
              %s318 = scalar_lea.vmem %s209, %s317 [#allocation4]
              // While loop
              $region48: #{downblock_forward.4} parent=39 // loop_pre_header
                _
              $region49: #{downblock_forward.4} parent=39 // loop_header
                %s320 = sphi 0, %s322
                %p321 = scmp.ge.s32.totalorder %s320, %s313
                %s325 = sphi 0, %s338
                %s326 = sphi %s316, %s341
                %s327 = sphi %s318, %s342
              $region50: #{downblock_forward.4} parent=39 // loop_header_branch
                %324 = sbr.rel (%p321) target = $region54
              $region51: #{downblock_forward.4} parent=39 // loop_body
                %v328 = vld [vmem:[%s326] sm:$0xf]
                %329 = vst [vmem:[%s327] sm:$0xf] %v328
                %v330 = vld [vmem:[%s326 + $0x48] sm:$0xf]
                %331 = vst [vmem:[%s327 + $0x20] sm:$0xf] %v330
                %v332 = vld [vmem:[%s326 + $0x90] sm:$0xf]
                %333 = vst [vmem:[%s327 + $0x40] sm:$0xf] %v332
                %v334 = vld [vmem:[%s326 + $0xd8] sm:$0xf]
                %335 = vst [vmem:[%s327 + $0x60] sm:$0xf] %v334
                %s336 = sadd.s32 1, %s325
                %p337 = scmp.ge.s32.totalorder %s336, %s313
                %s338 = scalar_select %p337, 0, %s336
                %s339 = smul.u32 %s338, 4
                %s340 = smul.u32 %s338, 4
                %s341 = scalar_lea.vmem %s316, %s339
                %s342 = scalar_lea.vmem %s318, %s340 [#allocation4]
              $region52: #{downblock_forward.4} parent=39 // loop_footer
                %s322 = sadd.s32 %s320, 1
              $region53: #{downblock_forward.4} parent=39 // loop_footer_branch
                %319 = sbr.rel target = $region49
              $region54: #{downblock_forward.4} parent=39 // loop_exit
                _
            $region40: #{downblock_forward.4} parent=31 // pred_fallthru
              _
          $region32: #{downblock_forward.4} parent=27 // pred_fallthru
            _
          %498 = vnop
        $region28: #{downblock_forward.4} parent=23 // pred_fallthru
          _
        // Predicated region
        $region87: #{downblock_forward.4} parent=23 // pred_check
          %p499 = pneg %p83
        $region88: #{downblock_forward.4} parent=23 // pred_check_branch
          %501 = sbr.rel (%p499) target = $region90
        $region89: #{downblock_forward.4} parent=23 // pred_region
          %s502 = sand.u32 %s73, 1
          %s503 = sand.u32 %s73, 1
          %s504 = smul.addr %s503, 32
          %s505 = scalar_lea.vmem [#allocation5], %s504
          %s506 = smul.u32 %s18, 4
          %s507 = sadd.s32 %s506, 4
          %s508 = smul.addr %s507, 2
          %s509 = smul.addr %s17, 72
          %s510 = sadd.s32 %s508, %s509
          %s511 = smul.addr %s510, 4
          %s512 = scalar_lea.vmem %s1, %s511
          // Predicated region
          $region91: #{downblock_forward.4} parent=89 // pred_check
            _
          $region92: #{downblock_forward.4} parent=89 // pred_check_branch
            %514 = sbr.rel (0) target = $region94
          $region93: #{downblock_forward.4} parent=89 // pred_region
            // Predicated region
            $region95: #{downblock_forward.4} parent=93 // pred_check
              _
            $region96: #{downblock_forward.4} parent=93 // pred_check_branch
              %516 = sbr.rel target = $region98
            $region97: #{downblock_forward.4} parent=93 // pred_region
              // Predicated region
              $region110: #{downblock_forward.4} parent=97 // pred_check
                _
              $region111: #{downblock_forward.4} parent=97 // pred_check_branch
                %545 = sbr.rel (0) target = $region113
              $region112: #{downblock_forward.4} parent=97 // pred_region
                loop: start=0, step=1, limit=1
                $region114: #{downblock_forward.4} parent=112 // loop_pre_header
                  _
                $region115: #{downblock_forward.4} parent=112 // loop_header
                  %s547 = sphi 0, %s551
                  %p548 = scmp.ge.s32.totalorder %s547, 1
                  %s552 = sphi %s512, %s512
                  %s553 = sphi %s505, %s505
                $region116: #{downblock_forward.4} parent=112 // loop_header_branch
                  %550 = sbr.rel (%p548) target = $region120
                $region117: #{downblock_forward.4} parent=112 // loop_body
                  _
                $region118: #{downblock_forward.4} parent=112 // loop_footer
                  %s551 = sadd.s32 1, %s547
                $region119: #{downblock_forward.4} parent=112 // loop_footer_branch
                  %546 = sbr.rel target = $region115
                $region120: #{downblock_forward.4} parent=112 // loop_exit
                  _
                loop: start=0, step=1, limit=1
                $region121: #{downblock_forward.4} parent=112 // loop_pre_header
                  _
                $region122: #{downblock_forward.4} parent=112 // loop_header
                  %s556 = sphi 0, %s560
                  %p557 = scmp.ge.s32.totalorder %s556, 1
                  %s561 = sphi %s512, %s512
                  %s562 = sphi %s505, %s505
                $region123: #{downblock_forward.4} parent=112 // loop_header_branch
                  %559 = sbr.rel (%p557) target = $region127
                $region124: #{downblock_forward.4} parent=112 // loop_body
                  %v563 = vld [vmem:[%s561] sm:$0xf]
                  %564 = vst [vmem:[%s562] sm:$0xf] %v563
                  %v565 = vld [vmem:[%s561 + $0x4] sm:$0xf]
                  %566 = vst [vmem:[%s562 + $0x4] sm:$0xf] %v565
                  %v567 = vld [vmem:[%s561 + $0x48] sm:$0xf]
                  %568 = vst [vmem:[%s562 + $0x8] sm:$0xf] %v567
                  %v569 = vld [vmem:[%s561 + $0x4c] sm:$0xf]
                  %570 = vst [vmem:[%s562 + $0xc] sm:$0xf] %v569
                  %v571 = vld [vmem:[%s561 + $0x90] sm:$0xf]
                  %572 = vst [vmem:[%s562 + $0x10] sm:$0xf] %v571
                  %v573 = vld [vmem:[%s561 + $0x94] sm:$0xf]
                  %574 = vst [vmem:[%s562 + $0x14] sm:$0xf] %v573
                  %v575 = vld [vmem:[%s561 + $0xd8] sm:$0xf]
                  %576 = vst [vmem:[%s562 + $0x18] sm:$0xf] %v575
                  %v577 = vld [vmem:[%s561 + $0xdc] sm:$0xf]
                  %578 = vst [vmem:[%s562 + $0x1c] sm:$0xf] %v577
                $region125: #{downblock_forward.4} parent=112 // loop_footer
                  %s560 = sadd.s32 1, %s556
                $region126: #{downblock_forward.4} parent=112 // loop_footer_branch
                  %555 = sbr.rel target = $region122
                $region127: #{downblock_forward.4} parent=112 // loop_exit
                  _
              $region113: #{downblock_forward.4} parent=97 // pred_fallthru
                _
            $region98: #{downblock_forward.4} parent=93 // pred_fallthru
              _
            // Predicated region
            $region99: #{downblock_forward.4} parent=93 // pred_check
              _
            $region100: #{downblock_forward.4} parent=93 // pred_check_branch
              %518 = sbr.rel (0) target = $region102
            $region101: #{downblock_forward.4} parent=93 // pred_region
              loop: start=0, step=1, limit=1
              $region103: #{downblock_forward.4} parent=101 // loop_pre_header
                _
              $region104: #{downblock_forward.4} parent=101 // loop_header
                %s521 = sphi 0, %s525
                %p522 = scmp.ge.s32.totalorder %s521, 1
                %s526 = sphi %s512, %s512
                %s527 = sphi %s505, %s505
              $region105: #{downblock_forward.4} parent=101 // loop_header_branch
                %524 = sbr.rel (%p522) target = $region109
              $region106: #{downblock_forward.4} parent=101 // loop_body
                %v528 = vld [vmem:[%s526] sm:$0xf]
                %529 = vst [vmem:[%s527] sm:$0xf] %v528
                %v530 = vld [vmem:[%s526 + $0x4] sm:$0xf]
                %531 = vst [vmem:[%s527 + $0x4] sm:$0xf] %v530
                %v532 = vld [vmem:[%s526 + $0x48] sm:$0xf]
                %533 = vst [vmem:[%s527 + $0x8] sm:$0xf] %v532
                %v534 = vld [vmem:[%s526 + $0x4c] sm:$0xf]
                %535 = vst [vmem:[%s527 + $0xc] sm:$0xf] %v534
                %v536 = vld [vmem:[%s526 + $0x90] sm:$0xf]
                %537 = vst [vmem:[%s527 + $0x10] sm:$0xf] %v536
                %v538 = vld [vmem:[%s526 + $0x94] sm:$0xf]
                %539 = vst [vmem:[%s527 + $0x14] sm:$0xf] %v538
                %v540 = vld [vmem:[%s526 + $0xd8] sm:$0xf]
                %541 = vst [vmem:[%s527 + $0x18] sm:$0xf] %v540
                %v542 = vld [vmem:[%s526 + $0xdc] sm:$0xf]
                %543 = vst [vmem:[%s527 + $0x1c] sm:$0xf] %v542
              $region107: #{downblock_forward.4} parent=101 // loop_footer
                %s525 = sadd.s32 1, %s521
              $region108: #{downblock_forward.4} parent=101 // loop_footer_branch
                %520 = sbr.rel target = $region104
              $region109: #{downblock_forward.4} parent=101 // loop_exit
                _
            $region102: #{downblock_forward.4} parent=93 // pred_fallthru
              _
          $region94: #{downblock_forward.4} parent=89 // pred_fallthru
            _
          %579 = vnop
        $region90: #{downblock_forward.4} parent=23 // pred_fallthru
          _
      $region24: #{downblock_forward.4} parent=5 // pred_fallthru
        _
      %p580 = scmp.le.s32.totalorder 1, %s10
      %p581 = scmp.lt.s32.totalorder %s10, 5
      %p582 = pnand %p580, %p581
      %p583 = pneg %p582
      // Predicated region
      $region128: #{downblock_forward.4} parent=5 // pred_check
        _
      $region129: #{downblock_forward.4} parent=5 // pred_check_branch
        %585 = sbr.rel (%p582) target = $region131
      $region130: #{downblock_forward.4} parent=5 // pred_region
        %s586 = ssub.s32 %s10, 1
        %s587 = sand.u32 %s44, 1
        %s588 = sand.u32 %s44, 1
        %s589 = smul.addr %s588, 128
        %s590 = scalar_lea.vmem [#allocation4], %s589
        // Predicated region
        $region132: #{downblock_forward.4} parent=130 // pred_check
          %p591 = pneg %p57
        $region133: #{downblock_forward.4} parent=130 // pred_check_branch
          %593 = sbr.rel (%p591) target = $region135
        $region134: #{downblock_forward.4} parent=130 // pred_region
          _
        $region135: #{downblock_forward.4} parent=130 // pred_fallthru
          _
        %s594 = sand.u32 %s76, 1
        %s595 = sand.u32 %s76, 1
        %s596 = smul.addr %s595, 32
        %s597 = scalar_lea.vmem [#allocation5], %s596
        // Predicated region
        $region136: #{downblock_forward.4} parent=130 // pred_check
          %p598 = pneg %p89
        $region137: #{downblock_forward.4} parent=130 // pred_check_branch
          %600 = sbr.rel (%p598) target = $region139
        $region138: #{downblock_forward.4} parent=130 // pred_region
          _
        $region139: #{downblock_forward.4} parent=130 // pred_fallthru
          _
        %s601 = sand.u32 %s44, 1
        %s602 = sand.u32 %s44, 1
        %s603 = smul.addr %s602, 128
        %s604 = scalar_lea.vmem [#allocation4], %s603
        %p605 = pneg %p57
        %p606 = pneg %p54
        %s607 = sand.u32 %s76, 1
        %s608 = sand.u32 %s76, 1
        %s609 = smul.addr %s608, 32
        %s610 = scalar_lea.vmem [#allocation5], %s609
        %p611 = pneg %p89
        %p612 = pneg %p86
        %p613 = scmp.lt.s32.totalorder %s22, 0
        %s614 = scalar_select %p613, %s22, 0
        %s615 = smul.addr %s614, 2
        %s616 = scalar_lea.vmem %s2, %s615
        %p617 = pneg %p115
        %p618 = pneg %p112
        %p619 = scmp.lt.s32.totalorder %s22, 0
        %s620 = scalar_select %p619, %s22, 0
        %s621 = scalar_lea.vmem %s3, %s620
        %p622 = pneg %p141
        %p623 = pneg %p138
        %p624 = pneg %p171
        %p625 = pneg %p168
        %s626 = smul.u32 4, %s21
        %p627 = scmp.lt.s32.totalorder %s20, 1
        %s628 = scalar_select %p627, %s20, 1
        %p629 = scmp.lt.s32.totalorder %s626, 7
        %s630 = scalar_select %p629, %s626, 7
        %p631 = scmp.lt.s32.totalorder %s22, 0
        %s632 = scalar_select %p631, %s22, 0
        %s633 = sadd.s32 %s632, %s630
        %s634 = smul.addr %s628, 8
        %s635 = sadd.s32 %s633, %s634
        %s636 = smul.addr %s635, 4
        %s637 = scalar_lea.vmem %s4, %s636
        %s638 = smul.u32 4, %s21
        %s639 = ssub.s32 9, %s638
        %p640 = scmp.lt.s32.totalorder %s639, 4
        %s641 = scalar_select %p640, %s639, 4
        %s642 = smul.u32 256, %s641
        %s643 = smul.u32 %s642, 2
        %s644 = smul.u32 %s21, 4
        %s645 = sadd.s32 %s644, 4
        %p646 = scmp.lt.s32.totalorder %s22, 0
        %s647 = scalar_select %p646, %s22, 0
        %s648 = smul.addr %s647, 2
        %s649 = scalar_lea.vmem %s2, %s648
        %p650 = scmp.lt.s32.totalorder %s22, 0
        %s651 = scalar_select %p650, %s22, 0
        %s652 = scalar_lea.vmem %s3, %s651
        %s653 = smul.u32 4, %s21
        %p654 = scmp.lt.s32.totalorder %s20, 1
        %s655 = scalar_select %p654, %s20, 1
        %p656 = scmp.lt.s32.totalorder %s653, 7
        %s657 = scalar_select %p656, %s653, 7
        %p658 = scmp.lt.s32.totalorder %s22, 0
        %s659 = scalar_select %p658, %s22, 0
        %s660 = sadd.s32 %s659, %s657
        %s661 = smul.addr %s655, 8
        %s662 = sadd.s32 %s660, %s661
        %s663 = smul.addr %s662, 4
        %s664 = scalar_lea.vmem %s4, %s663
        %s665 = smul.u32 4, %s21
        %v666 = vld [vmem:[%s590] sm:$0xf]
        %v667 = vld [vmem:[%s590 + $0x4] sm:$0x1]
        %v668 = vld [vmem:[%s590 + $0x8] sm:$0xf]
        %v669 = vld [vmem:[%s590 + $0xc] sm:$0x1]
        %v670 = vld [vmem:[%s590 + $0x10] sm:$0xf]
        %v671 = vld [vmem:[%s590 + $0x14] sm:$0x1]
        %v672 = vld [vmem:[%s590 + $0x18] sm:$0xf]
        %v673 = vld [vmem:[%s590 + $0x1c] sm:$0x1]
        %v674 = vld [vmem:[%s590 + $0x20] sm:$0xf]
        %v675 = vld [vmem:[%s590 + $0x24] sm:$0x1]
        %v676 = vld [vmem:[%s590 + $0x28] sm:$0xf]
        %v677 = vld [vmem:[%s590 + $0x2c] sm:$0x1]
        %v678 = vld [vmem:[%s590 + $0x30] sm:$0xf]
        %v679 = vld [vmem:[%s590 + $0x34] sm:$0x1]
        %v680 = vld [vmem:[%s590 + $0x38] sm:$0xf]
        %v681 = vld [vmem:[%s590 + $0x3c] sm:$0x1]
        %v682 = vld [vmem:[%s590 + $0x40] sm:$0xf]
        %v683 = vld [vmem:[%s590 + $0x44] sm:$0x1]
        %v684 = vld [vmem:[%s590 + $0x48] sm:$0xf]
        %v685 = vld [vmem:[%s590 + $0x4c] sm:$0x1]
        %v686 = vld [vmem:[%s590 + $0x50] sm:$0xf]
        %v687 = vld [vmem:[%s590 + $0x54] sm:$0x1]
        %v688 = vld [vmem:[%s590 + $0x58] sm:$0xf]
        %v689 = vld [vmem:[%s590 + $0x5c] sm:$0x1]
        %v690 = vld [vmem:[%s590 + $0x60] sm:$0xf]
        %v691 = vld [vmem:[%s590 + $0x64] sm:$0x1]
        %v692 = vld [vmem:[%s590 + $0x68] sm:$0xf]
        %v693 = vld [vmem:[%s590 + $0x6c] sm:$0x1]
        %v694 = vld [vmem:[%s590 + $0x70] sm:$0xf]
        %v695 = vld [vmem:[%s590 + $0x74] sm:$0x1]
        %v696 = vld [vmem:[%s590 + $0x78] sm:$0xf]
        %v697 = vld [vmem:[%s590 + $0x7c] sm:$0x1]
        %vm698 = vcmask 27648
        %699 = vst.msk [vmem:[#allocation2] sm:$0xf] %vm698, %v666
        %vm700 = vcmask 24576
        %vm701 = vsmask.f32 256
        %vm702 = vmand %vm700, %vm701
        %v703 = vld [vmem:[#allocation2 + $0x4] sm:$0x1]
        %v704 = vsel %vm702, %v667, %v703
        %705 = vst [vmem:[#allocation2 + $0x4] sm:$0x1] %v704
        %706 = vst.msk [vmem:[#allocation2 + $0x8] sm:$0xf] %vm698, %v668
        %v707 = vld [vmem:[#allocation2 + $0xc] sm:$0x1]
        %v708 = vsel %vm702, %v669, %v707
        %709 = vst [vmem:[#allocation2 + $0xc] sm:$0x1] %v708
        %710 = vst.msk [vmem:[#allocation2 + $0x10] sm:$0xf] %vm698, %v670
        %v711 = vld [vmem:[#allocation2 + $0x14] sm:$0x1]
        %v712 = vsel %vm702, %v671, %v711
        %713 = vst [vmem:[#allocation2 + $0x14] sm:$0x1] %v712
        %714 = vst.msk [vmem:[#allocation2 + $0x18] sm:$0xf] %vm698, %v672
        %v715 = vld [vmem:[#allocation2 + $0x1c] sm:$0x1]
        %v716 = vsel %vm702, %v673, %v715
        %717 = vst [vmem:[#allocation2 + $0x1c] sm:$0x1] %v716
        %718 = vst.msk [vmem:[#allocation2 + $0x28] sm:$0xf] %vm698, %v674
        %v719 = vld [vmem:[#allocation2 + $0x2c] sm:$0x1]
        %v720 = vsel %vm702, %v675, %v719
        %721 = vst [vmem:[#allocation2 + $0x2c] sm:$0x1] %v720
        %722 = vst.msk [vmem:[#allocation2 + $0x30] sm:$0xf] %vm698, %v676
        %v723 = vld [vmem:[#allocation2 + $0x34] sm:$0x1]
        %v724 = vsel %vm702, %v677, %v723
        %725 = vst [vmem:[#allocation2 + $0x34] sm:$0x1] %v724
        %726 = vst.msk [vmem:[#allocation2 + $0x38] sm:$0xf] %vm698, %v678
        %v727 = vld [vmem:[#allocation2 + $0x3c] sm:$0x1]
        %v728 = vsel %vm702, %v679, %v727
        %729 = vst [vmem:[#allocation2 + $0x3c] sm:$0x1] %v728
        %730 = vst.msk [vmem:[#allocation2 + $0x40] sm:$0xf] %vm698, %v680
        %v731 = vld [vmem:[#allocation2 + $0x44] sm:$0x1]
        %v732 = vsel %vm702, %v681, %v731
        %733 = vst [vmem:[#allocation2 + $0x44] sm:$0x1] %v732
        %734 = vst.msk [vmem:[#allocation2 + $0x50] sm:$0xf] %vm698, %v682
        %v735 = vld [vmem:[#allocation2 + $0x54] sm:$0x1]
        %v736 = vsel %vm702, %v683, %v735
        %737 = vst [vmem:[#allocation2 + $0x54] sm:$0x1] %v736
        %738 = vst.msk [vmem:[#allocation2 + $0x58] sm:$0xf] %vm698, %v684
        %v739 = vld [vmem:[#allocation2 + $0x5c] sm:$0x1]
        %v740 = vsel %vm702, %v685, %v739
        %741 = vst [vmem:[#allocation2 + $0x5c] sm:$0x1] %v740
        %742 = vst.msk [vmem:[#allocation2 + $0x60] sm:$0xf] %vm698, %v686
        %v743 = vld [vmem:[#allocation2 + $0x64] sm:$0x1]
        %v744 = vsel %vm702, %v687, %v743
        %745 = vst [vmem:[#allocation2 + $0x64] sm:$0x1] %v744
        %746 = vst.msk [vmem:[#allocation2 + $0x68] sm:$0xf] %vm698, %v688
        %v747 = vld [vmem:[#allocation2 + $0x6c] sm:$0x1]
        %v748 = vsel %vm702, %v689, %v747
        %749 = vst [vmem:[#allocation2 + $0x6c] sm:$0x1] %v748
        %750 = vst.msk [vmem:[#allocation2 + $0x78] sm:$0xf] %vm698, %v690
        %v751 = vld [vmem:[#allocation2 + $0x7c] sm:$0x1]
        %v752 = vsel %vm702, %v691, %v751
        %753 = vst [vmem:[#allocation2 + $0x7c] sm:$0x1] %v752
        %754 = vst.msk [vmem:[#allocation2 + $0x80] sm:$0xf] %vm698, %v692
        %v755 = vld [vmem:[#allocation2 + $0x84] sm:$0x1]
        %v756 = vsel %vm702, %v693, %v755
        %757 = vst [vmem:[#allocation2 + $0x84] sm:$0x1] %v756
        %758 = vst.msk [vmem:[#allocation2 + $0x88] sm:$0xf] %vm698, %v694
        %v759 = vld [vmem:[#allocation2 + $0x8c] sm:$0x1]
        %v760 = vsel %vm702, %v695, %v759
        %761 = vst [vmem:[#allocation2 + $0x8c] sm:$0x1] %v760
        %762 = vst.msk [vmem:[#allocation2 + $0x90] sm:$0xf] %vm698, %v696
        %v763 = vld [vmem:[#allocation2 + $0x94] sm:$0x1]
        %v764 = vsel %vm702, %v697, %v763
        %765 = vst [vmem:[#allocation2 + $0x94] sm:$0x1] %v764
        %v766 = vld [vmem:[%s597] sm:$0xf]
        %v767 = vld [vmem:[%s597 + $0x4] sm:$0x1]
        %v768 = vld [vmem:[%s597 + $0x8] sm:$0xf]
        %v769 = vld [vmem:[%s597 + $0xc] sm:$0x1]
        %v770 = vld [vmem:[%s597 + $0x10] sm:$0xf]
        %v771 = vld [vmem:[%s597 + $0x14] sm:$0x1]
        %v772 = vld [vmem:[%s597 + $0x18] sm:$0xf]
        %v773 = vld [vmem:[%s597 + $0x1c] sm:$0x1]
        %s774 = scalar_lea.vmem [#allocation2], 32
        %775 = vst.msk [vmem:[%s774] sm:$0xf] %vm698, %v766
        %v776 = vld [vmem:[%s774 + $0x4] sm:$0x1]
        %v777 = vsel %vm702, %v767, %v776
        %778 = vst [vmem:[%s774 + $0x4] sm:$0x1] %v777
        %779 = vst.msk [vmem:[%s774 + $0x28] sm:$0xf] %vm698, %v768
        %v780 = vld [vmem:[%s774 + $0x2c] sm:$0x1]
        %v781 = vsel %vm702, %v769, %v780
        %782 = vst [vmem:[%s774 + $0x2c] sm:$0x1] %v781
        %783 = vst.msk [vmem:[%s774 + $0x50] sm:$0xf] %vm698, %v770
        %v784 = vld [vmem:[%s774 + $0x54] sm:$0x1]
        %v785 = vsel %vm702, %v771, %v784
        %786 = vst [vmem:[%s774 + $0x54] sm:$0x1] %v785
        %787 = vst.msk [vmem:[%s774 + $0x78] sm:$0xf] %vm698, %v772
        %v788 = vld [vmem:[%s774 + $0x7c] sm:$0x1]
        %v789 = vsel %vm702, %v773, %v788
        %790 = vst [vmem:[%s774 + $0x7c] sm:$0x1] %v789
        %v791 = vld [vmem:[#allocation2] sm:$0xf]
        %v792 = vld [vmem:[#allocation2 + $0x8] sm:$0xf]
        %v793 = vld [vmem:[#allocation2 + $0x10] sm:$0xf]
        %v794 = vld [vmem:[#allocation2 + $0x18] sm:$0xf]
        %v795 = vunpack.c.l.bf16 %v791
        %v796 = vunpack.c.l.bf16 %v792
        %v797 = vunpack.c.l.bf16 %v793
        %v798 = vunpack.c.l.bf16 %v794
        %v799 = vld [vmem:[%s649] sm:$0x3]
        %v800 = vunpack.c.l.bf16 %v799
        %802 = vset.pattern.permute.xlu0 0
        %803 = vperm.xlu0 %802, %v795
        %v804 = vpop.permute.xlu0 %803
        %807 = vset.pattern.permute.xlu0 0
        %808 = vperm.xlu0 %807, %v796
        %v809 = vpop.permute.xlu0 %808
        %812 = vset.pattern.permute.xlu0 0
        %813 = vperm.xlu0 %812, %v797
        %v814 = vpop.permute.xlu0 %813
        %817 = vset.pattern.permute.xlu0 0
        %818 = vperm.xlu0 %817, %v798
        %v819 = vpop.permute.xlu0 %818
        %v821 = vlaneseq
        %v822 = vshrl.u32 %v821, 7
        %v823 = vsub.s32 0, %v822
        %v824 = vrot.slane %v800, %v823
        %v825 = vmul.f32 %v804, %v824
        %v826 = vmul.f32 %v809, %v824
        %v827 = vmul.f32 %v814, %v824
        %v828 = vmul.f32 %v819, %v824
        %829 = vset.pattern.permute.xlu0 1
        %830 = vperm.xlu0 %829, %v795
        %v831 = vpop.permute.xlu0 %830
        %833 = vset.pattern.permute.xlu0 1
        %834 = vperm.xlu0 %833, %v796
        %v835 = vpop.permute.xlu0 %834
        %837 = vset.pattern.permute.xlu0 1
        %838 = vperm.xlu0 %837, %v797
        %v839 = vpop.permute.xlu0 %838
        %841 = vset.pattern.permute.xlu0 1
        %842 = vperm.xlu0 %841, %v798
        %v843 = vpop.permute.xlu0 %842
        %v845 = vlaneseq
        %v846 = vshrl.u32 %v845, 7
        %v847 = vsub.s32 1, %v846
        %v848 = vrot.slane %v800, %v847
        %v849 = vmul.f32 %v831, %v848
        %v850 = vmul.f32 %v835, %v848
        %v851 = vmul.f32 %v839, %v848
        %v852 = vmul.f32 %v843, %v848
        %v853 = vadd.f32 %v825, %v849
        %v854 = vadd.f32 %v826, %v850
        %v855 = vadd.f32 %v827, %v851
        %v856 = vadd.f32 %v828, %v852
        %857 = vset.pattern.permute.xlu0 2
        %858 = vperm.xlu0 %857, %v795
        %v859 = vpop.permute.xlu0 %858
        %861 = vset.pattern.permute.xlu0 2
        %862 = vperm.xlu0 %861, %v796
        %v863 = vpop.permute.xlu0 %862
        %865 = vset.pattern.permute.xlu0 2
        %866 = vperm.xlu0 %865, %v797
        %v867 = vpop.permute.xlu0 %866
        %869 = vset.pattern.permute.xlu0 2
        %870 = vperm.xlu0 %869, %v798
        %v871 = vpop.permute.xlu0 %870
        %v873 = vlaneseq
        %v874 = vshrl.u32 %v873, 7
        %v875 = vsub.s32 2, %v874
        %v876 = vrot.slane %v800, %v875
        %v877 = vmul.f32 %v859, %v876
        %v878 = vmul.f32 %v863, %v876
        %v879 = vmul.f32 %v867, %v876
        %v880 = vmul.f32 %v871, %v876
        %v881 = vadd.f32 %v853, %v877
        %v882 = vadd.f32 %v854, %v878
        %v883 = vadd.f32 %v855, %v879
        %v884 = vadd.f32 %v856, %v880
        %885 = vset.pattern.permute.xlu0 3
        %886 = vperm.xlu0 %885, %v795
        %v887 = vpop.permute.xlu0 %886
        %889 = vset.pattern.permute.xlu0 3
        %890 = vperm.xlu0 %889, %v796
        %v891 = vpop.permute.xlu0 %890
        %893 = vset.pattern.permute.xlu0 3
        %894 = vperm.xlu0 %893, %v797
        %v895 = vpop.permute.xlu0 %894
        %897 = vset.pattern.permute.xlu0 3
        %898 = vperm.xlu0 %897, %v798
        %v899 = vpop.permute.xlu0 %898
        %v901 = vlaneseq
        %v902 = vshrl.u32 %v901, 7
        %v903 = vsub.s32 3, %v902
        %v904 = vrot.slane %v800, %v903
        %v905 = vmul.f32 %v887, %v904
        %v906 = vmul.f32 %v891, %v904
        %v907 = vmul.f32 %v895, %v904
        %v908 = vmul.f32 %v899, %v904
        %v909 = vadd.f32 %v881, %v905
        %v910 = vadd.f32 %v882, %v906
        %v911 = vadd.f32 %v883, %v907
        %v912 = vadd.f32 %v884, %v908
        %v913 = vld [vmem:[%s652] sm:$0x1]
        %v915 = vlaneseq
        %v916 = vshrl.u32 %v915, 7
        %v917 = vsub.s32 0, %v916
        %v918 = vrot.slane %v913, %v917
        %v920 = vadd.f32 %v909, %v918
        %v921 = vadd.f32 %v910, %v918
        %v922 = vadd.f32 %v911, %v918
        %v923 = vadd.f32 %v912, %v918
        %924 = vst [vmem:[#allocation3] sm:$0xff] %v920
        %925 = vst [vmem:[#allocation3 + $0x8] sm:$0xff] %v921
        %926 = vst [vmem:[#allocation3 + $0x10] sm:$0xff] %v922
        %927 = vst [vmem:[#allocation3 + $0x18] sm:$0xff] %v923
        %s928 = scalar_lea.vmem [#allocation2], 40
        %v929 = vld [vmem:[%s928] sm:$0xf]
        %v930 = vld [vmem:[%s928 + $0x8] sm:$0xf]
        %v931 = vld [vmem:[%s928 + $0x10] sm:$0xf]
        %v932 = vld [vmem:[%s928 + $0x18] sm:$0xf]
        %v933 = vunpack.c.l.bf16 %v929
        %v934 = vunpack.c.l.bf16 %v930
        %v935 = vunpack.c.l.bf16 %v931
        %v936 = vunpack.c.l.bf16 %v932
        %s937 = scalar_lea.vmem %s649, 2
        %v938 = vld [vmem:[%s937] sm:$0x3]
        %v939 = vunpack.c.l.bf16 %v938
        %941 = vset.pattern.permute.xlu0 0
        %942 = vperm.xlu0 %941, %v933
        %v943 = vpop.permute.xlu0 %942
        %946 = vset.pattern.permute.xlu0 0
        %947 = vperm.xlu0 %946, %v934
        %v948 = vpop.permute.xlu0 %947
        %951 = vset.pattern.permute.xlu0 0
        %952 = vperm.xlu0 %951, %v935
        %v953 = vpop.permute.xlu0 %952
        %956 = vset.pattern.permute.xlu0 0
        %957 = vperm.xlu0 %956, %v936
        %v958 = vpop.permute.xlu0 %957
        %v960 = vlaneseq
        %v961 = vshrl.u32 %v960, 7
        %v962 = vsub.s32 0, %v961
        %v963 = vrot.slane %v939, %v962
        %v964 = vmul.f32 %v943, %v963
        %v965 = vmul.f32 %v948, %v963
        %v966 = vmul.f32 %v953, %v963
        %v967 = vmul.f32 %v958, %v963
        %968 = vset.pattern.permute.xlu0 1
        %969 = vperm.xlu0 %968, %v933
        %v970 = vpop.permute.xlu0 %969
        %972 = vset.pattern.permute.xlu0 1
        %973 = vperm.xlu0 %972, %v934
        %v974 = vpop.permute.xlu0 %973
        %976 = vset.pattern.permute.xlu0 1
        %977 = vperm.xlu0 %976, %v935
        %v978 = vpop.permute.xlu0 %977
        %980 = vset.pattern.permute.xlu0 1
        %981 = vperm.xlu0 %980, %v936
        %v982 = vpop.permute.xlu0 %981
        %v984 = vlaneseq
        %v985 = vshrl.u32 %v984, 7
        %v986 = vsub.s32 1, %v985
        %v987 = vrot.slane %v939, %v986
        %v988 = vmul.f32 %v970, %v987
        %v989 = vmul.f32 %v974, %v987
        %v990 = vmul.f32 %v978, %v987
        %v991 = vmul.f32 %v982, %v987
        %v992 = vadd.f32 %v964, %v988
        %v993 = vadd.f32 %v965, %v989
        %v994 = vadd.f32 %v966, %v990
        %v995 = vadd.f32 %v967, %v991
        %996 = vset.pattern.permute.xlu0 2
        %997 = vperm.xlu0 %996, %v933
        %v998 = vpop.permute.xlu0 %997
        %1000 = vset.pattern.permute.xlu0 2
        %1001 = vperm.xlu0 %1000, %v934
        %v1002 = vpop.permute.xlu0 %1001
        %1004 = vset.pattern.permute.xlu0 2
        %1005 = vperm.xlu0 %1004, %v935
        %v1006 = vpop.permute.xlu0 %1005
        %1008 = vset.pattern.permute.xlu0 2
        %1009 = vperm.xlu0 %1008, %v936
        %v1010 = vpop.permute.xlu0 %1009
        %v1012 = vlaneseq
        %v1013 = vshrl.u32 %v1012, 7
        %v1014 = vsub.s32 2, %v1013
        %v1015 = vrot.slane %v939, %v1014
        %v1016 = vmul.f32 %v998, %v1015
        %v1017 = vmul.f32 %v1002, %v1015
        %v1018 = vmul.f32 %v1006, %v1015
        %v1019 = vmul.f32 %v1010, %v1015
        %v1020 = vadd.f32 %v992, %v1016
        %v1021 = vadd.f32 %v993, %v1017
        %v1022 = vadd.f32 %v994, %v1018
        %v1023 = vadd.f32 %v995, %v1019
        %1024 = vset.pattern.permute.xlu0 3
        %1025 = vperm.xlu0 %1024, %v933
        %v1026 = vpop.permute.xlu0 %1025
        %1028 = vset.pattern.permute.xlu0 3
        %1029 = vperm.xlu0 %1028, %v934
        %v1030 = vpop.permute.xlu0 %1029
        %1032 = vset.pattern.permute.xlu0 3
        %1033 = vperm.xlu0 %1032, %v935
        %v1034 = vpop.permute.xlu0 %1033
        %1036 = vset.pattern.permute.xlu0 3
        %1037 = vperm.xlu0 %1036, %v936
        %v1038 = vpop.permute.xlu0 %1037
        %v1040 = vlaneseq
        %v1041 = vshrl.u32 %v1040, 7
        %v1042 = vsub.s32 3, %v1041
        %v1043 = vrot.slane %v939, %v1042
        %v1044 = vmul.f32 %v1026, %v1043
        %v1045 = vmul.f32 %v1030, %v1043
        %v1046 = vmul.f32 %v1034, %v1043
        %v1047 = vmul.f32 %v1038, %v1043
        %v1048 = vadd.f32 %v1020, %v1044
        %v1049 = vadd.f32 %v1021, %v1045
        %v1050 = vadd.f32 %v1022, %v1046
        %v1051 = vadd.f32 %v1023, %v1047
        %v1052 = vld [vmem:[#allocation3] sm:$0xff]
        %v1053 = vld [vmem:[#allocation3 + $0x8] sm:$0xff]
        %v1054 = vld [vmem:[#allocation3 + $0x10] sm:$0xff]
        %v1055 = vld [vmem:[#allocation3 + $0x18] sm:$0xff]
        %v1056 = vadd.f32 %v1052, %v1048
        %v1057 = vadd.f32 %v1053, %v1049
        %v1058 = vadd.f32 %v1054, %v1050
        %v1059 = vadd.f32 %v1055, %v1051
        %1060 = vst [vmem:[#allocation3] sm:$0xff] %v1056
        %1061 = vst [vmem:[#allocation3 + $0x8] sm:$0xff] %v1057
        %1062 = vst [vmem:[#allocation3 + $0x10] sm:$0xff] %v1058
        %1063 = vst [vmem:[#allocation3 + $0x18] sm:$0xff] %v1059
        %v1064 = vld [vmem:[#allocation2] sm:$0xf]
        %v1065 = vld [vmem:[#allocation2 + $0x4] sm:$0x1]
        %v1066 = vld [vmem:[#allocation2 + $0x8] sm:$0xf]
        %v1067 = vld [vmem:[#allocation2 + $0xc] sm:$0x1]
        %v1068 = vld [vmem:[#allocation2 + $0x10] sm:$0xf]
        %v1069 = vld [vmem:[#allocation2 + $0x14] sm:$0x1]
        %v1070 = vld [vmem:[#allocation2 + $0x18] sm:$0xf]
        %v1071 = vld [vmem:[#allocation2 + $0x1c] sm:$0x1]
        %vm1072 = vsmask.f32 3328
        %vm1073 = vsmask.f32 7440
        %vm1074 = vmor %vm1072, %vm1073
        %v1076 = vshrl.u32 %v1064, 16
        %v1078 = vrot.slane %v1076, 4
        %v1079 = vshll.u32 %v1064, 16
        %v1081 = vrot.slane %v1079, 5
        %v1082 = vor.u32 %v1078, %v1081
        %v1083 = vrot.slane %v1082, 4
        %v1085 = vshll.u32 %v1065, 16
        %v1087 = vrot.slane %v1085, 5
        %v1088 = vsel %vm1074, %v1083, %v1087
        %v1090 = vshrl.u32 %v1066, 16
        %v1092 = vrot.slane %v1090, 4
        %v1093 = vshll.u32 %v1066, 16
        %v1095 = vrot.slane %v1093, 5
        %v1096 = vor.u32 %v1092, %v1095
        %v1097 = vrot.slane %v1096, 4
        %v1099 = vshll.u32 %v1067, 16
        %v1101 = vrot.slane %v1099, 5
        %v1102 = vsel %vm1074, %v1097, %v1101
        %v1104 = vshrl.u32 %v1068, 16
        %v1106 = vrot.slane %v1104, 4
        %v1107 = vshll.u32 %v1068, 16
        %v1109 = vrot.slane %v1107, 5
        %v1110 = vor.u32 %v1106, %v1109
        %v1111 = vrot.slane %v1110, 4
        %v1113 = vshll.u32 %v1069, 16
        %v1115 = vrot.slane %v1113, 5
        %v1116 = vsel %vm1074, %v1111, %v1115
        %v1118 = vshrl.u32 %v1070, 16
        %v1120 = vrot.slane %v1118, 4
        %v1121 = vshll.u32 %v1070, 16
        %v1123 = vrot.slane %v1121, 5
        %v1124 = vor.u32 %v1120, %v1123
        %v1125 = vrot.slane %v1124, 4
        %v1127 = vshll.u32 %v1071, 16
        %v1129 = vrot.slane %v1127, 5
        %v1130 = vsel %vm1074, %v1125, %v1129
        %v1135 = vunpack.c.l.bf16 %v1088
        %v1136 = vunpack.c.l.bf16 %v1102
        %v1137 = vunpack.c.l.bf16 %v1116
        %v1138 = vunpack.c.l.bf16 %v1130
        %s1139 = scalar_lea.vmem %s649, 4
        %v1140 = vld [vmem:[%s1139] sm:$0x3]
        %v1141 = vunpack.c.l.bf16 %v1140
        %1143 = vset.pattern.permute.xlu0 0
        %1144 = vperm.xlu0 %1143, %v1135
        %v1145 = vpop.permute.xlu0 %1144
        %1148 = vset.pattern.permute.xlu0 0
        %1149 = vperm.xlu0 %1148, %v1136
        %v1150 = vpop.permute.xlu0 %1149
        %1153 = vset.pattern.permute.xlu0 0
        %1154 = vperm.xlu0 %1153, %v1137
        %v1155 = vpop.permute.xlu0 %1154
        %1158 = vset.pattern.permute.xlu0 0
        %1159 = vperm.xlu0 %1158, %v1138
        %v1160 = vpop.permute.xlu0 %1159
        %v1162 = vlaneseq
        %v1163 = vshrl.u32 %v1162, 7
        %v1164 = vsub.s32 0, %v1163
        %v1165 = vrot.slane %v1141, %v1164
        %v1166 = vmul.f32 %v1145, %v1165
        %v1167 = vmul.f32 %v1150, %v1165
        %v1168 = vmul.f32 %v1155, %v1165
        %v1169 = vmul.f32 %v1160, %v1165
        %1170 = vset.pattern.permute.xlu0 1
        %1171 = vperm.xlu0 %1170, %v1135
        %v1172 = vpop.permute.xlu0 %1171
        %1174 = vset.pattern.permute.xlu0 1
        %1175 = vperm.xlu0 %1174, %v1136
        %v1176 = vpop.permute.xlu0 %1175
        %1178 = vset.pattern.permute.xlu0 1
        %1179 = vperm.xlu0 %1178, %v1137
        %v1180 = vpop.permute.xlu0 %1179
        %1182 = vset.pattern.permute.xlu0 1
        %1183 = vperm.xlu0 %1182, %v1138
        %v1184 = vpop.permute.xlu0 %1183
        %v1186 = vlaneseq
        %v1187 = vshrl.u32 %v1186, 7
        %v1188 = vsub.s32 1, %v1187
        %v1189 = vrot.slane %v1141, %v1188
        %v1190 = vmul.f32 %v1172, %v1189
        %v1191 = vmul.f32 %v1176, %v1189
        %v1192 = vmul.f32 %v1180, %v1189
        %v1193 = vmul.f32 %v1184, %v1189
        %v1194 = vadd.f32 %v1166, %v1190
        %v1195 = vadd.f32 %v1167, %v1191
        %v1196 = vadd.f32 %v1168, %v1192
        %v1197 = vadd.f32 %v1169, %v1193
        %1198 = vset.pattern.permute.xlu0 2
        %1199 = vperm.xlu0 %1198, %v1135
        %v1200 = vpop.permute.xlu0 %1199
        %1202 = vset.pattern.permute.xlu0 2
        %1203 = vperm.xlu0 %1202, %v1136
        %v1204 = vpop.permute.xlu0 %1203
        %1206 = vset.pattern.permute.xlu0 2
        %1207 = vperm.xlu0 %1206, %v1137
        %v1208 = vpop.permute.xlu0 %1207
        %1210 = vset.pattern.permute.xlu0 2
        %1211 = vperm.xlu0 %1210, %v1138
        %v1212 = vpop.permute.xlu0 %1211
        %v1214 = vlaneseq
        %v1215 = vshrl.u32 %v1214, 7
        %v1216 = vsub.s32 2, %v1215
        %v1217 = vrot.slane %v1141, %v1216
        %v1218 = vmul.f32 %v1200, %v1217
        %v1219 = vmul.f32 %v1204, %v1217
        %v1220 = vmul.f32 %v1208, %v1217
        %v1221 = vmul.f32 %v1212, %v1217
        %v1222 = vadd.f32 %v1194, %v1218
        %v1223 = vadd.f32 %v1195, %v1219
        %v1224 = vadd.f32 %v1196, %v1220
        %v1225 = vadd.f32 %v1197, %v1221
        %1226 = vset.pattern.permute.xlu0 3
        %1227 = vperm.xlu0 %1226, %v1135
        %v1228 = vpop.permute.xlu0 %1227
        %1230 = vset.pattern.permute.xlu0 3
        %1231 = vperm.xlu0 %1230, %v1136
        %v1232 = vpop.permute.xlu0 %1231
        %1234 = vset.pattern.permute.xlu0 3
        %1235 = vperm.xlu0 %1234, %v1137
        %v1236 = vpop.permute.xlu0 %1235
        %1238 = vset.pattern.permute.xlu0 3
        %1239 = vperm.xlu0 %1238, %v1138
        %v1240 = vpop.permute.xlu0 %1239
        %v1242 = vlaneseq
        %v1243 = vshrl.u32 %v1242, 7
        %v1244 = vsub.s32 3, %v1243
        %v1245 = vrot.slane %v1141, %v1244
        %v1246 = vmul.f32 %v1228, %v1245
        %v1247 = vmul.f32 %v1232, %v1245
        %v1248 = vmul.f32 %v1236, %v1245
        %v1249 = vmul.f32 %v1240, %v1245
        %v1250 = vadd.f32 %v1222, %v1246
        %v1251 = vadd.f32 %v1223, %v1247
        %v1252 = vadd.f32 %v1224, %v1248
        %v1253 = vadd.f32 %v1225, %v1249
        %v1254 = vld [vmem:[#allocation3] sm:$0xff]
        %v1255 = vld [vmem:[#allocation3 + $0x8] sm:$0xff]
        %v1256 = vld [vmem:[#allocation3 + $0x10] sm:$0xff]
        %v1257 = vld [vmem:[#allocation3 + $0x18] sm:$0xff]
        %v1258 = vadd.f32 %v1254, %v1250
        %v1259 = vadd.f32 %v1255, %v1251
        %v1260 = vadd.f32 %v1256, %v1252
        %v1261 = vadd.f32 %v1257, %v1253
        %1262 = vst [vmem:[#allocation3] sm:$0xff] %v1258
        %1263 = vst [vmem:[#allocation3 + $0x8] sm:$0xff] %v1259
        %1264 = vst [vmem:[#allocation3 + $0x10] sm:$0xff] %v1260
        %1265 = vst [vmem:[#allocation3 + $0x18] sm:$0xff] %v1261
        %s1266 = scalar_lea.vmem [#allocation2], 80
        %v1267 = vld [vmem:[%s1266] sm:$0xf]
        %v1268 = vld [vmem:[%s1266 + $0x8] sm:$0xf]
        %v1269 = vld [vmem:[%s1266 + $0x10] sm:$0xf]
        %v1270 = vld [vmem:[%s1266 + $0x18] sm:$0xf]
        %v1271 = vunpack.c.l.bf16 %v1267
        %v1272 = vunpack.c.l.bf16 %v1268
        %v1273 = vunpack.c.l.bf16 %v1269
        %v1274 = vunpack.c.l.bf16 %v1270
        %s1275 = scalar_lea.vmem %s649, 6
        %v1276 = vld [vmem:[%s1275] sm:$0x3]
        %v1277 = vunpack.c.l.bf16 %v1276
        %1279 = vset.pattern.permute.xlu0 0
        %1280 = vperm.xlu0 %1279, %v1271
        %v1281 = vpop.permute.xlu0 %1280
        %1284 = vset.pattern.permute.xlu0 0
        %1285 = vperm.xlu0 %1284, %v1272
        %v1286 = vpop.permute.xlu0 %1285
        %1289 = vset.pattern.permute.xlu0 0
        %1290 = vperm.xlu0 %1289, %v1273
        %v1291 = vpop.permute.xlu0 %1290
        %1294 = vset.pattern.permute.xlu0 0
        %1295 = vperm.xlu0 %1294, %v1274
        %v1296 = vpop.permute.xlu0 %1295
        %v1298 = vlaneseq
        %v1299 = vshrl.u32 %v1298, 7
        %v1300 = vsub.s32 0, %v1299
        %v1301 = vrot.slane %v1277, %v1300
        %v1302 = vmul.f32 %v1281, %v1301
        %v1303 = vmul.f32 %v1286, %v1301
        %v1304 = vmul.f32 %v1291, %v1301
        %v1305 = vmul.f32 %v1296, %v1301
        %1306 = vset.pattern.permute.xlu0 1
        %1307 = vperm.xlu0 %1306, %v1271
        %v1308 = vpop.permute.xlu0 %1307
        %1310 = vset.pattern.permute.xlu0 1
        %1311 = vperm.xlu0 %1310, %v1272
        %v1312 = vpop.permute.xlu0 %1311
        %1314 = vset.pattern.permute.xlu0 1
        %1315 = vperm.xlu0 %1314, %v1273
        %v1316 = vpop.permute.xlu0 %1315
        %1318 = vset.pattern.permute.xlu0 1
        %1319 = vperm.xlu0 %1318, %v1274
        %v1320 = vpop.permute.xlu0 %1319
        %v1322 = vlaneseq
        %v1323 = vshrl.u32 %v1322, 7
        %v1324 = vsub.s32 1, %v1323
        %v1325 = vrot.slane %v1277, %v1324
        %v1326 = vmul.f32 %v1308, %v1325
        %v1327 = vmul.f32 %v1312, %v1325
        %v1328 = vmul.f32 %v1316, %v1325
        %v1329 = vmul.f32 %v1320, %v1325
        %v1330 = vadd.f32 %v1302, %v1326
        %v1331 = vadd.f32 %v1303, %v1327
        %v1332 = vadd.f32 %v1304, %v1328
        %v1333 = vadd.f32 %v1305, %v1329
        %1334 = vset.pattern.permute.xlu0 2
        %1335 = vperm.xlu0 %1334, %v1271
        %v1336 = vpop.permute.xlu0 %1335
        %1338 = vset.pattern.permute.xlu0 2
        %1339 = vperm.xlu0 %1338, %v1272
        %v1340 = vpop.permute.xlu0 %1339
        %1342 = vset.pattern.permute.xlu0 2
        %1343 = vperm.xlu0 %1342, %v1273
        %v1344 = vpop.permute.xlu0 %1343
        %1346 = vset.pattern.permute.xlu0 2
        %1347 = vperm.xlu0 %1346, %v1274
        %v1348 = vpop.permute.xlu0 %1347
        %v1350 = vlaneseq
        %v1351 = vshrl.u32 %v1350, 7
        %v1352 = vsub.s32 2, %v1351
        %v1353 = vrot.slane %v1277, %v1352
        %v1354 = vmul.f32 %v1336, %v1353
        %v1355 = vmul.f32 %v1340, %v1353
        %v1356 = vmul.f32 %v1344, %v1353
        %v1357 = vmul.f32 %v1348, %v1353
        %v1358 = vadd.f32 %v1330, %v1354
        %v1359 = vadd.f32 %v1331, %v1355
        %v1360 = vadd.f32 %v1332, %v1356
        %v1361 = vadd.f32 %v1333, %v1357
        %1362 = vset.pattern.permute.xlu0 3
        %1363 = vperm.xlu0 %1362, %v1271
        %v1364 = vpop.permute.xlu0 %1363
        %1366 = vset.pattern.permute.xlu0 3
        %1367 = vperm.xlu0 %1366, %v1272
        %v1368 = vpop.permute.xlu0 %1367
        %1370 = vset.pattern.permute.xlu0 3
        %1371 = vperm.xlu0 %1370, %v1273
        %v1372 = vpop.permute.xlu0 %1371
        %1374 = vset.pattern.permute.xlu0 3
        %1375 = vperm.xlu0 %1374, %v1274
        %v1376 = vpop.permute.xlu0 %1375
        %v1378 = vlaneseq
        %v1379 = vshrl.u32 %v1378, 7
        %v1380 = vsub.s32 3, %v1379
        %v1381 = vrot.slane %v1277, %v1380
        %v1382 = vmul.f32 %v1364, %v1381
        %v1383 = vmul.f32 %v1368, %v1381
        %v1384 = vmul.f32 %v1372, %v1381
        %v1385 = vmul.f32 %v1376, %v1381
        %v1386 = vadd.f32 %v1358, %v1382
        %v1387 = vadd.f32 %v1359, %v1383
        %v1388 = vadd.f32 %v1360, %v1384
        %v1389 = vadd.f32 %v1361, %v1385
        %v1390 = vld [vmem:[#allocation3] sm:$0xff]
        %v1391 = vld [vmem:[#allocation3 + $0x8] sm:$0xff]
        %v1392 = vld [vmem:[#allocation3 + $0x10] sm:$0xff]
        %v1393 = vld [vmem:[#allocation3 + $0x18] sm:$0xff]
        %v1394 = vadd.f32 %v1390, %v1386
        %v1395 = vadd.f32 %v1391, %v1387
        %v1396 = vadd.f32 %v1392, %v1388
        %v1397 = vadd.f32 %v1393, %v1389
        %1398 = vst [vmem:[#allocation3] sm:$0xff] %v1394
        %1399 = vst [vmem:[#allocation3 + $0x8] sm:$0xff] %v1395
        %1400 = vst [vmem:[#allocation3 + $0x10] sm:$0xff] %v1396
        %1401 = vst [vmem:[#allocation3 + $0x18] sm:$0xff] %v1397
        %s1402 = scalar_lea.vmem [#allocation2], 120
        %v1403 = vld [vmem:[%s1402] sm:$0xf]
        %v1404 = vld [vmem:[%s1402 + $0x8] sm:$0xf]
        %v1405 = vld [vmem:[%s1402 + $0x10] sm:$0xf]
        %v1406 = vld [vmem:[%s1402 + $0x18] sm:$0xf]
        %v1407 = vunpack.c.l.bf16 %v1403
        %v1408 = vunpack.c.l.bf16 %v1404
        %v1409 = vunpack.c.l.bf16 %v1405
        %v1410 = vunpack.c.l.bf16 %v1406
        %s1411 = scalar_lea.vmem %s649, 8
        %v1412 = vld [vmem:[%s1411] sm:$0x3]
        %v1413 = vunpack.c.l.bf16 %v1412
        %1415 = vset.pattern.permute.xlu0 0
        %1416 = vperm.xlu0 %1415, %v1407
        %v1417 = vpop.permute.xlu0 %1416
        %1420 = vset.pattern.permute.xlu0 0
        %1421 = vperm.xlu0 %1420, %v1408
        %v1422 = vpop.permute.xlu0 %1421
        %1425 = vset.pattern.permute.xlu0 0
        %1426 = vperm.xlu0 %1425, %v1409
        %v1427 = vpop.permute.xlu0 %1426
        %1430 = vset.pattern.permute.xlu0 0
        %1431 = vperm.xlu0 %1430, %v1410
        %v1432 = vpop.permute.xlu0 %1431
        %v1434 = vlaneseq
        %v1435 = vshrl.u32 %v1434, 7
        %v1436 = vsub.s32 0, %v1435
        %v1437 = vrot.slane %v1413, %v1436
        %v1438 = vmul.f32 %v1417, %v1437
        %v1439 = vmul.f32 %v1422, %v1437
        %v1440 = vmul.f32 %v1427, %v1437
        %v1441 = vmul.f32 %v1432, %v1437
        %1442 = vset.pattern.permute.xlu0 1
        %1443 = vperm.xlu0 %1442, %v1407
        %v1444 = vpop.permute.xlu0 %1443
        %1446 = vset.pattern.permute.xlu0 1
        %1447 = vperm.xlu0 %1446, %v1408
        %v1448 = vpop.permute.xlu0 %1447
        %1450 = vset.pattern.permute.xlu0 1
        %1451 = vperm.xlu0 %1450, %v1409
        %v1452 = vpop.permute.xlu0 %1451
        %1454 = vset.pattern.permute.xlu0 1
        %1455 = vperm.xlu0 %1454, %v1410
        %v1456 = vpop.permute.xlu0 %1455
        %v1458 = vlaneseq
        %v1459 = vshrl.u32 %v1458, 7
        %v1460 = vsub.s32 1, %v1459
        %v1461 = vrot.slane %v1413, %v1460
        %v1462 = vmul.f32 %v1444, %v1461
        %v1463 = vmul.f32 %v1448, %v1461
        %v1464 = vmul.f32 %v1452, %v1461
        %v1465 = vmul.f32 %v1456, %v1461
        %v1466 = vadd.f32 %v1438, %v1462
        %v1467 = vadd.f32 %v1439, %v1463
        %v1468 = vadd.f32 %v1440, %v1464
        %v1469 = vadd.f32 %v1441, %v1465
        %1470 = vset.pattern.permute.xlu0 2
        %1471 = vperm.xlu0 %1470, %v1407
        %v1472 = vpop.permute.xlu0 %1471
        %1474 = vset.pattern.permute.xlu0 2
        %1475 = vperm.xlu0 %1474, %v1408
        %v1476 = vpop.permute.xlu0 %1475
        %1478 = vset.pattern.permute.xlu0 2
        %1479 = vperm.xlu0 %1478, %v1409
        %v1480 = vpop.permute.xlu0 %1479
        %1482 = vset.pattern.permute.xlu0 2
        %1483 = vperm.xlu0 %1482, %v1410
        %v1484 = vpop.permute.xlu0 %1483
        %v1486 = vlaneseq
        %v1487 = vshrl.u32 %v1486, 7
        %v1488 = vsub.s32 2, %v1487
        %v1489 = vrot.slane %v1413, %v1488
        %v1490 = vmul.f32 %v1472, %v1489
        %v1491 = vmul.f32 %v1476, %v1489
        %v1492 = vmul.f32 %v1480, %v1489
        %v1493 = vmul.f32 %v1484, %v1489
        %v1494 = vadd.f32 %v1466, %v1490
        %v1495 = vadd.f32 %v1467, %v1491
        %v1496 = vadd.f32 %v1468, %v1492
        %v1497 = vadd.f32 %v1469, %v1493
        %1498 = vset.pattern.permute.xlu0 3
        %1499 = vperm.xlu0 %1498, %v1407
        %v1500 = vpop.permute.xlu0 %1499
        %1502 = vset.pattern.permute.xlu0 3
        %1503 = vperm.xlu0 %1502, %v1408
        %v1504 = vpop.permute.xlu0 %1503
        %1506 = vset.pattern.permute.xlu0 3
        %1507 = vperm.xlu0 %1506, %v1409
        %v1508 = vpop.permute.xlu0 %1507
        %1510 = vset.pattern.permute.xlu0 3
        %1511 = vperm.xlu0 %1510, %v1410
        %v1512 = vpop.permute.xlu0 %1511
        %v1514 = vlaneseq
        %v1515 = vshrl.u32 %v1514, 7
        %v1516 = vsub.s32 3, %v1515
        %v1517 = vrot.slane %v1413, %v1516
        %v1518 = vmul.f32 %v1500, %v1517
        %v1519 = vmul.f32 %v1504, %v1517
        %v1520 = vmul.f32 %v1508, %v1517
        %v1521 = vmul.f32 %v1512, %v1517
        %v1522 = vadd.f32 %v1494, %v1518
        %v1523 = vadd.f32 %v1495, %v1519
        %v1524 = vadd.f32 %v1496, %v1520
        %v1525 = vadd.f32 %v1497, %v1521
        %v1526 = vld [vmem:[#allocation3] sm:$0xff]
        %v1527 = vld [vmem:[#allocation3 + $0x8] sm:$0xff]
        %v1528 = vld [vmem:[#allocation3 + $0x10] sm:$0xff]
        %v1529 = vld [vmem:[#allocation3 + $0x18] sm:$0xff]
        %v1530 = vadd.f32 %v1526, %v1522
        %v1531 = vadd.f32 %v1527, %v1523
        %v1532 = vadd.f32 %v1528, %v1524
        %v1533 = vadd.f32 %v1529, %v1525
        %1534 = vst [vmem:[#allocation3] sm:$0xff] %v1530
        %1535 = vst [vmem:[#allocation3 + $0x8] sm:$0xff] %v1531
        %1536 = vst [vmem:[#allocation3 + $0x10] sm:$0xff] %v1532
        %1537 = vst [vmem:[#allocation3 + $0x18] sm:$0xff] %v1533
        %v1538 = vld [vmem:[%s1266] sm:$0xf]
        %v1539 = vld [vmem:[%s1266 + $0x4] sm:$0x1]
        %v1540 = vld [vmem:[%s1266 + $0x8] sm:$0xf]
        %v1541 = vld [vmem:[%s1266 + $0xc] sm:$0x1]
        %v1542 = vld [vmem:[%s1266 + $0x10] sm:$0xf]
        %v1543 = vld [vmem:[%s1266 + $0x14] sm:$0x1]
        %v1544 = vld [vmem:[%s1266 + $0x18] sm:$0xf]
        %v1545 = vld [vmem:[%s1266 + $0x1c] sm:$0x1]
        %v1547 = vshrl.u32 %v1538, 16
        %v1549 = vrot.slane %v1547, 4
        %v1550 = vshll.u32 %v1538, 16
        %v1552 = vrot.slane %v1550, 5
        %v1553 = vor.u32 %v1549, %v1552
        %v1554 = vrot.slane %v1553, 4
        %v1556 = vshll.u32 %v1539, 16
        %v1558 = vrot.slane %v1556, 5
        %v1559 = vsel %vm1074, %v1554, %v1558
        %v1561 = vshrl.u32 %v1540, 16
        %v1563 = vrot.slane %v1561, 4
        %v1564 = vshll.u32 %v1540, 16
        %v1566 = vrot.slane %v1564, 5
        %v1567 = vor.u32 %v1563, %v1566
        %v1568 = vrot.slane %v1567, 4
        %v1570 = vshll.u32 %v1541, 16
        %v1572 = vrot.slane %v1570, 5
        %v1573 = vsel %vm1074, %v1568, %v1572
        %v1575 = vshrl.u32 %v1542, 16
        %v1577 = vrot.slane %v1575, 4
        %v1578 = vshll.u32 %v1542, 16
        %v1580 = vrot.slane %v1578, 5
        %v1581 = vor.u32 %v1577, %v1580
        %v1582 = vrot.slane %v1581, 4
        %v1584 = vshll.u32 %v1543, 16
        %v1586 = vrot.slane %v1584, 5
        %v1587 = vsel %vm1074, %v1582, %v1586
        %v1589 = vshrl.u32 %v1544, 16
        %v1591 = vrot.slane %v1589, 4
        %v1592 = vshll.u32 %v1544, 16
        %v1594 = vrot.slane %v1592, 5
        %v1595 = vor.u32 %v1591, %v1594
        %v1596 = vrot.slane %v1595, 4
        %v1598 = vshll.u32 %v1545, 16
        %v1600 = vrot.slane %v1598, 5
        %v1601 = vsel %vm1074, %v1596, %v1600
        %v1606 = vunpack.c.l.bf16 %v1559
        %v1607 = vunpack.c.l.bf16 %v1573
        %v1608 = vunpack.c.l.bf16 %v1587
        %v1609 = vunpack.c.l.bf16 %v1601
        %s1610 = scalar_lea.vmem %s649, 10
        %v1611 = vld [vmem:[%s1610] sm:$0x3]
        %v1612 = vunpack.c.l.bf16 %v1611
        %1614 = vset.pattern.permute.xlu0 0
        %1615 = vperm.xlu0 %1614, %v1606
        %v1616 = vpop.permute.xlu0 %1615
        %1619 = vset.pattern.permute.xlu0 0
        %1620 = vperm.xlu0 %1619, %v1607
        %v1621 = vpop.permute.xlu0 %1620
        %1624 = vset.pattern.permute.xlu0 0
        %1625 = vperm.xlu0 %1624, %v1608
        %v1626 = vpop.permute.xlu0 %1625
        %1629 = vset.pattern.permute.xlu0 0
        %1630 = vperm.xlu0 %1629, %v1609
        %v1631 = vpop.permute.xlu0 %1630
        %v1633 = vlaneseq
        %v1634 = vshrl.u32 %v1633, 7
        %v1635 = vsub.s32 0, %v1634
        %v1636 = vrot.slane %v1612, %v1635
        %v1637 = vmul.f32 %v1616, %v1636
        %v1638 = vmul.f32 %v1621, %v1636
        %v1639 = vmul.f32 %v1626, %v1636
        %v1640 = vmul.f32 %v1631, %v1636
        %1641 = vset.pattern.permute.xlu0 1
        %1642 = vperm.xlu0 %1641, %v1606
        %v1643 = vpop.permute.xlu0 %1642
        %1645 = vset.pattern.permute.xlu0 1
        %1646 = vperm.xlu0 %1645, %v1607
        %v1647 = vpop.permute.xlu0 %1646
        %1649 = vset.pattern.permute.xlu0 1
        %1650 = vperm.xlu0 %1649, %v1608
        %v1651 = vpop.permute.xlu0 %1650
        %1653 = vset.pattern.permute.xlu0 1
        %1654 = vperm.xlu0 %1653, %v1609
        %v1655 = vpop.permute.xlu0 %1654
        %v1657 = vlaneseq
        %v1658 = vshrl.u32 %v1657, 7
        %v1659 = vsub.s32 1, %v1658
        %v1660 = vrot.slane %v1612, %v1659
        %v1661 = vmul.f32 %v1643, %v1660
        %v1662 = vmul.f32 %v1647, %v1660
        %v1663 = vmul.f32 %v1651, %v1660
        %v1664 = vmul.f32 %v1655, %v1660
        %v1665 = vadd.f32 %v1637, %v1661
        %v1666 = vadd.f32 %v1638, %v1662
        %v1667 = vadd.f32 %v1639, %v1663
        %v1668 = vadd.f32 %v1640, %v1664
        %1669 = vset.pattern.permute.xlu0 2
        %1670 = vperm.xlu0 %1669, %v1606
        %v1671 = vpop.permute.xlu0 %1670
        %1673 = vset.pattern.permute.xlu0 2
        %1674 = vperm.xlu0 %1673, %v1607
        %v1675 = vpop.permute.xlu0 %1674
        %1677 = vset.pattern.permute.xlu0 2
        %1678 = vperm.xlu0 %1677, %v1608
        %v1679 = vpop.permute.xlu0 %1678
        %1681 = vset.pattern.permute.xlu0 2
        %1682 = vperm.xlu0 %1681, %v1609
        %v1683 = vpop.permute.xlu0 %1682
        %v1685 = vlaneseq
        %v1686 = vshrl.u32 %v1685, 7
        %v1687 = vsub.s32 2, %v1686
        %v1688 = vrot.slane %v1612, %v1687
        %v1689 = vmul.f32 %v1671, %v1688
        %v1690 = vmul.f32 %v1675, %v1688
        %v1691 = vmul.f32 %v1679, %v1688
        %v1692 = vmul.f32 %v1683, %v1688
        %v1693 = vadd.f32 %v1665, %v1689
        %v1694 = vadd.f32 %v1666, %v1690
        %v1695 = vadd.f32 %v1667, %v1691
        %v1696 = vadd.f32 %v1668, %v1692
        %1697 = vset.pattern.permute.xlu0 3
        %1698 = vperm.xlu0 %1697, %v1606
        %v1699 = vpop.permute.xlu0 %1698
        %1701 = vset.pattern.permute.xlu0 3
        %1702 = vperm.xlu0 %1701, %v1607
        %v1703 = vpop.permute.xlu0 %1702
        %1705 = vset.pattern.permute.xlu0 3
        %1706 = vperm.xlu0 %1705, %v1608
        %v1707 = vpop.permute.xlu0 %1706
        %1709 = vset.pattern.permute.xlu0 3
        %1710 = vperm.xlu0 %1709, %v1609
        %v1711 = vpop.permute.xlu0 %1710
        %v1713 = vlaneseq
        %v1714 = vshrl.u32 %v1713, 7
        %v1715 = vsub.s32 3, %v1714
        %v1716 = vrot.slane %v1612, %v1715
        %v1717 = vmul.f32 %v1699, %v1716
        %v1718 = vmul.f32 %v1703, %v1716
        %v1719 = vmul.f32 %v1707, %v1716
        %v1720 = vmul.f32 %v1711, %v1716
        %v1721 = vadd.f32 %v1693, %v1717
        %v1722 = vadd.f32 %v1694, %v1718
        %v1723 = vadd.f32 %v1695, %v1719
        %v1724 = vadd.f32 %v1696, %v1720
        %v1725 = vld [vmem:[#allocation3] sm:$0xff]
        %v1726 = vld [vmem:[#allocation3 + $0x8] sm:$0xff]
        %v1727 = vld [vmem:[#allocation3 + $0x10] sm:$0xff]
        %v1728 = vld [vmem:[#allocation3 + $0x18] sm:$0xff]
        %v1729 = vadd.f32 %v1725, %v1721
        %v1730 = vadd.f32 %v1726, %v1722
        %v1731 = vadd.f32 %v1727, %v1723
        %v1732 = vadd.f32 %v1728, %v1724
        %1733 = vst [vmem:[#allocation3] sm:$0xff] %v1729
        %1734 = vst [vmem:[#allocation3 + $0x8] sm:$0xff] %v1730
        %1735 = vst [vmem:[#allocation3 + $0x10] sm:$0xff] %v1731
        %1736 = vst [vmem:[#allocation3 + $0x18] sm:$0xff] %v1732
        %s1737 = scalar_lea.vmem [#allocation2], 8
        %v1738 = vld [vmem:[%s1737] sm:$0xf]
        %v1739 = vld [vmem:[%s1737 + $0x8] sm:$0xf]
        %v1740 = vld [vmem:[%s1737 + $0x10] sm:$0xf]
        %v1741 = vld [vmem:[%s1737 + $0x18] sm:$0xf]
        %v1742 = vunpack.c.l.bf16 %v1738
        %v1743 = vunpack.c.l.bf16 %v1739
        %v1744 = vunpack.c.l.bf16 %v1740
        %v1745 = vunpack.c.l.bf16 %v1741
        %s1746 = scalar_lea.vmem %s649, 12
        %v1747 = vld [vmem:[%s1746] sm:$0x3]
        %v1748 = vunpack.c.l.bf16 %v1747
        %1750 = vset.pattern.permute.xlu0 0
        %1751 = vperm.xlu0 %1750, %v1742
        %v1752 = vpop.permute.xlu0 %1751
        %1755 = vset.pattern.permute.xlu0 0
        %1756 = vperm.xlu0 %1755, %v1743
        %v1757 = vpop.permute.xlu0 %1756
        %1760 = vset.pattern.permute.xlu0 0
        %1761 = vperm.xlu0 %1760, %v1744
        %v1762 = vpop.permute.xlu0 %1761
        %1765 = vset.pattern.permute.xlu0 0
        %1766 = vperm.xlu0 %1765, %v1745
        %v1767 = vpop.permute.xlu0 %1766
        %v1769 = vlaneseq
        %v1770 = vshrl.u32 %v1769, 7
        %v1771 = vsub.s32 0, %v1770
        %v1772 = vrot.slane %v1748, %v1771
        %v1773 = vmul.f32 %v1752, %v1772
        %v1774 = vmul.f32 %v1757, %v1772
        %v1775 = vmul.f32 %v1762, %v1772
        %v1776 = vmul.f32 %v1767, %v1772
        %1777 = vset.pattern.permute.xlu0 1
        %1778 = vperm.xlu0 %1777, %v1742
        %v1779 = vpop.permute.xlu0 %1778
        %1781 = vset.pattern.permute.xlu0 1
        %1782 = vperm.xlu0 %1781, %v1743
        %v1783 = vpop.permute.xlu0 %1782
        %1785 = vset.pattern.permute.xlu0 1
        %1786 = vperm.xlu0 %1785, %v1744
        %v1787 = vpop.permute.xlu0 %1786
        %1789 = vset.pattern.permute.xlu0 1
        %1790 = vperm.xlu0 %1789, %v1745
        %v1791 = vpop.permute.xlu0 %1790
        %v1793 = vlaneseq
        %v1794 = vshrl.u32 %v1793, 7
        %v1795 = vsub.s32 1, %v1794
        %v1796 = vrot.slane %v1748, %v1795
        %v1797 = vmul.f32 %v1779, %v1796
        %v1798 = vmul.f32 %v1783, %v1796
        %v1799 = vmul.f32 %v1787, %v1796
        %v1800 = vmul.f32 %v1791, %v1796
        %v1801 = vadd.f32 %v1773, %v1797
        %v1802 = vadd.f32 %v1774, %v1798
        %v1803 = vadd.f32 %v1775, %v1799
        %v1804 = vadd.f32 %v1776, %v1800
        %1805 = vset.pattern.permute.xlu0 2
        %1806 = vperm.xlu0 %1805, %v1742
        %v1807 = vpop.permute.xlu0 %1806
        %1809 = vset.pattern.permute.xlu0 2
        %1810 = vperm.xlu0 %1809, %v1743
        %v1811 = vpop.permute.xlu0 %1810
        %1813 = vset.pattern.permute.xlu0 2
        %1814 = vperm.xlu0 %1813, %v1744
        %v1815 = vpop.permute.xlu0 %1814
        %1817 = vset.pattern.permute.xlu0 2
        %1818 = vperm.xlu0 %1817, %v1745
        %v1819 = vpop.permute.xlu0 %1818
        %v1821 = vlaneseq
        %v1822 = vshrl.u32 %v1821, 7
        %v1823 = vsub.s32 2, %v1822
        %v1824 = vrot.slane %v1748, %v1823
        %v1825 = vmul.f32 %v1807, %v1824
        %v1826 = vmul.f32 %v1811, %v1824
        %v1827 = vmul.f32 %v1815, %v1824
        %v1828 = vmul.f32 %v1819, %v1824
        %v1829 = vadd.f32 %v1801, %v1825
        %v1830 = vadd.f32 %v1802, %v1826
        %v1831 = vadd.f32 %v1803, %v1827
        %v1832 = vadd.f32 %v1804, %v1828
        %1833 = vset.pattern.permute.xlu0 3
        %1834 = vperm.xlu0 %1833, %v1742
        %v1835 = vpop.permute.xlu0 %1834
        %1837 = vset.pattern.permute.xlu0 3
        %1838 = vperm.xlu0 %1837, %v1743
        %v1839 = vpop.permute.xlu0 %1838
        %1841 = vset.pattern.permute.xlu0 3
        %1842 = vperm.xlu0 %1841, %v1744
        %v1843 = vpop.permute.xlu0 %1842
        %1845 = vset.pattern.permute.xlu0 3
        %1846 = vperm.xlu0 %1845, %v1745
        %v1847 = vpop.permute.xlu0 %1846
        %v1849 = vlaneseq
        %v1850 = vshrl.u32 %v1849, 7
        %v1851 = vsub.s32 3, %v1850
        %v1852 = vrot.slane %v1748, %v1851
        %v1853 = vmul.f32 %v1835, %v1852
        %v1854 = vmul.f32 %v1839, %v1852
        %v1855 = vmul.f32 %v1843, %v1852
        %v1856 = vmul.f32 %v1847, %v1852
        %v1857 = vadd.f32 %v1829, %v1853
        %v1858 = vadd.f32 %v1830, %v1854
        %v1859 = vadd.f32 %v1831, %v1855
        %v1860 = vadd.f32 %v1832, %v1856
        %v1861 = vld [vmem:[#allocation3] sm:$0xff]
        %v1862 = vld [vmem:[#allocation3 + $0x8] sm:$0xff]
        %v1863 = vld [vmem:[#allocation3 + $0x10] sm:$0xff]
        %v1864 = vld [vmem:[#allocation3 + $0x18] sm:$0xff]
        %v1865 = vadd.f32 %v1861, %v1857
        %v1866 = vadd.f32 %v1862, %v1858
        %v1867 = vadd.f32 %v1863, %v1859
        %v1868 = vadd.f32 %v1864, %v1860
        %1869 = vst [vmem:[#allocation3] sm:$0xff] %v1865
        %1870 = vst [vmem:[#allocation3 + $0x8] sm:$0xff] %v1866
        %1871 = vst [vmem:[#allocation3 + $0x10] sm:$0xff] %v1867
        %1872 = vst [vmem:[#allocation3 + $0x18] sm:$0xff] %v1868
        %s1873 = scalar_lea.vmem [#allocation2], 48
        %v1874 = vld [vmem:[%s1873] sm:$0xf]
        %v1875 = vld [vmem:[%s1873 + $0x8] sm:$0xf]
        %v1876 = vld [vmem:[%s1873 + $0x10] sm:$0xf]
        %v1877 = vld [vmem:[%s1873 + $0x18] sm:$0xf]
        %v1878 = vunpack.c.l.bf16 %v1874
        %v1879 = vunpack.c.l.bf16 %v1875
        %v1880 = vunpack.c.l.bf16 %v1876
        %v1881 = vunpack.c.l.bf16 %v1877
        %s1882 = scalar_lea.vmem %s649, 14
        %v1883 = vld [vmem:[%s1882] sm:$0x3]
        %v1884 = vunpack.c.l.bf16 %v1883
        %1886 = vset.pattern.permute.xlu0 0
        %1887 = vperm.xlu0 %1886, %v1878
        %v1888 = vpop.permute.xlu0 %1887
        %1891 = vset.pattern.permute.xlu0 0
        %1892 = vperm.xlu0 %1891, %v1879
        %v1893 = vpop.permute.xlu0 %1892
        %1896 = vset.pattern.permute.xlu0 0
        %1897 = vperm.xlu0 %1896, %v1880
        %v1898 = vpop.permute.xlu0 %1897
        %1901 = vset.pattern.permute.xlu0 0
        %1902 = vperm.xlu0 %1901, %v1881
        %v1903 = vpop.permute.xlu0 %1902
        %v1905 = vlaneseq
        %v1906 = vshrl.u32 %v1905, 7
        %v1907 = vsub.s32 0, %v1906
        %v1908 = vrot.slane %v1884, %v1907
        %v1909 = vmul.f32 %v1888, %v1908
        %v1910 = vmul.f32 %v1893, %v1908
        %v1911 = vmul.f32 %v1898, %v1908
        %v1912 = vmul.f32 %v1903, %v1908
        %1913 = vset.pattern.permute.xlu0 1
        %1914 = vperm.xlu0 %1913, %v1878
        %v1915 = vpop.permute.xlu0 %1914
        %1917 = vset.pattern.permute.xlu0 1
        %1918 = vperm.xlu0 %1917, %v1879
        %v1919 = vpop.permute.xlu0 %1918
        %1921 = vset.pattern.permute.xlu0 1
        %1922 = vperm.xlu0 %1921, %v1880
        %v1923 = vpop.permute.xlu0 %1922
        %1925 = vset.pattern.permute.xlu0 1
        %1926 = vperm.xlu0 %1925, %v1881
        %v1927 = vpop.permute.xlu0 %1926
        %v1929 = vlaneseq
        %v1930 = vshrl.u32 %v1929, 7
        %v1931 = vsub.s32 1, %v1930
        %v1932 = vrot.slane %v1884, %v1931
        %v1933 = vmul.f32 %v1915, %v1932
        %v1934 = vmul.f32 %v1919, %v1932
        %v1935 = vmul.f32 %v1923, %v1932
        %v1936 = vmul.f32 %v1927, %v1932
        %v1937 = vadd.f32 %v1909, %v1933
        %v1938 = vadd.f32 %v1910, %v1934
        %v1939 = vadd.f32 %v1911, %v1935
        %v1940 = vadd.f32 %v1912, %v1936
        %1941 = vset.pattern.permute.xlu0 2
        %1942 = vperm.xlu0 %1941, %v1878
        %v1943 = vpop.permute.xlu0 %1942
        %1945 = vset.pattern.permute.xlu0 2
        %1946 = vperm.xlu0 %1945, %v1879
        %v1947 = vpop.permute.xlu0 %1946
        %1949 = vset.pattern.permute.xlu0 2
        %1950 = vperm.xlu0 %1949, %v1880
        %v1951 = vpop.permute.xlu0 %1950
        %1953 = vset.pattern.permute.xlu0 2
        %1954 = vperm.xlu0 %1953, %v1881
        %v1955 = vpop.permute.xlu0 %1954
        %v1957 = vlaneseq
        %v1958 = vshrl.u32 %v1957, 7
        %v1959 = vsub.s32 2, %v1958
        %v1960 = vrot.slane %v1884, %v1959
        %v1961 = vmul.f32 %v1943, %v1960
        %v1962 = vmul.f32 %v1947, %v1960
        %v1963 = vmul.f32 %v1951, %v1960
        %v1964 = vmul.f32 %v1955, %v1960
        %v1965 = vadd.f32 %v1937, %v1961
        %v1966 = vadd.f32 %v1938, %v1962
        %v1967 = vadd.f32 %v1939, %v1963
        %v1968 = vadd.f32 %v1940, %v1964
        %1969 = vset.pattern.permute.xlu0 3
        %1970 = vperm.xlu0 %1969, %v1878
        %v1971 = vpop.permute.xlu0 %1970
        %1973 = vset.pattern.permute.xlu0 3
        %1974 = vperm.xlu0 %1973, %v1879
        %v1975 = vpop.permute.xlu0 %1974
        %1977 = vset.pattern.permute.xlu0 3
        %1978 = vperm.xlu0 %1977, %v1880
        %v1979 = vpop.permute.xlu0 %1978
        %1981 = vset.pattern.permute.xlu0 3
        %1982 = vperm.xlu0 %1981, %v1881
        %v1983 = vpop.permute.xlu0 %1982
        %v1985 = vlaneseq
        %v1986 = vshrl.u32 %v1985, 7
        %v1987 = vsub.s32 3, %v1986
        %v1988 = vrot.slane %v1884, %v1987
        %v1989 = vmul.f32 %v1971, %v1988
        %v1990 = vmul.f32 %v1975, %v1988
        %v1991 = vmul.f32 %v1979, %v1988
        %v1992 = vmul.f32 %v1983, %v1988
        %v1993 = vadd.f32 %v1965, %v1989
        %v1994 = vadd.f32 %v1966, %v1990
        %v1995 = vadd.f32 %v1967, %v1991
        %v1996 = vadd.f32 %v1968, %v1992
        %v1997 = vld [vmem:[#allocation3] sm:$0xff]
        %v1998 = vld [vmem:[#allocation3 + $0x8] sm:$0xff]
        %v1999 = vld [vmem:[#allocation3 + $0x10] sm:$0xff]
        %v2000 = vld [vmem:[#allocation3 + $0x18] sm:$0xff]
        %v2001 = vadd.f32 %v1997, %v1993
        %v2002 = vadd.f32 %v1998, %v1994
        %v2003 = vadd.f32 %v1999, %v1995
        %v2004 = vadd.f32 %v2000, %v1996
        %2005 = vst [vmem:[#allocation3] sm:$0xff] %v2001
        %2006 = vst [vmem:[#allocation3 + $0x8] sm:$0xff] %v2002
        %2007 = vst [vmem:[#allocation3 + $0x10] sm:$0xff] %v2003
        %2008 = vst [vmem:[#allocation3 + $0x18] sm:$0xff] %v2004
        %v2009 = vld [vmem:[%s1737] sm:$0xf]
        %v2010 = vld [vmem:[%s1737 + $0x4] sm:$0x1]
        %v2011 = vld [vmem:[%s1737 + $0x8] sm:$0xf]
        %v2012 = vld [vmem:[%s1737 + $0xc] sm:$0x1]
        %v2013 = vld [vmem:[%s1737 + $0x10] sm:$0xf]
        %v2014 = vld [vmem:[%s1737 + $0x14] sm:$0x1]
        %v2015 = vld [vmem:[%s1737 + $0x18] sm:$0xf]
        %v2016 = vld [vmem:[%s1737 + $0x1c] sm:$0x1]
        %v2018 = vshrl.u32 %v2009, 16
        %v2020 = vrot.slane %v2018, 4
        %v2021 = vshll.u32 %v2009, 16
        %v2023 = vrot.slane %v2021, 5
        %v2024 = vor.u32 %v2020, %v2023
        %v2025 = vrot.slane %v2024, 4
        %v2027 = vshll.u32 %v2010, 16
        %v2029 = vrot.slane %v2027, 5
        %v2030 = vsel %vm1074, %v2025, %v2029
        %v2032 = vshrl.u32 %v2011, 16
        %v2034 = vrot.slane %v2032, 4
        %v2035 = vshll.u32 %v2011, 16
        %v2037 = vrot.slane %v2035, 5
        %v2038 = vor.u32 %v2034, %v2037
        %v2039 = vrot.slane %v2038, 4
        %v2041 = vshll.u32 %v2012, 16
        %v2043 = vrot.slane %v2041, 5
        %v2044 = vsel %vm1074, %v2039, %v2043
        %v2046 = vshrl.u32 %v2013, 16
        %v2048 = vrot.slane %v2046, 4
        %v2049 = vshll.u32 %v2013, 16
        %v2051 = vrot.slane %v2049, 5
        %v2052 = vor.u32 %v2048, %v2051
        %v2053 = vrot.slane %v2052, 4
        %v2055 = vshll.u32 %v2014, 16
        %v2057 = vrot.slane %v2055, 5
        %v2058 = vsel %vm1074, %v2053, %v2057
        %v2060 = vshrl.u32 %v2015, 16
        %v2062 = vrot.slane %v2060, 4
        %v2063 = vshll.u32 %v2015, 16
        %v2065 = vrot.slane %v2063, 5
        %v2066 = vor.u32 %v2062, %v2065
        %v2067 = vrot.slane %v2066, 4
        %v2069 = vshll.u32 %v2016, 16
        %v2071 = vrot.slane %v2069, 5
        %v2072 = vsel %vm1074, %v2067, %v2071
        %v2077 = vunpack.c.l.bf16 %v2030
        %v2078 = vunpack.c.l.bf16 %v2044
        %v2079 = vunpack.c.l.bf16 %v2058
        %v2080 = vunpack.c.l.bf16 %v2072
        %s2081 = scalar_lea.vmem %s649, 16
        %v2082 = vld [vmem:[%s2081] sm:$0x3]
        %v2083 = vunpack.c.l.bf16 %v2082
        %2085 = vset.pattern.permute.xlu0 0
        %2086 = vperm.xlu0 %2085, %v2077
        %v2087 = vpop.permute.xlu0 %2086
        %2090 = vset.pattern.permute.xlu0 0
        %2091 = vperm.xlu0 %2090, %v2078
        %v2092 = vpop.permute.xlu0 %2091
        %2095 = vset.pattern.permute.xlu0 0
        %2096 = vperm.xlu0 %2095, %v2079
        %v2097 = vpop.permute.xlu0 %2096
        %2100 = vset.pattern.permute.xlu0 0
        %2101 = vperm.xlu0 %2100, %v2080
        %v2102 = vpop.permute.xlu0 %2101
        %v2104 = vlaneseq
        %v2105 = vshrl.u32 %v2104, 7
        %v2106 = vsub.s32 0, %v2105
        %v2107 = vrot.slane %v2083, %v2106
        %v2108 = vmul.f32 %v2087, %v2107
        %v2109 = vmul.f32 %v2092, %v2107
        %v2110 = vmul.f32 %v2097, %v2107
        %v2111 = vmul.f32 %v2102, %v2107
        %2112 = vset.pattern.permute.xlu0 1
        %2113 = vperm.xlu0 %2112, %v2077
        %v2114 = vpop.permute.xlu0 %2113
        %2116 = vset.pattern.permute.xlu0 1
        %2117 = vperm.xlu0 %2116, %v2078
        %v2118 = vpop.permute.xlu0 %2117
        %2120 = vset.pattern.permute.xlu0 1
        %2121 = vperm.xlu0 %2120, %v2079
        %v2122 = vpop.permute.xlu0 %2121
        %2124 = vset.pattern.permute.xlu0 1
        %2125 = vperm.xlu0 %2124, %v2080
        %v2126 = vpop.permute.xlu0 %2125
        %v2128 = vlaneseq
        %v2129 = vshrl.u32 %v2128, 7
        %v2130 = vsub.s32 1, %v2129
        %v2131 = vrot.slane %v2083, %v2130
        %v2132 = vmul.f32 %v2114, %v2131
        %v2133 = vmul.f32 %v2118, %v2131
        %v2134 = vmul.f32 %v2122, %v2131
        %v2135 = vmul.f32 %v2126, %v2131
        %v2136 = vadd.f32 %v2108, %v2132
        %v2137 = vadd.f32 %v2109, %v2133
        %v2138 = vadd.f32 %v2110, %v2134
        %v2139 = vadd.f32 %v2111, %v2135
        %2140 = vset.pattern.permute.xlu0 2
        %2141 = vperm.xlu0 %2140, %v2077
        %v2142 = vpop.permute.xlu0 %2141
        %2144 = vset.pattern.permute.xlu0 2
        %2145 = vperm.xlu0 %2144, %v2078
        %v2146 = vpop.permute.xlu0 %2145
        %2148 = vset.pattern.permute.xlu0 2
        %2149 = vperm.xlu0 %2148, %v2079
        %v2150 = vpop.permute.xlu0 %2149
        %2152 = vset.pattern.permute.xlu0 2
        %2153 = vperm.xlu0 %2152, %v2080
        %v2154 = vpop.permute.xlu0 %2153
        %v2156 = vlaneseq
        %v2157 = vshrl.u32 %v2156, 7
        %v2158 = vsub.s32 2, %v2157
        %v2159 = vrot.slane %v2083, %v2158
        %v2160 = vmul.f32 %v2142, %v2159
        %v2161 = vmul.f32 %v2146, %v2159
        %v2162 = vmul.f32 %v2150, %v2159
        %v2163 = vmul.f32 %v2154, %v2159
        %v2164 = vadd.f32 %v2136, %v2160
        %v2165 = vadd.f32 %v2137, %v2161
        %v2166 = vadd.f32 %v2138, %v2162
        %v2167 = vadd.f32 %v2139, %v2163
        %2168 = vset.pattern.permute.xlu0 3
        %2169 = vperm.xlu0 %2168, %v2077
        %v2170 = vpop.permute.xlu0 %2169
        %2172 = vset.pattern.permute.xlu0 3
        %2173 = vperm.xlu0 %2172, %v2078
        %v2174 = vpop.permute.xlu0 %2173
        %2176 = vset.pattern.permute.xlu0 3
        %2177 = vperm.xlu0 %2176, %v2079
        %v2178 = vpop.permute.xlu0 %2177
        %2180 = vset.pattern.permute.xlu0 3
        %2181 = vperm.xlu0 %2180, %v2080
        %v2182 = vpop.permute.xlu0 %2181
        %v2184 = vlaneseq
        %v2185 = vshrl.u32 %v2184, 7
        %v2186 = vsub.s32 3, %v2185
        %v2187 = vrot.slane %v2083, %v2186
        %v2188 = vmul.f32 %v2170, %v2187
        %v2189 = vmul.f32 %v2174, %v2187
        %v2190 = vmul.f32 %v2178, %v2187
        %v2191 = vmul.f32 %v2182, %v2187
        %v2192 = vadd.f32 %v2164, %v2188
        %v2193 = vadd.f32 %v2165, %v2189
        %v2194 = vadd.f32 %v2166, %v2190
        %v2195 = vadd.f32 %v2167, %v2191
        %v2196 = vld [vmem:[#allocation3] sm:$0xff]
        %v2197 = vld [vmem:[#allocation3 + $0x8] sm:$0xff]
        %v2198 = vld [vmem:[#allocation3 + $0x10] sm:$0xff]
        %v2199 = vld [vmem:[#allocation3 + $0x18] sm:$0xff]
        %v2200 = vadd.f32 %v2196, %v2192
        %v2201 = vadd.f32 %v2197, %v2193
        %v2202 = vadd.f32 %v2198, %v2194
        %v2203 = vadd.f32 %v2199, %v2195
        %2204 = vst [vmem:[#allocation3] sm:$0xff] %v2200
        %2205 = vst [vmem:[#allocation3 + $0x8] sm:$0xff] %v2201
        %2206 = vst [vmem:[#allocation3 + $0x10] sm:$0xff] %v2202
        %2207 = vst [vmem:[#allocation3 + $0x18] sm:$0xff] %v2203
        %v2208 = vld [vmem:[#allocation3] sm:$0xff]
        %v2209 = vld [vmem:[#allocation3 + $0x8] sm:$0xff]
        %v2210 = vld [vmem:[#allocation3 + $0x10] sm:$0xff]
        %v2211 = vld [vmem:[#allocation3 + $0x18] sm:$0xff]
        %v2212 = vpack.c.bf16 %v2208, %v2208
        %v2213 = vpack.c.bf16 %v2209, %v2209
        %v2214 = vpack.c.bf16 %v2210, %v2210
        %v2215 = vpack.c.bf16 %v2211, %v2211
        %2216 = vst [vmem:[%s664] sm:$0xf] %v2212
        %2217 = vst [vmem:[%s664 + $0x4] sm:$0xf] %v2213
        %2218 = vst [vmem:[%s664 + $0x8] sm:$0xf] %v2214
        %2219 = vst [vmem:[%s664 + $0xc] sm:$0xf] %v2215
        %s2220 = smul.u32 4, %s21
        %p2221 = scmp.lt.s32.totalorder %s20, 1
        %s2222 = scalar_select %p2221, %s20, 1
        %p2223 = scmp.lt.s32.totalorder %s2220, 7
        %s2224 = scalar_select %p2223, %s2220, 7
        %p2225 = scmp.lt.s32.totalorder %s22, 0
        %s2226 = scalar_select %p2225, %s22, 0
        %s2227 = sadd.s32 %s2226, %s2224
        %s2228 = smul.addr %s2222, 8
        %s2229 = sadd.s32 %s2227, %s2228
        %s2230 = smul.addr %s2229, 4
        %s2231 = scalar_lea.vmem %s4, %s2230
        // Predicated region
        $region140: #{downblock_forward.4} parent=130 // pred_check
          %p2232 = pneg %p168
        $region141: #{downblock_forward.4} parent=130 // pred_check_branch
          %2234 = sbr.rel (%p2232) target = $region143
        $region142: #{downblock_forward.4} parent=130 // pred_region
          %s2235 = smul.u32 4, %s21
        $region143: #{downblock_forward.4} parent=130 // pred_fallthru
          _
      $region131: #{downblock_forward.4} parent=5 // pred_fallthru
        _
      %p2236 = scmp.le.s32.totalorder 2, %s10
      // Predicated region
      $region144: #{downblock_forward.4} parent=5 // pred_check
        %p2237 = pneg %p2236
      $region145: #{downblock_forward.4} parent=5 // pred_check_branch
        %2239 = sbr.rel (%p2237) target = $region147
      $region146: #{downblock_forward.4} parent=5 // pred_region
        %s2240 = ssub.s32 %s10, 2
        // Predicated region
        $region148: #{downblock_forward.4} parent=146 // pred_check
          %p2241 = pneg %p174
        $region149: #{downblock_forward.4} parent=146 // pred_check_branch
          %2243 = sbr.rel (%p2241) target = $region151
        $region150: #{downblock_forward.4} parent=146 // pred_region
          %s2244 = smul.u32 4, %s24
          %p2245 = scmp.lt.s32.totalorder %s23, 1
          %s2246 = scalar_select %p2245, %s23, 1
          %p2247 = scmp.lt.s32.totalorder %s2244, 7
          %s2248 = scalar_select %p2247, %s2244, 7
          %p2249 = scmp.lt.s32.totalorder %s25, 0
          %s2250 = scalar_select %p2249, %s25, 0
          %s2251 = sadd.s32 %s2250, %s2248
          %s2252 = smul.addr %s2246, 8
          %s2253 = sadd.s32 %s2251, %s2252
          %s2254 = smul.addr %s2253, 4
          %s2255 = scalar_lea.vmem %s4, %s2254
        $region151: #{downblock_forward.4} parent=146 // pred_fallthru
          _
      $region147: #{downblock_forward.4} parent=5 // pred_fallthru
        _
    $region6: #{downblock_forward.4} parent=1 // loop_footer
      %s14 = sadd.s32 1, %s10
    $region7: #{downblock_forward.4} parent=1 // loop_footer_branch
      %9 = sbr.rel target = $region3
    $region8: #{downblock_forward.4} parent=1 // loop_exit
      _

// kernel: downblock_forward.5
$region0: #{downblock_forward.5}
  #allocation0 [shape = 'u32[]', space=smem, size = 0x4, offset = 0x4, fixed_abs, tag = 'smem constant byte address 0x4 - core index']
  #allocation1 [shape = 'u32[144,128]{1,0:T(1,128)}', space=vmem, size = 0x12000, scoped, tag = 'internal scratch']
  #allocation2 [shape = 'bf16[6,10,128]{2,1,0:T(8,128)(2,1)}', space=vmem, size = 0x6000, scoped, tag = 'scratch operand']
  #allocation3 [shape = 'f32[32,128]{1,0:T(8,128)}', space=vmem, size = 0x4000, scoped, tag = 'scratch operand']
  %s0 = inlined_call_operand.vmem [shape: bf16[2,8,8,128], index: 0, kind: input, shape index: {}, may-alias: {0,1,2}]
  %s1 = inlined_call_operand.vmem [shape: bf16[2,8,8,128], index: 1, kind: input, shape index: {}, may-alias: {0,1,2}]
  %s2 = inlined_call_operand.vmem [shape: bf16[2,8,8,128], index: 2, kind: input, shape index: {}, may-alias: {0,1,2}]
  %s3 = inlined_call_operand.vmem [shape: bf16[9,128,128], index: 3, kind: input, shape index: {}]
  %s4 = inlined_call_operand.vmem [shape: f32[1,128], index: 4, kind: input, shape index: {}]
  %s5 = inlined_call_operand.vmem [shape: f32[128,128], index: 5, kind: input, shape index: {}]
  %s6 = inlined_call_operand.vmem [shape: bf16[2,8,8,128], index: 6, kind: output, shape index: {0}]
  %s7 = inlined_call_operand.vmem [shape: f32[2,2,2,128], index: 7, kind: output, shape index: {1}]
  %8 = xla_tuple %s6, %s7
  %s9 = sld [smem:[#allocation0]]
  $region65: #{downblock_forward.5} parent=0
    _
  %s11 = ssub.s32 1, %s9
  %s12 = scalar_select 0, %s11, %s9
  loop: start=0, step=1, limit=6
  $region2: #{downblock_forward.5} parent=0 // loop_pre_header
    _
  $region3: #{downblock_forward.5} parent=0 // loop_header
    %s14 = sphi 0, %s18
    %p15 = scmp.ge.s32.totalorder %s14, 6
    %s21 = sphi 0, %s40
    %s22 = sphi 0, %s36
    %s23 = sphi 0, %s32
    %s24 = sphi 0, %s21
    %s25 = sphi 0, %s22
    %s26 = sphi 0, %s23
    %s27 = sphi 0, %s24
    %s28 = sphi 0, %s25
    %s29 = sphi 0, %s26
    %s45 = sphi 0, %s47
    %s48 = sphi 0, %s45
    %s49 = sphi 0, %s48
    %s65 = sphi 0, %s49
    %s81 = sphi 0, %s83
    %s84 = sphi 0, %s81
    %s85 = sphi 0, %s84
    %s101 = sphi 0, %s85
    %s117 = sphi 0, %s119
    %s120 = sphi 0, %s117
    %s121 = sphi 0, %s120
    %s137 = sphi 0, %s121
    %s143 = sphi 0, %s145
    %s146 = sphi 0, %s143
    %s147 = sphi 0, %s146
    %s163 = sphi 0, %s147
    %s169 = sphi 0, %s171
    %s172 = sphi 0, %s169
    %s173 = sphi 0, %s172
    %s189 = sphi 0, %s173
    %s195 = sphi 0, %s197
    %s198 = sphi 0, %s195
    %s199 = sphi 0, %s198
    %s215 = sphi 0, %s199
    %s225 = sphi 0, %s227
    %s228 = sphi 0, %s225
    %s229 = sphi 0, %s228
    %s245 = sphi 0, %s229
    %s255 = sphi 0, %s257
    %s258 = sphi 0, %s255
    %s259 = sphi 0, %s258
    %s275 = sphi 0, %s259
  $region4: #{downblock_forward.5} parent=0 // loop_header_branch
    %17 = sbr.rel (%p15) target = $region8
  $region5: #{downblock_forward.5} parent=0 // loop_body
    %s19 = ssub.s32 %s14, 1
    %s20 = ssub.s32 %s14, 2
    %s30 = sadd.s32 1, %s23
    %p31 = scmp.ge.s32.totalorder %s30, 1
    %s32 = scalar_select %p31, 0, %s30
    %s33 = sadd.s32 1, %s22
    %s34 = scalar_select %p31, %s33, %s22
    %p35 = scmp.ge.s32.totalorder %s34, 2
    %s36 = scalar_select %p35, 0, %s34
    %s37 = sadd.s32 1, %s21
    %s38 = scalar_select %p35, %s37, %s21
    %p39 = scmp.ge.s32.totalorder %s38, 2
    %s40 = scalar_select %p39, 0, %s38
    %s41 = ssub.s32 %s21, %s40
    %s42 = ssub.s32 %s22, %s36
    %s43 = sor.u32 %s41, %s42
    %p44 = scmp.eq.s32.totalorder %s43, 0
    %s46 = sadd.s32 %s45, 1
    %s47 = scalar_select %p44, %s45, %s46
    %p50 = pneg %p44
    %p51 = scmp.eq.s32.totalorder %s14, 3
    %p52 = por %p50, %p51
    %p53 = scmp.ne.s32.totalorder %s45, %s48
    %p54 = scmp.eq.s32.totalorder %s14, 0
    %p55 = por %p53, %p54
    %p56 = scmp.ne.s32.totalorder %s45, %s48
    %p57 = scmp.eq.s32.totalorder %s19, 3
    %p58 = por %p56, %p57
    %p59 = scmp.ne.s32.totalorder %s48, %s49
    %p60 = scmp.eq.s32.totalorder %s19, 0
    %p61 = por %p59, %p60
    %p62 = scmp.ne.s32.totalorder %s48, %s49
    %p63 = scmp.eq.s32.totalorder %s20, 3
    %p64 = por %p62, %p63
    %p66 = scmp.ne.s32.totalorder %s49, %s65
    %p67 = scmp.eq.s32.totalorder %s20, 0
    %p68 = por %p66, %p67
    %s69 = smul.u32 %s22, 4
    %s70 = ssub.s32 %s69, 1
    %p71 = scmp.gt.s32.totalorder %s70, 0
    %s72 = scalar_select %p71, %s70, 0
    %s73 = smul.u32 %s36, 4
    %s74 = ssub.s32 %s73, 1
    %p75 = scmp.gt.s32.totalorder %s74, 0
    %s76 = scalar_select %p75, %s74, 0
    %s77 = ssub.s32 %s21, %s40
    %s78 = ssub.s32 %s72, %s76
    %s79 = sor.u32 %s77, %s78
    %p80 = scmp.eq.s32.totalorder %s79, 0
    %s82 = sadd.s32 %s81, 1
    %s83 = scalar_select %p80, %s81, %s82
    %p86 = pneg %p80
    %p87 = scmp.eq.s32.totalorder %s14, 3
    %p88 = por %p86, %p87
    %p89 = scmp.ne.s32.totalorder %s81, %s84
    %p90 = scmp.eq.s32.totalorder %s14, 0
    %p91 = por %p89, %p90
    %p92 = scmp.ne.s32.totalorder %s81, %s84
    %p93 = scmp.eq.s32.totalorder %s19, 3
    %p94 = por %p92, %p93
    %p95 = scmp.ne.s32.totalorder %s84, %s85
    %p96 = scmp.eq.s32.totalorder %s19, 0
    %p97 = por %p95, %p96
    %p98 = scmp.ne.s32.totalorder %s84, %s85
    %p99 = scmp.eq.s32.totalorder %s20, 3
    %p100 = por %p98, %p99
    %p102 = scmp.ne.s32.totalorder %s85, %s101
    %p103 = scmp.eq.s32.totalorder %s20, 0
    %p104 = por %p102, %p103
    %s105 = smul.u32 %s22, 4
    %s106 = sadd.s32 %s105, 4
    %p107 = scmp.lt.s32.totalorder %s106, 7
    %s108 = scalar_select %p107, %s106, 7
    %s109 = smul.u32 %s36, 4
    %s110 = sadd.s32 %s109, 4
    %p111 = scmp.lt.s32.totalorder %s110, 7
    %s112 = scalar_select %p111, %s110, 7
    %s113 = ssub.s32 %s21, %s40
    %s114 = ssub.s32 %s108, %s112
    %s115 = sor.u32 %s113, %s114
    %p116 = scmp.eq.s32.totalorder %s115, 0
    %s118 = sadd.s32 %s117, 1
    %s119 = scalar_select %p116, %s117, %s118
    %p122 = pneg %p116
    %p123 = scmp.eq.s32.totalorder %s14, 3
    %p124 = por %p122, %p123
    %p125 = scmp.ne.s32.totalorder %s117, %s120
    %p126 = scmp.eq.s32.totalorder %s14, 0
    %p127 = por %p125, %p126
    %p128 = scmp.ne.s32.totalorder %s117, %s120
    %p129 = scmp.eq.s32.totalorder %s19, 3
    %p130 = por %p128, %p129
    %p131 = scmp.ne.s32.totalorder %s120, %s121
    %p132 = scmp.eq.s32.totalorder %s19, 0
    %p133 = por %p131, %p132
    %p134 = scmp.ne.s32.totalorder %s120, %s121
    %p135 = scmp.eq.s32.totalorder %s20, 3
    %p136 = por %p134, %p135
    %p138 = scmp.ne.s32.totalorder %s121, %s137
    %p139 = scmp.eq.s32.totalorder %s20, 0
    %p140 = por %p138, %p139
    %s141 = ssub.s32 %s23, %s32
    %p142 = scmp.eq.s32.totalorder %s141, 0
    %s144 = sadd.s32 %s143, 1
    %s145 = scalar_select %p142, %s143, %s144
    %p148 = pneg %p142
    %p149 = scmp.eq.s32.totalorder %s14, 3
    %p150 = por %p148, %p149
    %p151 = scmp.ne.s32.totalorder %s143, %s146
    %p152 = scmp.eq.s32.totalorder %s14, 0
    %p153 = por %p151, %p152
    %p154 = scmp.ne.s32.totalorder %s143, %s146
    %p155 = scmp.eq.s32.totalorder %s19, 3
    %p156 = por %p154, %p155
    %p157 = scmp.ne.s32.totalorder %s146, %s147
    %p158 = scmp.eq.s32.totalorder %s19, 0
    %p159 = por %p157, %p158
    %p160 = scmp.ne.s32.totalorder %s146, %s147
    %p161 = scmp.eq.s32.totalorder %s20, 3
    %p162 = por %p160, %p161
    %p164 = scmp.ne.s32.totalorder %s147, %s163
    %p165 = scmp.eq.s32.totalorder %s20, 0
    %p166 = por %p164, %p165
    %s167 = ssub.s32 %s23, %s32
    %p168 = scmp.eq.s32.totalorder %s167, 0
    %s170 = sadd.s32 %s169, 1
    %s171 = scalar_select %p168, %s169, %s170
    %p174 = pneg %p168
    %p175 = scmp.eq.s32.totalorder %s14, 3
    %p176 = por %p174, %p175
    %p177 = scmp.ne.s32.totalorder %s169, %s172
    %p178 = scmp.eq.s32.totalorder %s14, 0
    %p179 = por %p177, %p178
    %p180 = scmp.ne.s32.totalorder %s169, %s172
    %p181 = scmp.eq.s32.totalorder %s19, 3
    %p182 = por %p180, %p181
    %p183 = scmp.ne.s32.totalorder %s172, %s173
    %p184 = scmp.eq.s32.totalorder %s19, 0
    %p185 = por %p183, %p184
    %p186 = scmp.ne.s32.totalorder %s172, %s173
    %p187 = scmp.eq.s32.totalorder %s20, 3
    %p188 = por %p186, %p187
    %p190 = scmp.ne.s32.totalorder %s173, %s189
    %p191 = scmp.eq.s32.totalorder %s20, 0
    %p192 = por %p190, %p191
    %s193 = ssub.s32 %s23, %s32
    %p194 = scmp.eq.s32.totalorder %s193, 0
    %s196 = sadd.s32 %s195, 1
    %s197 = scalar_select %p194, %s195, %s196
    %p200 = pneg %p194
    %p201 = scmp.eq.s32.totalorder %s14, 3
    %p202 = por %p200, %p201
    %p203 = scmp.ne.s32.totalorder %s195, %s198
    %p204 = scmp.eq.s32.totalorder %s14, 0
    %p205 = por %p203, %p204
    %p206 = scmp.ne.s32.totalorder %s195, %s198
    %p207 = scmp.eq.s32.totalorder %s19, 3
    %p208 = por %p206, %p207
    %p209 = scmp.ne.s32.totalorder %s198, %s199
    %p210 = scmp.eq.s32.totalorder %s19, 0
    %p211 = por %p209, %p210
    %p212 = scmp.ne.s32.totalorder %s198, %s199
    %p213 = scmp.eq.s32.totalorder %s20, 3
    %p214 = por %p212, %p213
    %p216 = scmp.ne.s32.totalorder %s199, %s215
    %p217 = scmp.eq.s32.totalorder %s20, 0
    %p218 = por %p216, %p217
    %s219 = ssub.s32 %s21, %s40
    %s220 = ssub.s32 %s22, %s36
    %s221 = sor.u32 %s219, %s220
    %s222 = ssub.s32 %s23, %s32
    %s223 = sor.u32 %s221, %s222
    %p224 = scmp.eq.s32.totalorder %s223, 0
    %s226 = sadd.s32 %s225, 1
    %s227 = scalar_select %p224, %s225, %s226
    %p230 = pneg %p224
    %p231 = scmp.eq.s32.totalorder %s14, 3
    %p232 = por %p230, %p231
    %p233 = scmp.ne.s32.totalorder %s225, %s228
    %p234 = scmp.eq.s32.totalorder %s14, 0
    %p235 = por %p233, %p234
    %p236 = scmp.ne.s32.totalorder %s225, %s228
    %p237 = scmp.eq.s32.totalorder %s19, 3
    %p238 = por %p236, %p237
    %p239 = scmp.ne.s32.totalorder %s228, %s229
    %p240 = scmp.eq.s32.totalorder %s19, 0
    %p241 = por %p239, %p240
    %p242 = scmp.ne.s32.totalorder %s228, %s229
    %p243 = scmp.eq.s32.totalorder %s20, 3
    %p244 = por %p242, %p243
    %p246 = scmp.ne.s32.totalorder %s229, %s245
    %p247 = scmp.eq.s32.totalorder %s20, 0
    %p248 = por %p246, %p247
    %s249 = sadd.s32 %s22, %s23
    %s250 = sadd.s32 %s36, %s32
    %s251 = ssub.s32 %s21, %s40
    %s252 = ssub.s32 %s249, %s250
    %s253 = sor.u32 %s251, %s252
    %p254 = scmp.eq.s32.totalorder %s253, 0
    %s256 = sadd.s32 %s255, 1
    %s257 = scalar_select %p254, %s255, %s256
    %p260 = pneg %p254
    %p261 = scmp.eq.s32.totalorder %s14, 3
    %p262 = por %p260, %p261
    %p263 = scmp.ne.s32.totalorder %s255, %s258
    %p264 = scmp.eq.s32.totalorder %s14, 0
    %p265 = por %p263, %p264
    %p266 = scmp.ne.s32.totalorder %s255, %s258
    %p267 = scmp.eq.s32.totalorder %s19, 3
    %p268 = por %p266, %p267
    %p269 = scmp.ne.s32.totalorder %s258, %s259
    %p270 = scmp.eq.s32.totalorder %s19, 0
    %p271 = por %p269, %p270
    %p272 = scmp.ne.s32.totalorder %s258, %s259
    %p273 = scmp.eq.s32.totalorder %s20, 3
    %p274 = por %p272, %p273
    %p276 = scmp.ne.s32.totalorder %s259, %s275
    %p277 = scmp.eq.s32.totalorder %s20, 0
    %p278 = por %p276, %p277
    %p279 = scmp.le.s32.totalorder 1, %s14
    %p280 = scmp.lt.s32.totalorder %s14, 5
    %p281 = pnand %p279, %p280
    %p282 = pneg %p281
    // Predicated region
    $region9: #{downblock_forward.5} parent=5 // pred_check
      _
    $region10: #{downblock_forward.5} parent=5 // pred_check_branch
      %284 = sbr.rel (%p281) target = $region12
    $region11: #{downblock_forward.5} parent=5 // pred_region
      %s285 = ssub.s32 %s14, 1
      // Predicated region
      $region13: #{downblock_forward.5} parent=11 // pred_check
        %p286 = pneg %p159
      $region14: #{downblock_forward.5} parent=11 // pred_check_branch
        %288 = sbr.rel (%p286) target = $region16
      $region15: #{downblock_forward.5} parent=11 // pred_region
        %p289 = scmp.lt.s32.totalorder %s26, 0
        %s290 = scalar_select %p289, %s26, 0
        %s291 = smul.addr %s290, 4
        %s292 = scalar_lea.vmem %s3, %s291
      $region16: #{downblock_forward.5} parent=11 // pred_fallthru
        _
      // Predicated region
      $region17: #{downblock_forward.5} parent=11 // pred_check
        %p293 = pneg %p185
      $region18: #{downblock_forward.5} parent=11 // pred_check_branch
        %295 = sbr.rel (%p293) target = $region20
      $region19: #{downblock_forward.5} parent=11 // pred_region
        %p296 = scmp.lt.s32.totalorder %s26, 0
        %s297 = scalar_select %p296, %s26, 0
        %s298 = scalar_lea.vmem %s4, %s297
      $region20: #{downblock_forward.5} parent=11 // pred_fallthru
        _
      // Predicated region
      $region21: #{downblock_forward.5} parent=11 // pred_check
        %p299 = pneg %p211
      $region22: #{downblock_forward.5} parent=11 // pred_check_branch
        %301 = sbr.rel (%p299) target = $region24
      $region23: #{downblock_forward.5} parent=11 // pred_region
        %s302 = smul.u32 16, %s26
        %p303 = scmp.lt.s32.totalorder %s302, 15
        %s304 = scalar_select %p303, %s302, 15
        %s305 = smul.addr %s304, 8
        %s306 = scalar_lea.vmem %s5, %s305
        %s307 = smul.u32 16, %s26
      $region24: #{downblock_forward.5} parent=11 // pred_fallthru
        _
    $region12: #{downblock_forward.5} parent=5 // pred_fallthru
      _
    %p308 = scmp.lt.s32.totalorder %s14, 4
    // Predicated region
    $region25: #{downblock_forward.5} parent=5 // pred_check
      %p309 = pneg %p308
    $region26: #{downblock_forward.5} parent=5 // pred_check_branch
      %311 = sbr.rel (%p309) target = $region28
    $region27: #{downblock_forward.5} parent=5 // pred_region
      // Predicated region
      $region29: #{downblock_forward.5} parent=27 // pred_check
        %p312 = pneg %p55
      $region30: #{downblock_forward.5} parent=27 // pred_check_branch
        %314 = sbr.rel (%p312) target = $region32
      $region31: #{downblock_forward.5} parent=27 // pred_region
        %s315 = smul.u32 4, %s22
        %p316 = scmp.lt.s32.totalorder %s21, 1
        %s317 = scalar_select %p316, %s21, 1
        %p318 = scmp.lt.s32.totalorder %s315, 7
        %s319 = scalar_select %p318, %s315, 7
        %s320 = smul.addr %s317, 8
        %s321 = sadd.s32 %s319, %s320
        %s322 = smul.addr %s321, 4
        %s323 = scalar_lea.vmem %s0, %s322
        %s324 = smul.u32 4, %s22
      $region32: #{downblock_forward.5} parent=27 // pred_fallthru
        _
      // Predicated region
      $region33: #{downblock_forward.5} parent=27 // pred_check
        %p325 = pneg %p91
      $region34: #{downblock_forward.5} parent=27 // pred_check_branch
        %327 = sbr.rel (%p325) target = $region36
      $region35: #{downblock_forward.5} parent=27 // pred_region
        %s328 = smul.u32 %s22, 4
        %s329 = ssub.s32 %s328, 1
        %p330 = scmp.gt.s32.totalorder %s329, 0
        %s331 = scalar_select %p330, %s329, 0
        %p332 = scmp.lt.s32.totalorder %s21, 1
        %s333 = scalar_select %p332, %s21, 1
        %p334 = scmp.lt.s32.totalorder %s331, 7
        %s335 = scalar_select %p334, %s331, 7
        %s336 = smul.addr %s333, 8
        %s337 = sadd.s32 %s335, %s336
        %s338 = smul.addr %s337, 4
        %s339 = scalar_lea.vmem %s1, %s338
        %s340 = smul.u32 %s22, 4
        %s341 = ssub.s32 %s340, 1
        %p342 = scmp.gt.s32.totalorder %s341, 0
        %s343 = scalar_select %p342, %s341, 0
      $region36: #{downblock_forward.5} parent=27 // pred_fallthru
        _
      // Predicated region
      $region37: #{downblock_forward.5} parent=27 // pred_check
        %p344 = pneg %p127
      $region38: #{downblock_forward.5} parent=27 // pred_check_branch
        %346 = sbr.rel (%p344) target = $region40
      $region39: #{downblock_forward.5} parent=27 // pred_region
        %s347 = smul.u32 %s22, 4
        %s348 = sadd.s32 %s347, 4
        %p349 = scmp.lt.s32.totalorder %s348, 7
        %s350 = scalar_select %p349, %s348, 7
        %p351 = scmp.lt.s32.totalorder %s21, 1
        %s352 = scalar_select %p351, %s21, 1
        %p353 = scmp.lt.s32.totalorder %s350, 7
        %s354 = scalar_select %p353, %s350, 7
        %s355 = smul.addr %s352, 8
        %s356 = sadd.s32 %s354, %s355
        %s357 = smul.addr %s356, 4
        %s358 = scalar_lea.vmem %s2, %s357
        %s359 = smul.u32 %s22, 4
        %s360 = sadd.s32 %s359, 4
        %p361 = scmp.lt.s32.totalorder %s360, 7
        %s362 = scalar_select %p361, %s360, 7
      $region40: #{downblock_forward.5} parent=27 // pred_fallthru
        _
    $region28: #{downblock_forward.5} parent=5 // pred_fallthru
      _
    %p363 = scmp.le.s32.totalorder 1, %s14
    %p364 = scmp.lt.s32.totalorder %s14, 5
    %p365 = pnand %p363, %p364
    %p366 = pneg %p365
    // Predicated region
    $region41: #{downblock_forward.5} parent=5 // pred_check
      _
    $region42: #{downblock_forward.5} parent=5 // pred_check_branch
      %368 = sbr.rel (%p365) target = $region44
    $region43: #{downblock_forward.5} parent=5 // pred_region
      %s369 = ssub.s32 %s14, 1
      %s370 = smul.u32 4, %s25
      %p371 = scmp.lt.s32.totalorder %s24, 1
      %s372 = scalar_select %p371, %s24, 1
      %p373 = scmp.lt.s32.totalorder %s370, 7
      %s374 = scalar_select %p373, %s370, 7
      %s375 = smul.addr %s372, 8
      %s376 = sadd.s32 %s374, %s375
      %s377 = smul.addr %s376, 4
      %s378 = scalar_lea.vmem %s0, %s377
      %p379 = pneg %p61
      %p380 = pneg %p58
      %s381 = smul.u32 %s25, 4
      %s382 = ssub.s32 %s381, 1
      %p383 = scmp.gt.s32.totalorder %s382, 0
      %s384 = scalar_select %p383, %s382, 0
      %p385 = scmp.lt.s32.totalorder %s24, 1
      %s386 = scalar_select %p385, %s24, 1
      %p387 = scmp.lt.s32.totalorder %s384, 7
      %s388 = scalar_select %p387, %s384, 7
      %s389 = smul.addr %s386, 8
      %s390 = sadd.s32 %s388, %s389
      %s391 = smul.addr %s390, 4
      %s392 = scalar_lea.vmem %s1, %s391
      %p393 = pneg %p97
      %p394 = pneg %p94
      %s395 = smul.u32 %s25, 4
      %s396 = sadd.s32 %s395, 4
      %p397 = scmp.lt.s32.totalorder %s396, 7
      %s398 = scalar_select %p397, %s396, 7
      %p399 = scmp.lt.s32.totalorder %s24, 1
      %s400 = scalar_select %p399, %s24, 1
      %p401 = scmp.lt.s32.totalorder %s398, 7
      %s402 = scalar_select %p401, %s398, 7
      %s403 = smul.addr %s400, 8
      %s404 = sadd.s32 %s402, %s403
      %s405 = smul.addr %s404, 4
      %s406 = scalar_lea.vmem %s2, %s405
      %p407 = pneg %p133
      %p408 = pneg %p130
      %p409 = scmp.lt.s32.totalorder %s26, 0
      %s410 = scalar_select %p409, %s26, 0
      %s411 = smul.addr %s410, 4
      %s412 = scalar_lea.vmem %s3, %s411
      %p413 = pneg %p159
      %p414 = pneg %p156
      %p415 = scmp.lt.s32.totalorder %s26, 0
      %s416 = scalar_select %p415, %s26, 0
      %s417 = scalar_lea.vmem %s4, %s416
      %p418 = pneg %p185
      %p419 = pneg %p182
      %s420 = smul.u32 16, %s26
      %p421 = scmp.lt.s32.totalorder %s420, 15
      %s422 = scalar_select %p421, %s420, 15
      %s423 = smul.addr %s422, 8
      %s424 = scalar_lea.vmem %s5, %s423
      %p425 = pneg %p211
      %p426 = pneg %p208
      %p427 = pneg %p241
      %p428 = pneg %p238
      %s429 = smul.u32 4, %s25
      %p430 = scmp.lt.s32.totalorder %s24, 1
      %s431 = scalar_select %p430, %s24, 1
      %p432 = scmp.lt.s32.totalorder %s429, 7
      %s433 = scalar_select %p432, %s429, 7
      %p434 = scmp.lt.s32.totalorder %s26, 0
      %s435 = scalar_select %p434, %s26, 0
      %s436 = sadd.s32 %s435, %s433
      %s437 = smul.addr %s431, 8
      %s438 = sadd.s32 %s436, %s437
      %s439 = smul.addr %s438, 4
      %s440 = scalar_lea.vmem %s6, %s439
      %p441 = pneg %p271
      %p442 = pneg %p268
      %s443 = sadd.s32 %s25, %s26
      %p444 = scmp.lt.s32.totalorder %s24, 1
      %s445 = scalar_select %p444, %s24, 1
      %p446 = scmp.lt.s32.totalorder %s443, 1
      %s447 = scalar_select %p446, %s443, 1
      %s448 = smul.addr %s445, 2
      %s449 = sadd.s32 %s447, %s448
      %s450 = smul.addr %s449, 2
      %s451 = scalar_lea.vmem %s7, %s450
      %s452 = smul.u32 4, %s25
      %p453 = scmp.lt.s32.totalorder %s24, 1
      %s454 = scalar_select %p453, %s24, 1
      %p455 = scmp.lt.s32.totalorder %s452, 7
      %s456 = scalar_select %p455, %s452, 7
      %s457 = smul.addr %s454, 8
      %s458 = sadd.s32 %s456, %s457
      %s459 = smul.addr %s458, 4
      %s460 = scalar_lea.vmem %s0, %s459
      %s461 = smul.u32 4, %s25
      %s462 = smul.u32 %s25, 4
      %s463 = ssub.s32 %s462, 1
      %p464 = scmp.gt.s32.totalorder %s463, 0
      %s465 = scalar_select %p464, %s463, 0
      %p466 = scmp.lt.s32.totalorder %s24, 1
      %s467 = scalar_select %p466, %s24, 1
      %p468 = scmp.lt.s32.totalorder %s465, 7
      %s469 = scalar_select %p468, %s465, 7
      %s470 = smul.addr %s467, 8
      %s471 = sadd.s32 %s469, %s470
      %s472 = smul.addr %s471, 4
      %s473 = scalar_lea.vmem %s1, %s472
      %s474 = smul.u32 %s25, 4
      %s475 = ssub.s32 %s474, 1
      %p476 = scmp.gt.s32.totalorder %s475, 0
      %s477 = scalar_select %p476, %s475, 0
      %s478 = smul.u32 %s25, 4
      %s479 = sadd.s32 %s478, 4
      %p480 = scmp.lt.s32.totalorder %s479, 7
      %s481 = scalar_select %p480, %s479, 7
      %p482 = scmp.lt.s32.totalorder %s24, 1
      %s483 = scalar_select %p482, %s24, 1
      %p484 = scmp.lt.s32.totalorder %s481, 7
      %s485 = scalar_select %p484, %s481, 7
      %s486 = smul.addr %s483, 8
      %s487 = sadd.s32 %s485, %s486
      %s488 = smul.addr %s487, 4
      %s489 = scalar_lea.vmem %s2, %s488
      %s490 = smul.u32 %s25, 4
      %s491 = sadd.s32 %s490, 4
      %p492 = scmp.lt.s32.totalorder %s491, 7
      %s493 = scalar_select %p492, %s491, 7
      %p494 = scmp.lt.s32.totalorder %s26, 0
      %s495 = scalar_select %p494, %s26, 0
      %s496 = smul.addr %s495, 4
      %s497 = scalar_lea.vmem %s3, %s496
      %p498 = scmp.lt.s32.totalorder %s26, 0
      %s499 = scalar_select %p498, %s26, 0
      %s500 = scalar_lea.vmem %s4, %s499
      %s501 = smul.u32 16, %s26
      %p502 = scmp.lt.s32.totalorder %s501, 15
      %s503 = scalar_select %p502, %s501, 15
      %s504 = smul.addr %s503, 8
      %s505 = scalar_lea.vmem %s5, %s504
      %s506 = smul.u32 16, %s26
      %s507 = smul.u32 4, %s25
      %p508 = scmp.lt.s32.totalorder %s24, 1
      %s509 = scalar_select %p508, %s24, 1
      %p510 = scmp.lt.s32.totalorder %s507, 7
      %s511 = scalar_select %p510, %s507, 7
      %p512 = scmp.lt.s32.totalorder %s26, 0
      %s513 = scalar_select %p512, %s26, 0
      %s514 = sadd.s32 %s513, %s511
      %s515 = smul.addr %s509, 8
      %s516 = sadd.s32 %s514, %s515
      %s517 = smul.addr %s516, 4
      %s518 = scalar_lea.vmem %s6, %s517
      %s519 = smul.u32 4, %s25
      %s520 = sadd.s32 %s25, %s26
      %p521 = scmp.lt.s32.totalorder %s24, 1
      %s522 = scalar_select %p521, %s24, 1
      %p523 = scmp.lt.s32.totalorder %s520, 1
      %s524 = scalar_select %p523, %s520, 1
      %s525 = smul.addr %s522, 2
      %s526 = sadd.s32 %s524, %s525
      %s527 = smul.addr %s526, 2
      %s528 = scalar_lea.vmem %s7, %s527
      %s529 = sadd.s32 %s25, %s26
      %v531 = vld [vmem:[%s473] sm:$0xf]
      %v532 = vld [vmem:[%s489] sm:$0xf]
      %p533 = scmp.gt.s32.totalorder %s25, 0
      %s534 = scalar_select %p533, 1, 0
      %v535 = vstv %s534
      %vm536 = vcmp.eq.s32.totalorder %v535, 1
      %v537 = vsel %vm536, %v531, 0
      %p538 = scmp.lt.s32.totalorder %s25, 1
      %s539 = scalar_select %p538, 1, 0
      %v540 = vstv %s539
      %vm541 = vcmp.eq.s32.totalorder %v540, 1
      %v542 = vsel %vm541, %v532, 0
      %v543 = vld [vmem:[%s460] sm:$0xf]
      %v544 = vld [vmem:[%s460 + $0x4] sm:$0xf]
      %v545 = vld [vmem:[%s460 + $0x8] sm:$0xf]
      %v546 = vld [vmem:[%s460 + $0xc] sm:$0xf]
      %vm547 = vcmask 1040384
      %vm548 = vsmask.f32 256
      %vm549 = vmand %vm547, %vm548
      %v550 = vld [vmem:[#allocation2] sm:$0x1]
      %v551 = vsel %vm549, 0, %v550
      %552 = vst [vmem:[#allocation2] sm:$0x1] %v551
      %v553 = vld [vmem:[#allocation2 + $0x8] sm:$0x1]
      %v554 = vsel %vm549, 0, %v553
      %555 = vst [vmem:[#allocation2 + $0x8] sm:$0x1] %v554
      %v556 = vld [vmem:[#allocation2 + $0x10] sm:$0x1]
      %v557 = vsel %vm549, 0, %v556
      %558 = vst [vmem:[#allocation2 + $0x10] sm:$0x1] %v557
      %v559 = vld [vmem:[#allocation2 + $0x18] sm:$0x1]
      %v560 = vsel %vm549, 0, %v559
      %561 = vst [vmem:[#allocation2 + $0x18] sm:$0x1] %v560
      %v562 = vld [vmem:[#allocation2 + $0x20] sm:$0x1]
      %v563 = vsel %vm549, 0, %v562
      %564 = vst [vmem:[#allocation2 + $0x20] sm:$0x1] %v563
      %v565 = vld [vmem:[#allocation2 + $0x28] sm:$0x1]
      %v566 = vsel %vm549, 0, %v565
      %567 = vst [vmem:[#allocation2 + $0x28] sm:$0x1] %v566
      %vm568 = vsmask.f32 7938
      %vm569 = vmand %vm547, %vm568
      %v570 = vld [vmem:[#allocation2 + $0x4] sm:$0x1]
      %v571 = vsel %vm569, 0, %v570
      %572 = vst [vmem:[#allocation2 + $0x4] sm:$0x1] %v571
      %v573 = vld [vmem:[#allocation2 + $0xc] sm:$0x1]
      %v574 = vsel %vm569, 0, %v573
      %575 = vst [vmem:[#allocation2 + $0xc] sm:$0x1] %v574
      %v576 = vld [vmem:[#allocation2 + $0x14] sm:$0x1]
      %v577 = vsel %vm569, 0, %v576
      %578 = vst [vmem:[#allocation2 + $0x14] sm:$0x1] %v577
      %v579 = vld [vmem:[#allocation2 + $0x1c] sm:$0x1]
      %v580 = vsel %vm569, 0, %v579
      %581 = vst [vmem:[#allocation2 + $0x1c] sm:$0x1] %v580
      %v582 = vld [vmem:[#allocation2 + $0x24] sm:$0x1]
      %v583 = vsel %vm569, 0, %v582
      %584 = vst [vmem:[#allocation2 + $0x24] sm:$0x1] %v583
      %v585 = vld [vmem:[#allocation2 + $0x2c] sm:$0x1]
      %v586 = vsel %vm569, 0, %v585
      %587 = vst [vmem:[#allocation2 + $0x2c] sm:$0x1] %v586
      %v589 = vshrl.u32 %v537, 16
      %v591 = vrot.slane %v589, 7
      %v592 = vshll.u32 %v537, 16
      %v594 = vor.u32 %v591, %v592
      %v595 = vrot.slane %v591, 4
      %vm598 = vcmask 1043456
      %vm599 = vmand %vm598, %vm568
      %v600 = vld [vmem:[#allocation2] sm:$0xf]
      %v601 = vsel %vm599, %v594, %v600
      %602 = vst [vmem:[#allocation2] sm:$0xf] %v601
      %v603 = vld [vmem:[#allocation2 + $0x4] sm:$0x1]
      %v604 = vsel %vm549, %v595, %v603
      %605 = vst [vmem:[#allocation2 + $0x4] sm:$0x1] %v604
      %v607 = vshrl.u32 %v543, 16
      %v609 = vrot.slane %v607, 7
      %v610 = vshll.u32 %v543, 16
      %v612 = vor.u32 %v609, %v610
      %v613 = vrot.slane %v609, 4
      %v615 = vshrl.u32 %v544, 16
      %v617 = vrot.slane %v615, 7
      %v618 = vshll.u32 %v544, 16
      %v620 = vor.u32 %v617, %v618
      %v621 = vrot.slane %v617, 4
      %v623 = vshrl.u32 %v545, 16
      %v625 = vrot.slane %v623, 7
      %v626 = vshll.u32 %v545, 16
      %v628 = vor.u32 %v625, %v626
      %v629 = vrot.slane %v625, 4
      %v631 = vshrl.u32 %v546, 16
      %v633 = vrot.slane %v631, 7
      %v634 = vshll.u32 %v546, 16
      %v636 = vor.u32 %v633, %v634
      %v637 = vrot.slane %v633, 4
      %s646 = scalar_lea.vmem [#allocation2], 8
      %v647 = vld [vmem:[%s646] sm:$0xf]
      %v648 = vsel %vm599, %v612, %v647
      %649 = vst [vmem:[%s646] sm:$0xf] %v648
      %v650 = vld [vmem:[%s646 + $0x4] sm:$0x1]
      %v651 = vsel %vm549, %v613, %v650
      %652 = vst [vmem:[%s646 + $0x4] sm:$0x1] %v651
      %v653 = vld [vmem:[%s646 + $0x8] sm:$0xf]
      %v654 = vsel %vm599, %v620, %v653
      %655 = vst [vmem:[%s646 + $0x8] sm:$0xf] %v654
      %v656 = vld [vmem:[%s646 + $0xc] sm:$0x1]
      %v657 = vsel %vm549, %v621, %v656
      %658 = vst [vmem:[%s646 + $0xc] sm:$0x1] %v657
      %v659 = vld [vmem:[%s646 + $0x10] sm:$0xf]
      %v660 = vsel %vm599, %v628, %v659
      %661 = vst [vmem:[%s646 + $0x10] sm:$0xf] %v660
      %v662 = vld [vmem:[%s646 + $0x14] sm:$0x1]
      %v663 = vsel %vm549, %v629, %v662
      %664 = vst [vmem:[%s646 + $0x14] sm:$0x1] %v663
      %v665 = vld [vmem:[%s646 + $0x18] sm:$0xf]
      %v666 = vsel %vm599, %v636, %v665
      %667 = vst [vmem:[%s646 + $0x18] sm:$0xf] %v666
      %v668 = vld [vmem:[%s646 + $0x1c] sm:$0x1]
      %v669 = vsel %vm549, %v637, %v668
      %670 = vst [vmem:[%s646 + $0x1c] sm:$0x1] %v669
      %v672 = vshrl.u32 %v542, 16
      %v674 = vrot.slane %v672, 7
      %v675 = vshll.u32 %v542, 16
      %v677 = vor.u32 %v674, %v675
      %v678 = vrot.slane %v674, 4
      %s681 = scalar_lea.vmem [#allocation2], 40
      %v682 = vld [vmem:[%s681] sm:$0xf]
      %v683 = vsel %vm599, %v677, %v682
      %684 = vst [vmem:[%s681] sm:$0xf] %v683
      %v685 = vld [vmem:[%s681 + $0x4] sm:$0x1]
      %v686 = vsel %vm549, %v678, %v685
      %687 = vst [vmem:[%s681 + $0x4] sm:$0x1] %v686
      %v688 = vld [vmem:[#allocation2] sm:$0xf]
      %v689 = vld [vmem:[#allocation2 + $0x8] sm:$0xf]
      %v690 = vld [vmem:[#allocation2 + $0x10] sm:$0xf]
      %v691 = vld [vmem:[#allocation2 + $0x18] sm:$0xf]
      %v692 = vld [vmem:[%s497] sm:$0xf]
      %v693 = vld [vmem:[%s497 + $0x4] sm:$0xf]
      %v694 = vld [vmem:[%s497 + $0x8] sm:$0xf]
      %v695 = vld [vmem:[%s497 + $0xc] sm:$0xf]
      %v696 = vld [vmem:[%s497 + $0x10] sm:$0xf]
      %v697 = vld [vmem:[%s497 + $0x14] sm:$0xf]
      %v698 = vld [vmem:[%s497 + $0x18] sm:$0xf]
      %v699 = vld [vmem:[%s497 + $0x1c] sm:$0xf]
      %v700 = vld [vmem:[%s497 + $0x20] sm:$0xf]
      %v701 = vld [vmem:[%s497 + $0x24] sm:$0xf]
      %v702 = vld [vmem:[%s497 + $0x28] sm:$0xf]
      %v703 = vld [vmem:[%s497 + $0x2c] sm:$0xf]
      %v704 = vld [vmem:[%s497 + $0x30] sm:$0xf]
      %v705 = vld [vmem:[%s497 + $0x34] sm:$0xf]
      %v706 = vld [vmem:[%s497 + $0x38] sm:$0xf]
      %v707 = vld [vmem:[%s497 + $0x3c] sm:$0xf]
      %v708 = vld [vmem:[%s500] sm:$0x1]
      %v710 = vlaneseq
      %v711 = vshrl.u32 %v710, 7
      %v712 = vsub.s32 0, %v711
      %v713 = vrot.slane %v708, %v712
      %v719 = vunpack.c.l.b16 %v688
      %v720 = vunpack.c.l.b16 %v689
      %v721 = vunpack.c.l.b16 %v690
      %v722 = vunpack.c.l.b16 %v691
      %v723 = vpack.c.b16 %v720, %v719
      %v724 = vpack.c.b16 %v722, %v721
      %v743 = vunpack.c.l.b16 %v692
      %v744 = vunpack.c.l.b16 %v693
      %v745 = vunpack.c.l.b16 %v694
      %v746 = vunpack.c.l.b16 %v695
      %v747 = vunpack.c.l.b16 %v696
      %v748 = vunpack.c.l.b16 %v697
      %v749 = vunpack.c.l.b16 %v698
      %v750 = vunpack.c.l.b16 %v699
      %v751 = vunpack.c.l.b16 %v700
      %v752 = vunpack.c.l.b16 %v701
      %v753 = vunpack.c.l.b16 %v702
      %v754 = vunpack.c.l.b16 %v703
      %v755 = vunpack.c.l.b16 %v704
      %v756 = vunpack.c.l.b16 %v705
      %v757 = vunpack.c.l.b16 %v706
      %v758 = vunpack.c.l.b16 %v707
      %v759 = vpack.c.b16 %v744, %v743
      %v760 = vpack.c.b16 %v746, %v745
      %v761 = vpack.c.b16 %v748, %v747
      %v762 = vpack.c.b16 %v750, %v749
      %v763 = vpack.c.b16 %v752, %v751
      %v764 = vpack.c.b16 %v754, %v753
      %v765 = vpack.c.b16 %v756, %v755
      %v766 = vpack.c.b16 %v758, %v757
      %775 = vmatprep.subr.bf16.mxu0 0
      %776 = vmatpush1.bf16.msra.mxu0 %v759
      %777 = vmatprep.subr.bf16.mxu0 0
      %778 = vmatpush1.bf16.msra.mxu0 %v760
      %779 = vmatprep.subr.bf16.mxu0 0
      %780 = vmatpush1.bf16.msra.mxu0 %v761
      %781 = vmatprep.subr.bf16.mxu0 0
      %782 = vmatpush1.bf16.msra.mxu0 %v762
      %783 = vmatprep.subr.bf16.mxu0 0
      %784 = vmatpush1.bf16.msra.mxu0 %v763
      %785 = vmatprep.subr.bf16.mxu0 0
      %786 = vmatpush1.bf16.msra.mxu0 %v764
      %787 = vmatprep.subr.bf16.mxu0 0
      %788 = vmatpush1.bf16.msra.mxu0 %v765
      %789 = vmatprep.subr.bf16.mxu0 0
      %790 = vmatpush1.bf16.msra.mxu0 %v766
      %791 = vmatprep.subr.bf16.mxu0 0
      %792 = vmatpush1.bf16.msra.mxu0 0
      %793 = vmatprep.subr.bf16.mxu0 0
      %794 = vmatpush1.bf16.msra.mxu0 0
      %795 = vmatprep.subr.bf16.mxu0 0
      %796 = vmatpush1.bf16.msra.mxu0 0
      %797 = vmatprep.subr.bf16.mxu0 0
      %798 = vmatpush1.bf16.msra.mxu0 0
      %799 = vmatprep.subr.bf16.mxu0 0
      %800 = vmatpush1.bf16.msra.mxu0 0
      %801 = vmatprep.subr.bf16.mxu0 0
      %802 = vmatpush1.bf16.msra.mxu0 0
      %803 = vmatprep.subr.bf16.mxu0 0
      %804 = vmatpush1.bf16.msra.mxu0 0
      %805 = vmatprep.subr.bf16.mxu0 0
      %806 = vmatpush1.bf16.msra.mxu0 0
      %807 = vmatprep.mubr.bf16.mxu0 0
      %808 = vmatmul.mubr.bf16.gmra.mrb[0].mxu0 %v723
      %v809 = vpop.f32.mrb[0].mxu0
      %v810 = vadd.f32 %v713, %v809
      %v811 = vpop.f32.mrb[0].mxu0
      %v812 = vpop.f32.mrb[0].mxu0
      %v813 = vadd.f32 %v713, %v812
      %v814 = vpop.f32.mrb[0].mxu0
      %815 = vmatprep.mubr.bf16.mxu0 0
      %816 = vmatmul.mubr.bf16.gmra.mrb[0].mxu0 %v724
      %v817 = vpop.f32.mrb[0].mxu0
      %v818 = vadd.f32 %v713, %v817
      %v819 = vpop.f32.mrb[0].mxu0
      %v820 = vpop.f32.mrb[0].mxu0
      %v821 = vadd.f32 %v713, %v820
      %v822 = vpop.f32.mrb[0].mxu0
      %823 = vdwg.mxu0
      %824 = vst [vmem:[#allocation3] sm:$0xff] %v810
      %825 = vst [vmem:[#allocation3 + $0x8] sm:$0xff] %v813
      %826 = vst [vmem:[#allocation3 + $0x10] sm:$0xff] %v818
      %827 = vst [vmem:[#allocation3 + $0x18] sm:$0xff] %v821
      %v828 = vld [vmem:[#allocation2] sm:$0xf]
      %v829 = vld [vmem:[#allocation2 + $0x4] sm:$0x1]
      %v830 = vld [vmem:[#allocation2 + $0x8] sm:$0xf]
      %v831 = vld [vmem:[#allocation2 + $0xc] sm:$0x1]
      %v832 = vld [vmem:[#allocation2 + $0x10] sm:$0xf]
      %v833 = vld [vmem:[#allocation2 + $0x14] sm:$0x1]
      %v834 = vld [vmem:[#allocation2 + $0x18] sm:$0xf]
      %v835 = vld [vmem:[#allocation2 + $0x1c] sm:$0x1]
      %vm836 = vsmask.f32 3328
      %vm837 = vsmask.f32 7440
      %vm838 = vmor %vm836, %vm837
      %v840 = vshrl.u32 %v828, 16
      %v842 = vrot.slane %v840, 4
      %v843 = vshll.u32 %v828, 16
      %v845 = vrot.slane %v843, 5
      %v846 = vor.u32 %v842, %v845
      %v847 = vrot.slane %v846, 4
      %v849 = vshll.u32 %v829, 16
      %v851 = vrot.slane %v849, 5
      %v852 = vsel %vm838, %v847, %v851
      %v854 = vshrl.u32 %v830, 16
      %v856 = vrot.slane %v854, 4
      %v857 = vshll.u32 %v830, 16
      %v859 = vrot.slane %v857, 5
      %v860 = vor.u32 %v856, %v859
      %v861 = vrot.slane %v860, 4
      %v863 = vshll.u32 %v831, 16
      %v865 = vrot.slane %v863, 5
      %v866 = vsel %vm838, %v861, %v865
      %v868 = vshrl.u32 %v832, 16
      %v870 = vrot.slane %v868, 4
      %v871 = vshll.u32 %v832, 16
      %v873 = vrot.slane %v871, 5
      %v874 = vor.u32 %v870, %v873
      %v875 = vrot.slane %v874, 4
      %v877 = vshll.u32 %v833, 16
      %v879 = vrot.slane %v877, 5
      %v880 = vsel %vm838, %v875, %v879
      %v882 = vshrl.u32 %v834, 16
      %v884 = vrot.slane %v882, 4
      %v885 = vshll.u32 %v834, 16
      %v887 = vrot.slane %v885, 5
      %v888 = vor.u32 %v884, %v887
      %v889 = vrot.slane %v888, 4
      %v891 = vshll.u32 %v835, 16
      %v893 = vrot.slane %v891, 5
      %v894 = vsel %vm838, %v889, %v893
      %s895 = scalar_lea.vmem %s497, 64
      %v896 = vld [vmem:[%s895] sm:$0xf]
      %v897 = vld [vmem:[%s895 + $0x4] sm:$0xf]
      %v898 = vld [vmem:[%s895 + $0x8] sm:$0xf]
      %v899 = vld [vmem:[%s895 + $0xc] sm:$0xf]
      %v900 = vld [vmem:[%s895 + $0x10] sm:$0xf]
      %v901 = vld [vmem:[%s895 + $0x14] sm:$0xf]
      %v902 = vld [vmem:[%s895 + $0x18] sm:$0xf]
      %v903 = vld [vmem:[%s895 + $0x1c] sm:$0xf]
      %v904 = vld [vmem:[%s895 + $0x20] sm:$0xf]
      %v905 = vld [vmem:[%s895 + $0x24] sm:$0xf]
      %v906 = vld [vmem:[%s895 + $0x28] sm:$0xf]
      %v907 = vld [vmem:[%s895 + $0x2c] sm:$0xf]
      %v908 = vld [vmem:[%s895 + $0x30] sm:$0xf]
      %v909 = vld [vmem:[%s895 + $0x34] sm:$0xf]
      %v910 = vld [vmem:[%s895 + $0x38] sm:$0xf]
      %v911 = vld [vmem:[%s895 + $0x3c] sm:$0xf]
      %v912 = vunpack.c.l.b16 %v852
      %v913 = vunpack.c.l.b16 %v866
      %v914 = vunpack.c.l.b16 %v880
      %v915 = vunpack.c.l.b16 %v894
      %v916 = vpack.c.b16 %v913, %v912
      %v917 = vpack.c.b16 %v915, %v914
      %v936 = vunpack.c.l.b16 %v896
      %v937 = vunpack.c.l.b16 %v897
      %v938 = vunpack.c.l.b16 %v898
      %v939 = vunpack.c.l.b16 %v899
      %v940 = vunpack.c.l.b16 %v900
      %v941 = vunpack.c.l.b16 %v901
      %v942 = vunpack.c.l.b16 %v902
      %v943 = vunpack.c.l.b16 %v903
      %v944 = vunpack.c.l.b16 %v904
      %v945 = vunpack.c.l.b16 %v905
      %v946 = vunpack.c.l.b16 %v906
      %v947 = vunpack.c.l.b16 %v907
      %v948 = vunpack.c.l.b16 %v908
      %v949 = vunpack.c.l.b16 %v909
      %v950 = vunpack.c.l.b16 %v910
      %v951 = vunpack.c.l.b16 %v911
      %v952 = vpack.c.b16 %v937, %v936
      %v953 = vpack.c.b16 %v939, %v938
      %v954 = vpack.c.b16 %v941, %v940
      %v955 = vpack.c.b16 %v943, %v942
      %v956 = vpack.c.b16 %v945, %v944
      %v957 = vpack.c.b16 %v947, %v946
      %v958 = vpack.c.b16 %v949, %v948
      %v959 = vpack.c.b16 %v951, %v950
      %968 = vmatprep.subr.bf16.mxu0 0
      %969 = vmatpush1.bf16.msra.mxu0 %v952
      %970 = vmatprep.subr.bf16.mxu0 0
      %971 = vmatpush1.bf16.msra.mxu0 %v953
      %972 = vmatprep.subr.bf16.mxu0 0
      %973 = vmatpush1.bf16.msra.mxu0 %v954
      %974 = vmatprep.subr.bf16.mxu0 0
      %975 = vmatpush1.bf16.msra.mxu0 %v955
      %976 = vmatprep.subr.bf16.mxu0 0
      %977 = vmatpush1.bf16.msra.mxu0 %v956
      %978 = vmatprep.subr.bf16.mxu0 0
      %979 = vmatpush1.bf16.msra.mxu0 %v957
      %980 = vmatprep.subr.bf16.mxu0 0
      %981 = vmatpush1.bf16.msra.mxu0 %v958
      %982 = vmatprep.subr.bf16.mxu0 0
      %983 = vmatpush1.bf16.msra.mxu0 %v959
      %984 = vmatprep.subr.bf16.mxu0 0
      %985 = vmatpush1.bf16.msra.mxu0 0
      %986 = vmatprep.subr.bf16.mxu0 0
      %987 = vmatpush1.bf16.msra.mxu0 0
      %988 = vmatprep.subr.bf16.mxu0 0
      %989 = vmatpush1.bf16.msra.mxu0 0
      %990 = vmatprep.subr.bf16.mxu0 0
      %991 = vmatpush1.bf16.msra.mxu0 0
      %992 = vmatprep.subr.bf16.mxu0 0
      %993 = vmatpush1.bf16.msra.mxu0 0
      %994 = vmatprep.subr.bf16.mxu0 0
      %995 = vmatpush1.bf16.msra.mxu0 0
      %996 = vmatprep.subr.bf16.mxu0 0
      %997 = vmatpush1.bf16.msra.mxu0 0
      %998 = vmatprep.subr.bf16.mxu0 0
      %999 = vmatpush1.bf16.msra.mxu0 0
      %1000 = vmatprep.mubr.bf16.mxu0 0
      %1001 = vmatmul.mubr.bf16.gmra.mrb[0].mxu0 %v916
      %v1002 = vpop.f32.mrb[0].mxu0
      %v1003 = vadd.f32 0.0, %v1002
      %v1004 = vpop.f32.mrb[0].mxu0
      %v1005 = vpop.f32.mrb[0].mxu0
      %v1006 = vadd.f32 0.0, %v1005
      %v1007 = vpop.f32.mrb[0].mxu0
      %1008 = vmatprep.mubr.bf16.mxu0 0
      %1009 = vmatmul.mubr.bf16.gmra.mrb[0].mxu0 %v917
      %v1010 = vpop.f32.mrb[0].mxu0
      %v1011 = vadd.f32 0.0, %v1010
      %v1012 = vpop.f32.mrb[0].mxu0
      %v1013 = vpop.f32.mrb[0].mxu0
      %v1014 = vadd.f32 0.0, %v1013
      %v1015 = vpop.f32.mrb[0].mxu0
      %1016 = vdwg.mxu0
      %v1017 = vld [vmem:[#allocation3] sm:$0xff]
      %v1018 = vld [vmem:[#allocation3 + $0x8] sm:$0xff]
      %v1019 = vld [vmem:[#allocation3 + $0x10] sm:$0xff]
      %v1020 = vld [vmem:[#allocation3 + $0x18] sm:$0xff]
      %v1021 = vadd.f32 %v1017, %v1003
      %v1022 = vadd.f32 %v1018, %v1006
      %v1023 = vadd.f32 %v1019, %v1011
      %v1024 = vadd.f32 %v1020, %v1014
      %1025 = vst [vmem:[#allocation3] sm:$0xff] %v1021
      %1026 = vst [vmem:[#allocation3 + $0x8] sm:$0xff] %v1022
      %1027 = vst [vmem:[#allocation3 + $0x10] sm:$0xff] %v1023
      %1028 = vst [vmem:[#allocation3 + $0x18] sm:$0xff] %v1024
      %v1029 = vld [vmem:[#allocation2] sm:$0xe]
      %v1030 = vld [vmem:[#allocation2 + $0x4] sm:$0x1]
      %v1031 = vld [vmem:[#allocation2 + $0x8] sm:$0xe]
      %v1032 = vld [vmem:[#allocation2 + $0xc] sm:$0x1]
      %v1033 = vld [vmem:[#allocation2 + $0x10] sm:$0xe]
      %v1034 = vld [vmem:[#allocation2 + $0x14] sm:$0x1]
      %v1035 = vld [vmem:[#allocation2 + $0x18] sm:$0xe]
      %v1036 = vld [vmem:[#allocation2 + $0x1c] sm:$0x1]
      %vm1045 = vcmask 1042432
      %vm1046 = vcmask 1046532
      %vm1047 = vmor %vm1045, %vm1046
      %v1048 = vrot.slane %v1029, 5
      %v1049 = vrot.slane %v1048, 4
      %v1050 = vrot.slane %v1030, 5
      %v1051 = vsel %vm1047, %v1049, %v1050
      %v1052 = vrot.slane %v1031, 5
      %v1053 = vrot.slane %v1052, 4
      %v1054 = vrot.slane %v1032, 5
      %v1055 = vsel %vm1047, %v1053, %v1054
      %v1056 = vrot.slane %v1033, 5
      %v1057 = vrot.slane %v1056, 4
      %v1058 = vrot.slane %v1034, 5
      %v1059 = vsel %vm1047, %v1057, %v1058
      %v1060 = vrot.slane %v1035, 5
      %v1061 = vrot.slane %v1060, 4
      %v1062 = vrot.slane %v1036, 5
      %v1063 = vsel %vm1047, %v1061, %v1062
      %s1064 = scalar_lea.vmem %s497, 128
      %v1065 = vld [vmem:[%s1064] sm:$0xf]
      %v1066 = vld [vmem:[%s1064 + $0x4] sm:$0xf]
      %v1067 = vld [vmem:[%s1064 + $0x8] sm:$0xf]
      %v1068 = vld [vmem:[%s1064 + $0xc] sm:$0xf]
      %v1069 = vld [vmem:[%s1064 + $0x10] sm:$0xf]
      %v1070 = vld [vmem:[%s1064 + $0x14] sm:$0xf]
      %v1071 = vld [vmem:[%s1064 + $0x18] sm:$0xf]
      %v1072 = vld [vmem:[%s1064 + $0x1c] sm:$0xf]
      %v1073 = vld [vmem:[%s1064 + $0x20] sm:$0xf]
      %v1074 = vld [vmem:[%s1064 + $0x24] sm:$0xf]
      %v1075 = vld [vmem:[%s1064 + $0x28] sm:$0xf]
      %v1076 = vld [vmem:[%s1064 + $0x2c] sm:$0xf]
      %v1077 = vld [vmem:[%s1064 + $0x30] sm:$0xf]
      %v1078 = vld [vmem:[%s1064 + $0x34] sm:$0xf]
      %v1079 = vld [vmem:[%s1064 + $0x38] sm:$0xf]
      %v1080 = vld [vmem:[%s1064 + $0x3c] sm:$0xf]
      %v1081 = vunpack.c.l.b16 %v1051
      %v1082 = vunpack.c.l.b16 %v1055
      %v1083 = vunpack.c.l.b16 %v1059
      %v1084 = vunpack.c.l.b16 %v1063
      %v1085 = vpack.c.b16 %v1082, %v1081
      %v1086 = vpack.c.b16 %v1084, %v1083
      %v1105 = vunpack.c.l.b16 %v1065
      %v1106 = vunpack.c.l.b16 %v1066
      %v1107 = vunpack.c.l.b16 %v1067
      %v1108 = vunpack.c.l.b16 %v1068
      %v1109 = vunpack.c.l.b16 %v1069
      %v1110 = vunpack.c.l.b16 %v1070
      %v1111 = vunpack.c.l.b16 %v1071
      %v1112 = vunpack.c.l.b16 %v1072
      %v1113 = vunpack.c.l.b16 %v1073
      %v1114 = vunpack.c.l.b16 %v1074
      %v1115 = vunpack.c.l.b16 %v1075
      %v1116 = vunpack.c.l.b16 %v1076
      %v1117 = vunpack.c.l.b16 %v1077
      %v1118 = vunpack.c.l.b16 %v1078
      %v1119 = vunpack.c.l.b16 %v1079
      %v1120 = vunpack.c.l.b16 %v1080
      %v1121 = vpack.c.b16 %v1106, %v1105
      %v1122 = vpack.c.b16 %v1108, %v1107
      %v1123 = vpack.c.b16 %v1110, %v1109
      %v1124 = vpack.c.b16 %v1112, %v1111
      %v1125 = vpack.c.b16 %v1114, %v1113
      %v1126 = vpack.c.b16 %v1116, %v1115
      %v1127 = vpack.c.b16 %v1118, %v1117
      %v1128 = vpack.c.b16 %v1120, %v1119
      %1137 = vmatprep.subr.bf16.mxu0 0
      %1138 = vmatpush1.bf16.msra.mxu0 %v1121
      %1139 = vmatprep.subr.bf16.mxu0 0
      %1140 = vmatpush1.bf16.msra.mxu0 %v1122
      %1141 = vmatprep.subr.bf16.mxu0 0
      %1142 = vmatpush1.bf16.msra.mxu0 %v1123
      %1143 = vmatprep.subr.bf16.mxu0 0
      %1144 = vmatpush1.bf16.msra.mxu0 %v1124
      %1145 = vmatprep.subr.bf16.mxu0 0
      %1146 = vmatpush1.bf16.msra.mxu0 %v1125
      %1147 = vmatprep.subr.bf16.mxu0 0
      %1148 = vmatpush1.bf16.msra.mxu0 %v1126
      %1149 = vmatprep.subr.bf16.mxu0 0
      %1150 = vmatpush1.bf16.msra.mxu0 %v1127
      %1151 = vmatprep.subr.bf16.mxu0 0
      %1152 = vmatpush1.bf16.msra.mxu0 %v1128
      %1153 = vmatprep.subr.bf16.mxu0 0
      %1154 = vmatpush1.bf16.msra.mxu0 0
      %1155 = vmatprep.subr.bf16.mxu0 0
      %1156 = vmatpush1.bf16.msra.mxu0 0
      %1157 = vmatprep.subr.bf16.mxu0 0
      %1158 = vmatpush1.bf16.msra.mxu0 0
      %1159 = vmatprep.subr.bf16.mxu0 0
      %1160 = vmatpush1.bf16.msra.mxu0 0
      %1161 = vmatprep.subr.bf16.mxu0 0
      %1162 = vmatpush1.bf16.msra.mxu0 0
      %1163 = vmatprep.subr.bf16.mxu0 0
      %1164 = vmatpush1.bf16.msra.mxu0 0
      %1165 = vmatprep.subr.bf16.mxu0 0
      %1166 = vmatpush1.bf16.msra.mxu0 0
      %1167 = vmatprep.subr.bf16.mxu0 0
      %1168 = vmatpush1.bf16.msra.mxu0 0
      %1169 = vmatprep.mubr.bf16.mxu0 0
      %1170 = vmatmul.mubr.bf16.gmra.mrb[0].mxu0 %v1085
      %v1171 = vpop.f32.mrb[0].mxu0
      %v1172 = vadd.f32 0.0, %v1171
      %v1173 = vpop.f32.mrb[0].mxu0
      %v1174 = vpop.f32.mrb[0].mxu0
      %v1175 = vadd.f32 0.0, %v1174
      %v1176 = vpop.f32.mrb[0].mxu0
      %1177 = vmatprep.mubr.bf16.mxu0 0
      %1178 = vmatmul.mubr.bf16.gmra.mrb[0].mxu0 %v1086
      %v1179 = vpop.f32.mrb[0].mxu0
      %v1180 = vadd.f32 0.0, %v1179
      %v1181 = vpop.f32.mrb[0].mxu0
      %v1182 = vpop.f32.mrb[0].mxu0
      %v1183 = vadd.f32 0.0, %v1182
      %v1184 = vpop.f32.mrb[0].mxu0
      %1185 = vdwg.mxu0
      %v1186 = vld [vmem:[#allocation3] sm:$0xff]
      %v1187 = vld [vmem:[#allocation3 + $0x8] sm:$0xff]
      %v1188 = vld [vmem:[#allocation3 + $0x10] sm:$0xff]
      %v1189 = vld [vmem:[#allocation3 + $0x18] sm:$0xff]
      %v1190 = vadd.f32 %v1186, %v1172
      %v1191 = vadd.f32 %v1187, %v1175
      %v1192 = vadd.f32 %v1188, %v1180
      %v1193 = vadd.f32 %v1189, %v1183
      %1194 = vst [vmem:[#allocation3] sm:$0xff] %v1190
      %1195 = vst [vmem:[#allocation3 + $0x8] sm:$0xff] %v1191
      %1196 = vst [vmem:[#allocation3 + $0x10] sm:$0xff] %v1192
      %1197 = vst [vmem:[#allocation3 + $0x18] sm:$0xff] %v1193
      %v1198 = vld [vmem:[%s646] sm:$0xf]
      %v1199 = vld [vmem:[%s646 + $0x8] sm:$0xf]
      %v1200 = vld [vmem:[%s646 + $0x10] sm:$0xf]
      %v1201 = vld [vmem:[%s646 + $0x18] sm:$0xf]
      %s1202 = scalar_lea.vmem %s497, 192
      %v1203 = vld [vmem:[%s1202] sm:$0xf]
      %v1204 = vld [vmem:[%s1202 + $0x4] sm:$0xf]
      %v1205 = vld [vmem:[%s1202 + $0x8] sm:$0xf]
      %v1206 = vld [vmem:[%s1202 + $0xc] sm:$0xf]
      %v1207 = vld [vmem:[%s1202 + $0x10] sm:$0xf]
      %v1208 = vld [vmem:[%s1202 + $0x14] sm:$0xf]
      %v1209 = vld [vmem:[%s1202 + $0x18] sm:$0xf]
      %v1210 = vld [vmem:[%s1202 + $0x1c] sm:$0xf]
      %v1211 = vld [vmem:[%s1202 + $0x20] sm:$0xf]
      %v1212 = vld [vmem:[%s1202 + $0x24] sm:$0xf]
      %v1213 = vld [vmem:[%s1202 + $0x28] sm:$0xf]
      %v1214 = vld [vmem:[%s1202 + $0x2c] sm:$0xf]
      %v1215 = vld [vmem:[%s1202 + $0x30] sm:$0xf]
      %v1216 = vld [vmem:[%s1202 + $0x34] sm:$0xf]
      %v1217 = vld [vmem:[%s1202 + $0x38] sm:$0xf]
      %v1218 = vld [vmem:[%s1202 + $0x3c] sm:$0xf]
      %v1223 = vunpack.c.l.b16 %v1198
      %v1224 = vunpack.c.l.b16 %v1199
      %v1225 = vunpack.c.l.b16 %v1200
      %v1226 = vunpack.c.l.b16 %v1201
      %v1227 = vpack.c.b16 %v1224, %v1223
      %v1228 = vpack.c.b16 %v1226, %v1225
      %v1247 = vunpack.c.l.b16 %v1203
      %v1248 = vunpack.c.l.b16 %v1204
      %v1249 = vunpack.c.l.b16 %v1205
      %v1250 = vunpack.c.l.b16 %v1206
      %v1251 = vunpack.c.l.b16 %v1207
      %v1252 = vunpack.c.l.b16 %v1208
      %v1253 = vunpack.c.l.b16 %v1209
      %v1254 = vunpack.c.l.b16 %v1210
      %v1255 = vunpack.c.l.b16 %v1211
      %v1256 = vunpack.c.l.b16 %v1212
      %v1257 = vunpack.c.l.b16 %v1213
      %v1258 = vunpack.c.l.b16 %v1214
      %v1259 = vunpack.c.l.b16 %v1215
      %v1260 = vunpack.c.l.b16 %v1216
      %v1261 = vunpack.c.l.b16 %v1217
      %v1262 = vunpack.c.l.b16 %v1218
      %v1263 = vpack.c.b16 %v1248, %v1247
      %v1264 = vpack.c.b16 %v1250, %v1249
      %v1265 = vpack.c.b16 %v1252, %v1251
      %v1266 = vpack.c.b16 %v1254, %v1253
      %v1267 = vpack.c.b16 %v1256, %v1255
      %v1268 = vpack.c.b16 %v1258, %v1257
      %v1269 = vpack.c.b16 %v1260, %v1259
      %v1270 = vpack.c.b16 %v1262, %v1261
      %1279 = vmatprep.subr.bf16.mxu0 0
      %1280 = vmatpush1.bf16.msra.mxu0 %v1263
      %1281 = vmatprep.subr.bf16.mxu0 0
      %1282 = vmatpush1.bf16.msra.mxu0 %v1264
      %1283 = vmatprep.subr.bf16.mxu0 0
      %1284 = vmatpush1.bf16.msra.mxu0 %v1265
      %1285 = vmatprep.subr.bf16.mxu0 0
      %1286 = vmatpush1.bf16.msra.mxu0 %v1266
      %1287 = vmatprep.subr.bf16.mxu0 0
      %1288 = vmatpush1.bf16.msra.mxu0 %v1267
      %1289 = vmatprep.subr.bf16.mxu0 0
      %1290 = vmatpush1.bf16.msra.mxu0 %v1268
      %1291 = vmatprep.subr.bf16.mxu0 0
      %1292 = vmatpush1.bf16.msra.mxu0 %v1269
      %1293 = vmatprep.subr.bf16.mxu0 0
      %1294 = vmatpush1.bf16.msra.mxu0 %v1270
      %1295 = vmatprep.subr.bf16.mxu0 0
      %1296 = vmatpush1.bf16.msra.mxu0 0
      %1297 = vmatprep.subr.bf16.mxu0 0
      %1298 = vmatpush1.bf16.msra.mxu0 0
      %1299 = vmatprep.subr.bf16.mxu0 0
      %1300 = vmatpush1.bf16.msra.mxu0 0
      %1301 = vmatprep.subr.bf16.mxu0 0
      %1302 = vmatpush1.bf16.msra.mxu0 0
      %1303 = vmatprep.subr.bf16.mxu0 0
      %1304 = vmatpush1.bf16.msra.mxu0 0
      %1305 = vmatprep.subr.bf16.mxu0 0
      %1306 = vmatpush1.bf16.msra.mxu0 0
      %1307 = vmatprep.subr.bf16.mxu0 0
      %1308 = vmatpush1.bf16.msra.mxu0 0
      %1309 = vmatprep.subr.bf16.mxu0 0
      %1310 = vmatpush1.bf16.msra.mxu0 0
      %1311 = vmatprep.mubr.bf16.mxu0 0
      %1312 = vmatmul.mubr.bf16.gmra.mrb[0].mxu0 %v1227
      %v1313 = vpop.f32.mrb[0].mxu0
      %v1314 = vadd.f32 0.0, %v1313
      %v1315 = vpop.f32.mrb[0].mxu0
      %v1316 = vpop.f32.mrb[0].mxu0
      %v1317 = vadd.f32 0.0, %v1316
      %v1318 = vpop.f32.mrb[0].mxu0
      %1319 = vmatprep.mubr.bf16.mxu0 0
      %1320 = vmatmul.mubr.bf16.gmra.mrb[0].mxu0 %v1228
      %v1321 = vpop.f32.mrb[0].mxu0
      %v1322 = vadd.f32 0.0, %v1321
      %v1323 = vpop.f32.mrb[0].mxu0
      %v1324 = vpop.f32.mrb[0].mxu0
      %v1325 = vadd.f32 0.0, %v1324
      %v1326 = vpop.f32.mrb[0].mxu0
      %1327 = vdwg.mxu0
      %v1328 = vld [vmem:[#allocation3] sm:$0xff]
      %v1329 = vld [vmem:[#allocation3 + $0x8] sm:$0xff]
      %v1330 = vld [vmem:[#allocation3 + $0x10] sm:$0xff]
      %v1331 = vld [vmem:[#allocation3 + $0x18] sm:$0xff]
      %v1332 = vadd.f32 %v1328, %v1314
      %v1333 = vadd.f32 %v1329, %v1317
      %v1334 = vadd.f32 %v1330, %v1322
      %v1335 = vadd.f32 %v1331, %v1325
      %1336 = vst [vmem:[#allocation3] sm:$0xff] %v1332
      %1337 = vst [vmem:[#allocation3 + $0x8] sm:$0xff] %v1333
      %1338 = vst [vmem:[#allocation3 + $0x10] sm:$0xff] %v1334
      %1339 = vst [vmem:[#allocation3 + $0x18] sm:$0xff] %v1335
      %v1340 = vld [vmem:[%s646] sm:$0xf]
      %v1341 = vld [vmem:[%s646 + $0x4] sm:$0x1]
      %v1342 = vld [vmem:[%s646 + $0x8] sm:$0xf]
      %v1343 = vld [vmem:[%s646 + $0xc] sm:$0x1]
      %v1344 = vld [vmem:[%s646 + $0x10] sm:$0xf]
      %v1345 = vld [vmem:[%s646 + $0x14] sm:$0x1]
      %v1346 = vld [vmem:[%s646 + $0x18] sm:$0xf]
      %v1347 = vld [vmem:[%s646 + $0x1c] sm:$0x1]
      %v1349 = vshrl.u32 %v1340, 16
      %v1351 = vrot.slane %v1349, 4
      %v1352 = vshll.u32 %v1340, 16
      %v1354 = vrot.slane %v1352, 5
      %v1355 = vor.u32 %v1351, %v1354
      %v1356 = vrot.slane %v1355, 4
      %v1358 = vshll.u32 %v1341, 16
      %v1360 = vrot.slane %v1358, 5
      %v1361 = vsel %vm838, %v1356, %v1360
      %v1363 = vshrl.u32 %v1342, 16
      %v1365 = vrot.slane %v1363, 4
      %v1366 = vshll.u32 %v1342, 16
      %v1368 = vrot.slane %v1366, 5
      %v1369 = vor.u32 %v1365, %v1368
      %v1370 = vrot.slane %v1369, 4
      %v1372 = vshll.u32 %v1343, 16
      %v1374 = vrot.slane %v1372, 5
      %v1375 = vsel %vm838, %v1370, %v1374
      %v1377 = vshrl.u32 %v1344, 16
      %v1379 = vrot.slane %v1377, 4
      %v1380 = vshll.u32 %v1344, 16
      %v1382 = vrot.slane %v1380, 5
      %v1383 = vor.u32 %v1379, %v1382
      %v1384 = vrot.slane %v1383, 4
      %v1386 = vshll.u32 %v1345, 16
      %v1388 = vrot.slane %v1386, 5
      %v1389 = vsel %vm838, %v1384, %v1388
      %v1391 = vshrl.u32 %v1346, 16
      %v1393 = vrot.slane %v1391, 4
      %v1394 = vshll.u32 %v1346, 16
      %v1396 = vrot.slane %v1394, 5
      %v1397 = vor.u32 %v1393, %v1396
      %v1398 = vrot.slane %v1397, 4
      %v1400 = vshll.u32 %v1347, 16
      %v1402 = vrot.slane %v1400, 5
      %v1403 = vsel %vm838, %v1398, %v1402
      %s1404 = scalar_lea.vmem %s497, 256
      %v1405 = vld [vmem:[%s1404] sm:$0xf]
      %v1406 = vld [vmem:[%s1404 + $0x4] sm:$0xf]
      %v1407 = vld [vmem:[%s1404 + $0x8] sm:$0xf]
      %v1408 = vld [vmem:[%s1404 + $0xc] sm:$0xf]
      %v1409 = vld [vmem:[%s1404 + $0x10] sm:$0xf]
      %v1410 = vld [vmem:[%s1404 + $0x14] sm:$0xf]
      %v1411 = vld [vmem:[%s1404 + $0x18] sm:$0xf]
      %v1412 = vld [vmem:[%s1404 + $0x1c] sm:$0xf]
      %v1413 = vld [vmem:[%s1404 + $0x20] sm:$0xf]
      %v1414 = vld [vmem:[%s1404 + $0x24] sm:$0xf]
      %v1415 = vld [vmem:[%s1404 + $0x28] sm:$0xf]
      %v1416 = vld [vmem:[%s1404 + $0x2c] sm:$0xf]
      %v1417 = vld [vmem:[%s1404 + $0x30] sm:$0xf]
      %v1418 = vld [vmem:[%s1404 + $0x34] sm:$0xf]
      %v1419 = vld [vmem:[%s1404 + $0x38] sm:$0xf]
      %v1420 = vld [vmem:[%s1404 + $0x3c] sm:$0xf]
      %v1421 = vunpack.c.l.b16 %v1361
      %v1422 = vunpack.c.l.b16 %v1375
      %v1423 = vunpack.c.l.b16 %v1389
      %v1424 = vunpack.c.l.b16 %v1403
      %v1425 = vpack.c.b16 %v1422, %v1421
      %v1426 = vpack.c.b16 %v1424, %v1423
      %v1445 = vunpack.c.l.b16 %v1405
      %v1446 = vunpack.c.l.b16 %v1406
      %v1447 = vunpack.c.l.b16 %v1407
      %v1448 = vunpack.c.l.b16 %v1408
      %v1449 = vunpack.c.l.b16 %v1409
      %v1450 = vunpack.c.l.b16 %v1410
      %v1451 = vunpack.c.l.b16 %v1411
      %v1452 = vunpack.c.l.b16 %v1412
      %v1453 = vunpack.c.l.b16 %v1413
      %v1454 = vunpack.c.l.b16 %v1414
      %v1455 = vunpack.c.l.b16 %v1415
      %v1456 = vunpack.c.l.b16 %v1416
      %v1457 = vunpack.c.l.b16 %v1417
      %v1458 = vunpack.c.l.b16 %v1418
      %v1459 = vunpack.c.l.b16 %v1419
      %v1460 = vunpack.c.l.b16 %v1420
      %v1461 = vpack.c.b16 %v1446, %v1445
      %v1462 = vpack.c.b16 %v1448, %v1447
      %v1463 = vpack.c.b16 %v1450, %v1449
      %v1464 = vpack.c.b16 %v1452, %v1451
      %v1465 = vpack.c.b16 %v1454, %v1453
      %v1466 = vpack.c.b16 %v1456, %v1455
      %v1467 = vpack.c.b16 %v1458, %v1457
      %v1468 = vpack.c.b16 %v1460, %v1459
      %1477 = vmatprep.subr.bf16.mxu0 0
      %1478 = vmatpush1.bf16.msra.mxu0 %v1461
      %1479 = vmatprep.subr.bf16.mxu0 0
      %1480 = vmatpush1.bf16.msra.mxu0 %v1462
      %1481 = vmatprep.subr.bf16.mxu0 0
      %1482 = vmatpush1.bf16.msra.mxu0 %v1463
      %1483 = vmatprep.subr.bf16.mxu0 0
      %1484 = vmatpush1.bf16.msra.mxu0 %v1464
      %1485 = vmatprep.subr.bf16.mxu0 0
      %1486 = vmatpush1.bf16.msra.mxu0 %v1465
      %1487 = vmatprep.subr.bf16.mxu0 0
      %1488 = vmatpush1.bf16.msra.mxu0 %v1466
      %1489 = vmatprep.subr.bf16.mxu0 0
      %1490 = vmatpush1.bf16.msra.mxu0 %v1467
      %1491 = vmatprep.subr.bf16.mxu0 0
      %1492 = vmatpush1.bf16.msra.mxu0 %v1468
      %1493 = vmatprep.subr.bf16.mxu0 0
      %1494 = vmatpush1.bf16.msra.mxu0 0
      %1495 = vmatprep.subr.bf16.mxu0 0
      %1496 = vmatpush1.bf16.msra.mxu0 0
      %1497 = vmatprep.subr.bf16.mxu0 0
      %1498 = vmatpush1.bf16.msra.mxu0 0
      %1499 = vmatprep.subr.bf16.mxu0 0
      %1500 = vmatpush1.bf16.msra.mxu0 0
      %1501 = vmatprep.subr.bf16.mxu0 0
      %1502 = vmatpush1.bf16.msra.mxu0 0
      %1503 = vmatprep.subr.bf16.mxu0 0
      %1504 = vmatpush1.bf16.msra.mxu0 0
      %1505 = vmatprep.subr.bf16.mxu0 0
      %1506 = vmatpush1.bf16.msra.mxu0 0
      %1507 = vmatprep.subr.bf16.mxu0 0
      %1508 = vmatpush1.bf16.msra.mxu0 0
      %1509 = vmatprep.mubr.bf16.mxu0 0
      %1510 = vmatmul.mubr.bf16.gmra.mrb[0].mxu0 %v1425
      %v1511 = vpop.f32.mrb[0].mxu0
      %v1512 = vadd.f32 0.0, %v1511
      %v1513 = vpop.f32.mrb[0].mxu0
      %v1514 = vpop.f32.mrb[0].mxu0
      %v1515 = vadd.f32 0.0, %v1514
      %v1516 = vpop.f32.mrb[0].mxu0
      %1517 = vmatprep.mubr.bf16.mxu0 0
      %1518 = vmatmul.mubr.bf16.gmra.mrb[0].mxu0 %v1426
      %v1519 = vpop.f32.mrb[0].mxu0
      %v1520 = vadd.f32 0.0, %v1519
      %v1521 = vpop.f32.mrb[0].mxu0
      %v1522 = vpop.f32.mrb[0].mxu0
      %v1523 = vadd.f32 0.0, %v1522
      %v1524 = vpop.f32.mrb[0].mxu0
      %1525 = vdwg.mxu0
      %v1526 = vld [vmem:[#allocation3] sm:$0xff]
      %v1527 = vld [vmem:[#allocation3 + $0x8] sm:$0xff]
      %v1528 = vld [vmem:[#allocation3 + $0x10] sm:$0xff]
      %v1529 = vld [vmem:[#allocation3 + $0x18] sm:$0xff]
      %v1530 = vadd.f32 %v1526, %v1512
      %v1531 = vadd.f32 %v1527, %v1515
      %v1532 = vadd.f32 %v1528, %v1520
      %v1533 = vadd.f32 %v1529, %v1523
      %1534 = vst [vmem:[#allocation3] sm:$0xff] %v1530
      %1535 = vst [vmem:[#allocation3 + $0x8] sm:$0xff] %v1531
      %1536 = vst [vmem:[#allocation3 + $0x10] sm:$0xff] %v1532
      %1537 = vst [vmem:[#allocation3 + $0x18] sm:$0xff] %v1533
      %v1538 = vld [vmem:[%s646] sm:$0xe]
      %v1539 = vld [vmem:[%s646 + $0x4] sm:$0x1]
      %v1540 = vld [vmem:[%s646 + $0x8] sm:$0xe]
      %v1541 = vld [vmem:[%s646 + $0xc] sm:$0x1]
      %v1542 = vld [vmem:[%s646 + $0x10] sm:$0xe]
      %v1543 = vld [vmem:[%s646 + $0x14] sm:$0x1]
      %v1544 = vld [vmem:[%s646 + $0x18] sm:$0xe]
      %v1545 = vld [vmem:[%s646 + $0x1c] sm:$0x1]
      %v1554 = vrot.slane %v1538, 5
      %v1555 = vrot.slane %v1554, 4
      %v1556 = vrot.slane %v1539, 5
      %v1557 = vsel %vm1047, %v1555, %v1556
      %v1558 = vrot.slane %v1540, 5
      %v1559 = vrot.slane %v1558, 4
      %v1560 = vrot.slane %v1541, 5
      %v1561 = vsel %vm1047, %v1559, %v1560
      %v1562 = vrot.slane %v1542, 5
      %v1563 = vrot.slane %v1562, 4
      %v1564 = vrot.slane %v1543, 5
      %v1565 = vsel %vm1047, %v1563, %v1564
      %v1566 = vrot.slane %v1544, 5
      %v1567 = vrot.slane %v1566, 4
      %v1568 = vrot.slane %v1545, 5
      %v1569 = vsel %vm1047, %v1567, %v1568
      %s1570 = scalar_lea.vmem %s497, 320
      %v1571 = vld [vmem:[%s1570] sm:$0xf]
      %v1572 = vld [vmem:[%s1570 + $0x4] sm:$0xf]
      %v1573 = vld [vmem:[%s1570 + $0x8] sm:$0xf]
      %v1574 = vld [vmem:[%s1570 + $0xc] sm:$0xf]
      %v1575 = vld [vmem:[%s1570 + $0x10] sm:$0xf]
      %v1576 = vld [vmem:[%s1570 + $0x14] sm:$0xf]
      %v1577 = vld [vmem:[%s1570 + $0x18] sm:$0xf]
      %v1578 = vld [vmem:[%s1570 + $0x1c] sm:$0xf]
      %v1579 = vld [vmem:[%s1570 + $0x20] sm:$0xf]
      %v1580 = vld [vmem:[%s1570 + $0x24] sm:$0xf]
      %v1581 = vld [vmem:[%s1570 + $0x28] sm:$0xf]
      %v1582 = vld [vmem:[%s1570 + $0x2c] sm:$0xf]
      %v1583 = vld [vmem:[%s1570 + $0x30] sm:$0xf]
      %v1584 = vld [vmem:[%s1570 + $0x34] sm:$0xf]
      %v1585 = vld [vmem:[%s1570 + $0x38] sm:$0xf]
      %v1586 = vld [vmem:[%s1570 + $0x3c] sm:$0xf]
      %v1587 = vunpack.c.l.b16 %v1557
      %v1588 = vunpack.c.l.b16 %v1561
      %v1589 = vunpack.c.l.b16 %v1565
      %v1590 = vunpack.c.l.b16 %v1569
      %v1591 = vpack.c.b16 %v1588, %v1587
      %v1592 = vpack.c.b16 %v1590, %v1589
      %v1611 = vunpack.c.l.b16 %v1571
      %v1612 = vunpack.c.l.b16 %v1572
      %v1613 = vunpack.c.l.b16 %v1573
      %v1614 = vunpack.c.l.b16 %v1574
      %v1615 = vunpack.c.l.b16 %v1575
      %v1616 = vunpack.c.l.b16 %v1576
      %v1617 = vunpack.c.l.b16 %v1577
      %v1618 = vunpack.c.l.b16 %v1578
      %v1619 = vunpack.c.l.b16 %v1579
      %v1620 = vunpack.c.l.b16 %v1580
      %v1621 = vunpack.c.l.b16 %v1581
      %v1622 = vunpack.c.l.b16 %v1582
      %v1623 = vunpack.c.l.b16 %v1583
      %v1624 = vunpack.c.l.b16 %v1584
      %v1625 = vunpack.c.l.b16 %v1585
      %v1626 = vunpack.c.l.b16 %v1586
      %v1627 = vpack.c.b16 %v1612, %v1611
      %v1628 = vpack.c.b16 %v1614, %v1613
      %v1629 = vpack.c.b16 %v1616, %v1615
      %v1630 = vpack.c.b16 %v1618, %v1617
      %v1631 = vpack.c.b16 %v1620, %v1619
      %v1632 = vpack.c.b16 %v1622, %v1621
      %v1633 = vpack.c.b16 %v1624, %v1623
      %v1634 = vpack.c.b16 %v1626, %v1625
      %1643 = vmatprep.subr.bf16.mxu0 0
      %1644 = vmatpush1.bf16.msra.mxu0 %v1627
      %1645 = vmatprep.subr.bf16.mxu0 0
      %1646 = vmatpush1.bf16.msra.mxu0 %v1628
      %1647 = vmatprep.subr.bf16.mxu0 0
      %1648 = vmatpush1.bf16.msra.mxu0 %v1629
      %1649 = vmatprep.subr.bf16.mxu0 0
      %1650 = vmatpush1.bf16.msra.mxu0 %v1630
      %1651 = vmatprep.subr.bf16.mxu0 0
      %1652 = vmatpush1.bf16.msra.mxu0 %v1631
      %1653 = vmatprep.subr.bf16.mxu0 0
      %1654 = vmatpush1.bf16.msra.mxu0 %v1632
      %1655 = vmatprep.subr.bf16.mxu0 0
      %1656 = vmatpush1.bf16.msra.mxu0 %v1633
      %1657 = vmatprep.subr.bf16.mxu0 0
      %1658 = vmatpush1.bf16.msra.mxu0 %v1634
      %1659 = vmatprep.subr.bf16.mxu0 0
      %1660 = vmatpush1.bf16.msra.mxu0 0
      %1661 = vmatprep.subr.bf16.mxu0 0
      %1662 = vmatpush1.bf16.msra.mxu0 0
      %1663 = vmatprep.subr.bf16.mxu0 0
      %1664 = vmatpush1.bf16.msra.mxu0 0
      %1665 = vmatprep.subr.bf16.mxu0 0
      %1666 = vmatpush1.bf16.msra.mxu0 0
      %1667 = vmatprep.subr.bf16.mxu0 0
      %1668 = vmatpush1.bf16.msra.mxu0 0
      %1669 = vmatprep.subr.bf16.mxu0 0
      %1670 = vmatpush1.bf16.msra.mxu0 0
      %1671 = vmatprep.subr.bf16.mxu0 0
      %1672 = vmatpush1.bf16.msra.mxu0 0
      %1673 = vmatprep.subr.bf16.mxu0 0
      %1674 = vmatpush1.bf16.msra.mxu0 0
      %1675 = vmatprep.mubr.bf16.mxu0 0
      %1676 = vmatmul.mubr.bf16.gmra.mrb[0].mxu0 %v1591
      %v1677 = vpop.f32.mrb[0].mxu0
      %v1678 = vadd.f32 0.0, %v1677
      %v1679 = vpop.f32.mrb[0].mxu0
      %v1680 = vpop.f32.mrb[0].mxu0
      %v1681 = vadd.f32 0.0, %v1680
      %v1682 = vpop.f32.mrb[0].mxu0
      %1683 = vmatprep.mubr.bf16.mxu0 0
      %1684 = vmatmul.mubr.bf16.gmra.mrb[0].mxu0 %v1592
      %v1685 = vpop.f32.mrb[0].mxu0
      %v1686 = vadd.f32 0.0, %v1685
      %v1687 = vpop.f32.mrb[0].mxu0
      %v1688 = vpop.f32.mrb[0].mxu0
      %v1689 = vadd.f32 0.0, %v1688
      %v1690 = vpop.f32.mrb[0].mxu0
      %1691 = vdwg.mxu0
      %v1692 = vld [vmem:[#allocation3] sm:$0xff]
      %v1693 = vld [vmem:[#allocation3 + $0x8] sm:$0xff]
      %v1694 = vld [vmem:[#allocation3 + $0x10] sm:$0xff]
      %v1695 = vld [vmem:[#allocation3 + $0x18] sm:$0xff]
      %v1696 = vadd.f32 %v1692, %v1678
      %v1697 = vadd.f32 %v1693, %v1681
      %v1698 = vadd.f32 %v1694, %v1686
      %v1699 = vadd.f32 %v1695, %v1689
      %1700 = vst [vmem:[#allocation3] sm:$0xff] %v1696
      %1701 = vst [vmem:[#allocation3 + $0x8] sm:$0xff] %v1697
      %1702 = vst [vmem:[#allocation3 + $0x10] sm:$0xff] %v1698
      %1703 = vst [vmem:[#allocation3 + $0x18] sm:$0xff] %v1699
      %s1704 = scalar_lea.vmem [#allocation2], 16
      %v1705 = vld [vmem:[%s1704] sm:$0xf]
      %v1706 = vld [vmem:[%s1704 + $0x8] sm:$0xf]
      %v1707 = vld [vmem:[%s1704 + $0x10] sm:$0xf]
      %v1708 = vld [vmem:[%s1704 + $0x18] sm:$0xf]
      %s1709 = scalar_lea.vmem %s497, 384
      %v1710 = vld [vmem:[%s1709] sm:$0xf]
      %v1711 = vld [vmem:[%s1709 + $0x4] sm:$0xf]
      %v1712 = vld [vmem:[%s1709 + $0x8] sm:$0xf]
      %v1713 = vld [vmem:[%s1709 + $0xc] sm:$0xf]
      %v1714 = vld [vmem:[%s1709 + $0x10] sm:$0xf]
      %v1715 = vld [vmem:[%s1709 + $0x14] sm:$0xf]
      %v1716 = vld [vmem:[%s1709 + $0x18] sm:$0xf]
      %v1717 = vld [vmem:[%s1709 + $0x1c] sm:$0xf]
      %v1718 = vld [vmem:[%s1709 + $0x20] sm:$0xf]
      %v1719 = vld [vmem:[%s1709 + $0x24] sm:$0xf]
      %v1720 = vld [vmem:[%s1709 + $0x28] sm:$0xf]
      %v1721 = vld [vmem:[%s1709 + $0x2c] sm:$0xf]
      %v1722 = vld [vmem:[%s1709 + $0x30] sm:$0xf]
      %v1723 = vld [vmem:[%s1709 + $0x34] sm:$0xf]
      %v1724 = vld [vmem:[%s1709 + $0x38] sm:$0xf]
      %v1725 = vld [vmem:[%s1709 + $0x3c] sm:$0xf]
      %v1730 = vunpack.c.l.b16 %v1705
      %v1731 = vunpack.c.l.b16 %v1706
      %v1732 = vunpack.c.l.b16 %v1707
      %v1733 = vunpack.c.l.b16 %v1708
      %v1734 = vpack.c.b16 %v1731, %v1730
      %v1735 = vpack.c.b16 %v1733, %v1732
      %v1754 = vunpack.c.l.b16 %v1710
      %v1755 = vunpack.c.l.b16 %v1711
      %v1756 = vunpack.c.l.b16 %v1712
      %v1757 = vunpack.c.l.b16 %v1713
      %v1758 = vunpack.c.l.b16 %v1714
      %v1759 = vunpack.c.l.b16 %v1715
      %v1760 = vunpack.c.l.b16 %v1716
      %v1761 = vunpack.c.l.b16 %v1717
      %v1762 = vunpack.c.l.b16 %v1718
      %v1763 = vunpack.c.l.b16 %v1719
      %v1764 = vunpack.c.l.b16 %v1720
      %v1765 = vunpack.c.l.b16 %v1721
      %v1766 = vunpack.c.l.b16 %v1722
      %v1767 = vunpack.c.l.b16 %v1723
      %v1768 = vunpack.c.l.b16 %v1724
      %v1769 = vunpack.c.l.b16 %v1725
      %v1770 = vpack.c.b16 %v1755, %v1754
      %v1771 = vpack.c.b16 %v1757, %v1756
      %v1772 = vpack.c.b16 %v1759, %v1758
      %v1773 = vpack.c.b16 %v1761, %v1760
      %v1774 = vpack.c.b16 %v1763, %v1762
      %v1775 = vpack.c.b16 %v1765, %v1764
      %v1776 = vpack.c.b16 %v1767, %v1766
      %v1777 = vpack.c.b16 %v1769, %v1768
      %1786 = vmatprep.subr.bf16.mxu0 0
      %1787 = vmatpush1.bf16.msra.mxu0 %v1770
      %1788 = vmatprep.subr.bf16.mxu0 0
      %1789 = vmatpush1.bf16.msra.mxu0 %v1771
      %1790 = vmatprep.subr.bf16.mxu0 0
      %1791 = vmatpush1.bf16.msra.mxu0 %v1772
      %1792 = vmatprep.subr.bf16.mxu0 0
      %1793 = vmatpush1.bf16.msra.mxu0 %v1773
      %1794 = vmatprep.subr.bf16.mxu0 0
      %1795 = vmatpush1.bf16.msra.mxu0 %v1774
      %1796 = vmatprep.subr.bf16.mxu0 0
      %1797 = vmatpush1.bf16.msra.mxu0 %v1775
      %1798 = vmatprep.subr.bf16.mxu0 0
      %1799 = vmatpush1.bf16.msra.mxu0 %v1776
      %1800 = vmatprep.subr.bf16.mxu0 0
      %1801 = vmatpush1.bf16.msra.mxu0 %v1777
      %1802 = vmatprep.subr.bf16.mxu0 0
      %1803 = vmatpush1.bf16.msra.mxu0 0
      %1804 = vmatprep.subr.bf16.mxu0 0
      %1805 = vmatpush1.bf16.msra.mxu0 0
      %1806 = vmatprep.subr.bf16.mxu0 0
      %1807 = vmatpush1.bf16.msra.mxu0 0
      %1808 = vmatprep.subr.bf16.mxu0 0
      %1809 = vmatpush1.bf16.msra.mxu0 0
      %1810 = vmatprep.subr.bf16.mxu0 0
      %1811 = vmatpush1.bf16.msra.mxu0 0
      %1812 = vmatprep.subr.bf16.mxu0 0
      %1813 = vmatpush1.bf16.msra.mxu0 0
      %1814 = vmatprep.subr.bf16.mxu0 0
      %1815 = vmatpush1.bf16.msra.mxu0 0
      %1816 = vmatprep.subr.bf16.mxu0 0
      %1817 = vmatpush1.bf16.msra.mxu0 0
      %1818 = vmatprep.mubr.bf16.mxu0 0
      %1819 = vmatmul.mubr.bf16.gmra.mrb[0].mxu0 %v1734
      %v1820 = vpop.f32.mrb[0].mxu0
      %v1821 = vadd.f32 0.0, %v1820
      %v1822 = vpop.f32.mrb[0].mxu0
      %v1823 = vpop.f32.mrb[0].mxu0
      %v1824 = vadd.f32 0.0, %v1823
      %v1825 = vpop.f32.mrb[0].mxu0
      %1826 = vmatprep.mubr.bf16.mxu0 0
      %1827 = vmatmul.mubr.bf16.gmra.mrb[0].mxu0 %v1735
      %v1828 = vpop.f32.mrb[0].mxu0
      %v1829 = vadd.f32 0.0, %v1828
      %v1830 = vpop.f32.mrb[0].mxu0
      %v1831 = vpop.f32.mrb[0].mxu0
      %v1832 = vadd.f32 0.0, %v1831
      %v1833 = vpop.f32.mrb[0].mxu0
      %1834 = vdwg.mxu0
      %v1835 = vld [vmem:[#allocation3] sm:$0xff]
      %v1836 = vld [vmem:[#allocation3 + $0x8] sm:$0xff]
      %v1837 = vld [vmem:[#allocation3 + $0x10] sm:$0xff]
      %v1838 = vld [vmem:[#allocation3 + $0x18] sm:$0xff]
      %v1839 = vadd.f32 %v1835, %v1821
      %v1840 = vadd.f32 %v1836, %v1824
      %v1841 = vadd.f32 %v1837, %v1829
      %v1842 = vadd.f32 %v1838, %v1832
      %1843 = vst [vmem:[#allocation3] sm:$0xff] %v1839
      %1844 = vst [vmem:[#allocation3 + $0x8] sm:$0xff] %v1840
      %1845 = vst [vmem:[#allocation3 + $0x10] sm:$0xff] %v1841
      %1846 = vst [vmem:[#allocation3 + $0x18] sm:$0xff] %v1842
      %v1847 = vld [vmem:[%s1704] sm:$0xf]
      %v1848 = vld [vmem:[%s1704 + $0x4] sm:$0x1]
      %v1849 = vld [vmem:[%s1704 + $0x8] sm:$0xf]
      %v1850 = vld [vmem:[%s1704 + $0xc] sm:$0x1]
      %v1851 = vld [vmem:[%s1704 + $0x10] sm:$0xf]
      %v1852 = vld [vmem:[%s1704 + $0x14] sm:$0x1]
      %v1853 = vld [vmem:[%s1704 + $0x18] sm:$0xf]
      %v1854 = vld [vmem:[%s1704 + $0x1c] sm:$0x1]
      %v1856 = vshrl.u32 %v1847, 16
      %v1858 = vrot.slane %v1856, 4
      %v1859 = vshll.u32 %v1847, 16
      %v1861 = vrot.slane %v1859, 5
      %v1862 = vor.u32 %v1858, %v1861
      %v1863 = vrot.slane %v1862, 4
      %v1865 = vshll.u32 %v1848, 16
      %v1867 = vrot.slane %v1865, 5
      %v1868 = vsel %vm838, %v1863, %v1867
      %v1870 = vshrl.u32 %v1849, 16
      %v1872 = vrot.slane %v1870, 4
      %v1873 = vshll.u32 %v1849, 16
      %v1875 = vrot.slane %v1873, 5
      %v1876 = vor.u32 %v1872, %v1875
      %v1877 = vrot.slane %v1876, 4
      %v1879 = vshll.u32 %v1850, 16
      %v1881 = vrot.slane %v1879, 5
      %v1882 = vsel %vm838, %v1877, %v1881
      %v1884 = vshrl.u32 %v1851, 16
      %v1886 = vrot.slane %v1884, 4
      %v1887 = vshll.u32 %v1851, 16
      %v1889 = vrot.slane %v1887, 5
      %v1890 = vor.u32 %v1886, %v1889
      %v1891 = vrot.slane %v1890, 4
      %v1893 = vshll.u32 %v1852, 16
      %v1895 = vrot.slane %v1893, 5
      %v1896 = vsel %vm838, %v1891, %v1895
      %v1898 = vshrl.u32 %v1853, 16
      %v1900 = vrot.slane %v1898, 4
      %v1901 = vshll.u32 %v1853, 16
      %v1903 = vrot.slane %v1901, 5
      %v1904 = vor.u32 %v1900, %v1903
      %v1905 = vrot.slane %v1904, 4
      %v1907 = vshll.u32 %v1854, 16
      %v1909 = vrot.slane %v1907, 5
      %v1910 = vsel %vm838, %v1905, %v1909
      %s1911 = scalar_lea.vmem %s497, 448
      %v1912 = vld [vmem:[%s1911] sm:$0xf]
      %v1913 = vld [vmem:[%s1911 + $0x4] sm:$0xf]
      %v1914 = vld [vmem:[%s1911 + $0x8] sm:$0xf]
      %v1915 = vld [vmem:[%s1911 + $0xc] sm:$0xf]
      %v1916 = vld [vmem:[%s1911 + $0x10] sm:$0xf]
      %v1917 = vld [vmem:[%s1911 + $0x14] sm:$0xf]
      %v1918 = vld [vmem:[%s1911 + $0x18] sm:$0xf]
      %v1919 = vld [vmem:[%s1911 + $0x1c] sm:$0xf]
      %v1920 = vld [vmem:[%s1911 + $0x20] sm:$0xf]
      %v1921 = vld [vmem:[%s1911 + $0x24] sm:$0xf]
      %v1922 = vld [vmem:[%s1911 + $0x28] sm:$0xf]
      %v1923 = vld [vmem:[%s1911 + $0x2c] sm:$0xf]
      %v1924 = vld [vmem:[%s1911 + $0x30] sm:$0xf]
      %v1925 = vld [vmem:[%s1911 + $0x34] sm:$0xf]
      %v1926 = vld [vmem:[%s1911 + $0x38] sm:$0xf]
      %v1927 = vld [vmem:[%s1911 + $0x3c] sm:$0xf]
      %v1928 = vunpack.c.l.b16 %v1868
      %v1929 = vunpack.c.l.b16 %v1882
      %v1930 = vunpack.c.l.b16 %v1896
      %v1931 = vunpack.c.l.b16 %v1910
      %v1932 = vpack.c.b16 %v1929, %v1928
      %v1933 = vpack.c.b16 %v1931, %v1930
      %v1952 = vunpack.c.l.b16 %v1912
      %v1953 = vunpack.c.l.b16 %v1913
      %v1954 = vunpack.c.l.b16 %v1914
      %v1955 = vunpack.c.l.b16 %v1915
      %v1956 = vunpack.c.l.b16 %v1916
      %v1957 = vunpack.c.l.b16 %v1917
      %v1958 = vunpack.c.l.b16 %v1918
      %v1959 = vunpack.c.l.b16 %v1919
      %v1960 = vunpack.c.l.b16 %v1920
      %v1961 = vunpack.c.l.b16 %v1921
      %v1962 = vunpack.c.l.b16 %v1922
      %v1963 = vunpack.c.l.b16 %v1923
      %v1964 = vunpack.c.l.b16 %v1924
      %v1965 = vunpack.c.l.b16 %v1925
      %v1966 = vunpack.c.l.b16 %v1926
      %v1967 = vunpack.c.l.b16 %v1927
      %v1968 = vpack.c.b16 %v1953, %v1952
      %v1969 = vpack.c.b16 %v1955, %v1954
      %v1970 = vpack.c.b16 %v1957, %v1956
      %v1971 = vpack.c.b16 %v1959, %v1958
      %v1972 = vpack.c.b16 %v1961, %v1960
      %v1973 = vpack.c.b16 %v1963, %v1962
      %v1974 = vpack.c.b16 %v1965, %v1964
      %v1975 = vpack.c.b16 %v1967, %v1966
      %1984 = vmatprep.subr.bf16.mxu0 0
      %1985 = vmatpush1.bf16.msra.mxu0 %v1968
      %1986 = vmatprep.subr.bf16.mxu0 0
      %1987 = vmatpush1.bf16.msra.mxu0 %v1969
      %1988 = vmatprep.subr.bf16.mxu0 0
      %1989 = vmatpush1.bf16.msra.mxu0 %v1970
      %1990 = vmatprep.subr.bf16.mxu0 0
      %1991 = vmatpush1.bf16.msra.mxu0 %v1971
      %1992 = vmatprep.subr.bf16.mxu0 0
      %1993 = vmatpush1.bf16.msra.mxu0 %v1972
      %1994 = vmatprep.subr.bf16.mxu0 0
      %1995 = vmatpush1.bf16.msra.mxu0 %v1973
      %1996 = vmatprep.subr.bf16.mxu0 0
      %1997 = vmatpush1.bf16.msra.mxu0 %v1974
      %1998 = vmatprep.subr.bf16.mxu0 0
      %1999 = vmatpush1.bf16.msra.mxu0 %v1975
      %2000 = vmatprep.subr.bf16.mxu0 0
      %2001 = vmatpush1.bf16.msra.mxu0 0
      %2002 = vmatprep.subr.bf16.mxu0 0
      %2003 = vmatpush1.bf16.msra.mxu0 0
      %2004 = vmatprep.subr.bf16.mxu0 0
      %2005 = vmatpush1.bf16.msra.mxu0 0
      %2006 = vmatprep.subr.bf16.mxu0 0
      %2007 = vmatpush1.bf16.msra.mxu0 0
      %2008 = vmatprep.subr.bf16.mxu0 0
      %2009 = vmatpush1.bf16.msra.mxu0 0
      %2010 = vmatprep.subr.bf16.mxu0 0
      %2011 = vmatpush1.bf16.msra.mxu0 0
      %2012 = vmatprep.subr.bf16.mxu0 0
      %2013 = vmatpush1.bf16.msra.mxu0 0
      %2014 = vmatprep.subr.bf16.mxu0 0
      %2015 = vmatpush1.bf16.msra.mxu0 0
      %2016 = vmatprep.mubr.bf16.mxu0 0
      %2017 = vmatmul.mubr.bf16.gmra.mrb[0].mxu0 %v1932
      %v2018 = vpop.f32.mrb[0].mxu0
      %v2019 = vadd.f32 0.0, %v2018
      %v2020 = vpop.f32.mrb[0].mxu0
      %v2021 = vpop.f32.mrb[0].mxu0
      %v2022 = vadd.f32 0.0, %v2021
      %v2023 = vpop.f32.mrb[0].mxu0
      %2024 = vmatprep.mubr.bf16.mxu0 0
      %2025 = vmatmul.mubr.bf16.gmra.mrb[0].mxu0 %v1933
      %v2026 = vpop.f32.mrb[0].mxu0
      %v2027 = vadd.f32 0.0, %v2026
      %v2028 = vpop.f32.mrb[0].mxu0
      %v2029 = vpop.f32.mrb[0].mxu0
      %v2030 = vadd.f32 0.0, %v2029
      %v2031 = vpop.f32.mrb[0].mxu0
      %2032 = vdwg.mxu0
      %v2033 = vld [vmem:[#allocation3] sm:$0xff]
      %v2034 = vld [vmem:[#allocation3 + $0x8] sm:$0xff]
      %v2035 = vld [vmem:[#allocation3 + $0x10] sm:$0xff]
      %v2036 = vld [vmem:[#allocation3 + $0x18] sm:$0xff]
      %v2037 = vadd.f32 %v2033, %v2019
      %v2038 = vadd.f32 %v2034, %v2022
      %v2039 = vadd.f32 %v2035, %v2027
      %v2040 = vadd.f32 %v2036, %v2030
      %2041 = vst [vmem:[#allocation3] sm:$0xff] %v2037
      %2042 = vst [vmem:[#allocation3 + $0x8] sm:$0xff] %v2038
      %2043 = vst [vmem:[#allocation3 + $0x10] sm:$0xff] %v2039
      %2044 = vst [vmem:[#allocation3 + $0x18] sm:$0xff] %v2040
      %v2045 = vld [vmem:[%s1704] sm:$0xe]
      %v2046 = vld [vmem:[%s1704 + $0x4] sm:$0x1]
      %v2047 = vld [vmem:[%s1704 + $0x8] sm:$0xe]
      %v2048 = vld [vmem:[%s1704 + $0xc] sm:$0x1]
      %v2049 = vld [vmem:[%s1704 + $0x10] sm:$0xe]
      %v2050 = vld [vmem:[%s1704 + $0x14] sm:$0x1]
      %v2051 = vld [vmem:[%s1704 + $0x18] sm:$0xe]
      %v2052 = vld [vmem:[%s1704 + $0x1c] sm:$0x1]
      %v2061 = vrot.slane %v2045, 5
      %v2062 = vrot.slane %v2061, 4
      %v2063 = vrot.slane %v2046, 5
      %v2064 = vsel %vm1047, %v2062, %v2063
      %v2065 = vrot.slane %v2047, 5
      %v2066 = vrot.slane %v2065, 4
      %v2067 = vrot.slane %v2048, 5
      %v2068 = vsel %vm1047, %v2066, %v2067
      %v2069 = vrot.slane %v2049, 5
      %v2070 = vrot.slane %v2069, 4
      %v2071 = vrot.slane %v2050, 5
      %v2072 = vsel %vm1047, %v2070, %v2071
      %v2073 = vrot.slane %v2051, 5
      %v2074 = vrot.slane %v2073, 4
      %v2075 = vrot.slane %v2052, 5
      %v2076 = vsel %vm1047, %v2074, %v2075
      %s2077 = scalar_lea.vmem %s497, 512
      %v2078 = vld [vmem:[%s2077] sm:$0xf]
      %v2079 = vld [vmem:[%s2077 + $0x4] sm:$0xf]
      %v2080 = vld [vmem:[%s2077 + $0x8] sm:$0xf]
      %v2081 = vld [vmem:[%s2077 + $0xc] sm:$0xf]
      %v2082 = vld [vmem:[%s2077 + $0x10] sm:$0xf]
      %v2083 = vld [vmem:[%s2077 + $0x14] sm:$0xf]
      %v2084 = vld [vmem:[%s2077 + $0x18] sm:$0xf]
      %v2085 = vld [vmem:[%s2077 + $0x1c] sm:$0xf]
      %v2086 = vld [vmem:[%s2077 + $0x20] sm:$0xf]
      %v2087 = vld [vmem:[%s2077 + $0x24] sm:$0xf]
      %v2088 = vld [vmem:[%s2077 + $0x28] sm:$0xf]
      %v2089 = vld [vmem:[%s2077 + $0x2c] sm:$0xf]
      %v2090 = vld [vmem:[%s2077 + $0x30] sm:$0xf]
      %v2091 = vld [vmem:[%s2077 + $0x34] sm:$0xf]
      %v2092 = vld [vmem:[%s2077 + $0x38] sm:$0xf]
      %v2093 = vld [vmem:[%s2077 + $0x3c] sm:$0xf]
      %v2094 = vunpack.c.l.b16 %v2064
      %v2095 = vunpack.c.l.b16 %v2068
      %v2096 = vunpack.c.l.b16 %v2072
      %v2097 = vunpack.c.l.b16 %v2076
      %v2098 = vpack.c.b16 %v2095, %v2094
      %v2099 = vpack.c.b16 %v2097, %v2096
      %v2118 = vunpack.c.l.b16 %v2078
      %v2119 = vunpack.c.l.b16 %v2079
      %v2120 = vunpack.c.l.b16 %v2080
      %v2121 = vunpack.c.l.b16 %v2081
      %v2122 = vunpack.c.l.b16 %v2082
      %v2123 = vunpack.c.l.b16 %v2083
      %v2124 = vunpack.c.l.b16 %v2084
      %v2125 = vunpack.c.l.b16 %v2085
      %v2126 = vunpack.c.l.b16 %v2086
      %v2127 = vunpack.c.l.b16 %v2087
      %v2128 = vunpack.c.l.b16 %v2088
      %v2129 = vunpack.c.l.b16 %v2089
      %v2130 = vunpack.c.l.b16 %v2090
      %v2131 = vunpack.c.l.b16 %v2091
      %v2132 = vunpack.c.l.b16 %v2092
      %v2133 = vunpack.c.l.b16 %v2093
      %v2134 = vpack.c.b16 %v2119, %v2118
      %v2135 = vpack.c.b16 %v2121, %v2120
      %v2136 = vpack.c.b16 %v2123, %v2122
      %v2137 = vpack.c.b16 %v2125, %v2124
      %v2138 = vpack.c.b16 %v2127, %v2126
      %v2139 = vpack.c.b16 %v2129, %v2128
      %v2140 = vpack.c.b16 %v2131, %v2130
      %v2141 = vpack.c.b16 %v2133, %v2132
      %2150 = vmatprep.subr.bf16.mxu0 0
      %2151 = vmatpush1.bf16.msra.mxu0 %v2134
      %2152 = vmatprep.subr.bf16.mxu0 0
      %2153 = vmatpush1.bf16.msra.mxu0 %v2135
      %2154 = vmatprep.subr.bf16.mxu0 0
      %2155 = vmatpush1.bf16.msra.mxu0 %v2136
      %2156 = vmatprep.subr.bf16.mxu0 0
      %2157 = vmatpush1.bf16.msra.mxu0 %v2137
      %2158 = vmatprep.subr.bf16.mxu0 0
      %2159 = vmatpush1.bf16.msra.mxu0 %v2138
      %2160 = vmatprep.subr.bf16.mxu0 0
      %2161 = vmatpush1.bf16.msra.mxu0 %v2139
      %2162 = vmatprep.subr.bf16.mxu0 0
      %2163 = vmatpush1.bf16.msra.mxu0 %v2140
      %2164 = vmatprep.subr.bf16.mxu0 0
      %2165 = vmatpush1.bf16.msra.mxu0 %v2141
      %2166 = vmatprep.subr.bf16.mxu0 0
      %2167 = vmatpush1.bf16.msra.mxu0 0
      %2168 = vmatprep.subr.bf16.mxu0 0
      %2169 = vmatpush1.bf16.msra.mxu0 0
      %2170 = vmatprep.subr.bf16.mxu0 0
      %2171 = vmatpush1.bf16.msra.mxu0 0
      %2172 = vmatprep.subr.bf16.mxu0 0
      %2173 = vmatpush1.bf16.msra.mxu0 0
      %2174 = vmatprep.subr.bf16.mxu0 0
      %2175 = vmatpush1.bf16.msra.mxu0 0
      %2176 = vmatprep.subr.bf16.mxu0 0
      %2177 = vmatpush1.bf16.msra.mxu0 0
      %2178 = vmatprep.subr.bf16.mxu0 0
      %2179 = vmatpush1.bf16.msra.mxu0 0
      %2180 = vmatprep.subr.bf16.mxu0 0
      %2181 = vmatpush1.bf16.msra.mxu0 0
      %2182 = vmatprep.mubr.bf16.mxu0 0
      %2183 = vmatmul.mubr.bf16.gmra.mrb[0].mxu0 %v2098
      %v2184 = vpop.f32.mrb[0].mxu0
      %v2185 = vadd.f32 0.0, %v2184
      %v2186 = vpop.f32.mrb[0].mxu0
      %v2187 = vpop.f32.mrb[0].mxu0
      %v2188 = vadd.f32 0.0, %v2187
      %v2189 = vpop.f32.mrb[0].mxu0
      %2190 = vmatprep.mubr.bf16.mxu0 0
      %2191 = vmatmul.mubr.bf16.gmra.mrb[0].mxu0 %v2099
      %v2192 = vpop.f32.mrb[0].mxu0
      %v2193 = vadd.f32 0.0, %v2192
      %v2194 = vpop.f32.mrb[0].mxu0
      %v2195 = vpop.f32.mrb[0].mxu0
      %v2196 = vadd.f32 0.0, %v2195
      %v2197 = vpop.f32.mrb[0].mxu0
      %2198 = vdwg.mxu0
      %v2199 = vld [vmem:[#allocation3] sm:$0xff]
      %v2200 = vld [vmem:[#allocation3 + $0x8] sm:$0xff]
      %v2201 = vld [vmem:[#allocation3 + $0x10] sm:$0xff]
      %v2202 = vld [vmem:[#allocation3 + $0x18] sm:$0xff]
      %v2203 = vadd.f32 %v2199, %v2185
      %v2204 = vadd.f32 %v2200, %v2188
      %v2205 = vadd.f32 %v2201, %v2193
      %v2206 = vadd.f32 %v2202, %v2196
      %2207 = vst [vmem:[#allocation3] sm:$0xff] %v2203
      %2208 = vst [vmem:[#allocation3 + $0x8] sm:$0xff] %v2204
      %2209 = vst [vmem:[#allocation3 + $0x10] sm:$0xff] %v2205
      %2210 = vst [vmem:[#allocation3 + $0x18] sm:$0xff] %v2206
      %v2211 = vld [vmem:[#allocation3] sm:$0xff]
      %v2212 = vld [vmem:[#allocation3 + $0x8] sm:$0xff]
      %v2213 = vld [vmem:[#allocation3 + $0x10] sm:$0xff]
      %v2214 = vld [vmem:[#allocation3 + $0x18] sm:$0xff]
      %v2215 = vpack.c.bf16 %v2211, %v2211
      %v2216 = vpack.c.bf16 %v2212, %v2212
      %v2217 = vpack.c.bf16 %v2213, %v2213
      %v2218 = vpack.c.bf16 %v2214, %v2214
      %2219 = vst [vmem:[%s518] sm:$0xf] %v2215
      %2220 = vst [vmem:[%s518 + $0x4] sm:$0xf] %v2216
      %2221 = vst [vmem:[%s518 + $0x8] sm:$0xf] %v2217
      %2222 = vst [vmem:[%s518 + $0xc] sm:$0xf] %v2218
      %v2223 = vadd.f32 %v2211, %v2212
      %v2224 = vadd.f32 %v2223, %v2213
      %v2225 = vadd.f32 %v2224, %v2214
      %v2226 = vrot.slane %v2225, 4
      %v2227 = vadd.f32 %v2225, %v2226
      %v2228 = vrot.slane %v2227, 2
      %v2229 = vadd.f32 %v2227, %v2228
      %v2230 = vrot.slane %v2229, 1
      %v2231 = vadd.f32 %v2229, %v2230
      %v2232 = vmul.f32 %v2211, %v2211
      %v2233 = vmul.f32 %v2212, %v2212
      %v2234 = vmul.f32 %v2213, %v2213
      %v2235 = vmul.f32 %v2214, %v2214
      %v2236 = vadd.f32 %v2232, %v2233
      %v2237 = vadd.f32 %v2236, %v2234
      %v2238 = vadd.f32 %v2237, %v2235
      %v2239 = vrot.slane %v2238, 4
      %v2240 = vadd.f32 %v2238, %v2239
      %v2241 = vrot.slane %v2240, 2
      %v2242 = vadd.f32 %v2240, %v2241
      %v2243 = vrot.slane %v2242, 1
      %v2244 = vadd.f32 %v2242, %v2243
      %v2245 = vld [vmem:[%s505] sm:$0xff]
      %v2246 = vld [vmem:[%s505 + $0x8] sm:$0xff]
      %v2247 = vld [vmem:[%s505 + $0x10] sm:$0xff]
      %v2248 = vld [vmem:[%s505 + $0x18] sm:$0xff]
      %v2249 = vld [vmem:[%s505 + $0x20] sm:$0xff]
      %v2250 = vld [vmem:[%s505 + $0x28] sm:$0xff]
      %v2251 = vld [vmem:[%s505 + $0x30] sm:$0xff]
      %v2252 = vld [vmem:[%s505 + $0x38] sm:$0xff]
      %v2253 = vld [vmem:[%s505 + $0x40] sm:$0xff]
      %v2254 = vld [vmem:[%s505 + $0x48] sm:$0xff]
      %v2255 = vld [vmem:[%s505 + $0x50] sm:$0xff]
      %v2256 = vld [vmem:[%s505 + $0x58] sm:$0xff]
      %v2257 = vld [vmem:[%s505 + $0x60] sm:$0xff]
      %v2258 = vld [vmem:[%s505 + $0x68] sm:$0xff]
      %v2259 = vld [vmem:[%s505 + $0x70] sm:$0xff]
      %v2260 = vld [vmem:[%s505 + $0x78] sm:$0xff]
      %2261 = vmatprep.subr.mxu0 0.0
      %2262 = vmatpush1.msra.mxu0 %v2245
      %2263 = vmatprep.subr.mxu0 0.0
      %2264 = vmatpush1.msra.mxu0 %v2246
      %2265 = vmatprep.subr.mxu0 0.0
      %2266 = vmatpush1.msra.mxu0 %v2247
      %2267 = vmatprep.subr.mxu0 0.0
      %2268 = vmatpush1.msra.mxu0 %v2248
      %2269 = vmatprep.subr.mxu0 0.0
      %2270 = vmatpush1.msra.mxu0 %v2249
      %2271 = vmatprep.subr.mxu0 0.0
      %2272 = vmatpush1.msra.mxu0 %v2250
      %2273 = vmatprep.subr.mxu0 0.0
      %2274 = vmatpush1.msra.mxu0 %v2251
      %2275 = vmatprep.subr.mxu0 0.0
      %2276 = vmatpush1.msra.mxu0 %v2252
      %2277 = vmatprep.subr.mxu0 0.0
      %2278 = vmatpush1.msra.mxu0 %v2253
      %2279 = vmatprep.subr.mxu0 0.0
      %2280 = vmatpush1.msra.mxu0 %v2254
      %2281 = vmatprep.subr.mxu0 0.0
      %2282 = vmatpush1.msra.mxu0 %v2255
      %2283 = vmatprep.subr.mxu0 0.0
      %2284 = vmatpush1.msra.mxu0 %v2256
      %2285 = vmatprep.subr.mxu0 0.0
      %2286 = vmatpush1.msra.mxu0 %v2257
      %2287 = vmatprep.subr.mxu0 0.0
      %2288 = vmatpush1.msra.mxu0 %v2258
      %2289 = vmatprep.subr.mxu0 0.0
      %2290 = vmatpush1.msra.mxu0 %v2259
      %2291 = vmatprep.subr.mxu0 0.0
      %2292 = vmatpush1.msra.mxu0 %v2260
      %2293 = vmatprep.subr.mxu0 0.0
      %2294 = vmatpush1.msra.mxu0 0.0
      %2295 = vmatprep.subr.mxu0 0.0
      %2296 = vmatpush1.msra.mxu0 0.0
      %2297 = vmatprep.subr.mxu0 0.0
      %2298 = vmatpush1.msra.mxu0 0.0
      %2299 = vmatprep.subr.mxu0 0.0
      %2300 = vmatpush1.msra.mxu0 0.0
      %2301 = vmatprep.subr.mxu0 0.0
      %2302 = vmatpush1.msra.mxu0 0.0
      %2303 = vmatprep.subr.mxu0 0.0
      %2304 = vmatpush1.msra.mxu0 0.0
      %2305 = vmatprep.subr.mxu0 0.0
      %2306 = vmatpush1.msra.mxu0 0.0
      %2307 = vmatprep.subr.mxu0 0.0
      %2308 = vmatpush1.msra.mxu0 0.0
      %2309 = vmatprep.subr.mxu0 0.0
      %2310 = vmatpush1.msra.mxu0 0.0
      %2311 = vmatprep.subr.mxu0 0.0
      %2312 = vmatpush1.msra.mxu0 0.0
      %2313 = vmatprep.subr.mxu0 0.0
      %2314 = vmatpush1.msra.mxu0 0.0
      %2315 = vmatprep.subr.mxu0 0.0
      %2316 = vmatpush1.msra.mxu0 0.0
      %2317 = vmatprep.subr.mxu0 0.0
      %2318 = vmatpush1.msra.mxu0 0.0
      %2319 = vmatprep.subr.mxu0 0.0
      %2320 = vmatpush1.msra.mxu0 0.0
      %2321 = vmatprep.subr.mxu0 0.0
      %2322 = vmatpush1.msra.mxu0 0.0
      %2323 = vmatprep.subr.mxu0 0.0
      %2324 = vmatpush1.msra.mxu0 0.0
      %2325 = vmatprep.mubr.f32.mxu0 0.0
      %2326 = vmatmul.mubr.f32.gmra.mrb[0].mxu0 %v2231
      %v2327 = vpop.f32.mrb[0].mxu0
      %v2328 = vadd.f32 0.0, %v2327
      %v2329 = vpop.f32.mrb[0].mxu0
      %2330 = vdwg.mxu0
      %2331 = vst [vmem:[%s528] sm:$0x1] %v2328
      %v2332 = vld [vmem:[%s505] sm:$0xff]
      %v2333 = vld [vmem:[%s505 + $0x8] sm:$0xff]
      %v2334 = vld [vmem:[%s505 + $0x10] sm:$0xff]
      %v2335 = vld [vmem:[%s505 + $0x18] sm:$0xff]
      %v2336 = vld [vmem:[%s505 + $0x20] sm:$0xff]
      %v2337 = vld [vmem:[%s505 + $0x28] sm:$0xff]
      %v2338 = vld [vmem:[%s505 + $0x30] sm:$0xff]
      %v2339 = vld [vmem:[%s505 + $0x38] sm:$0xff]
      %v2340 = vld [vmem:[%s505 + $0x40] sm:$0xff]
      %v2341 = vld [vmem:[%s505 + $0x48] sm:$0xff]
      %v2342 = vld [vmem:[%s505 + $0x50] sm:$0xff]
      %v2343 = vld [vmem:[%s505 + $0x58] sm:$0xff]
      %v2344 = vld [vmem:[%s505 + $0x60] sm:$0xff]
      %v2345 = vld [vmem:[%s505 + $0x68] sm:$0xff]
      %v2346 = vld [vmem:[%s505 + $0x70] sm:$0xff]
      %v2347 = vld [vmem:[%s505 + $0x78] sm:$0xff]
      %2348 = vmatprep.subr.mxu0 0.0
      %2349 = vmatpush1.msra.mxu0 %v2332
      %2350 = vmatprep.subr.mxu0 0.0
      %2351 = vmatpush1.msra.mxu0 %v2333
      %2352 = vmatprep.subr.mxu0 0.0
      %2353 = vmatpush1.msra.mxu0 %v2334
      %2354 = vmatprep.subr.mxu0 0.0
      %2355 = vmatpush1.msra.mxu0 %v2335
      %2356 = vmatprep.subr.mxu0 0.0
      %2357 = vmatpush1.msra.mxu0 %v2336
      %2358 = vmatprep.subr.mxu0 0.0
      %2359 = vmatpush1.msra.mxu0 %v2337
      %2360 = vmatprep.subr.mxu0 0.0
      %2361 = vmatpush1.msra.mxu0 %v2338
      %2362 = vmatprep.subr.mxu0 0.0
      %2363 = vmatpush1.msra.mxu0 %v2339
      %2364 = vmatprep.subr.mxu0 0.0
      %2365 = vmatpush1.msra.mxu0 %v2340
      %2366 = vmatprep.subr.mxu0 0.0
      %2367 = vmatpush1.msra.mxu0 %v2341
      %2368 = vmatprep.subr.mxu0 0.0
      %2369 = vmatpush1.msra.mxu0 %v2342
      %2370 = vmatprep.subr.mxu0 0.0
      %2371 = vmatpush1.msra.mxu0 %v2343
      %2372 = vmatprep.subr.mxu0 0.0
      %2373 = vmatpush1.msra.mxu0 %v2344
      %2374 = vmatprep.subr.mxu0 0.0
      %2375 = vmatpush1.msra.mxu0 %v2345
      %2376 = vmatprep.subr.mxu0 0.0
      %2377 = vmatpush1.msra.mxu0 %v2346
      %2378 = vmatprep.subr.mxu0 0.0
      %2379 = vmatpush1.msra.mxu0 %v2347
      %2380 = vmatprep.subr.mxu0 0.0
      %2381 = vmatpush1.msra.mxu0 0.0
      %2382 = vmatprep.subr.mxu0 0.0
      %2383 = vmatpush1.msra.mxu0 0.0
      %2384 = vmatprep.subr.mxu0 0.0
      %2385 = vmatpush1.msra.mxu0 0.0
      %2386 = vmatprep.subr.mxu0 0.0
      %2387 = vmatpush1.msra.mxu0 0.0
      %2388 = vmatprep.subr.mxu0 0.0
      %2389 = vmatpush1.msra.mxu0 0.0
      %2390 = vmatprep.subr.mxu0 0.0
      %2391 = vmatpush1.msra.mxu0 0.0
      %2392 = vmatprep.subr.mxu0 0.0
      %2393 = vmatpush1.msra.mxu0 0.0
      %2394 = vmatprep.subr.mxu0 0.0
      %2395 = vmatpush1.msra.mxu0 0.0
      %2396 = vmatprep.subr.mxu0 0.0
      %2397 = vmatpush1.msra.mxu0 0.0
      %2398 = vmatprep.subr.mxu0 0.0
      %2399 = vmatpush1.msra.mxu0 0.0
      %2400 = vmatprep.subr.mxu0 0.0
      %2401 = vmatpush1.msra.mxu0 0.0
      %2402 = vmatprep.subr.mxu0 0.0
      %2403 = vmatpush1.msra.mxu0 0.0
      %2404 = vmatprep.subr.mxu0 0.0
      %2405 = vmatpush1.msra.mxu0 0.0
      %2406 = vmatprep.subr.mxu0 0.0
      %2407 = vmatpush1.msra.mxu0 0.0
      %2408 = vmatprep.subr.mxu0 0.0
      %2409 = vmatpush1.msra.mxu0 0.0
      %2410 = vmatprep.subr.mxu0 0.0
      %2411 = vmatpush1.msra.mxu0 0.0
      %2412 = vmatprep.mubr.f32.mxu0 0.0
      %2413 = vmatmul.mubr.f32.gmra.mrb[0].mxu0 %v2244
      %v2414 = vpop.f32.mrb[0].mxu0
      %v2415 = vadd.f32 0.0, %v2414
      %v2416 = vpop.f32.mrb[0].mxu0
      %2417 = vdwg.mxu0
      %2418 = vst [vmem:[%s528 + $0x1] sm:$0x1] %v2415
      %s2419 = smul.u32 4, %s25
      %p2420 = scmp.lt.s32.totalorder %s24, 1
      %s2421 = scalar_select %p2420, %s24, 1
      %p2422 = scmp.lt.s32.totalorder %s2419, 7
      %s2423 = scalar_select %p2422, %s2419, 7
      %p2424 = scmp.lt.s32.totalorder %s26, 0
      %s2425 = scalar_select %p2424, %s26, 0
      %s2426 = sadd.s32 %s2425, %s2423
      %s2427 = smul.addr %s2421, 8
      %s2428 = sadd.s32 %s2426, %s2427
      %s2429 = smul.addr %s2428, 4
      %s2430 = scalar_lea.vmem %s6, %s2429
      %s2431 = sadd.s32 %s25, %s26
      %p2432 = scmp.lt.s32.totalorder %s24, 1
      %s2433 = scalar_select %p2432, %s24, 1
      %p2434 = scmp.lt.s32.totalorder %s2431, 1
      %s2435 = scalar_select %p2434, %s2431, 1
      %s2436 = smul.addr %s2433, 2
      %s2437 = sadd.s32 %s2435, %s2436
      %s2438 = smul.addr %s2437, 2
      %s2439 = scalar_lea.vmem %s7, %s2438
      // Predicated region
      $region45: #{downblock_forward.5} parent=43 // pred_check
        %p2440 = pneg %p238
      $region46: #{downblock_forward.5} parent=43 // pred_check_branch
        %2442 = sbr.rel (%p2440) target = $region48
      $region47: #{downblock_forward.5} parent=43 // pred_region
        %s2443 = smul.u32 4, %s25
      $region48: #{downblock_forward.5} parent=43 // pred_fallthru
        _
      // Predicated region
      $region49: #{downblock_forward.5} parent=43 // pred_check
        %p2444 = pneg %p268
      $region50: #{downblock_forward.5} parent=43 // pred_check_branch
        %2446 = sbr.rel (%p2444) target = $region52
      $region51: #{downblock_forward.5} parent=43 // pred_region
        %s2447 = sadd.s32 %s25, %s26
      $region52: #{downblock_forward.5} parent=43 // pred_fallthru
        _
    $region44: #{downblock_forward.5} parent=5 // pred_fallthru
      _
    %p2448 = scmp.le.s32.totalorder 2, %s14
    // Predicated region
    $region53: #{downblock_forward.5} parent=5 // pred_check
      %p2449 = pneg %p2448
    $region54: #{downblock_forward.5} parent=5 // pred_check_branch
      %2451 = sbr.rel (%p2449) target = $region56
    $region55: #{downblock_forward.5} parent=5 // pred_region
      %s2452 = ssub.s32 %s14, 2
      // Predicated region
      $region57: #{downblock_forward.5} parent=55 // pred_check
        %p2453 = pneg %p244
      $region58: #{downblock_forward.5} parent=55 // pred_check_branch
        %2455 = sbr.rel (%p2453) target = $region60
      $region59: #{downblock_forward.5} parent=55 // pred_region
        %s2456 = smul.u32 4, %s28
        %p2457 = scmp.lt.s32.totalorder %s27, 1
        %s2458 = scalar_select %p2457, %s27, 1
        %p2459 = scmp.lt.s32.totalorder %s2456, 7
        %s2460 = scalar_select %p2459, %s2456, 7
        %p2461 = scmp.lt.s32.totalorder %s29, 0
        %s2462 = scalar_select %p2461, %s29, 0
        %s2463 = sadd.s32 %s2462, %s2460
        %s2464 = smul.addr %s2458, 8
        %s2465 = sadd.s32 %s2463, %s2464
        %s2466 = smul.addr %s2465, 4
        %s2467 = scalar_lea.vmem %s6, %s2466
      $region60: #{downblock_forward.5} parent=55 // pred_fallthru
        _
      // Predicated region
      $region61: #{downblock_forward.5} parent=55 // pred_check
        %p2468 = pneg %p274
      $region62: #{downblock_forward.5} parent=55 // pred_check_branch
        %2470 = sbr.rel (%p2468) target = $region64
      $region63: #{downblock_forward.5} parent=55 // pred_region
        %s2471 = sadd.s32 %s28, %s29
        %p2472 = scmp.lt.s32.totalorder %s27, 1
        %s2473 = scalar_select %p2472, %s27, 1
        %p2474 = scmp.lt.s32.totalorder %s2471, 1
        %s2475 = scalar_select %p2474, %s2471, 1
        %s2476 = smul.addr %s2473, 2
        %s2477 = sadd.s32 %s2475, %s2476
        %s2478 = smul.addr %s2477, 2
        %s2479 = scalar_lea.vmem %s7, %s2478
      $region64: #{downblock_forward.5} parent=55 // pred_fallthru
        _
    $region56: #{downblock_forward.5} parent=5 // pred_fallthru
      _
  $region6: #{downblock_forward.5} parent=0 // loop_footer
    %s18 = sadd.s32 1, %s14
  $region7: #{downblock_forward.5} parent=0 // loop_footer_branch
    %13 = sbr.rel target = $region3
  $region8: #{downblock_forward.5} parent=0 // loop_exit
    _

// kernel: downblock_forward.6
$region0: #{downblock_forward.6}
  #allocation0 [shape = 'u32[]', space=smem, size = 0x4, offset = 0x4, fixed_abs, tag = 'smem constant byte address 0x4 - core index']
  #allocation1 [shape = 'u32[144,128]{1,0:T(1,128)}', space=vmem, size = 0x12000, scoped, tag = 'internal scratch']
  #allocation2 [shape = 'bf16[6,10,128]{2,1,0:T(8,128)(2,1)}', space=vmem, size = 0x6000, scoped, tag = 'scratch operand']
  #allocation3 [shape = 'f32[32,128]{1,0:T(8,128)}', space=vmem, size = 0x4000, scoped, tag = 'scratch operand']
  %s0 = inlined_call_operand.vmem [shape: bf16[2,8,8,128], index: 0, kind: input, shape index: {}, may-alias: {0,1,2}]
  %s1 = inlined_call_operand.vmem [shape: bf16[2,8,8,128], index: 1, kind: input, shape index: {}, may-alias: {0,1,2}]
  %s2 = inlined_call_operand.vmem [shape: bf16[2,8,8,128], index: 2, kind: input, shape index: {}, may-alias: {0,1,2}]
  %s3 = inlined_call_operand.vmem [shape: f32[2,1,128], index: 3, kind: input, shape index: {}]
  %s4 = inlined_call_operand.vmem [shape: f32[2,1,128], index: 4, kind: input, shape index: {}]
  %s5 = inlined_call_operand.vmem [shape: bf16[9,128,128], index: 5, kind: input, shape index: {}]
  %s6 = inlined_call_operand.vmem [shape: f32[1,128], index: 6, kind: input, shape index: {}]
  %s7 = inlined_call_operand.vmem [shape: f32[128,128], index: 7, kind: input, shape index: {}]
  %s8 = inlined_call_operand.vmem [shape: bf16[2,8,8,128], index: 8, kind: output, shape index: {0}]
  %s9 = inlined_call_operand.vmem [shape: f32[2,2,2,128], index: 9, kind: output, shape index: {1}]
  %10 = xla_tuple %s8, %s9
  %s11 = sld [smem:[#allocation0]]
  $region73: #{downblock_forward.6} parent=0
    _
  %s13 = ssub.s32 1, %s11
  %s14 = scalar_select 0, %s13, %s11
  loop: start=0, step=1, limit=6
  $region2: #{downblock_forward.6} parent=0 // loop_pre_header
    _
  $region3: #{downblock_forward.6} parent=0 // loop_header
    %s16 = sphi 0, %s20
    %p17 = scmp.ge.s32.totalorder %s16, 6
    %s23 = sphi 0, %s42
    %s24 = sphi 0, %s38
    %s25 = sphi 0, %s34
    %s26 = sphi 0, %s23
    %s27 = sphi 0, %s24
    %s28 = sphi 0, %s25
    %s29 = sphi 0, %s26
    %s30 = sphi 0, %s27
    %s31 = sphi 0, %s28
    %s47 = sphi 0, %s49
    %s50 = sphi 0, %s47
    %s51 = sphi 0, %s50
    %s67 = sphi 0, %s51
    %s83 = sphi 0, %s85
    %s86 = sphi 0, %s83
    %s87 = sphi 0, %s86
    %s103 = sphi 0, %s87
    %s119 = sphi 0, %s121
    %s122 = sphi 0, %s119
    %s123 = sphi 0, %s122
    %s139 = sphi 0, %s123
    %s145 = sphi 0, %s147
    %s148 = sphi 0, %s145
    %s149 = sphi 0, %s148
    %s165 = sphi 0, %s149
    %s171 = sphi 0, %s173
    %s174 = sphi 0, %s171
    %s175 = sphi 0, %s174
    %s191 = sphi 0, %s175
    %s197 = sphi 0, %s199
    %s200 = sphi 0, %s197
    %s201 = sphi 0, %s200
    %s217 = sphi 0, %s201
    %s223 = sphi 0, %s225
    %s226 = sphi 0, %s223
    %s227 = sphi 0, %s226
    %s243 = sphi 0, %s227
    %s249 = sphi 0, %s251
    %s252 = sphi 0, %s249
    %s253 = sphi 0, %s252
    %s269 = sphi 0, %s253
    %s279 = sphi 0, %s281
    %s282 = sphi 0, %s279
    %s283 = sphi 0, %s282
    %s299 = sphi 0, %s283
    %s309 = sphi 0, %s311
    %s312 = sphi 0, %s309
    %s313 = sphi 0, %s312
    %s329 = sphi 0, %s313
  $region4: #{downblock_forward.6} parent=0 // loop_header_branch
    %19 = sbr.rel (%p17) target = $region8
  $region5: #{downblock_forward.6} parent=0 // loop_body
    %s21 = ssub.s32 %s16, 1
    %s22 = ssub.s32 %s16, 2
    %s32 = sadd.s32 1, %s25
    %p33 = scmp.ge.s32.totalorder %s32, 1
    %s34 = scalar_select %p33, 0, %s32
    %s35 = sadd.s32 1, %s24
    %s36 = scalar_select %p33, %s35, %s24
    %p37 = scmp.ge.s32.totalorder %s36, 2
    %s38 = scalar_select %p37, 0, %s36
    %s39 = sadd.s32 1, %s23
    %s40 = scalar_select %p37, %s39, %s23
    %p41 = scmp.ge.s32.totalorder %s40, 2
    %s42 = scalar_select %p41, 0, %s40
    %s43 = ssub.s32 %s23, %s42
    %s44 = ssub.s32 %s24, %s38
    %s45 = sor.u32 %s43, %s44
    %p46 = scmp.eq.s32.totalorder %s45, 0
    %s48 = sadd.s32 %s47, 1
    %s49 = scalar_select %p46, %s47, %s48
    %p52 = pneg %p46
    %p53 = scmp.eq.s32.totalorder %s16, 3
    %p54 = por %p52, %p53
    %p55 = scmp.ne.s32.totalorder %s47, %s50
    %p56 = scmp.eq.s32.totalorder %s16, 0
    %p57 = por %p55, %p56
    %p58 = scmp.ne.s32.totalorder %s47, %s50
    %p59 = scmp.eq.s32.totalorder %s21, 3
    %p60 = por %p58, %p59
    %p61 = scmp.ne.s32.totalorder %s50, %s51
    %p62 = scmp.eq.s32.totalorder %s21, 0
    %p63 = por %p61, %p62
    %p64 = scmp.ne.s32.totalorder %s50, %s51
    %p65 = scmp.eq.s32.totalorder %s22, 3
    %p66 = por %p64, %p65
    %p68 = scmp.ne.s32.totalorder %s51, %s67
    %p69 = scmp.eq.s32.totalorder %s22, 0
    %p70 = por %p68, %p69
    %s71 = smul.u32 %s24, 4
    %s72 = ssub.s32 %s71, 1
    %p73 = scmp.gt.s32.totalorder %s72, 0
    %s74 = scalar_select %p73, %s72, 0
    %s75 = smul.u32 %s38, 4
    %s76 = ssub.s32 %s75, 1
    %p77 = scmp.gt.s32.totalorder %s76, 0
    %s78 = scalar_select %p77, %s76, 0
    %s79 = ssub.s32 %s23, %s42
    %s80 = ssub.s32 %s74, %s78
    %s81 = sor.u32 %s79, %s80
    %p82 = scmp.eq.s32.totalorder %s81, 0
    %s84 = sadd.s32 %s83, 1
    %s85 = scalar_select %p82, %s83, %s84
    %p88 = pneg %p82
    %p89 = scmp.eq.s32.totalorder %s16, 3
    %p90 = por %p88, %p89
    %p91 = scmp.ne.s32.totalorder %s83, %s86
    %p92 = scmp.eq.s32.totalorder %s16, 0
    %p93 = por %p91, %p92
    %p94 = scmp.ne.s32.totalorder %s83, %s86
    %p95 = scmp.eq.s32.totalorder %s21, 3
    %p96 = por %p94, %p95
    %p97 = scmp.ne.s32.totalorder %s86, %s87
    %p98 = scmp.eq.s32.totalorder %s21, 0
    %p99 = por %p97, %p98
    %p100 = scmp.ne.s32.totalorder %s86, %s87
    %p101 = scmp.eq.s32.totalorder %s22, 3
    %p102 = por %p100, %p101
    %p104 = scmp.ne.s32.totalorder %s87, %s103
    %p105 = scmp.eq.s32.totalorder %s22, 0
    %p106 = por %p104, %p105
    %s107 = smul.u32 %s24, 4
    %s108 = sadd.s32 %s107, 4
    %p109 = scmp.lt.s32.totalorder %s108, 7
    %s110 = scalar_select %p109, %s108, 7
    %s111 = smul.u32 %s38, 4
    %s112 = sadd.s32 %s111, 4
    %p113 = scmp.lt.s32.totalorder %s112, 7
    %s114 = scalar_select %p113, %s112, 7
    %s115 = ssub.s32 %s23, %s42
    %s116 = ssub.s32 %s110, %s114
    %s117 = sor.u32 %s115, %s116
    %p118 = scmp.eq.s32.totalorder %s117, 0
    %s120 = sadd.s32 %s119, 1
    %s121 = scalar_select %p118, %s119, %s120
    %p124 = pneg %p118
    %p125 = scmp.eq.s32.totalorder %s16, 3
    %p126 = por %p124, %p125
    %p127 = scmp.ne.s32.totalorder %s119, %s122
    %p128 = scmp.eq.s32.totalorder %s16, 0
    %p129 = por %p127, %p128
    %p130 = scmp.ne.s32.totalorder %s119, %s122
    %p131 = scmp.eq.s32.totalorder %s21, 3
    %p132 = por %p130, %p131
    %p133 = scmp.ne.s32.totalorder %s122, %s123
    %p134 = scmp.eq.s32.totalorder %s21, 0
    %p135 = por %p133, %p134
    %p136 = scmp.ne.s32.totalorder %s122, %s123
    %p137 = scmp.eq.s32.totalorder %s22, 3
    %p138 = por %p136, %p137
    %p140 = scmp.ne.s32.totalorder %s123, %s139
    %p141 = scmp.eq.s32.totalorder %s22, 0
    %p142 = por %p140, %p141
    %s143 = ssub.s32 %s23, %s42
    %p144 = scmp.eq.s32.totalorder %s143, 0
    %s146 = sadd.s32 %s145, 1
    %s147 = scalar_select %p144, %s145, %s146
    %p150 = pneg %p144
    %p151 = scmp.eq.s32.totalorder %s16, 3
    %p152 = por %p150, %p151
    %p153 = scmp.ne.s32.totalorder %s145, %s148
    %p154 = scmp.eq.s32.totalorder %s16, 0
    %p155 = por %p153, %p154
    %p156 = scmp.ne.s32.totalorder %s145, %s148
    %p157 = scmp.eq.s32.totalorder %s21, 3
    %p158 = por %p156, %p157
    %p159 = scmp.ne.s32.totalorder %s148, %s149
    %p160 = scmp.eq.s32.totalorder %s21, 0
    %p161 = por %p159, %p160
    %p162 = scmp.ne.s32.totalorder %s148, %s149
    %p163 = scmp.eq.s32.totalorder %s22, 3
    %p164 = por %p162, %p163
    %p166 = scmp.ne.s32.totalorder %s149, %s165
    %p167 = scmp.eq.s32.totalorder %s22, 0
    %p168 = por %p166, %p167
    %s169 = ssub.s32 %s23, %s42
    %p170 = scmp.eq.s32.totalorder %s169, 0
    %s172 = sadd.s32 %s171, 1
    %s173 = scalar_select %p170, %s171, %s172
    %p176 = pneg %p170
    %p177 = scmp.eq.s32.totalorder %s16, 3
    %p178 = por %p176, %p177
    %p179 = scmp.ne.s32.totalorder %s171, %s174
    %p180 = scmp.eq.s32.totalorder %s16, 0
    %p181 = por %p179, %p180
    %p182 = scmp.ne.s32.totalorder %s171, %s174
    %p183 = scmp.eq.s32.totalorder %s21, 3
    %p184 = por %p182, %p183
    %p185 = scmp.ne.s32.totalorder %s174, %s175
    %p186 = scmp.eq.s32.totalorder %s21, 0
    %p187 = por %p185, %p186
    %p188 = scmp.ne.s32.totalorder %s174, %s175
    %p189 = scmp.eq.s32.totalorder %s22, 3
    %p190 = por %p188, %p189
    %p192 = scmp.ne.s32.totalorder %s175, %s191
    %p193 = scmp.eq.s32.totalorder %s22, 0
    %p194 = por %p192, %p193
    %s195 = ssub.s32 %s25, %s34
    %p196 = scmp.eq.s32.totalorder %s195, 0
    %s198 = sadd.s32 %s197, 1
    %s199 = scalar_select %p196, %s197, %s198
    %p202 = pneg %p196
    %p203 = scmp.eq.s32.totalorder %s16, 3
    %p204 = por %p202, %p203
    %p205 = scmp.ne.s32.totalorder %s197, %s200
    %p206 = scmp.eq.s32.totalorder %s16, 0
    %p207 = por %p205, %p206
    %p208 = scmp.ne.s32.totalorder %s197, %s200
    %p209 = scmp.eq.s32.totalorder %s21, 3
    %p210 = por %p208, %p209
    %p211 = scmp.ne.s32.totalorder %s200, %s201
    %p212 = scmp.eq.s32.totalorder %s21, 0
    %p213 = por %p211, %p212
    %p214 = scmp.ne.s32.totalorder %s200, %s201
    %p215 = scmp.eq.s32.totalorder %s22, 3
    %p216 = por %p214, %p215
    %p218 = scmp.ne.s32.totalorder %s201, %s217
    %p219 = scmp.eq.s32.totalorder %s22, 0
    %p220 = por %p218, %p219
    %s221 = ssub.s32 %s25, %s34
    %p222 = scmp.eq.s32.totalorder %s221, 0
    %s224 = sadd.s32 %s223, 1
    %s225 = scalar_select %p222, %s223, %s224
    %p228 = pneg %p222
    %p229 = scmp.eq.s32.totalorder %s16, 3
    %p230 = por %p228, %p229
    %p231 = scmp.ne.s32.totalorder %s223, %s226
    %p232 = scmp.eq.s32.totalorder %s16, 0
    %p233 = por %p231, %p232
    %p234 = scmp.ne.s32.totalorder %s223, %s226
    %p235 = scmp.eq.s32.totalorder %s21, 3
    %p236 = por %p234, %p235
    %p237 = scmp.ne.s32.totalorder %s226, %s227
    %p238 = scmp.eq.s32.totalorder %s21, 0
    %p239 = por %p237, %p238
    %p240 = scmp.ne.s32.totalorder %s226, %s227
    %p241 = scmp.eq.s32.totalorder %s22, 3
    %p242 = por %p240, %p241
    %p244 = scmp.ne.s32.totalorder %s227, %s243
    %p245 = scmp.eq.s32.totalorder %s22, 0
    %p246 = por %p244, %p245
    %s247 = ssub.s32 %s25, %s34
    %p248 = scmp.eq.s32.totalorder %s247, 0
    %s250 = sadd.s32 %s249, 1
    %s251 = scalar_select %p248, %s249, %s250
    %p254 = pneg %p248
    %p255 = scmp.eq.s32.totalorder %s16, 3
    %p256 = por %p254, %p255
    %p257 = scmp.ne.s32.totalorder %s249, %s252
    %p258 = scmp.eq.s32.totalorder %s16, 0
    %p259 = por %p257, %p258
    %p260 = scmp.ne.s32.totalorder %s249, %s252
    %p261 = scmp.eq.s32.totalorder %s21, 3
    %p262 = por %p260, %p261
    %p263 = scmp.ne.s32.totalorder %s252, %s253
    %p264 = scmp.eq.s32.totalorder %s21, 0
    %p265 = por %p263, %p264
    %p266 = scmp.ne.s32.totalorder %s252, %s253
    %p267 = scmp.eq.s32.totalorder %s22, 3
    %p268 = por %p266, %p267
    %p270 = scmp.ne.s32.totalorder %s253, %s269
    %p271 = scmp.eq.s32.totalorder %s22, 0
    %p272 = por %p270, %p271
    %s273 = ssub.s32 %s23, %s42
    %s274 = ssub.s32 %s24, %s38
    %s275 = sor.u32 %s273, %s274
    %s276 = ssub.s32 %s25, %s34
    %s277 = sor.u32 %s275, %s276
    %p278 = scmp.eq.s32.totalorder %s277, 0
    %s280 = sadd.s32 %s279, 1
    %s281 = scalar_select %p278, %s279, %s280
    %p284 = pneg %p278
    %p285 = scmp.eq.s32.totalorder %s16, 3
    %p286 = por %p284, %p285
    %p287 = scmp.ne.s32.totalorder %s279, %s282
    %p288 = scmp.eq.s32.totalorder %s16, 0
    %p289 = por %p287, %p288
    %p290 = scmp.ne.s32.totalorder %s279, %s282
    %p291 = scmp.eq.s32.totalorder %s21, 3
    %p292 = por %p290, %p291
    %p293 = scmp.ne.s32.totalorder %s282, %s283
    %p294 = scmp.eq.s32.totalorder %s21, 0
    %p295 = por %p293, %p294
    %p296 = scmp.ne.s32.totalorder %s282, %s283
    %p297 = scmp.eq.s32.totalorder %s22, 3
    %p298 = por %p296, %p297
    %p300 = scmp.ne.s32.totalorder %s283, %s299
    %p301 = scmp.eq.s32.totalorder %s22, 0
    %p302 = por %p300, %p301
    %s303 = sadd.s32 %s24, %s25
    %s304 = sadd.s32 %s38, %s34
    %s305 = ssub.s32 %s23, %s42
    %s306 = ssub.s32 %s303, %s304
    %s307 = sor.u32 %s305, %s306
    %p308 = scmp.eq.s32.totalorder %s307, 0
    %s310 = sadd.s32 %s309, 1
    %s311 = scalar_select %p308, %s309, %s310
    %p314 = pneg %p308
    %p315 = scmp.eq.s32.totalorder %s16, 3
    %p316 = por %p314, %p315
    %p317 = scmp.ne.s32.totalorder %s309, %s312
    %p318 = scmp.eq.s32.totalorder %s16, 0
    %p319 = por %p317, %p318
    %p320 = scmp.ne.s32.totalorder %s309, %s312
    %p321 = scmp.eq.s32.totalorder %s21, 3
    %p322 = por %p320, %p321
    %p323 = scmp.ne.s32.totalorder %s312, %s313
    %p324 = scmp.eq.s32.totalorder %s21, 0
    %p325 = por %p323, %p324
    %p326 = scmp.ne.s32.totalorder %s312, %s313
    %p327 = scmp.eq.s32.totalorder %s22, 3
    %p328 = por %p326, %p327
    %p330 = scmp.ne.s32.totalorder %s313, %s329
    %p331 = scmp.eq.s32.totalorder %s22, 0
    %p332 = por %p330, %p331
    %p333 = scmp.le.s32.totalorder 1, %s16
    %p334 = scmp.lt.s32.totalorder %s16, 5
    %p335 = pnand %p333, %p334
    %p336 = pneg %p335
    // Predicated region
    $region9: #{downblock_forward.6} parent=5 // pred_check
      _
    $region10: #{downblock_forward.6} parent=5 // pred_check_branch
      %338 = sbr.rel (%p335) target = $region12
    $region11: #{downblock_forward.6} parent=5 // pred_region
      %s339 = ssub.s32 %s16, 1
      // Predicated region
      $region13: #{downblock_forward.6} parent=11 // pred_check
        %p340 = pneg %p213
      $region14: #{downblock_forward.6} parent=11 // pred_check_branch
        %342 = sbr.rel (%p340) target = $region16
      $region15: #{downblock_forward.6} parent=11 // pred_region
        %p343 = scmp.lt.s32.totalorder %s28, 0
        %s344 = scalar_select %p343, %s28, 0
        %s345 = smul.addr %s344, 4
        %s346 = scalar_lea.vmem %s5, %s345
      $region16: #{downblock_forward.6} parent=11 // pred_fallthru
        _
      // Predicated region
      $region17: #{downblock_forward.6} parent=11 // pred_check
        %p347 = pneg %p239
      $region18: #{downblock_forward.6} parent=11 // pred_check_branch
        %349 = sbr.rel (%p347) target = $region20
      $region19: #{downblock_forward.6} parent=11 // pred_region
        %p350 = scmp.lt.s32.totalorder %s28, 0
        %s351 = scalar_select %p350, %s28, 0
        %s352 = scalar_lea.vmem %s6, %s351
      $region20: #{downblock_forward.6} parent=11 // pred_fallthru
        _
      // Predicated region
      $region21: #{downblock_forward.6} parent=11 // pred_check
        %p353 = pneg %p265
      $region22: #{downblock_forward.6} parent=11 // pred_check_branch
        %355 = sbr.rel (%p353) target = $region24
      $region23: #{downblock_forward.6} parent=11 // pred_region
        %s356 = smul.u32 16, %s28
        %p357 = scmp.lt.s32.totalorder %s356, 15
        %s358 = scalar_select %p357, %s356, 15
        %s359 = smul.addr %s358, 8
        %s360 = scalar_lea.vmem %s7, %s359
        %s361 = smul.u32 16, %s28
      $region24: #{downblock_forward.6} parent=11 // pred_fallthru
        _
    $region12: #{downblock_forward.6} parent=5 // pred_fallthru
      _
    %p362 = scmp.lt.s32.totalorder %s16, 4
    // Predicated region
    $region25: #{downblock_forward.6} parent=5 // pred_check
      %p363 = pneg %p362
    $region26: #{downblock_forward.6} parent=5 // pred_check_branch
      %365 = sbr.rel (%p363) target = $region28
    $region27: #{downblock_forward.6} parent=5 // pred_region
      // Predicated region
      $region29: #{downblock_forward.6} parent=27 // pred_check
        %p366 = pneg %p57
      $region30: #{downblock_forward.6} parent=27 // pred_check_branch
        %368 = sbr.rel (%p366) target = $region32
      $region31: #{downblock_forward.6} parent=27 // pred_region
        %s369 = smul.u32 4, %s24
        %p370 = scmp.lt.s32.totalorder %s23, 1
        %s371 = scalar_select %p370, %s23, 1
        %p372 = scmp.lt.s32.totalorder %s369, 7
        %s373 = scalar_select %p372, %s369, 7
        %s374 = smul.addr %s371, 8
        %s375 = sadd.s32 %s373, %s374
        %s376 = smul.addr %s375, 4
        %s377 = scalar_lea.vmem %s0, %s376
        %s378 = smul.u32 4, %s24
      $region32: #{downblock_forward.6} parent=27 // pred_fallthru
        _
      // Predicated region
      $region33: #{downblock_forward.6} parent=27 // pred_check
        %p379 = pneg %p93
      $region34: #{downblock_forward.6} parent=27 // pred_check_branch
        %381 = sbr.rel (%p379) target = $region36
      $region35: #{downblock_forward.6} parent=27 // pred_region
        %s382 = smul.u32 %s24, 4
        %s383 = ssub.s32 %s382, 1
        %p384 = scmp.gt.s32.totalorder %s383, 0
        %s385 = scalar_select %p384, %s383, 0
        %p386 = scmp.lt.s32.totalorder %s23, 1
        %s387 = scalar_select %p386, %s23, 1
        %p388 = scmp.lt.s32.totalorder %s385, 7
        %s389 = scalar_select %p388, %s385, 7
        %s390 = smul.addr %s387, 8
        %s391 = sadd.s32 %s389, %s390
        %s392 = smul.addr %s391, 4
        %s393 = scalar_lea.vmem %s1, %s392
        %s394 = smul.u32 %s24, 4
        %s395 = ssub.s32 %s394, 1
        %p396 = scmp.gt.s32.totalorder %s395, 0
        %s397 = scalar_select %p396, %s395, 0
      $region36: #{downblock_forward.6} parent=27 // pred_fallthru
        _
      // Predicated region
      $region37: #{downblock_forward.6} parent=27 // pred_check
        %p398 = pneg %p129
      $region38: #{downblock_forward.6} parent=27 // pred_check_branch
        %400 = sbr.rel (%p398) target = $region40
      $region39: #{downblock_forward.6} parent=27 // pred_region
        %s401 = smul.u32 %s24, 4
        %s402 = sadd.s32 %s401, 4
        %p403 = scmp.lt.s32.totalorder %s402, 7
        %s404 = scalar_select %p403, %s402, 7
        %p405 = scmp.lt.s32.totalorder %s23, 1
        %s406 = scalar_select %p405, %s23, 1
        %p407 = scmp.lt.s32.totalorder %s404, 7
        %s408 = scalar_select %p407, %s404, 7
        %s409 = smul.addr %s406, 8
        %s410 = sadd.s32 %s408, %s409
        %s411 = smul.addr %s410, 4
        %s412 = scalar_lea.vmem %s2, %s411
        %s413 = smul.u32 %s24, 4
        %s414 = sadd.s32 %s413, 4
        %p415 = scmp.lt.s32.totalorder %s414, 7
        %s416 = scalar_select %p415, %s414, 7
      $region40: #{downblock_forward.6} parent=27 // pred_fallthru
        _
      // Predicated region
      $region41: #{downblock_forward.6} parent=27 // pred_check
        %p417 = pneg %p155
      $region42: #{downblock_forward.6} parent=27 // pred_check_branch
        %419 = sbr.rel (%p417) target = $region44
      $region43: #{downblock_forward.6} parent=27 // pred_region
        %p420 = scmp.lt.s32.totalorder %s23, 1
        %s421 = scalar_select %p420, %s23, 1
        %s422 = scalar_lea.vmem %s3, %s421
      $region44: #{downblock_forward.6} parent=27 // pred_fallthru
        _
      // Predicated region
      $region45: #{downblock_forward.6} parent=27 // pred_check
        %p423 = pneg %p181
      $region46: #{downblock_forward.6} parent=27 // pred_check_branch
        %425 = sbr.rel (%p423) target = $region48
      $region47: #{downblock_forward.6} parent=27 // pred_region
        %p426 = scmp.lt.s32.totalorder %s23, 1
        %s427 = scalar_select %p426, %s23, 1
        %s428 = scalar_lea.vmem %s4, %s427
      $region48: #{downblock_forward.6} parent=27 // pred_fallthru
        _
    $region28: #{downblock_forward.6} parent=5 // pred_fallthru
      _
    %p429 = scmp.le.s32.totalorder 1, %s16
    %p430 = scmp.lt.s32.totalorder %s16, 5
    %p431 = pnand %p429, %p430
    %p432 = pneg %p431
    // Predicated region
    $region49: #{downblock_forward.6} parent=5 // pred_check
      _
    $region50: #{downblock_forward.6} parent=5 // pred_check_branch
      %434 = sbr.rel (%p431) target = $region52
    $region51: #{downblock_forward.6} parent=5 // pred_region
      %s435 = ssub.s32 %s16, 1
      %s436 = smul.u32 4, %s27
      %p437 = scmp.lt.s32.totalorder %s26, 1
      %s438 = scalar_select %p437, %s26, 1
      %p439 = scmp.lt.s32.totalorder %s436, 7
      %s440 = scalar_select %p439, %s436, 7
      %s441 = smul.addr %s438, 8
      %s442 = sadd.s32 %s440, %s441
      %s443 = smul.addr %s442, 4
      %s444 = scalar_lea.vmem %s0, %s443
      %p445 = pneg %p63
      %p446 = pneg %p60
      %s447 = smul.u32 %s27, 4
      %s448 = ssub.s32 %s447, 1
      %p449 = scmp.gt.s32.totalorder %s448, 0
      %s450 = scalar_select %p449, %s448, 0
      %p451 = scmp.lt.s32.totalorder %s26, 1
      %s452 = scalar_select %p451, %s26, 1
      %p453 = scmp.lt.s32.totalorder %s450, 7
      %s454 = scalar_select %p453, %s450, 7
      %s455 = smul.addr %s452, 8
      %s456 = sadd.s32 %s454, %s455
      %s457 = smul.addr %s456, 4
      %s458 = scalar_lea.vmem %s1, %s457
      %p459 = pneg %p99
      %p460 = pneg %p96
      %s461 = smul.u32 %s27, 4
      %s462 = sadd.s32 %s461, 4
      %p463 = scmp.lt.s32.totalorder %s462, 7
      %s464 = scalar_select %p463, %s462, 7
      %p465 = scmp.lt.s32.totalorder %s26, 1
      %s466 = scalar_select %p465, %s26, 1
      %p467 = scmp.lt.s32.totalorder %s464, 7
      %s468 = scalar_select %p467, %s464, 7
      %s469 = smul.addr %s466, 8
      %s470 = sadd.s32 %s468, %s469
      %s471 = smul.addr %s470, 4
      %s472 = scalar_lea.vmem %s2, %s471
      %p473 = pneg %p135
      %p474 = pneg %p132
      %p475 = scmp.lt.s32.totalorder %s26, 1
      %s476 = scalar_select %p475, %s26, 1
      %s477 = scalar_lea.vmem %s3, %s476
      %p478 = pneg %p161
      %p479 = pneg %p158
      %p480 = scmp.lt.s32.totalorder %s26, 1
      %s481 = scalar_select %p480, %s26, 1
      %s482 = scalar_lea.vmem %s4, %s481
      %p483 = pneg %p187
      %p484 = pneg %p184
      %p485 = scmp.lt.s32.totalorder %s28, 0
      %s486 = scalar_select %p485, %s28, 0
      %s487 = smul.addr %s486, 4
      %s488 = scalar_lea.vmem %s5, %s487
      %p489 = pneg %p213
      %p490 = pneg %p210
      %p491 = scmp.lt.s32.totalorder %s28, 0
      %s492 = scalar_select %p491, %s28, 0
      %s493 = scalar_lea.vmem %s6, %s492
      %p494 = pneg %p239
      %p495 = pneg %p236
      %s496 = smul.u32 16, %s28
      %p497 = scmp.lt.s32.totalorder %s496, 15
      %s498 = scalar_select %p497, %s496, 15
      %s499 = smul.addr %s498, 8
      %s500 = scalar_lea.vmem %s7, %s499
      %p501 = pneg %p265
      %p502 = pneg %p262
      %p503 = pneg %p295
      %p504 = pneg %p292
      %s505 = smul.u32 4, %s27
      %p506 = scmp.lt.s32.totalorder %s26, 1
      %s507 = scalar_select %p506, %s26, 1
      %p508 = scmp.lt.s32.totalorder %s505, 7
      %s509 = scalar_select %p508, %s505, 7
      %p510 = scmp.lt.s32.totalorder %s28, 0
      %s511 = scalar_select %p510, %s28, 0
      %s512 = sadd.s32 %s511, %s509
      %s513 = smul.addr %s507, 8
      %s514 = sadd.s32 %s512, %s513
      %s515 = smul.addr %s514, 4
      %s516 = scalar_lea.vmem %s8, %s515
      %p517 = pneg %p325
      %p518 = pneg %p322
      %s519 = sadd.s32 %s27, %s28
      %p520 = scmp.lt.s32.totalorder %s26, 1
      %s521 = scalar_select %p520, %s26, 1
      %p522 = scmp.lt.s32.totalorder %s519, 1
      %s523 = scalar_select %p522, %s519, 1
      %s524 = smul.addr %s521, 2
      %s525 = sadd.s32 %s523, %s524
      %s526 = smul.addr %s525, 2
      %s527 = scalar_lea.vmem %s9, %s526
      %s528 = smul.u32 4, %s27
      %p529 = scmp.lt.s32.totalorder %s26, 1
      %s530 = scalar_select %p529, %s26, 1
      %p531 = scmp.lt.s32.totalorder %s528, 7
      %s532 = scalar_select %p531, %s528, 7
      %s533 = smul.addr %s530, 8
      %s534 = sadd.s32 %s532, %s533
      %s535 = smul.addr %s534, 4
      %s536 = scalar_lea.vmem %s0, %s535
      %s537 = smul.u32 4, %s27
      %s538 = smul.u32 %s27, 4
      %s539 = ssub.s32 %s538, 1
      %p540 = scmp.gt.s32.totalorder %s539, 0
      %s541 = scalar_select %p540, %s539, 0
      %p542 = scmp.lt.s32.totalorder %s26, 1
      %s543 = scalar_select %p542, %s26, 1
      %p544 = scmp.lt.s32.totalorder %s541, 7
      %s545 = scalar_select %p544, %s541, 7
      %s546 = smul.addr %s543, 8
      %s547 = sadd.s32 %s545, %s546
      %s548 = smul.addr %s547, 4
      %s549 = scalar_lea.vmem %s1, %s548
      %s550 = smul.u32 %s27, 4
      %s551 = ssub.s32 %s550, 1
      %p552 = scmp.gt.s32.totalorder %s551, 0
      %s553 = scalar_select %p552, %s551, 0
      %s554 = smul.u32 %s27, 4
      %s555 = sadd.s32 %s554, 4
      %p556 = scmp.lt.s32.totalorder %s555, 7
      %s557 = scalar_select %p556, %s555, 7
      %p558 = scmp.lt.s32.totalorder %s26, 1
      %s559 = scalar_select %p558, %s26, 1
      %p560 = scmp.lt.s32.totalorder %s557, 7
      %s561 = scalar_select %p560, %s557, 7
      %s562 = smul.addr %s559, 8
      %s563 = sadd.s32 %s561, %s562
      %s564 = smul.addr %s563, 4
      %s565 = scalar_lea.vmem %s2, %s564
      %s566 = smul.u32 %s27, 4
      %s567 = sadd.s32 %s566, 4
      %p568 = scmp.lt.s32.totalorder %s567, 7
      %s569 = scalar_select %p568, %s567, 7
      %p570 = scmp.lt.s32.totalorder %s26, 1
      %s571 = scalar_select %p570, %s26, 1
      %s572 = scalar_lea.vmem %s3, %s571
      %p573 = scmp.lt.s32.totalorder %s26, 1
      %s574 = scalar_select %p573, %s26, 1
      %s575 = scalar_lea.vmem %s4, %s574
      %p576 = scmp.lt.s32.totalorder %s28, 0
      %s577 = scalar_select %p576, %s28, 0
      %s578 = smul.addr %s577, 4
      %s579 = scalar_lea.vmem %s5, %s578
      %p580 = scmp.lt.s32.totalorder %s28, 0
      %s581 = scalar_select %p580, %s28, 0
      %s582 = scalar_lea.vmem %s6, %s581
      %s583 = smul.u32 16, %s28
      %p584 = scmp.lt.s32.totalorder %s583, 15
      %s585 = scalar_select %p584, %s583, 15
      %s586 = smul.addr %s585, 8
      %s587 = scalar_lea.vmem %s7, %s586
      %s588 = smul.u32 16, %s28
      %s589 = smul.u32 4, %s27
      %p590 = scmp.lt.s32.totalorder %s26, 1
      %s591 = scalar_select %p590, %s26, 1
      %p592 = scmp.lt.s32.totalorder %s589, 7
      %s593 = scalar_select %p592, %s589, 7
      %p594 = scmp.lt.s32.totalorder %s28, 0
      %s595 = scalar_select %p594, %s28, 0
      %s596 = sadd.s32 %s595, %s593
      %s597 = smul.addr %s591, 8
      %s598 = sadd.s32 %s596, %s597
      %s599 = smul.addr %s598, 4
      %s600 = scalar_lea.vmem %s8, %s599
      %s601 = smul.u32 4, %s27
      %s602 = sadd.s32 %s27, %s28
      %p603 = scmp.lt.s32.totalorder %s26, 1
      %s604 = scalar_select %p603, %s26, 1
      %p605 = scmp.lt.s32.totalorder %s602, 1
      %s606 = scalar_select %p605, %s602, 1
      %s607 = smul.addr %s604, 2
      %s608 = sadd.s32 %s606, %s607
      %s609 = smul.addr %s608, 2
      %s610 = scalar_lea.vmem %s9, %s609
      %s611 = sadd.s32 %s27, %s28
      %v613 = vld [vmem:[%s549] sm:$0xf]
      %v614 = vunpack.c.l.bf16 %v613
      %v615 = vld [vmem:[%s572] sm:$0x1]
      %v617 = vlaneseq
      %v618 = vshrl.u32 %v617, 7
      %v619 = vsub.s32 0, %v618
      %v620 = vrot.slane %v615, %v619
      %v622 = vmul.f32 %v614, %v620
      %v623 = vld [vmem:[%s575] sm:$0x1]
      %v625 = vlaneseq
      %v626 = vshrl.u32 %v625, 7
      %v627 = vsub.s32 0, %v626
      %v628 = vrot.slane %v623, %v627
      %v630 = vadd.f32 %v622, %v628
      %v631 = vsub.f32 0.0, %v630
      %v632 = vmul.f32 %v631, 1.442695
      %v633 = vpow.pop %v632
      %v634 = vadd.f32 %v633, 1.0
      %v635 = vrcp.pop %v634
      %v636 = vmul.f32 1.0, %v635
      %v637 = vmul.f32 %v630, %v636
      %v638 = vpack.c.bf16 %v637, %v637
      %v639 = vld [vmem:[%s565] sm:$0xf]
      %v640 = vunpack.c.l.bf16 %v639
      %v641 = vmul.f32 %v640, %v620
      %v642 = vadd.f32 %v641, %v628
      %v643 = vsub.f32 0.0, %v642
      %v644 = vmul.f32 %v643, 1.442695
      %v645 = vpow.pop %v644
      %v646 = vadd.f32 %v645, 1.0
      %v647 = vrcp.pop %v646
      %v648 = vmul.f32 1.0, %v647
      %v649 = vmul.f32 %v642, %v648
      %v650 = vpack.c.bf16 %v649, %v649
      %p651 = scmp.gt.s32.totalorder %s27, 0
      %s652 = scalar_select %p651, 1, 0
      %v653 = vstv %s652
      %vm654 = vcmp.eq.s32.totalorder %v653, 1
      %v655 = vsel %vm654, %v638, 0
      %p656 = scmp.lt.s32.totalorder %s27, 1
      %s657 = scalar_select %p656, 1, 0
      %v658 = vstv %s657
      %vm659 = vcmp.eq.s32.totalorder %v658, 1
      %v660 = vsel %vm659, %v650, 0
      %v661 = vld [vmem:[%s536] sm:$0xf]
      %v662 = vld [vmem:[%s536 + $0x4] sm:$0xf]
      %v663 = vld [vmem:[%s536 + $0x8] sm:$0xf]
      %v664 = vld [vmem:[%s536 + $0xc] sm:$0xf]
      %v665 = vunpack.c.l.bf16 %v661
      %v666 = vunpack.c.l.bf16 %v662
      %v667 = vunpack.c.l.bf16 %v663
      %v668 = vunpack.c.l.bf16 %v664
      %v669 = vmul.f32 %v665, %v620
      %v670 = vmul.f32 %v666, %v620
      %v671 = vmul.f32 %v667, %v620
      %v672 = vmul.f32 %v668, %v620
      %v673 = vadd.f32 %v669, %v628
      %v674 = vadd.f32 %v670, %v628
      %v675 = vadd.f32 %v671, %v628
      %v676 = vadd.f32 %v672, %v628
      %v677 = vsub.f32 0.0, %v673
      %v678 = vsub.f32 0.0, %v674
      %v679 = vsub.f32 0.0, %v675
      %v680 = vsub.f32 0.0, %v676
      %v681 = vmul.f32 %v677, 1.442695
      %v682 = vpow.pop %v681
      %v683 = vmul.f32 %v678, 1.442695
      %v684 = vpow.pop %v683
      %v685 = vmul.f32 %v679, 1.442695
      %v686 = vpow.pop %v685
      %v687 = vmul.f32 %v680, 1.442695
      %v688 = vpow.pop %v687
      %v689 = vadd.f32 %v682, 1.0
      %v690 = vadd.f32 %v684, 1.0
      %v691 = vadd.f32 %v686, 1.0
      %v692 = vadd.f32 %v688, 1.0
      %v693 = vrcp.pop %v689
      %v694 = vmul.f32 1.0, %v693
      %v695 = vrcp.pop %v690
      %v696 = vmul.f32 1.0, %v695
      %v697 = vrcp.pop %v691
      %v698 = vmul.f32 1.0, %v697
      %v699 = vrcp.pop %v692
      %v700 = vmul.f32 1.0, %v699
      %v701 = vmul.f32 %v673, %v694
      %v702 = vmul.f32 %v674, %v696
      %v703 = vmul.f32 %v675, %v698
      %v704 = vmul.f32 %v676, %v700
      %v705 = vpack.c.bf16 %v701, %v701
      %v706 = vpack.c.bf16 %v702, %v702
      %v707 = vpack.c.bf16 %v703, %v703
      %v708 = vpack.c.bf16 %v704, %v704
      %vm709 = vcmask 1040384
      %vm710 = vsmask.f32 256
      %vm711 = vmand %vm709, %vm710
      %v712 = vld [vmem:[#allocation2] sm:$0x1]
      %v713 = vsel %vm711, 0, %v712
      %714 = vst [vmem:[#allocation2] sm:$0x1] %v713
      %v715 = vld [vmem:[#allocation2 + $0x8] sm:$0x1]
      %v716 = vsel %vm711, 0, %v715
      %717 = vst [vmem:[#allocation2 + $0x8] sm:$0x1] %v716
      %v718 = vld [vmem:[#allocation2 + $0x10] sm:$0x1]
      %v719 = vsel %vm711, 0, %v718
      %720 = vst [vmem:[#allocation2 + $0x10] sm:$0x1] %v719
      %v721 = vld [vmem:[#allocation2 + $0x18] sm:$0x1]
      %v722 = vsel %vm711, 0, %v721
      %723 = vst [vmem:[#allocation2 + $0x18] sm:$0x1] %v722
      %v724 = vld [vmem:[#allocation2 + $0x20] sm:$0x1]
      %v725 = vsel %vm711, 0, %v724
      %726 = vst [vmem:[#allocation2 + $0x20] sm:$0x1] %v725
      %v727 = vld [vmem:[#allocation2 + $0x28] sm:$0x1]
      %v728 = vsel %vm711, 0, %v727
      %729 = vst [vmem:[#allocation2 + $0x28] sm:$0x1] %v728
      %vm730 = vsmask.f32 7938
      %vm731 = vmand %vm709, %vm730
      %v732 = vld [vmem:[#allocation2 + $0x4] sm:$0x1]
      %v733 = vsel %vm731, 0, %v732
      %734 = vst [vmem:[#allocation2 + $0x4] sm:$0x1] %v733
      %v735 = vld [vmem:[#allocation2 + $0xc] sm:$0x1]
      %v736 = vsel %vm731, 0, %v735
      %737 = vst [vmem:[#allocation2 + $0xc] sm:$0x1] %v736
      %v738 = vld [vmem:[#allocation2 + $0x14] sm:$0x1]
      %v739 = vsel %vm731, 0, %v738
      %740 = vst [vmem:[#allocation2 + $0x14] sm:$0x1] %v739
      %v741 = vld [vmem:[#allocation2 + $0x1c] sm:$0x1]
      %v742 = vsel %vm731, 0, %v741
      %743 = vst [vmem:[#allocation2 + $0x1c] sm:$0x1] %v742
      %v744 = vld [vmem:[#allocation2 + $0x24] sm:$0x1]
      %v745 = vsel %vm731, 0, %v744
      %746 = vst [vmem:[#allocation2 + $0x24] sm:$0x1] %v745
      %v747 = vld [vmem:[#allocation2 + $0x2c] sm:$0x1]
      %v748 = vsel %vm731, 0, %v747
      %749 = vst [vmem:[#allocation2 + $0x2c] sm:$0x1] %v748
      %v751 = vunpack.c.l.b16 %v655
      %v752 = vpack.c.b16 %v751, %v751
      %v754 = vshrl.u32 %v752, 16
      %v756 = vrot.slane %v754, 7
      %v757 = vshll.u32 %v752, 16
      %v759 = vor.u32 %v756, %v757
      %v760 = vrot.slane %v756, 4
      %vm763 = vcmask 1043456
      %vm764 = vmand %vm763, %vm730
      %v765 = vld [vmem:[#allocation2] sm:$0xf]
      %v766 = vsel %vm764, %v759, %v765
      %767 = vst [vmem:[#allocation2] sm:$0xf] %v766
      %v768 = vld [vmem:[#allocation2 + $0x4] sm:$0x1]
      %v769 = vsel %vm711, %v760, %v768
      %770 = vst [vmem:[#allocation2 + $0x4] sm:$0x1] %v769
      %v775 = vunpack.c.l.b16 %v705
      %v776 = vunpack.c.l.b16 %v706
      %v777 = vunpack.c.l.b16 %v707
      %v778 = vunpack.c.l.b16 %v708
      %v779 = vpack.c.b16 %v775, %v775
      %v780 = vpack.c.b16 %v776, %v776
      %v781 = vpack.c.b16 %v777, %v777
      %v782 = vpack.c.b16 %v778, %v778
      %v784 = vshrl.u32 %v779, 16
      %v786 = vrot.slane %v784, 7
      %v787 = vshll.u32 %v779, 16
      %v789 = vor.u32 %v786, %v787
      %v790 = vrot.slane %v786, 4
      %v792 = vshrl.u32 %v780, 16
      %v794 = vrot.slane %v792, 7
      %v795 = vshll.u32 %v780, 16
      %v797 = vor.u32 %v794, %v795
      %v798 = vrot.slane %v794, 4
      %v800 = vshrl.u32 %v781, 16
      %v802 = vrot.slane %v800, 7
      %v803 = vshll.u32 %v781, 16
      %v805 = vor.u32 %v802, %v803
      %v806 = vrot.slane %v802, 4
      %v808 = vshrl.u32 %v782, 16
      %v810 = vrot.slane %v808, 7
      %v811 = vshll.u32 %v782, 16
      %v813 = vor.u32 %v810, %v811
      %v814 = vrot.slane %v810, 4
      %s823 = scalar_lea.vmem [#allocation2], 8
      %v824 = vld [vmem:[%s823] sm:$0xf]
      %v825 = vsel %vm764, %v789, %v824
      %826 = vst [vmem:[%s823] sm:$0xf] %v825
      %v827 = vld [vmem:[%s823 + $0x4] sm:$0x1]
      %v828 = vsel %vm711, %v790, %v827
      %829 = vst [vmem:[%s823 + $0x4] sm:$0x1] %v828
      %v830 = vld [vmem:[%s823 + $0x8] sm:$0xf]
      %v831 = vsel %vm764, %v797, %v830
      %832 = vst [vmem:[%s823 + $0x8] sm:$0xf] %v831
      %v833 = vld [vmem:[%s823 + $0xc] sm:$0x1]
      %v834 = vsel %vm711, %v798, %v833
      %835 = vst [vmem:[%s823 + $0xc] sm:$0x1] %v834
      %v836 = vld [vmem:[%s823 + $0x10] sm:$0xf]
      %v837 = vsel %vm764, %v805, %v836
      %838 = vst [vmem:[%s823 + $0x10] sm:$0xf] %v837
      %v839 = vld [vmem:[%s823 + $0x14] sm:$0x1]
      %v840 = vsel %vm711, %v806, %v839
      %841 = vst [vmem:[%s823 + $0x14] sm:$0x1] %v840
      %v842 = vld [vmem:[%s823 + $0x18] sm:$0xf]
      %v843 = vsel %vm764, %v813, %v842
      %844 = vst [vmem:[%s823 + $0x18] sm:$0xf] %v843
      %v845 = vld [vmem:[%s823 + $0x1c] sm:$0x1]
      %v846 = vsel %vm711, %v814, %v845
      %847 = vst [vmem:[%s823 + $0x1c] sm:$0x1] %v846
      %v849 = vunpack.c.l.b16 %v660
      %v850 = vpack.c.b16 %v849, %v849
      %v852 = vshrl.u32 %v850, 16
      %v854 = vrot.slane %v852, 7
      %v855 = vshll.u32 %v850, 16
      %v857 = vor.u32 %v854, %v855
      %v858 = vrot.slane %v854, 4
      %s861 = scalar_lea.vmem [#allocation2], 40
      %v862 = vld [vmem:[%s861] sm:$0xf]
      %v863 = vsel %vm764, %v857, %v862
      %864 = vst [vmem:[%s861] sm:$0xf] %v863
      %v865 = vld [vmem:[%s861 + $0x4] sm:$0x1]
      %v866 = vsel %vm711, %v858, %v865
      %867 = vst [vmem:[%s861 + $0x4] sm:$0x1] %v866
      %v868 = vld [vmem:[#allocation2] sm:$0xf]
      %v869 = vld [vmem:[#allocation2 + $0x8] sm:$0xf]
      %v870 = vld [vmem:[#allocation2 + $0x10] sm:$0xf]
      %v871 = vld [vmem:[#allocation2 + $0x18] sm:$0xf]
      %v872 = vld [vmem:[%s579] sm:$0xf]
      %v873 = vld [vmem:[%s579 + $0x4] sm:$0xf]
      %v874 = vld [vmem:[%s579 + $0x8] sm:$0xf]
      %v875 = vld [vmem:[%s579 + $0xc] sm:$0xf]
      %v876 = vld [vmem:[%s579 + $0x10] sm:$0xf]
      %v877 = vld [vmem:[%s579 + $0x14] sm:$0xf]
      %v878 = vld [vmem:[%s579 + $0x18] sm:$0xf]
      %v879 = vld [vmem:[%s579 + $0x1c] sm:$0xf]
      %v880 = vld [vmem:[%s579 + $0x20] sm:$0xf]
      %v881 = vld [vmem:[%s579 + $0x24] sm:$0xf]
      %v882 = vld [vmem:[%s579 + $0x28] sm:$0xf]
      %v883 = vld [vmem:[%s579 + $0x2c] sm:$0xf]
      %v884 = vld [vmem:[%s579 + $0x30] sm:$0xf]
      %v885 = vld [vmem:[%s579 + $0x34] sm:$0xf]
      %v886 = vld [vmem:[%s579 + $0x38] sm:$0xf]
      %v887 = vld [vmem:[%s579 + $0x3c] sm:$0xf]
      %v888 = vld [vmem:[%s582] sm:$0x1]
      %v890 = vlaneseq
      %v891 = vshrl.u32 %v890, 7
      %v892 = vsub.s32 0, %v891
      %v893 = vrot.slane %v888, %v892
      %v899 = vunpack.c.l.b16 %v868
      %v900 = vunpack.c.l.b16 %v869
      %v901 = vunpack.c.l.b16 %v870
      %v902 = vunpack.c.l.b16 %v871
      %v903 = vpack.c.b16 %v900, %v899
      %v904 = vpack.c.b16 %v902, %v901
      %v923 = vunpack.c.l.b16 %v872
      %v924 = vunpack.c.l.b16 %v873
      %v925 = vunpack.c.l.b16 %v874
      %v926 = vunpack.c.l.b16 %v875
      %v927 = vunpack.c.l.b16 %v876
      %v928 = vunpack.c.l.b16 %v877
      %v929 = vunpack.c.l.b16 %v878
      %v930 = vunpack.c.l.b16 %v879
      %v931 = vunpack.c.l.b16 %v880
      %v932 = vunpack.c.l.b16 %v881
      %v933 = vunpack.c.l.b16 %v882
      %v934 = vunpack.c.l.b16 %v883
      %v935 = vunpack.c.l.b16 %v884
      %v936 = vunpack.c.l.b16 %v885
      %v937 = vunpack.c.l.b16 %v886
      %v938 = vunpack.c.l.b16 %v887
      %v939 = vpack.c.b16 %v924, %v923
      %v940 = vpack.c.b16 %v926, %v925
      %v941 = vpack.c.b16 %v928, %v927
      %v942 = vpack.c.b16 %v930, %v929
      %v943 = vpack.c.b16 %v932, %v931
      %v944 = vpack.c.b16 %v934, %v933
      %v945 = vpack.c.b16 %v936, %v935
      %v946 = vpack.c.b16 %v938, %v937
      %955 = vmatprep.subr.bf16.mxu0 0
      %956 = vmatpush1.bf16.msra.mxu0 %v939
      %957 = vmatprep.subr.bf16.mxu0 0
      %958 = vmatpush1.bf16.msra.mxu0 %v940
      %959 = vmatprep.subr.bf16.mxu0 0
      %960 = vmatpush1.bf16.msra.mxu0 %v941
      %961 = vmatprep.subr.bf16.mxu0 0
      %962 = vmatpush1.bf16.msra.mxu0 %v942
      %963 = vmatprep.subr.bf16.mxu0 0
      %964 = vmatpush1.bf16.msra.mxu0 %v943
      %965 = vmatprep.subr.bf16.mxu0 0
      %966 = vmatpush1.bf16.msra.mxu0 %v944
      %967 = vmatprep.subr.bf16.mxu0 0
      %968 = vmatpush1.bf16.msra.mxu0 %v945
      %969 = vmatprep.subr.bf16.mxu0 0
      %970 = vmatpush1.bf16.msra.mxu0 %v946
      %971 = vmatprep.subr.bf16.mxu0 0
      %972 = vmatpush1.bf16.msra.mxu0 0
      %973 = vmatprep.subr.bf16.mxu0 0
      %974 = vmatpush1.bf16.msra.mxu0 0
      %975 = vmatprep.subr.bf16.mxu0 0
      %976 = vmatpush1.bf16.msra.mxu0 0
      %977 = vmatprep.subr.bf16.mxu0 0
      %978 = vmatpush1.bf16.msra.mxu0 0
      %979 = vmatprep.subr.bf16.mxu0 0
      %980 = vmatpush1.bf16.msra.mxu0 0
      %981 = vmatprep.subr.bf16.mxu0 0
      %982 = vmatpush1.bf16.msra.mxu0 0
      %983 = vmatprep.subr.bf16.mxu0 0
      %984 = vmatpush1.bf16.msra.mxu0 0
      %985 = vmatprep.subr.bf16.mxu0 0
      %986 = vmatpush1.bf16.msra.mxu0 0
      %987 = vmatprep.mubr.bf16.mxu0 0
      %988 = vmatmul.mubr.bf16.gmra.mrb[0].mxu0 %v903
      %v989 = vpop.f32.mrb[0].mxu0
      %v990 = vadd.f32 %v893, %v989
      %v991 = vpop.f32.mrb[0].mxu0
      %v992 = vpop.f32.mrb[0].mxu0
      %v993 = vadd.f32 %v893, %v992
      %v994 = vpop.f32.mrb[0].mxu0
      %995 = vmatprep.mubr.bf16.mxu0 0
      %996 = vmatmul.mubr.bf16.gmra.mrb[0].mxu0 %v904
      %v997 = vpop.f32.mrb[0].mxu0
      %v998 = vadd.f32 %v893, %v997
      %v999 = vpop.f32.mrb[0].mxu0
      %v1000 = vpop.f32.mrb[0].mxu0
      %v1001 = vadd.f32 %v893, %v1000
      %v1002 = vpop.f32.mrb[0].mxu0
      %1003 = vdwg.mxu0
      %1004 = vst [vmem:[#allocation3] sm:$0xff] %v990
      %1005 = vst [vmem:[#allocation3 + $0x8] sm:$0xff] %v993
      %1006 = vst [vmem:[#allocation3 + $0x10] sm:$0xff] %v998
      %1007 = vst [vmem:[#allocation3 + $0x18] sm:$0xff] %v1001
      %v1008 = vld [vmem:[#allocation2] sm:$0xf]
      %v1009 = vld [vmem:[#allocation2 + $0x4] sm:$0x1]
      %v1010 = vld [vmem:[#allocation2 + $0x8] sm:$0xf]
      %v1011 = vld [vmem:[#allocation2 + $0xc] sm:$0x1]
      %v1012 = vld [vmem:[#allocation2 + $0x10] sm:$0xf]
      %v1013 = vld [vmem:[#allocation2 + $0x14] sm:$0x1]
      %v1014 = vld [vmem:[#allocation2 + $0x18] sm:$0xf]
      %v1015 = vld [vmem:[#allocation2 + $0x1c] sm:$0x1]
      %vm1016 = vsmask.f32 3328
      %vm1017 = vsmask.f32 7440
      %vm1018 = vmor %vm1016, %vm1017
      %v1020 = vshrl.u32 %v1008, 16
      %v1022 = vrot.slane %v1020, 4
      %v1023 = vshll.u32 %v1008, 16
      %v1025 = vrot.slane %v1023, 5
      %v1026 = vor.u32 %v1022, %v1025
      %v1027 = vrot.slane %v1026, 4
      %v1029 = vshll.u32 %v1009, 16
      %v1031 = vrot.slane %v1029, 5
      %v1032 = vsel %vm1018, %v1027, %v1031
      %v1034 = vshrl.u32 %v1010, 16
      %v1036 = vrot.slane %v1034, 4
      %v1037 = vshll.u32 %v1010, 16
      %v1039 = vrot.slane %v1037, 5
      %v1040 = vor.u32 %v1036, %v1039
      %v1041 = vrot.slane %v1040, 4
      %v1043 = vshll.u32 %v1011, 16
      %v1045 = vrot.slane %v1043, 5
      %v1046 = vsel %vm1018, %v1041, %v1045
      %v1048 = vshrl.u32 %v1012, 16
      %v1050 = vrot.slane %v1048, 4
      %v1051 = vshll.u32 %v1012, 16
      %v1053 = vrot.slane %v1051, 5
      %v1054 = vor.u32 %v1050, %v1053
      %v1055 = vrot.slane %v1054, 4
      %v1057 = vshll.u32 %v1013, 16
      %v1059 = vrot.slane %v1057, 5
      %v1060 = vsel %vm1018, %v1055, %v1059
      %v1062 = vshrl.u32 %v1014, 16
      %v1064 = vrot.slane %v1062, 4
      %v1065 = vshll.u32 %v1014, 16
      %v1067 = vrot.slane %v1065, 5
      %v1068 = vor.u32 %v1064, %v1067
      %v1069 = vrot.slane %v1068, 4
      %v1071 = vshll.u32 %v1015, 16
      %v1073 = vrot.slane %v1071, 5
      %v1074 = vsel %vm1018, %v1069, %v1073
      %s1075 = scalar_lea.vmem %s579, 64
      %v1076 = vld [vmem:[%s1075] sm:$0xf]
      %v1077 = vld [vmem:[%s1075 + $0x4] sm:$0xf]
      %v1078 = vld [vmem:[%s1075 + $0x8] sm:$0xf]
      %v1079 = vld [vmem:[%s1075 + $0xc] sm:$0xf]
      %v1080 = vld [vmem:[%s1075 + $0x10] sm:$0xf]
      %v1081 = vld [vmem:[%s1075 + $0x14] sm:$0xf]
      %v1082 = vld [vmem:[%s1075 + $0x18] sm:$0xf]
      %v1083 = vld [vmem:[%s1075 + $0x1c] sm:$0xf]
      %v1084 = vld [vmem:[%s1075 + $0x20] sm:$0xf]
      %v1085 = vld [vmem:[%s1075 + $0x24] sm:$0xf]
      %v1086 = vld [vmem:[%s1075 + $0x28] sm:$0xf]
      %v1087 = vld [vmem:[%s1075 + $0x2c] sm:$0xf]
      %v1088 = vld [vmem:[%s1075 + $0x30] sm:$0xf]
      %v1089 = vld [vmem:[%s1075 + $0x34] sm:$0xf]
      %v1090 = vld [vmem:[%s1075 + $0x38] sm:$0xf]
      %v1091 = vld [vmem:[%s1075 + $0x3c] sm:$0xf]
      %v1092 = vunpack.c.l.b16 %v1032
      %v1093 = vunpack.c.l.b16 %v1046
      %v1094 = vunpack.c.l.b16 %v1060
      %v1095 = vunpack.c.l.b16 %v1074
      %v1096 = vpack.c.b16 %v1093, %v1092
      %v1097 = vpack.c.b16 %v1095, %v1094
      %v1116 = vunpack.c.l.b16 %v1076
      %v1117 = vunpack.c.l.b16 %v1077
      %v1118 = vunpack.c.l.b16 %v1078
      %v1119 = vunpack.c.l.b16 %v1079
      %v1120 = vunpack.c.l.b16 %v1080
      %v1121 = vunpack.c.l.b16 %v1081
      %v1122 = vunpack.c.l.b16 %v1082
      %v1123 = vunpack.c.l.b16 %v1083
      %v1124 = vunpack.c.l.b16 %v1084
      %v1125 = vunpack.c.l.b16 %v1085
      %v1126 = vunpack.c.l.b16 %v1086
      %v1127 = vunpack.c.l.b16 %v1087
      %v1128 = vunpack.c.l.b16 %v1088
      %v1129 = vunpack.c.l.b16 %v1089
      %v1130 = vunpack.c.l.b16 %v1090
      %v1131 = vunpack.c.l.b16 %v1091
      %v1132 = vpack.c.b16 %v1117, %v1116
      %v1133 = vpack.c.b16 %v1119, %v1118
      %v1134 = vpack.c.b16 %v1121, %v1120
      %v1135 = vpack.c.b16 %v1123, %v1122
      %v1136 = vpack.c.b16 %v1125, %v1124
      %v1137 = vpack.c.b16 %v1127, %v1126
      %v1138 = vpack.c.b16 %v1129, %v1128
      %v1139 = vpack.c.b16 %v1131, %v1130
      %1148 = vmatprep.subr.bf16.mxu0 0
      %1149 = vmatpush1.bf16.msra.mxu0 %v1132
      %1150 = vmatprep.subr.bf16.mxu0 0
      %1151 = vmatpush1.bf16.msra.mxu0 %v1133
      %1152 = vmatprep.subr.bf16.mxu0 0
      %1153 = vmatpush1.bf16.msra.mxu0 %v1134
      %1154 = vmatprep.subr.bf16.mxu0 0
      %1155 = vmatpush1.bf16.msra.mxu0 %v1135
      %1156 = vmatprep.subr.bf16.mxu0 0
      %1157 = vmatpush1.bf16.msra.mxu0 %v1136
      %1158 = vmatprep.subr.bf16.mxu0 0
      %1159 = vmatpush1.bf16.msra.mxu0 %v1137
      %1160 = vmatprep.subr.bf16.mxu0 0
      %1161 = vmatpush1.bf16.msra.mxu0 %v1138
      %1162 = vmatprep.subr.bf16.mxu0 0
      %1163 = vmatpush1.bf16.msra.mxu0 %v1139
      %1164 = vmatprep.subr.bf16.mxu0 0
      %1165 = vmatpush1.bf16.msra.mxu0 0
      %1166 = vmatprep.subr.bf16.mxu0 0
      %1167 = vmatpush1.bf16.msra.mxu0 0
      %1168 = vmatprep.subr.bf16.mxu0 0
      %1169 = vmatpush1.bf16.msra.mxu0 0
      %1170 = vmatprep.subr.bf16.mxu0 0
      %1171 = vmatpush1.bf16.msra.mxu0 0
      %1172 = vmatprep.subr.bf16.mxu0 0
      %1173 = vmatpush1.bf16.msra.mxu0 0
      %1174 = vmatprep.subr.bf16.mxu0 0
      %1175 = vmatpush1.bf16.msra.mxu0 0
      %1176 = vmatprep.subr.bf16.mxu0 0
      %1177 = vmatpush1.bf16.msra.mxu0 0
      %1178 = vmatprep.subr.bf16.mxu0 0
      %1179 = vmatpush1.bf16.msra.mxu0 0
      %1180 = vmatprep.mubr.bf16.mxu0 0
      %1181 = vmatmul.mubr.bf16.gmra.mrb[0].mxu0 %v1096
      %v1182 = vpop.f32.mrb[0].mxu0
      %v1183 = vadd.f32 0.0, %v1182
      %v1184 = vpop.f32.mrb[0].mxu0
      %v1185 = vpop.f32.mrb[0].mxu0
      %v1186 = vadd.f32 0.0, %v1185
      %v1187 = vpop.f32.mrb[0].mxu0
      %1188 = vmatprep.mubr.bf16.mxu0 0
      %1189 = vmatmul.mubr.bf16.gmra.mrb[0].mxu0 %v1097
      %v1190 = vpop.f32.mrb[0].mxu0
      %v1191 = vadd.f32 0.0, %v1190
      %v1192 = vpop.f32.mrb[0].mxu0
      %v1193 = vpop.f32.mrb[0].mxu0
      %v1194 = vadd.f32 0.0, %v1193
      %v1195 = vpop.f32.mrb[0].mxu0
      %1196 = vdwg.mxu0
      %v1197 = vld [vmem:[#allocation3] sm:$0xff]
      %v1198 = vld [vmem:[#allocation3 + $0x8] sm:$0xff]
      %v1199 = vld [vmem:[#allocation3 + $0x10] sm:$0xff]
      %v1200 = vld [vmem:[#allocation3 + $0x18] sm:$0xff]
      %v1201 = vadd.f32 %v1197, %v1183
      %v1202 = vadd.f32 %v1198, %v1186
      %v1203 = vadd.f32 %v1199, %v1191
      %v1204 = vadd.f32 %v1200, %v1194
      %1205 = vst [vmem:[#allocation3] sm:$0xff] %v1201
      %1206 = vst [vmem:[#allocation3 + $0x8] sm:$0xff] %v1202
      %1207 = vst [vmem:[#allocation3 + $0x10] sm:$0xff] %v1203
      %1208 = vst [vmem:[#allocation3 + $0x18] sm:$0xff] %v1204
      %v1209 = vld [vmem:[#allocation2] sm:$0xe]
      %v1210 = vld [vmem:[#allocation2 + $0x4] sm:$0x1]
      %v1211 = vld [vmem:[#allocation2 + $0x8] sm:$0xe]
      %v1212 = vld [vmem:[#allocation2 + $0xc] sm:$0x1]
      %v1213 = vld [vmem:[#allocation2 + $0x10] sm:$0xe]
      %v1214 = vld [vmem:[#allocation2 + $0x14] sm:$0x1]
      %v1215 = vld [vmem:[#allocation2 + $0x18] sm:$0xe]
      %v1216 = vld [vmem:[#allocation2 + $0x1c] sm:$0x1]
      %vm1225 = vcmask 1042432
      %vm1226 = vcmask 1046532
      %vm1227 = vmor %vm1225, %vm1226
      %v1228 = vrot.slane %v1209, 5
      %v1229 = vrot.slane %v1228, 4
      %v1230 = vrot.slane %v1210, 5
      %v1231 = vsel %vm1227, %v1229, %v1230
      %v1232 = vrot.slane %v1211, 5
      %v1233 = vrot.slane %v1232, 4
      %v1234 = vrot.slane %v1212, 5
      %v1235 = vsel %vm1227, %v1233, %v1234
      %v1236 = vrot.slane %v1213, 5
      %v1237 = vrot.slane %v1236, 4
      %v1238 = vrot.slane %v1214, 5
      %v1239 = vsel %vm1227, %v1237, %v1238
      %v1240 = vrot.slane %v1215, 5
      %v1241 = vrot.slane %v1240, 4
      %v1242 = vrot.slane %v1216, 5
      %v1243 = vsel %vm1227, %v1241, %v1242
      %s1244 = scalar_lea.vmem %s579, 128
      %v1245 = vld [vmem:[%s1244] sm:$0xf]
      %v1246 = vld [vmem:[%s1244 + $0x4] sm:$0xf]
      %v1247 = vld [vmem:[%s1244 + $0x8] sm:$0xf]
      %v1248 = vld [vmem:[%s1244 + $0xc] sm:$0xf]
      %v1249 = vld [vmem:[%s1244 + $0x10] sm:$0xf]
      %v1250 = vld [vmem:[%s1244 + $0x14] sm:$0xf]
      %v1251 = vld [vmem:[%s1244 + $0x18] sm:$0xf]
      %v1252 = vld [vmem:[%s1244 + $0x1c] sm:$0xf]
      %v1253 = vld [vmem:[%s1244 + $0x20] sm:$0xf]
      %v1254 = vld [vmem:[%s1244 + $0x24] sm:$0xf]
      %v1255 = vld [vmem:[%s1244 + $0x28] sm:$0xf]
      %v1256 = vld [vmem:[%s1244 + $0x2c] sm:$0xf]
      %v1257 = vld [vmem:[%s1244 + $0x30] sm:$0xf]
      %v1258 = vld [vmem:[%s1244 + $0x34] sm:$0xf]
      %v1259 = vld [vmem:[%s1244 + $0x38] sm:$0xf]
      %v1260 = vld [vmem:[%s1244 + $0x3c] sm:$0xf]
      %v1261 = vunpack.c.l.b16 %v1231
      %v1262 = vunpack.c.l.b16 %v1235
      %v1263 = vunpack.c.l.b16 %v1239
      %v1264 = vunpack.c.l.b16 %v1243
      %v1265 = vpack.c.b16 %v1262, %v1261
      %v1266 = vpack.c.b16 %v1264, %v1263
      %v1285 = vunpack.c.l.b16 %v1245
      %v1286 = vunpack.c.l.b16 %v1246
      %v1287 = vunpack.c.l.b16 %v1247
      %v1288 = vunpack.c.l.b16 %v1248
      %v1289 = vunpack.c.l.b16 %v1249
      %v1290 = vunpack.c.l.b16 %v1250
      %v1291 = vunpack.c.l.b16 %v1251
      %v1292 = vunpack.c.l.b16 %v1252
      %v1293 = vunpack.c.l.b16 %v1253
      %v1294 = vunpack.c.l.b16 %v1254
      %v1295 = vunpack.c.l.b16 %v1255
      %v1296 = vunpack.c.l.b16 %v1256
      %v1297 = vunpack.c.l.b16 %v1257
      %v1298 = vunpack.c.l.b16 %v1258
      %v1299 = vunpack.c.l.b16 %v1259
      %v1300 = vunpack.c.l.b16 %v1260
      %v1301 = vpack.c.b16 %v1286, %v1285
      %v1302 = vpack.c.b16 %v1288, %v1287
      %v1303 = vpack.c.b16 %v1290, %v1289
      %v1304 = vpack.c.b16 %v1292, %v1291
      %v1305 = vpack.c.b16 %v1294, %v1293
      %v1306 = vpack.c.b16 %v1296, %v1295
      %v1307 = vpack.c.b16 %v1298, %v1297
      %v1308 = vpack.c.b16 %v1300, %v1299
      %1317 = vmatprep.subr.bf16.mxu0 0
      %1318 = vmatpush1.bf16.msra.mxu0 %v1301
      %1319 = vmatprep.subr.bf16.mxu0 0
      %1320 = vmatpush1.bf16.msra.mxu0 %v1302
      %1321 = vmatprep.subr.bf16.mxu0 0
      %1322 = vmatpush1.bf16.msra.mxu0 %v1303
      %1323 = vmatprep.subr.bf16.mxu0 0
      %1324 = vmatpush1.bf16.msra.mxu0 %v1304
      %1325 = vmatprep.subr.bf16.mxu0 0
      %1326 = vmatpush1.bf16.msra.mxu0 %v1305
      %1327 = vmatprep.subr.bf16.mxu0 0
      %1328 = vmatpush1.bf16.msra.mxu0 %v1306
      %1329 = vmatprep.subr.bf16.mxu0 0
      %1330 = vmatpush1.bf16.msra.mxu0 %v1307
      %1331 = vmatprep.subr.bf16.mxu0 0
      %1332 = vmatpush1.bf16.msra.mxu0 %v1308
      %1333 = vmatprep.subr.bf16.mxu0 0
      %1334 = vmatpush1.bf16.msra.mxu0 0
      %1335 = vmatprep.subr.bf16.mxu0 0
      %1336 = vmatpush1.bf16.msra.mxu0 0
      %1337 = vmatprep.subr.bf16.mxu0 0
      %1338 = vmatpush1.bf16.msra.mxu0 0
      %1339 = vmatprep.subr.bf16.mxu0 0
      %1340 = vmatpush1.bf16.msra.mxu0 0
      %1341 = vmatprep.subr.bf16.mxu0 0
      %1342 = vmatpush1.bf16.msra.mxu0 0
      %1343 = vmatprep.subr.bf16.mxu0 0
      %1344 = vmatpush1.bf16.msra.mxu0 0
      %1345 = vmatprep.subr.bf16.mxu0 0
      %1346 = vmatpush1.bf16.msra.mxu0 0
      %1347 = vmatprep.subr.bf16.mxu0 0
      %1348 = vmatpush1.bf16.msra.mxu0 0
      %1349 = vmatprep.mubr.bf16.mxu0 0
      %1350 = vmatmul.mubr.bf16.gmra.mrb[0].mxu0 %v1265
      %v1351 = vpop.f32.mrb[0].mxu0
      %v1352 = vadd.f32 0.0, %v1351
      %v1353 = vpop.f32.mrb[0].mxu0
      %v1354 = vpop.f32.mrb[0].mxu0
      %v1355 = vadd.f32 0.0, %v1354
      %v1356 = vpop.f32.mrb[0].mxu0
      %1357 = vmatprep.mubr.bf16.mxu0 0
      %1358 = vmatmul.mubr.bf16.gmra.mrb[0].mxu0 %v1266
      %v1359 = vpop.f32.mrb[0].mxu0
      %v1360 = vadd.f32 0.0, %v1359
      %v1361 = vpop.f32.mrb[0].mxu0
      %v1362 = vpop.f32.mrb[0].mxu0
      %v1363 = vadd.f32 0.0, %v1362
      %v1364 = vpop.f32.mrb[0].mxu0
      %1365 = vdwg.mxu0
      %v1366 = vld [vmem:[#allocation3] sm:$0xff]
      %v1367 = vld [vmem:[#allocation3 + $0x8] sm:$0xff]
      %v1368 = vld [vmem:[#allocation3 + $0x10] sm:$0xff]
      %v1369 = vld [vmem:[#allocation3 + $0x18] sm:$0xff]
      %v1370 = vadd.f32 %v1366, %v1352
      %v1371 = vadd.f32 %v1367, %v1355
      %v1372 = vadd.f32 %v1368, %v1360
      %v1373 = vadd.f32 %v1369, %v1363
      %1374 = vst [vmem:[#allocation3] sm:$0xff] %v1370
      %1375 = vst [vmem:[#allocation3 + $0x8] sm:$0xff] %v1371
      %1376 = vst [vmem:[#allocation3 + $0x10] sm:$0xff] %v1372
      %1377 = vst [vmem:[#allocation3 + $0x18] sm:$0xff] %v1373
      %v1378 = vld [vmem:[%s823] sm:$0xf]
      %v1379 = vld [vmem:[%s823 + $0x8] sm:$0xf]
      %v1380 = vld [vmem:[%s823 + $0x10] sm:$0xf]
      %v1381 = vld [vmem:[%s823 + $0x18] sm:$0xf]
      %s1382 = scalar_lea.vmem %s579, 192
      %v1383 = vld [vmem:[%s1382] sm:$0xf]
      %v1384 = vld [vmem:[%s1382 + $0x4] sm:$0xf]
      %v1385 = vld [vmem:[%s1382 + $0x8] sm:$0xf]
      %v1386 = vld [vmem:[%s1382 + $0xc] sm:$0xf]
      %v1387 = vld [vmem:[%s1382 + $0x10] sm:$0xf]
      %v1388 = vld [vmem:[%s1382 + $0x14] sm:$0xf]
      %v1389 = vld [vmem:[%s1382 + $0x18] sm:$0xf]
      %v1390 = vld [vmem:[%s1382 + $0x1c] sm:$0xf]
      %v1391 = vld [vmem:[%s1382 + $0x20] sm:$0xf]
      %v1392 = vld [vmem:[%s1382 + $0x24] sm:$0xf]
      %v1393 = vld [vmem:[%s1382 + $0x28] sm:$0xf]
      %v1394 = vld [vmem:[%s1382 + $0x2c] sm:$0xf]
      %v1395 = vld [vmem:[%s1382 + $0x30] sm:$0xf]
      %v1396 = vld [vmem:[%s1382 + $0x34] sm:$0xf]
      %v1397 = vld [vmem:[%s1382 + $0x38] sm:$0xf]
      %v1398 = vld [vmem:[%s1382 + $0x3c] sm:$0xf]
      %v1403 = vunpack.c.l.b16 %v1378
      %v1404 = vunpack.c.l.b16 %v1379
      %v1405 = vunpack.c.l.b16 %v1380
      %v1406 = vunpack.c.l.b16 %v1381
      %v1407 = vpack.c.b16 %v1404, %v1403
      %v1408 = vpack.c.b16 %v1406, %v1405
      %v1427 = vunpack.c.l.b16 %v1383
      %v1428 = vunpack.c.l.b16 %v1384
      %v1429 = vunpack.c.l.b16 %v1385
      %v1430 = vunpack.c.l.b16 %v1386
      %v1431 = vunpack.c.l.b16 %v1387
      %v1432 = vunpack.c.l.b16 %v1388
      %v1433 = vunpack.c.l.b16 %v1389
      %v1434 = vunpack.c.l.b16 %v1390
      %v1435 = vunpack.c.l.b16 %v1391
      %v1436 = vunpack.c.l.b16 %v1392
      %v1437 = vunpack.c.l.b16 %v1393
      %v1438 = vunpack.c.l.b16 %v1394
      %v1439 = vunpack.c.l.b16 %v1395
      %v1440 = vunpack.c.l.b16 %v1396
      %v1441 = vunpack.c.l.b16 %v1397
      %v1442 = vunpack.c.l.b16 %v1398
      %v1443 = vpack.c.b16 %v1428, %v1427
      %v1444 = vpack.c.b16 %v1430, %v1429
      %v1445 = vpack.c.b16 %v1432, %v1431
      %v1446 = vpack.c.b16 %v1434, %v1433
      %v1447 = vpack.c.b16 %v1436, %v1435
      %v1448 = vpack.c.b16 %v1438, %v1437
      %v1449 = vpack.c.b16 %v1440, %v1439
      %v1450 = vpack.c.b16 %v1442, %v1441
      %1459 = vmatprep.subr.bf16.mxu0 0
      %1460 = vmatpush1.bf16.msra.mxu0 %v1443
      %1461 = vmatprep.subr.bf16.mxu0 0
      %1462 = vmatpush1.bf16.msra.mxu0 %v1444
      %1463 = vmatprep.subr.bf16.mxu0 0
      %1464 = vmatpush1.bf16.msra.mxu0 %v1445
      %1465 = vmatprep.subr.bf16.mxu0 0
      %1466 = vmatpush1.bf16.msra.mxu0 %v1446
      %1467 = vmatprep.subr.bf16.mxu0 0
      %1468 = vmatpush1.bf16.msra.mxu0 %v1447
      %1469 = vmatprep.subr.bf16.mxu0 0
      %1470 = vmatpush1.bf16.msra.mxu0 %v1448
      %1471 = vmatprep.subr.bf16.mxu0 0
      %1472 = vmatpush1.bf16.msra.mxu0 %v1449
      %1473 = vmatprep.subr.bf16.mxu0 0
      %1474 = vmatpush1.bf16.msra.mxu0 %v1450
      %1475 = vmatprep.subr.bf16.mxu0 0
      %1476 = vmatpush1.bf16.msra.mxu0 0
      %1477 = vmatprep.subr.bf16.mxu0 0
      %1478 = vmatpush1.bf16.msra.mxu0 0
      %1479 = vmatprep.subr.bf16.mxu0 0
      %1480 = vmatpush1.bf16.msra.mxu0 0
      %1481 = vmatprep.subr.bf16.mxu0 0
      %1482 = vmatpush1.bf16.msra.mxu0 0
      %1483 = vmatprep.subr.bf16.mxu0 0
      %1484 = vmatpush1.bf16.msra.mxu0 0
      %1485 = vmatprep.subr.bf16.mxu0 0
      %1486 = vmatpush1.bf16.msra.mxu0 0
      %1487 = vmatprep.subr.bf16.mxu0 0
      %1488 = vmatpush1.bf16.msra.mxu0 0
      %1489 = vmatprep.subr.bf16.mxu0 0
      %1490 = vmatpush1.bf16.msra.mxu0 0
      %1491 = vmatprep.mubr.bf16.mxu0 0
      %1492 = vmatmul.mubr.bf16.gmra.mrb[0].mxu0 %v1407
      %v1493 = vpop.f32.mrb[0].mxu0
      %v1494 = vadd.f32 0.0, %v1493
      %v1495 = vpop.f32.mrb[0].mxu0
      %v1496 = vpop.f32.mrb[0].mxu0
      %v1497 = vadd.f32 0.0, %v1496
      %v1498 = vpop.f32.mrb[0].mxu0
      %1499 = vmatprep.mubr.bf16.mxu0 0
      %1500 = vmatmul.mubr.bf16.gmra.mrb[0].mxu0 %v1408
      %v1501 = vpop.f32.mrb[0].mxu0
      %v1502 = vadd.f32 0.0, %v1501
      %v1503 = vpop.f32.mrb[0].mxu0
      %v1504 = vpop.f32.mrb[0].mxu0
      %v1505 = vadd.f32 0.0, %v1504
      %v1506 = vpop.f32.mrb[0].mxu0
      %1507 = vdwg.mxu0
      %v1508 = vld [vmem:[#allocation3] sm:$0xff]
      %v1509 = vld [vmem:[#allocation3 + $0x8] sm:$0xff]
      %v1510 = vld [vmem:[#allocation3 + $0x10] sm:$0xff]
      %v1511 = vld [vmem:[#allocation3 + $0x18] sm:$0xff]
      %v1512 = vadd.f32 %v1508, %v1494
      %v1513 = vadd.f32 %v1509, %v1497
      %v1514 = vadd.f32 %v1510, %v1502
      %v1515 = vadd.f32 %v1511, %v1505
      %1516 = vst [vmem:[#allocation3] sm:$0xff] %v1512
      %1517 = vst [vmem:[#allocation3 + $0x8] sm:$0xff] %v1513
      %1518 = vst [vmem:[#allocation3 + $0x10] sm:$0xff] %v1514
      %1519 = vst [vmem:[#allocation3 + $0x18] sm:$0xff] %v1515
      %v1520 = vld [vmem:[%s823] sm:$0xf]
      %v1521 = vld [vmem:[%s823 + $0x4] sm:$0x1]
      %v1522 = vld [vmem:[%s823 + $0x8] sm:$0xf]
      %v1523 = vld [vmem:[%s823 + $0xc] sm:$0x1]
      %v1524 = vld [vmem:[%s823 + $0x10] sm:$0xf]
      %v1525 = vld [vmem:[%s823 + $0x14] sm:$0x1]
      %v1526 = vld [vmem:[%s823 + $0x18] sm:$0xf]
      %v1527 = vld [vmem:[%s823 + $0x1c] sm:$0x1]
      %v1529 = vshrl.u32 %v1520, 16
      %v1531 = vrot.slane %v1529, 4
      %v1532 = vshll.u32 %v1520, 16
      %v1534 = vrot.slane %v1532, 5
      %v1535 = vor.u32 %v1531, %v1534
      %v1536 = vrot.slane %v1535, 4
      %v1538 = vshll.u32 %v1521, 16
      %v1540 = vrot.slane %v1538, 5
      %v1541 = vsel %vm1018, %v1536, %v1540
      %v1543 = vshrl.u32 %v1522, 16
      %v1545 = vrot.slane %v1543, 4
      %v1546 = vshll.u32 %v1522, 16
      %v1548 = vrot.slane %v1546, 5
      %v1549 = vor.u32 %v1545, %v1548
      %v1550 = vrot.slane %v1549, 4
      %v1552 = vshll.u32 %v1523, 16
      %v1554 = vrot.slane %v1552, 5
      %v1555 = vsel %vm1018, %v1550, %v1554
      %v1557 = vshrl.u32 %v1524, 16
      %v1559 = vrot.slane %v1557, 4
      %v1560 = vshll.u32 %v1524, 16
      %v1562 = vrot.slane %v1560, 5
      %v1563 = vor.u32 %v1559, %v1562
      %v1564 = vrot.slane %v1563, 4
      %v1566 = vshll.u32 %v1525, 16
      %v1568 = vrot.slane %v1566, 5
      %v1569 = vsel %vm1018, %v1564, %v1568
      %v1571 = vshrl.u32 %v1526, 16
      %v1573 = vrot.slane %v1571, 4
      %v1574 = vshll.u32 %v1526, 16
      %v1576 = vrot.slane %v1574, 5
      %v1577 = vor.u32 %v1573, %v1576
      %v1578 = vrot.slane %v1577, 4
      %v1580 = vshll.u32 %v1527, 16
      %v1582 = vrot.slane %v1580, 5
      %v1583 = vsel %vm1018, %v1578, %v1582
      %s1584 = scalar_lea.vmem %s579, 256
      %v1585 = vld [vmem:[%s1584] sm:$0xf]
      %v1586 = vld [vmem:[%s1584 + $0x4] sm:$0xf]
      %v1587 = vld [vmem:[%s1584 + $0x8] sm:$0xf]
      %v1588 = vld [vmem:[%s1584 + $0xc] sm:$0xf]
      %v1589 = vld [vmem:[%s1584 + $0x10] sm:$0xf]
      %v1590 = vld [vmem:[%s1584 + $0x14] sm:$0xf]
      %v1591 = vld [vmem:[%s1584 + $0x18] sm:$0xf]
      %v1592 = vld [vmem:[%s1584 + $0x1c] sm:$0xf]
      %v1593 = vld [vmem:[%s1584 + $0x20] sm:$0xf]
      %v1594 = vld [vmem:[%s1584 + $0x24] sm:$0xf]
      %v1595 = vld [vmem:[%s1584 + $0x28] sm:$0xf]
      %v1596 = vld [vmem:[%s1584 + $0x2c] sm:$0xf]
      %v1597 = vld [vmem:[%s1584 + $0x30] sm:$0xf]
      %v1598 = vld [vmem:[%s1584 + $0x34] sm:$0xf]
      %v1599 = vld [vmem:[%s1584 + $0x38] sm:$0xf]
      %v1600 = vld [vmem:[%s1584 + $0x3c] sm:$0xf]
      %v1601 = vunpack.c.l.b16 %v1541
      %v1602 = vunpack.c.l.b16 %v1555
      %v1603 = vunpack.c.l.b16 %v1569
      %v1604 = vunpack.c.l.b16 %v1583
      %v1605 = vpack.c.b16 %v1602, %v1601
      %v1606 = vpack.c.b16 %v1604, %v1603
      %v1625 = vunpack.c.l.b16 %v1585
      %v1626 = vunpack.c.l.b16 %v1586
      %v1627 = vunpack.c.l.b16 %v1587
      %v1628 = vunpack.c.l.b16 %v1588
      %v1629 = vunpack.c.l.b16 %v1589
      %v1630 = vunpack.c.l.b16 %v1590
      %v1631 = vunpack.c.l.b16 %v1591
      %v1632 = vunpack.c.l.b16 %v1592
      %v1633 = vunpack.c.l.b16 %v1593
      %v1634 = vunpack.c.l.b16 %v1594
      %v1635 = vunpack.c.l.b16 %v1595
      %v1636 = vunpack.c.l.b16 %v1596
      %v1637 = vunpack.c.l.b16 %v1597
      %v1638 = vunpack.c.l.b16 %v1598
      %v1639 = vunpack.c.l.b16 %v1599
      %v1640 = vunpack.c.l.b16 %v1600
      %v1641 = vpack.c.b16 %v1626, %v1625
      %v1642 = vpack.c.b16 %v1628, %v1627
      %v1643 = vpack.c.b16 %v1630, %v1629
      %v1644 = vpack.c.b16 %v1632, %v1631
      %v1645 = vpack.c.b16 %v1634, %v1633
      %v1646 = vpack.c.b16 %v1636, %v1635
      %v1647 = vpack.c.b16 %v1638, %v1637
      %v1648 = vpack.c.b16 %v1640, %v1639
      %1657 = vmatprep.subr.bf16.mxu0 0
      %1658 = vmatpush1.bf16.msra.mxu0 %v1641
      %1659 = vmatprep.subr.bf16.mxu0 0
      %1660 = vmatpush1.bf16.msra.mxu0 %v1642
      %1661 = vmatprep.subr.bf16.mxu0 0
      %1662 = vmatpush1.bf16.msra.mxu0 %v1643
      %1663 = vmatprep.subr.bf16.mxu0 0
      %1664 = vmatpush1.bf16.msra.mxu0 %v1644
      %1665 = vmatprep.subr.bf16.mxu0 0
      %1666 = vmatpush1.bf16.msra.mxu0 %v1645
      %1667 = vmatprep.subr.bf16.mxu0 0
      %1668 = vmatpush1.bf16.msra.mxu0 %v1646
      %1669 = vmatprep.subr.bf16.mxu0 0
      %1670 = vmatpush1.bf16.msra.mxu0 %v1647
      %1671 = vmatprep.subr.bf16.mxu0 0
      %1672 = vmatpush1.bf16.msra.mxu0 %v1648
      %1673 = vmatprep.subr.bf16.mxu0 0
      %1674 = vmatpush1.bf16.msra.mxu0 0
      %1675 = vmatprep.subr.bf16.mxu0 0
      %1676 = vmatpush1.bf16.msra.mxu0 0
      %1677 = vmatprep.subr.bf16.mxu0 0
      %1678 = vmatpush1.bf16.msra.mxu0 0
      %1679 = vmatprep.subr.bf16.mxu0 0
      %1680 = vmatpush1.bf16.msra.mxu0 0
      %1681 = vmatprep.subr.bf16.mxu0 0
      %1682 = vmatpush1.bf16.msra.mxu0 0
      %1683 = vmatprep.subr.bf16.mxu0 0
      %1684 = vmatpush1.bf16.msra.mxu0 0
      %1685 = vmatprep.subr.bf16.mxu0 0
      %1686 = vmatpush1.bf16.msra.mxu0 0
      %1687 = vmatprep.subr.bf16.mxu0 0
      %1688 = vmatpush1.bf16.msra.mxu0 0
      %1689 = vmatprep.mubr.bf16.mxu0 0
      %1690 = vmatmul.mubr.bf16.gmra.mrb[0].mxu0 %v1605
      %v1691 = vpop.f32.mrb[0].mxu0
      %v1692 = vadd.f32 0.0, %v1691
      %v1693 = vpop.f32.mrb[0].mxu0
      %v1694 = vpop.f32.mrb[0].mxu0
      %v1695 = vadd.f32 0.0, %v1694
      %v1696 = vpop.f32.mrb[0].mxu0
      %1697 = vmatprep.mubr.bf16.mxu0 0
      %1698 = vmatmul.mubr.bf16.gmra.mrb[0].mxu0 %v1606
      %v1699 = vpop.f32.mrb[0].mxu0
      %v1700 = vadd.f32 0.0, %v1699
      %v1701 = vpop.f32.mrb[0].mxu0
      %v1702 = vpop.f32.mrb[0].mxu0
      %v1703 = vadd.f32 0.0, %v1702
      %v1704 = vpop.f32.mrb[0].mxu0
      %1705 = vdwg.mxu0
      %v1706 = vld [vmem:[#allocation3] sm:$0xff]
      %v1707 = vld [vmem:[#allocation3 + $0x8] sm:$0xff]
      %v1708 = vld [vmem:[#allocation3 + $0x10] sm:$0xff]
      %v1709 = vld [vmem:[#allocation3 + $0x18] sm:$0xff]
      %v1710 = vadd.f32 %v1706, %v1692
      %v1711 = vadd.f32 %v1707, %v1695
      %v1712 = vadd.f32 %v1708, %v1700
      %v1713 = vadd.f32 %v1709, %v1703
      %1714 = vst [vmem:[#allocation3] sm:$0xff] %v1710
      %1715 = vst [vmem:[#allocation3 + $0x8] sm:$0xff] %v1711
      %1716 = vst [vmem:[#allocation3 + $0x10] sm:$0xff] %v1712
      %1717 = vst [vmem:[#allocation3 + $0x18] sm:$0xff] %v1713
      %v1718 = vld [vmem:[%s823] sm:$0xe]
      %v1719 = vld [vmem:[%s823 + $0x4] sm:$0x1]
      %v1720 = vld [vmem:[%s823 + $0x8] sm:$0xe]
      %v1721 = vld [vmem:[%s823 + $0xc] sm:$0x1]
      %v1722 = vld [vmem:[%s823 + $0x10] sm:$0xe]
      %v1723 = vld [vmem:[%s823 + $0x14] sm:$0x1]
      %v1724 = vld [vmem:[%s823 + $0x18] sm:$0xe]
      %v1725 = vld [vmem:[%s823 + $0x1c] sm:$0x1]
      %v1734 = vrot.slane %v1718, 5
      %v1735 = vrot.slane %v1734, 4
      %v1736 = vrot.slane %v1719, 5
      %v1737 = vsel %vm1227, %v1735, %v1736
      %v1738 = vrot.slane %v1720, 5
      %v1739 = vrot.slane %v1738, 4
      %v1740 = vrot.slane %v1721, 5
      %v1741 = vsel %vm1227, %v1739, %v1740
      %v1742 = vrot.slane %v1722, 5
      %v1743 = vrot.slane %v1742, 4
      %v1744 = vrot.slane %v1723, 5
      %v1745 = vsel %vm1227, %v1743, %v1744
      %v1746 = vrot.slane %v1724, 5
      %v1747 = vrot.slane %v1746, 4
      %v1748 = vrot.slane %v1725, 5
      %v1749 = vsel %vm1227, %v1747, %v1748
      %s1750 = scalar_lea.vmem %s579, 320
      %v1751 = vld [vmem:[%s1750] sm:$0xf]
      %v1752 = vld [vmem:[%s1750 + $0x4] sm:$0xf]
      %v1753 = vld [vmem:[%s1750 + $0x8] sm:$0xf]
      %v1754 = vld [vmem:[%s1750 + $0xc] sm:$0xf]
      %v1755 = vld [vmem:[%s1750 + $0x10] sm:$0xf]
      %v1756 = vld [vmem:[%s1750 + $0x14] sm:$0xf]
      %v1757 = vld [vmem:[%s1750 + $0x18] sm:$0xf]
      %v1758 = vld [vmem:[%s1750 + $0x1c] sm:$0xf]
      %v1759 = vld [vmem:[%s1750 + $0x20] sm:$0xf]
      %v1760 = vld [vmem:[%s1750 + $0x24] sm:$0xf]
      %v1761 = vld [vmem:[%s1750 + $0x28] sm:$0xf]
      %v1762 = vld [vmem:[%s1750 + $0x2c] sm:$0xf]
      %v1763 = vld [vmem:[%s1750 + $0x30] sm:$0xf]
      %v1764 = vld [vmem:[%s1750 + $0x34] sm:$0xf]
      %v1765 = vld [vmem:[%s1750 + $0x38] sm:$0xf]
      %v1766 = vld [vmem:[%s1750 + $0x3c] sm:$0xf]
      %v1767 = vunpack.c.l.b16 %v1737
      %v1768 = vunpack.c.l.b16 %v1741
      %v1769 = vunpack.c.l.b16 %v1745
      %v1770 = vunpack.c.l.b16 %v1749
      %v1771 = vpack.c.b16 %v1768, %v1767
      %v1772 = vpack.c.b16 %v1770, %v1769
      %v1791 = vunpack.c.l.b16 %v1751
      %v1792 = vunpack.c.l.b16 %v1752
      %v1793 = vunpack.c.l.b16 %v1753
      %v1794 = vunpack.c.l.b16 %v1754
      %v1795 = vunpack.c.l.b16 %v1755
      %v1796 = vunpack.c.l.b16 %v1756
      %v1797 = vunpack.c.l.b16 %v1757
      %v1798 = vunpack.c.l.b16 %v1758
      %v1799 = vunpack.c.l.b16 %v1759
      %v1800 = vunpack.c.l.b16 %v1760
      %v1801 = vunpack.c.l.b16 %v1761
      %v1802 = vunpack.c.l.b16 %v1762
      %v1803 = vunpack.c.l.b16 %v1763
      %v1804 = vunpack.c.l.b16 %v1764
      %v1805 = vunpack.c.l.b16 %v1765
      %v1806 = vunpack.c.l.b16 %v1766
      %v1807 = vpack.c.b16 %v1792, %v1791
      %v1808 = vpack.c.b16 %v1794, %v1793
      %v1809 = vpack.c.b16 %v1796, %v1795
      %v1810 = vpack.c.b16 %v1798, %v1797
      %v1811 = vpack.c.b16 %v1800, %v1799
      %v1812 = vpack.c.b16 %v1802, %v1801
      %v1813 = vpack.c.b16 %v1804, %v1803
      %v1814 = vpack.c.b16 %v1806, %v1805
      %1823 = vmatprep.subr.bf16.mxu0 0
      %1824 = vmatpush1.bf16.msra.mxu0 %v1807
      %1825 = vmatprep.subr.bf16.mxu0 0
      %1826 = vmatpush1.bf16.msra.mxu0 %v1808
      %1827 = vmatprep.subr.bf16.mxu0 0
      %1828 = vmatpush1.bf16.msra.mxu0 %v1809
      %1829 = vmatprep.subr.bf16.mxu0 0
      %1830 = vmatpush1.bf16.msra.mxu0 %v1810
      %1831 = vmatprep.subr.bf16.mxu0 0
      %1832 = vmatpush1.bf16.msra.mxu0 %v1811
      %1833 = vmatprep.subr.bf16.mxu0 0
      %1834 = vmatpush1.bf16.msra.mxu0 %v1812
      %1835 = vmatprep.subr.bf16.mxu0 0
      %1836 = vmatpush1.bf16.msra.mxu0 %v1813
      %1837 = vmatprep.subr.bf16.mxu0 0
      %1838 = vmatpush1.bf16.msra.mxu0 %v1814
      %1839 = vmatprep.subr.bf16.mxu0 0
      %1840 = vmatpush1.bf16.msra.mxu0 0
      %1841 = vmatprep.subr.bf16.mxu0 0
      %1842 = vmatpush1.bf16.msra.mxu0 0
      %1843 = vmatprep.subr.bf16.mxu0 0
      %1844 = vmatpush1.bf16.msra.mxu0 0
      %1845 = vmatprep.subr.bf16.mxu0 0
      %1846 = vmatpush1.bf16.msra.mxu0 0
      %1847 = vmatprep.subr.bf16.mxu0 0
      %1848 = vmatpush1.bf16.msra.mxu0 0
      %1849 = vmatprep.subr.bf16.mxu0 0
      %1850 = vmatpush1.bf16.msra.mxu0 0
      %1851 = vmatprep.subr.bf16.mxu0 0
      %1852 = vmatpush1.bf16.msra.mxu0 0
      %1853 = vmatprep.subr.bf16.mxu0 0
      %1854 = vmatpush1.bf16.msra.mxu0 0
      %1855 = vmatprep.mubr.bf16.mxu0 0
      %1856 = vmatmul.mubr.bf16.gmra.mrb[0].mxu0 %v1771
      %v1857 = vpop.f32.mrb[0].mxu0
      %v1858 = vadd.f32 0.0, %v1857
      %v1859 = vpop.f32.mrb[0].mxu0
      %v1860 = vpop.f32.mrb[0].mxu0
      %v1861 = vadd.f32 0.0, %v1860
      %v1862 = vpop.f32.mrb[0].mxu0
      %1863 = vmatprep.mubr.bf16.mxu0 0
      %1864 = vmatmul.mubr.bf16.gmra.mrb[0].mxu0 %v1772
      %v1865 = vpop.f32.mrb[0].mxu0
      %v1866 = vadd.f32 0.0, %v1865
      %v1867 = vpop.f32.mrb[0].mxu0
      %v1868 = vpop.f32.mrb[0].mxu0
      %v1869 = vadd.f32 0.0, %v1868
      %v1870 = vpop.f32.mrb[0].mxu0
      %1871 = vdwg.mxu0
      %v1872 = vld [vmem:[#allocation3] sm:$0xff]
      %v1873 = vld [vmem:[#allocation3 + $0x8] sm:$0xff]
      %v1874 = vld [vmem:[#allocation3 + $0x10] sm:$0xff]
      %v1875 = vld [vmem:[#allocation3 + $0x18] sm:$0xff]
      %v1876 = vadd.f32 %v1872, %v1858
      %v1877 = vadd.f32 %v1873, %v1861
      %v1878 = vadd.f32 %v1874, %v1866
      %v1879 = vadd.f32 %v1875, %v1869
      %1880 = vst [vmem:[#allocation3] sm:$0xff] %v1876
      %1881 = vst [vmem:[#allocation3 + $0x8] sm:$0xff] %v1877
      %1882 = vst [vmem:[#allocation3 + $0x10] sm:$0xff] %v1878
      %1883 = vst [vmem:[#allocation3 + $0x18] sm:$0xff] %v1879
      %s1884 = scalar_lea.vmem [#allocation2], 16
      %v1885 = vld [vmem:[%s1884] sm:$0xf]
      %v1886 = vld [vmem:[%s1884 + $0x8] sm:$0xf]
      %v1887 = vld [vmem:[%s1884 + $0x10] sm:$0xf]
      %v1888 = vld [vmem:[%s1884 + $0x18] sm:$0xf]
      %s1889 = scalar_lea.vmem %s579, 384
      %v1890 = vld [vmem:[%s1889] sm:$0xf]
      %v1891 = vld [vmem:[%s1889 + $0x4] sm:$0xf]
      %v1892 = vld [vmem:[%s1889 + $0x8] sm:$0xf]
      %v1893 = vld [vmem:[%s1889 + $0xc] sm:$0xf]
      %v1894 = vld [vmem:[%s1889 + $0x10] sm:$0xf]
      %v1895 = vld [vmem:[%s1889 + $0x14] sm:$0xf]
      %v1896 = vld [vmem:[%s1889 + $0x18] sm:$0xf]
      %v1897 = vld [vmem:[%s1889 + $0x1c] sm:$0xf]
      %v1898 = vld [vmem:[%s1889 + $0x20] sm:$0xf]
      %v1899 = vld [vmem:[%s1889 + $0x24] sm:$0xf]
      %v1900 = vld [vmem:[%s1889 + $0x28] sm:$0xf]
      %v1901 = vld [vmem:[%s1889 + $0x2c] sm:$0xf]
      %v1902 = vld [vmem:[%s1889 + $0x30] sm:$0xf]
      %v1903 = vld [vmem:[%s1889 + $0x34] sm:$0xf]
      %v1904 = vld [vmem:[%s1889 + $0x38] sm:$0xf]
      %v1905 = vld [vmem:[%s1889 + $0x3c] sm:$0xf]
      %v1910 = vunpack.c.l.b16 %v1885
      %v1911 = vunpack.c.l.b16 %v1886
      %v1912 = vunpack.c.l.b16 %v1887
      %v1913 = vunpack.c.l.b16 %v1888
      %v1914 = vpack.c.b16 %v1911, %v1910
      %v1915 = vpack.c.b16 %v1913, %v1912
      %v1934 = vunpack.c.l.b16 %v1890
      %v1935 = vunpack.c.l.b16 %v1891
      %v1936 = vunpack.c.l.b16 %v1892
      %v1937 = vunpack.c.l.b16 %v1893
      %v1938 = vunpack.c.l.b16 %v1894
      %v1939 = vunpack.c.l.b16 %v1895
      %v1940 = vunpack.c.l.b16 %v1896
      %v1941 = vunpack.c.l.b16 %v1897
      %v1942 = vunpack.c.l.b16 %v1898
      %v1943 = vunpack.c.l.b16 %v1899
      %v1944 = vunpack.c.l.b16 %v1900
      %v1945 = vunpack.c.l.b16 %v1901
      %v1946 = vunpack.c.l.b16 %v1902
      %v1947 = vunpack.c.l.b16 %v1903
      %v1948 = vunpack.c.l.b16 %v1904
      %v1949 = vunpack.c.l.b16 %v1905
      %v1950 = vpack.c.b16 %v1935, %v1934
      %v1951 = vpack.c.b16 %v1937, %v1936
      %v1952 = vpack.c.b16 %v1939, %v1938
      %v1953 = vpack.c.b16 %v1941, %v1940
      %v1954 = vpack.c.b16 %v1943, %v1942
      %v1955 = vpack.c.b16 %v1945, %v1944
      %v1956 = vpack.c.b16 %v1947, %v1946
      %v1957 = vpack.c.b16 %v1949, %v1948
      %1966 = vmatprep.subr.bf16.mxu0 0
      %1967 = vmatpush1.bf16.msra.mxu0 %v1950
      %1968 = vmatprep.subr.bf16.mxu0 0
      %1969 = vmatpush1.bf16.msra.mxu0 %v1951
      %1970 = vmatprep.subr.bf16.mxu0 0
      %1971 = vmatpush1.bf16.msra.mxu0 %v1952
      %1972 = vmatprep.subr.bf16.mxu0 0
      %1973 = vmatpush1.bf16.msra.mxu0 %v1953
      %1974 = vmatprep.subr.bf16.mxu0 0
      %1975 = vmatpush1.bf16.msra.mxu0 %v1954
      %1976 = vmatprep.subr.bf16.mxu0 0
      %1977 = vmatpush1.bf16.msra.mxu0 %v1955
      %1978 = vmatprep.subr.bf16.mxu0 0
      %1979 = vmatpush1.bf16.msra.mxu0 %v1956
      %1980 = vmatprep.subr.bf16.mxu0 0
      %1981 = vmatpush1.bf16.msra.mxu0 %v1957
      %1982 = vmatprep.subr.bf16.mxu0 0
      %1983 = vmatpush1.bf16.msra.mxu0 0
      %1984 = vmatprep.subr.bf16.mxu0 0
      %1985 = vmatpush1.bf16.msra.mxu0 0
      %1986 = vmatprep.subr.bf16.mxu0 0
      %1987 = vmatpush1.bf16.msra.mxu0 0
      %1988 = vmatprep.subr.bf16.mxu0 0
      %1989 = vmatpush1.bf16.msra.mxu0 0
      %1990 = vmatprep.subr.bf16.mxu0 0
      %1991 = vmatpush1.bf16.msra.mxu0 0
      %1992 = vmatprep.subr.bf16.mxu0 0
      %1993 = vmatpush1.bf16.msra.mxu0 0
      %1994 = vmatprep.subr.bf16.mxu0 0
      %1995 = vmatpush1.bf16.msra.mxu0 0
      %1996 = vmatprep.subr.bf16.mxu0 0
      %1997 = vmatpush1.bf16.msra.mxu0 0
      %1998 = vmatprep.mubr.bf16.mxu0 0
      %1999 = vmatmul.mubr.bf16.gmra.mrb[0].mxu0 %v1914
      %v2000 = vpop.f32.mrb[0].mxu0
      %v2001 = vadd.f32 0.0, %v2000
      %v2002 = vpop.f32.mrb[0].mxu0
      %v2003 = vpop.f32.mrb[0].mxu0
      %v2004 = vadd.f32 0.0, %v2003
      %v2005 = vpop.f32.mrb[0].mxu0
      %2006 = vmatprep.mubr.bf16.mxu0 0
      %2007 = vmatmul.mubr.bf16.gmra.mrb[0].mxu0 %v1915
      %v2008 = vpop.f32.mrb[0].mxu0
      %v2009 = vadd.f32 0.0, %v2008
      %v2010 = vpop.f32.mrb[0].mxu0
      %v2011 = vpop.f32.mrb[0].mxu0
      %v2012 = vadd.f32 0.0, %v2011
      %v2013 = vpop.f32.mrb[0].mxu0
      %2014 = vdwg.mxu0
      %v2015 = vld [vmem:[#allocation3] sm:$0xff]
      %v2016 = vld [vmem:[#allocation3 + $0x8] sm:$0xff]
      %v2017 = vld [vmem:[#allocation3 + $0x10] sm:$0xff]
      %v2018 = vld [vmem:[#allocation3 + $0x18] sm:$0xff]
      %v2019 = vadd.f32 %v2015, %v2001
      %v2020 = vadd.f32 %v2016, %v2004
      %v2021 = vadd.f32 %v2017, %v2009
      %v2022 = vadd.f32 %v2018, %v2012
      %2023 = vst [vmem:[#allocation3] sm:$0xff] %v2019
      %2024 = vst [vmem:[#allocation3 + $0x8] sm:$0xff] %v2020
      %2025 = vst [vmem:[#allocation3 + $0x10] sm:$0xff] %v2021
      %2026 = vst [vmem:[#allocation3 + $0x18] sm:$0xff] %v2022
      %v2027 = vld [vmem:[%s1884] sm:$0xf]
      %v2028 = vld [vmem:[%s1884 + $0x4] sm:$0x1]
      %v2029 = vld [vmem:[%s1884 + $0x8] sm:$0xf]
      %v2030 = vld [vmem:[%s1884 + $0xc] sm:$0x1]
      %v2031 = vld [vmem:[%s1884 + $0x10] sm:$0xf]
      %v2032 = vld [vmem:[%s1884 + $0x14] sm:$0x1]
      %v2033 = vld [vmem:[%s1884 + $0x18] sm:$0xf]
      %v2034 = vld [vmem:[%s1884 + $0x1c] sm:$0x1]
      %v2036 = vshrl.u32 %v2027, 16
      %v2038 = vrot.slane %v2036, 4
      %v2039 = vshll.u32 %v2027, 16
      %v2041 = vrot.slane %v2039, 5
      %v2042 = vor.u32 %v2038, %v2041
      %v2043 = vrot.slane %v2042, 4
      %v2045 = vshll.u32 %v2028, 16
      %v2047 = vrot.slane %v2045, 5
      %v2048 = vsel %vm1018, %v2043, %v2047
      %v2050 = vshrl.u32 %v2029, 16
      %v2052 = vrot.slane %v2050, 4
      %v2053 = vshll.u32 %v2029, 16
      %v2055 = vrot.slane %v2053, 5
      %v2056 = vor.u32 %v2052, %v2055
      %v2057 = vrot.slane %v2056, 4
      %v2059 = vshll.u32 %v2030, 16
      %v2061 = vrot.slane %v2059, 5
      %v2062 = vsel %vm1018, %v2057, %v2061
      %v2064 = vshrl.u32 %v2031, 16
      %v2066 = vrot.slane %v2064, 4
      %v2067 = vshll.u32 %v2031, 16
      %v2069 = vrot.slane %v2067, 5
      %v2070 = vor.u32 %v2066, %v2069
      %v2071 = vrot.slane %v2070, 4
      %v2073 = vshll.u32 %v2032, 16
      %v2075 = vrot.slane %v2073, 5
      %v2076 = vsel %vm1018, %v2071, %v2075
      %v2078 = vshrl.u32 %v2033, 16
      %v2080 = vrot.slane %v2078, 4
      %v2081 = vshll.u32 %v2033, 16
      %v2083 = vrot.slane %v2081, 5
      %v2084 = vor.u32 %v2080, %v2083
      %v2085 = vrot.slane %v2084, 4
      %v2087 = vshll.u32 %v2034, 16
      %v2089 = vrot.slane %v2087, 5
      %v2090 = vsel %vm1018, %v2085, %v2089
      %s2091 = scalar_lea.vmem %s579, 448
      %v2092 = vld [vmem:[%s2091] sm:$0xf]
      %v2093 = vld [vmem:[%s2091 + $0x4] sm:$0xf]
      %v2094 = vld [vmem:[%s2091 + $0x8] sm:$0xf]
      %v2095 = vld [vmem:[%s2091 + $0xc] sm:$0xf]
      %v2096 = vld [vmem:[%s2091 + $0x10] sm:$0xf]
      %v2097 = vld [vmem:[%s2091 + $0x14] sm:$0xf]
      %v2098 = vld [vmem:[%s2091 + $0x18] sm:$0xf]
      %v2099 = vld [vmem:[%s2091 + $0x1c] sm:$0xf]
      %v2100 = vld [vmem:[%s2091 + $0x20] sm:$0xf]
      %v2101 = vld [vmem:[%s2091 + $0x24] sm:$0xf]
      %v2102 = vld [vmem:[%s2091 + $0x28] sm:$0xf]
      %v2103 = vld [vmem:[%s2091 + $0x2c] sm:$0xf]
      %v2104 = vld [vmem:[%s2091 + $0x30] sm:$0xf]
      %v2105 = vld [vmem:[%s2091 + $0x34] sm:$0xf]
      %v2106 = vld [vmem:[%s2091 + $0x38] sm:$0xf]
      %v2107 = vld [vmem:[%s2091 + $0x3c] sm:$0xf]
      %v2108 = vunpack.c.l.b16 %v2048
      %v2109 = vunpack.c.l.b16 %v2062
      %v2110 = vunpack.c.l.b16 %v2076
      %v2111 = vunpack.c.l.b16 %v2090
      %v2112 = vpack.c.b16 %v2109, %v2108
      %v2113 = vpack.c.b16 %v2111, %v2110
      %v2132 = vunpack.c.l.b16 %v2092
      %v2133 = vunpack.c.l.b16 %v2093
      %v2134 = vunpack.c.l.b16 %v2094
      %v2135 = vunpack.c.l.b16 %v2095
      %v2136 = vunpack.c.l.b16 %v2096
      %v2137 = vunpack.c.l.b16 %v2097
      %v2138 = vunpack.c.l.b16 %v2098
      %v2139 = vunpack.c.l.b16 %v2099
      %v2140 = vunpack.c.l.b16 %v2100
      %v2141 = vunpack.c.l.b16 %v2101
      %v2142 = vunpack.c.l.b16 %v2102
      %v2143 = vunpack.c.l.b16 %v2103
      %v2144 = vunpack.c.l.b16 %v2104
      %v2145 = vunpack.c.l.b16 %v2105
      %v2146 = vunpack.c.l.b16 %v2106
      %v2147 = vunpack.c.l.b16 %v2107
      %v2148 = vpack.c.b16 %v2133, %v2132
      %v2149 = vpack.c.b16 %v2135, %v2134
      %v2150 = vpack.c.b16 %v2137, %v2136
      %v2151 = vpack.c.b16 %v2139, %v2138
      %v2152 = vpack.c.b16 %v2141, %v2140
      %v2153 = vpack.c.b16 %v2143, %v2142
      %v2154 = vpack.c.b16 %v2145, %v2144
      %v2155 = vpack.c.b16 %v2147, %v2146
      %2164 = vmatprep.subr.bf16.mxu0 0
      %2165 = vmatpush1.bf16.msra.mxu0 %v2148
      %2166 = vmatprep.subr.bf16.mxu0 0
      %2167 = vmatpush1.bf16.msra.mxu0 %v2149
      %2168 = vmatprep.subr.bf16.mxu0 0
      %2169 = vmatpush1.bf16.msra.mxu0 %v2150
      %2170 = vmatprep.subr.bf16.mxu0 0
      %2171 = vmatpush1.bf16.msra.mxu0 %v2151
      %2172 = vmatprep.subr.bf16.mxu0 0
      %2173 = vmatpush1.bf16.msra.mxu0 %v2152
      %2174 = vmatprep.subr.bf16.mxu0 0
      %2175 = vmatpush1.bf16.msra.mxu0 %v2153
      %2176 = vmatprep.subr.bf16.mxu0 0
      %2177 = vmatpush1.bf16.msra.mxu0 %v2154
      %2178 = vmatprep.subr.bf16.mxu0 0
      %2179 = vmatpush1.bf16.msra.mxu0 %v2155
      %2180 = vmatprep.subr.bf16.mxu0 0
      %2181 = vmatpush1.bf16.msra.mxu0 0
      %2182 = vmatprep.subr.bf16.mxu0 0
      %2183 = vmatpush1.bf16.msra.mxu0 0
      %2184 = vmatprep.subr.bf16.mxu0 0
      %2185 = vmatpush1.bf16.msra.mxu0 0
      %2186 = vmatprep.subr.bf16.mxu0 0
      %2187 = vmatpush1.bf16.msra.mxu0 0
      %2188 = vmatprep.subr.bf16.mxu0 0
      %2189 = vmatpush1.bf16.msra.mxu0 0
      %2190 = vmatprep.subr.bf16.mxu0 0
      %2191 = vmatpush1.bf16.msra.mxu0 0
      %2192 = vmatprep.subr.bf16.mxu0 0
      %2193 = vmatpush1.bf16.msra.mxu0 0
      %2194 = vmatprep.subr.bf16.mxu0 0
      %2195 = vmatpush1.bf16.msra.mxu0 0
      %2196 = vmatprep.mubr.bf16.mxu0 0
      %2197 = vmatmul.mubr.bf16.gmra.mrb[0].mxu0 %v2112
      %v2198 = vpop.f32.mrb[0].mxu0
      %v2199 = vadd.f32 0.0, %v2198
      %v2200 = vpop.f32.mrb[0].mxu0
      %v2201 = vpop.f32.mrb[0].mxu0
      %v2202 = vadd.f32 0.0, %v2201
      %v2203 = vpop.f32.mrb[0].mxu0
      %2204 = vmatprep.mubr.bf16.mxu0 0
      %2205 = vmatmul.mubr.bf16.gmra.mrb[0].mxu0 %v2113
      %v2206 = vpop.f32.mrb[0].mxu0
      %v2207 = vadd.f32 0.0, %v2206
      %v2208 = vpop.f32.mrb[0].mxu0
      %v2209 = vpop.f32.mrb[0].mxu0
      %v2210 = vadd.f32 0.0, %v2209
      %v2211 = vpop.f32.mrb[0].mxu0
      %2212 = vdwg.mxu0
      %v2213 = vld [vmem:[#allocation3] sm:$0xff]
      %v2214 = vld [vmem:[#allocation3 + $0x8] sm:$0xff]
      %v2215 = vld [vmem:[#allocation3 + $0x10] sm:$0xff]
      %v2216 = vld [vmem:[#allocation3 + $0x18] sm:$0xff]
      %v2217 = vadd.f32 %v2213, %v2199
      %v2218 = vadd.f32 %v2214, %v2202
      %v2219 = vadd.f32 %v2215, %v2207
      %v2220 = vadd.f32 %v2216, %v2210
      %2221 = vst [vmem:[#allocation3] sm:$0xff] %v2217
      %2222 = vst [vmem:[#allocation3 + $0x8] sm:$0xff] %v2218
      %2223 = vst [vmem:[#allocation3 + $0x10] sm:$0xff] %v2219
      %2224 = vst [vmem:[#allocation3 + $0x18] sm:$0xff] %v2220
      %v2225 = vld [vmem:[%s1884] sm:$0xe]
      %v2226 = vld [vmem:[%s1884 + $0x4] sm:$0x1]
      %v2227 = vld [vmem:[%s1884 + $0x8] sm:$0xe]
      %v2228 = vld [vmem:[%s1884 + $0xc] sm:$0x1]
      %v2229 = vld [vmem:[%s1884 + $0x10] sm:$0xe]
      %v2230 = vld [vmem:[%s1884 + $0x14] sm:$0x1]
      %v2231 = vld [vmem:[%s1884 + $0x18] sm:$0xe]
      %v2232 = vld [vmem:[%s1884 + $0x1c] sm:$0x1]
      %v2241 = vrot.slane %v2225, 5
      %v2242 = vrot.slane %v2241, 4
      %v2243 = vrot.slane %v2226, 5
      %v2244 = vsel %vm1227, %v2242, %v2243
      %v2245 = vrot.slane %v2227, 5
      %v2246 = vrot.slane %v2245, 4
      %v2247 = vrot.slane %v2228, 5
      %v2248 = vsel %vm1227, %v2246, %v2247
      %v2249 = vrot.slane %v2229, 5
      %v2250 = vrot.slane %v2249, 4
      %v2251 = vrot.slane %v2230, 5
      %v2252 = vsel %vm1227, %v2250, %v2251
      %v2253 = vrot.slane %v2231, 5
      %v2254 = vrot.slane %v2253, 4
      %v2255 = vrot.slane %v2232, 5
      %v2256 = vsel %vm1227, %v2254, %v2255
      %s2257 = scalar_lea.vmem %s579, 512
      %v2258 = vld [vmem:[%s2257] sm:$0xf]
      %v2259 = vld [vmem:[%s2257 + $0x4] sm:$0xf]
      %v2260 = vld [vmem:[%s2257 + $0x8] sm:$0xf]
      %v2261 = vld [vmem:[%s2257 + $0xc] sm:$0xf]
      %v2262 = vld [vmem:[%s2257 + $0x10] sm:$0xf]
      %v2263 = vld [vmem:[%s2257 + $0x14] sm:$0xf]
      %v2264 = vld [vmem:[%s2257 + $0x18] sm:$0xf]
      %v2265 = vld [vmem:[%s2257 + $0x1c] sm:$0xf]
      %v2266 = vld [vmem:[%s2257 + $0x20] sm:$0xf]
      %v2267 = vld [vmem:[%s2257 + $0x24] sm:$0xf]
      %v2268 = vld [vmem:[%s2257 + $0x28] sm:$0xf]
      %v2269 = vld [vmem:[%s2257 + $0x2c] sm:$0xf]
      %v2270 = vld [vmem:[%s2257 + $0x30] sm:$0xf]
      %v2271 = vld [vmem:[%s2257 + $0x34] sm:$0xf]
      %v2272 = vld [vmem:[%s2257 + $0x38] sm:$0xf]
      %v2273 = vld [vmem:[%s2257 + $0x3c] sm:$0xf]
      %v2274 = vunpack.c.l.b16 %v2244
      %v2275 = vunpack.c.l.b16 %v2248
      %v2276 = vunpack.c.l.b16 %v2252
      %v2277 = vunpack.c.l.b16 %v2256
      %v2278 = vpack.c.b16 %v2275, %v2274
      %v2279 = vpack.c.b16 %v2277, %v2276
      %v2298 = vunpack.c.l.b16 %v2258
      %v2299 = vunpack.c.l.b16 %v2259
      %v2300 = vunpack.c.l.b16 %v2260
      %v2301 = vunpack.c.l.b16 %v2261
      %v2302 = vunpack.c.l.b16 %v2262
      %v2303 = vunpack.c.l.b16 %v2263
      %v2304 = vunpack.c.l.b16 %v2264
      %v2305 = vunpack.c.l.b16 %v2265
      %v2306 = vunpack.c.l.b16 %v2266
      %v2307 = vunpack.c.l.b16 %v2267
      %v2308 = vunpack.c.l.b16 %v2268
      %v2309 = vunpack.c.l.b16 %v2269
      %v2310 = vunpack.c.l.b16 %v2270
      %v2311 = vunpack.c.l.b16 %v2271
      %v2312 = vunpack.c.l.b16 %v2272
      %v2313 = vunpack.c.l.b16 %v2273
      %v2314 = vpack.c.b16 %v2299, %v2298
      %v2315 = vpack.c.b16 %v2301, %v2300
      %v2316 = vpack.c.b16 %v2303, %v2302
      %v2317 = vpack.c.b16 %v2305, %v2304
      %v2318 = vpack.c.b16 %v2307, %v2306
      %v2319 = vpack.c.b16 %v2309, %v2308
      %v2320 = vpack.c.b16 %v2311, %v2310
      %v2321 = vpack.c.b16 %v2313, %v2312
      %2330 = vmatprep.subr.bf16.mxu0 0
      %2331 = vmatpush1.bf16.msra.mxu0 %v2314
      %2332 = vmatprep.subr.bf16.mxu0 0
      %2333 = vmatpush1.bf16.msra.mxu0 %v2315
      %2334 = vmatprep.subr.bf16.mxu0 0
      %2335 = vmatpush1.bf16.msra.mxu0 %v2316
      %2336 = vmatprep.subr.bf16.mxu0 0
      %2337 = vmatpush1.bf16.msra.mxu0 %v2317
      %2338 = vmatprep.subr.bf16.mxu0 0
      %2339 = vmatpush1.bf16.msra.mxu0 %v2318
      %2340 = vmatprep.subr.bf16.mxu0 0
      %2341 = vmatpush1.bf16.msra.mxu0 %v2319
      %2342 = vmatprep.subr.bf16.mxu0 0
      %2343 = vmatpush1.bf16.msra.mxu0 %v2320
      %2344 = vmatprep.subr.bf16.mxu0 0
      %2345 = vmatpush1.bf16.msra.mxu0 %v2321
      %2346 = vmatprep.subr.bf16.mxu0 0
      %2347 = vmatpush1.bf16.msra.mxu0 0
      %2348 = vmatprep.subr.bf16.mxu0 0
      %2349 = vmatpush1.bf16.msra.mxu0 0
      %2350 = vmatprep.subr.bf16.mxu0 0
      %2351 = vmatpush1.bf16.msra.mxu0 0
      %2352 = vmatprep.subr.bf16.mxu0 0
      %2353 = vmatpush1.bf16.msra.mxu0 0
      %2354 = vmatprep.subr.bf16.mxu0 0
      %2355 = vmatpush1.bf16.msra.mxu0 0
      %2356 = vmatprep.subr.bf16.mxu0 0
      %2357 = vmatpush1.bf16.msra.mxu0 0
      %2358 = vmatprep.subr.bf16.mxu0 0
      %2359 = vmatpush1.bf16.msra.mxu0 0
      %2360 = vmatprep.subr.bf16.mxu0 0
      %2361 = vmatpush1.bf16.msra.mxu0 0
      %2362 = vmatprep.mubr.bf16.mxu0 0
      %2363 = vmatmul.mubr.bf16.gmra.mrb[0].mxu0 %v2278
      %v2364 = vpop.f32.mrb[0].mxu0
      %v2365 = vadd.f32 0.0, %v2364
      %v2366 = vpop.f32.mrb[0].mxu0
      %v2367 = vpop.f32.mrb[0].mxu0
      %v2368 = vadd.f32 0.0, %v2367
      %v2369 = vpop.f32.mrb[0].mxu0
      %2370 = vmatprep.mubr.bf16.mxu0 0
      %2371 = vmatmul.mubr.bf16.gmra.mrb[0].mxu0 %v2279
      %v2372 = vpop.f32.mrb[0].mxu0
      %v2373 = vadd.f32 0.0, %v2372
      %v2374 = vpop.f32.mrb[0].mxu0
      %v2375 = vpop.f32.mrb[0].mxu0
      %v2376 = vadd.f32 0.0, %v2375
      %v2377 = vpop.f32.mrb[0].mxu0
      %2378 = vdwg.mxu0
      %v2379 = vld [vmem:[#allocation3] sm:$0xff]
      %v2380 = vld [vmem:[#allocation3 + $0x8] sm:$0xff]
      %v2381 = vld [vmem:[#allocation3 + $0x10] sm:$0xff]
      %v2382 = vld [vmem:[#allocation3 + $0x18] sm:$0xff]
      %v2383 = vadd.f32 %v2379, %v2365
      %v2384 = vadd.f32 %v2380, %v2368
      %v2385 = vadd.f32 %v2381, %v2373
      %v2386 = vadd.f32 %v2382, %v2376
      %2387 = vst [vmem:[#allocation3] sm:$0xff] %v2383
      %2388 = vst [vmem:[#allocation3 + $0x8] sm:$0xff] %v2384
      %2389 = vst [vmem:[#allocation3 + $0x10] sm:$0xff] %v2385
      %2390 = vst [vmem:[#allocation3 + $0x18] sm:$0xff] %v2386
      %v2391 = vld [vmem:[#allocation3] sm:$0xff]
      %v2392 = vld [vmem:[#allocation3 + $0x8] sm:$0xff]
      %v2393 = vld [vmem:[#allocation3 + $0x10] sm:$0xff]
      %v2394 = vld [vmem:[#allocation3 + $0x18] sm:$0xff]
      %v2395 = vpack.c.bf16 %v2391, %v2391
      %v2396 = vpack.c.bf16 %v2392, %v2392
      %v2397 = vpack.c.bf16 %v2393, %v2393
      %v2398 = vpack.c.bf16 %v2394, %v2394
      %2399 = vst [vmem:[%s600] sm:$0xf] %v2395
      %2400 = vst [vmem:[%s600 + $0x4] sm:$0xf] %v2396
      %2401 = vst [vmem:[%s600 + $0x8] sm:$0xf] %v2397
      %2402 = vst [vmem:[%s600 + $0xc] sm:$0xf] %v2398
      %v2403 = vadd.f32 %v2391, %v2392
      %v2404 = vadd.f32 %v2403, %v2393
      %v2405 = vadd.f32 %v2404, %v2394
      %v2406 = vrot.slane %v2405, 4
      %v2407 = vadd.f32 %v2405, %v2406
      %v2408 = vrot.slane %v2407, 2
      %v2409 = vadd.f32 %v2407, %v2408
      %v2410 = vrot.slane %v2409, 1
      %v2411 = vadd.f32 %v2409, %v2410
      %v2412 = vmul.f32 %v2391, %v2391
      %v2413 = vmul.f32 %v2392, %v2392
      %v2414 = vmul.f32 %v2393, %v2393
      %v2415 = vmul.f32 %v2394, %v2394
      %v2416 = vadd.f32 %v2412, %v2413
      %v2417 = vadd.f32 %v2416, %v2414
      %v2418 = vadd.f32 %v2417, %v2415
      %v2419 = vrot.slane %v2418, 4
      %v2420 = vadd.f32 %v2418, %v2419
      %v2421 = vrot.slane %v2420, 2
      %v2422 = vadd.f32 %v2420, %v2421
      %v2423 = vrot.slane %v2422, 1
      %v2424 = vadd.f32 %v2422, %v2423
      %v2425 = vld [vmem:[%s587] sm:$0xff]
      %v2426 = vld [vmem:[%s587 + $0x8] sm:$0xff]
      %v2427 = vld [vmem:[%s587 + $0x10] sm:$0xff]
      %v2428 = vld [vmem:[%s587 + $0x18] sm:$0xff]
      %v2429 = vld [vmem:[%s587 + $0x20] sm:$0xff]
      %v2430 = vld [vmem:[%s587 + $0x28] sm:$0xff]
      %v2431 = vld [vmem:[%s587 + $0x30] sm:$0xff]
      %v2432 = vld [vmem:[%s587 + $0x38] sm:$0xff]
      %v2433 = vld [vmem:[%s587 + $0x40] sm:$0xff]
      %v2434 = vld [vmem:[%s587 + $0x48] sm:$0xff]
      %v2435 = vld [vmem:[%s587 + $0x50] sm:$0xff]
      %v2436 = vld [vmem:[%s587 + $0x58] sm:$0xff]
      %v2437 = vld [vmem:[%s587 + $0x60] sm:$0xff]
      %v2438 = vld [vmem:[%s587 + $0x68] sm:$0xff]
      %v2439 = vld [vmem:[%s587 + $0x70] sm:$0xff]
      %v2440 = vld [vmem:[%s587 + $0x78] sm:$0xff]
      %2441 = vmatprep.subr.mxu0 0.0
      %2442 = vmatpush1.msra.mxu0 %v2425
      %2443 = vmatprep.subr.mxu0 0.0
      %2444 = vmatpush1.msra.mxu0 %v2426
      %2445 = vmatprep.subr.mxu0 0.0
      %2446 = vmatpush1.msra.mxu0 %v2427
      %2447 = vmatprep.subr.mxu0 0.0
      %2448 = vmatpush1.msra.mxu0 %v2428
      %2449 = vmatprep.subr.mxu0 0.0
      %2450 = vmatpush1.msra.mxu0 %v2429
      %2451 = vmatprep.subr.mxu0 0.0
      %2452 = vmatpush1.msra.mxu0 %v2430
      %2453 = vmatprep.subr.mxu0 0.0
      %2454 = vmatpush1.msra.mxu0 %v2431
      %2455 = vmatprep.subr.mxu0 0.0
      %2456 = vmatpush1.msra.mxu0 %v2432
      %2457 = vmatprep.subr.mxu0 0.0
      %2458 = vmatpush1.msra.mxu0 %v2433
      %2459 = vmatprep.subr.mxu0 0.0
      %2460 = vmatpush1.msra.mxu0 %v2434
      %2461 = vmatprep.subr.mxu0 0.0
      %2462 = vmatpush1.msra.mxu0 %v2435
      %2463 = vmatprep.subr.mxu0 0.0
      %2464 = vmatpush1.msra.mxu0 %v2436
      %2465 = vmatprep.subr.mxu0 0.0
      %2466 = vmatpush1.msra.mxu0 %v2437
      %2467 = vmatprep.subr.mxu0 0.0
      %2468 = vmatpush1.msra.mxu0 %v2438
      %2469 = vmatprep.subr.mxu0 0.0
      %2470 = vmatpush1.msra.mxu0 %v2439
      %2471 = vmatprep.subr.mxu0 0.0
      %2472 = vmatpush1.msra.mxu0 %v2440
      %2473 = vmatprep.subr.mxu0 0.0
      %2474 = vmatpush1.msra.mxu0 0.0
      %2475 = vmatprep.subr.mxu0 0.0
      %2476 = vmatpush1.msra.mxu0 0.0
      %2477 = vmatprep.subr.mxu0 0.0
      %2478 = vmatpush1.msra.mxu0 0.0
      %2479 = vmatprep.subr.mxu0 0.0
      %2480 = vmatpush1.msra.mxu0 0.0
      %2481 = vmatprep.subr.mxu0 0.0
      %2482 = vmatpush1.msra.mxu0 0.0
      %2483 = vmatprep.subr.mxu0 0.0
      %2484 = vmatpush1.msra.mxu0 0.0
      %2485 = vmatprep.subr.mxu0 0.0
      %2486 = vmatpush1.msra.mxu0 0.0
      %2487 = vmatprep.subr.mxu0 0.0
      %2488 = vmatpush1.msra.mxu0 0.0
      %2489 = vmatprep.subr.mxu0 0.0
      %2490 = vmatpush1.msra.mxu0 0.0
      %2491 = vmatprep.subr.mxu0 0.0
      %2492 = vmatpush1.msra.mxu0 0.0
      %2493 = vmatprep.subr.mxu0 0.0
      %2494 = vmatpush1.msra.mxu0 0.0
      %2495 = vmatprep.subr.mxu0 0.0
      %2496 = vmatpush1.msra.mxu0 0.0
      %2497 = vmatprep.subr.mxu0 0.0
      %2498 = vmatpush1.msra.mxu0 0.0
      %2499 = vmatprep.subr.mxu0 0.0
      %2500 = vmatpush1.msra.mxu0 0.0
      %2501 = vmatprep.subr.mxu0 0.0
      %2502 = vmatpush1.msra.mxu0 0.0
      %2503 = vmatprep.subr.mxu0 0.0
      %2504 = vmatpush1.msra.mxu0 0.0
      %2505 = vmatprep.mubr.f32.mxu0 0.0
      %2506 = vmatmul.mubr.f32.gmra.mrb[0].mxu0 %v2411
      %v2507 = vpop.f32.mrb[0].mxu0
      %v2508 = vadd.f32 0.0, %v2507
      %v2509 = vpop.f32.mrb[0].mxu0
      %2510 = vdwg.mxu0
      %2511 = vst [vmem:[%s610] sm:$0x1] %v2508
      %v2512 = vld [vmem:[%s587] sm:$0xff]
      %v2513 = vld [vmem:[%s587 + $0x8] sm:$0xff]
      %v2514 = vld [vmem:[%s587 + $0x10] sm:$0xff]
      %v2515 = vld [vmem:[%s587 + $0x18] sm:$0xff]
      %v2516 = vld [vmem:[%s587 + $0x20] sm:$0xff]
      %v2517 = vld [vmem:[%s587 + $0x28] sm:$0xff]
      %v2518 = vld [vmem:[%s587 + $0x30] sm:$0xff]
      %v2519 = vld [vmem:[%s587 + $0x38] sm:$0xff]
      %v2520 = vld [vmem:[%s587 + $0x40] sm:$0xff]
      %v2521 = vld [vmem:[%s587 + $0x48] sm:$0xff]
      %v2522 = vld [vmem:[%s587 + $0x50] sm:$0xff]
      %v2523 = vld [vmem:[%s587 + $0x58] sm:$0xff]
      %v2524 = vld [vmem:[%s587 + $0x60] sm:$0xff]
      %v2525 = vld [vmem:[%s587 + $0x68] sm:$0xff]
      %v2526 = vld [vmem:[%s587 + $0x70] sm:$0xff]
      %v2527 = vld [vmem:[%s587 + $0x78] sm:$0xff]
      %2528 = vmatprep.subr.mxu0 0.0
      %2529 = vmatpush1.msra.mxu0 %v2512
      %2530 = vmatprep.subr.mxu0 0.0
      %2531 = vmatpush1.msra.mxu0 %v2513
      %2532 = vmatprep.subr.mxu0 0.0
      %2533 = vmatpush1.msra.mxu0 %v2514
      %2534 = vmatprep.subr.mxu0 0.0
      %2535 = vmatpush1.msra.mxu0 %v2515
      %2536 = vmatprep.subr.mxu0 0.0
      %2537 = vmatpush1.msra.mxu0 %v2516
      %2538 = vmatprep.subr.mxu0 0.0
      %2539 = vmatpush1.msra.mxu0 %v2517
      %2540 = vmatprep.subr.mxu0 0.0
      %2541 = vmatpush1.msra.mxu0 %v2518
      %2542 = vmatprep.subr.mxu0 0.0
      %2543 = vmatpush1.msra.mxu0 %v2519
      %2544 = vmatprep.subr.mxu0 0.0
      %2545 = vmatpush1.msra.mxu0 %v2520
      %2546 = vmatprep.subr.mxu0 0.0
      %2547 = vmatpush1.msra.mxu0 %v2521
      %2548 = vmatprep.subr.mxu0 0.0
      %2549 = vmatpush1.msra.mxu0 %v2522
      %2550 = vmatprep.subr.mxu0 0.0
      %2551 = vmatpush1.msra.mxu0 %v2523
      %2552 = vmatprep.subr.mxu0 0.0
      %2553 = vmatpush1.msra.mxu0 %v2524
      %2554 = vmatprep.subr.mxu0 0.0
      %2555 = vmatpush1.msra.mxu0 %v2525
      %2556 = vmatprep.subr.mxu0 0.0
      %2557 = vmatpush1.msra.mxu0 %v2526
      %2558 = vmatprep.subr.mxu0 0.0
      %2559 = vmatpush1.msra.mxu0 %v2527
      %2560 = vmatprep.subr.mxu0 0.0
      %2561 = vmatpush1.msra.mxu0 0.0
      %2562 = vmatprep.subr.mxu0 0.0
      %2563 = vmatpush1.msra.mxu0 0.0
      %2564 = vmatprep.subr.mxu0 0.0
      %2565 = vmatpush1.msra.mxu0 0.0
      %2566 = vmatprep.subr.mxu0 0.0
      %2567 = vmatpush1.msra.mxu0 0.0
      %2568 = vmatprep.subr.mxu0 0.0
      %2569 = vmatpush1.msra.mxu0 0.0
      %2570 = vmatprep.subr.mxu0 0.0
      %2571 = vmatpush1.msra.mxu0 0.0
      %2572 = vmatprep.subr.mxu0 0.0
      %2573 = vmatpush1.msra.mxu0 0.0
      %2574 = vmatprep.subr.mxu0 0.0
      %2575 = vmatpush1.msra.mxu0 0.0
      %2576 = vmatprep.subr.mxu0 0.0
      %2577 = vmatpush1.msra.mxu0 0.0
      %2578 = vmatprep.subr.mxu0 0.0
      %2579 = vmatpush1.msra.mxu0 0.0
      %2580 = vmatprep.subr.mxu0 0.0
      %2581 = vmatpush1.msra.mxu0 0.0
      %2582 = vmatprep.subr.mxu0 0.0
      %2583 = vmatpush1.msra.mxu0 0.0
      %2584 = vmatprep.subr.mxu0 0.0
      %2585 = vmatpush1.msra.mxu0 0.0
      %2586 = vmatprep.subr.mxu0 0.0
      %2587 = vmatpush1.msra.mxu0 0.0
      %2588 = vmatprep.subr.mxu0 0.0
      %2589 = vmatpush1.msra.mxu0 0.0
      %2590 = vmatprep.subr.mxu0 0.0
      %2591 = vmatpush1.msra.mxu0 0.0
      %2592 = vmatprep.mubr.f32.mxu0 0.0
      %2593 = vmatmul.mubr.f32.gmra.mrb[0].mxu0 %v2424
      %v2594 = vpop.f32.mrb[0].mxu0
      %v2595 = vadd.f32 0.0, %v2594
      %v2596 = vpop.f32.mrb[0].mxu0
      %2597 = vdwg.mxu0
      %2598 = vst [vmem:[%s610 + $0x1] sm:$0x1] %v2595
      %s2599 = smul.u32 4, %s27
      %p2600 = scmp.lt.s32.totalorder %s26, 1
      %s2601 = scalar_select %p2600, %s26, 1
      %p2602 = scmp.lt.s32.totalorder %s2599, 7
      %s2603 = scalar_select %p2602, %s2599, 7
      %p2604 = scmp.lt.s32.totalorder %s28, 0
      %s2605 = scalar_select %p2604, %s28, 0
      %s2606 = sadd.s32 %s2605, %s2603
      %s2607 = smul.addr %s2601, 8
      %s2608 = sadd.s32 %s2606, %s2607
      %s2609 = smul.addr %s2608, 4
      %s2610 = scalar_lea.vmem %s8, %s2609
      %s2611 = sadd.s32 %s27, %s28
      %p2612 = scmp.lt.s32.totalorder %s26, 1
      %s2613 = scalar_select %p2612, %s26, 1
      %p2614 = scmp.lt.s32.totalorder %s2611, 1
      %s2615 = scalar_select %p2614, %s2611, 1
      %s2616 = smul.addr %s2613, 2
      %s2617 = sadd.s32 %s2615, %s2616
      %s2618 = smul.addr %s2617, 2
      %s2619 = scalar_lea.vmem %s9, %s2618
      // Predicated region
      $region53: #{downblock_forward.6} parent=51 // pred_check
        %p2620 = pneg %p292
      $region54: #{downblock_forward.6} parent=51 // pred_check_branch
        %2622 = sbr.rel (%p2620) target = $region56
      $region55: #{downblock_forward.6} parent=51 // pred_region
        %s2623 = smul.u32 4, %s27
      $region56: #{downblock_forward.6} parent=51 // pred_fallthru
        _
      // Predicated region
      $region57: #{downblock_forward.6} parent=51 // pred_check
        %p2624 = pneg %p322
      $region58: #{downblock_forward.6} parent=51 // pred_check_branch
        %2626 = sbr.rel (%p2624) target = $region60
      $region59: #{downblock_forward.6} parent=51 // pred_region
        %s2627 = sadd.s32 %s27, %s28
      $region60: #{downblock_forward.6} parent=51 // pred_fallthru
        _
    $region52: #{downblock_forward.6} parent=5 // pred_fallthru
      _
    %p2628 = scmp.le.s32.totalorder 2, %s16
    // Predicated region
    $region61: #{downblock_forward.6} parent=5 // pred_check
      %p2629 = pneg %p2628
    $region62: #{downblock_forward.6} parent=5 // pred_check_branch
      %2631 = sbr.rel (%p2629) target = $region64
    $region63: #{downblock_forward.6} parent=5 // pred_region
      %s2632 = ssub.s32 %s16, 2
      // Predicated region
      $region65: #{downblock_forward.6} parent=63 // pred_check
        %p2633 = pneg %p298
      $region66: #{downblock_forward.6} parent=63 // pred_check_branch
        %2635 = sbr.rel (%p2633) target = $region68
      $region67: #{downblock_forward.6} parent=63 // pred_region
        %s2636 = smul.u32 4, %s30
        %p2637 = scmp.lt.s32.totalorder %s29, 1
        %s2638 = scalar_select %p2637, %s29, 1
        %p2639 = scmp.lt.s32.totalorder %s2636, 7
        %s2640 = scalar_select %p2639, %s2636, 7
        %p2641 = scmp.lt.s32.totalorder %s31, 0
        %s2642 = scalar_select %p2641, %s31, 0
        %s2643 = sadd.s32 %s2642, %s2640
        %s2644 = smul.addr %s2638, 8
        %s2645 = sadd.s32 %s2643, %s2644
        %s2646 = smul.addr %s2645, 4
        %s2647 = scalar_lea.vmem %s8, %s2646
      $region68: #{downblock_forward.6} parent=63 // pred_fallthru
        _
      // Predicated region
      $region69: #{downblock_forward.6} parent=63 // pred_check
        %p2648 = pneg %p328
      $region70: #{downblock_forward.6} parent=63 // pred_check_branch
        %2650 = sbr.rel (%p2648) target = $region72
      $region71: #{downblock_forward.6} parent=63 // pred_region
        %s2651 = sadd.s32 %s30, %s31
        %p2652 = scmp.lt.s32.totalorder %s29, 1
        %s2653 = scalar_select %p2652, %s29, 1
        %p2654 = scmp.lt.s32.totalorder %s2651, 1
        %s2655 = scalar_select %p2654, %s2651, 1
        %s2656 = smul.addr %s2653, 2
        %s2657 = sadd.s32 %s2655, %s2656
        %s2658 = smul.addr %s2657, 2
        %s2659 = scalar_lea.vmem %s9, %s2658
      $region72: #{downblock_forward.6} parent=63 // pred_fallthru
        _
    $region64: #{downblock_forward.6} parent=5 // pred_fallthru
      _
  $region6: #{downblock_forward.6} parent=0 // loop_footer
    %s20 = sadd.s32 1, %s16
  $region7: #{downblock_forward.6} parent=0 // loop_footer_branch
    %15 = sbr.rel target = $region3
  $region8: #{downblock_forward.6} parent=0 // loop_exit
    _

</llo_original>
